<compile_context>
chip_gen: v6e
topology: v6e:2x2x1
jax: 0.10.0
libtpu: 0.0.40
codegen_flags: <defaults>
</compile_context>

<pallas_src>
import functools

import jax
import jax.numpy as jnp
from jax import lax
from jax.experimental import pallas as pl
from jax.experimental.pallas import tpu as pltpu

C = 50            # channel count fixed by the module
CP = 64           # lane-padded channel count used inside the kernel
NEG_SLOPE = 0.05  # IMDN/HNCT conv_block 'lrelu' default


def _cascade_kernel(xs_ref, w5_ref, b5_ref, w3_ref, b3_ref,
                    wA_ref, wB_ref, wD_ref, bF_ref, o_ref,
                    *, h_img, tile_h):
    """One (batch, H-tile) grid step.

    xs_ref : (1, 1, tile_h+6, W+4, CP) bf16 input slab (3-row / 2-col zero halo)
    w5_ref : (5, 5*CP, CP) bf16   per-kh conv5 weights, taps ordered (kw, cin)
    w3_ref : (3, 3*CP, CP) bf16   per-kh conv3 weights
    wA/wB/wD_ref : (CP, CP) bf16  folded 1x1 weights;  bF_ref : (1, CP) f32
    o_ref  : (1, tile_h, W, CP) f32 output tile
    """
    _, _, hs, ws, cp = xs_ref.shape
    w = ws - 4
    th = tile_h
    the = th + 2                      # extended rows: 1-row halo of `extra` for conv3
    m = th * w

    xs = xs_ref[...].reshape(hs, ws, cp)          # bf16 slab
    dot = functools.partial(jnp.dot, preferred_element_type=jnp.float32)

    def im2col_kh(src, kh, k, ho, wo):
        # taps for fixed kh, ordered (kw, cin): (ho*wo, k*cp); chunks 64-lane aligned
        cols = [src[kh:kh + ho, kw:kw + wo, :].reshape(ho * wo, cp)
                for kw in range(k)]
        return jnp.concatenate(cols, axis=-1)

    # ---- conv5 (5x5, pad=2) over extended rows: 5 per-kh K=5*CP bf16 matmuls
    acc5 = dot(im2col_kh(xs, 0, 5, the, w), w5_ref[0])
    for kh in range(1, 5):
        acc5 += dot(im2col_kh(xs, kh, 5, the, w), w5_ref[kh])
    conv5_ext = (acc5 + b5_ref[...]).reshape(the, w, cp)            # f32

    # ---- extra = x + conv5 (f32), zeroed outside the true image rows.
    # conv3 pads `extra` with zeros, NOT with values computed on zero-padded x.
    x_ext = xs[2:2 + the, 2:2 + w, :].astype(jnp.float32)
    g_row = (pl.program_id(1) * th - 1
             + lax.broadcasted_iota(jnp.int32, (the, 1, 1), 0))
    inside = jnp.logical_and(g_row >= 0, g_row < h_img)
    extra_ext = jnp.where(inside, x_ext + conv5_ext, 0.0)

    # Zero 1-column ring for conv3's width padding (no scratch zero-fill).
    extra_b = extra_ext.astype(jnp.bfloat16)
    zcol = jnp.zeros((the, 1, cp), jnp.bfloat16)
    extra_pad = jnp.concatenate([zcol, extra_b, zcol], axis=1)      # (th+2, W+2, CP)

    # ---- conv3 (3x3, pad=1): 3 per-kh K=3*CP bf16 matmuls
    acc3 = dot(im2col_kh(extra_pad, 0, 3, th, w), w3_ref[0])
    for kh in range(1, 3):
        acc3 += dot(im2col_kh(extra_pad, kh, 3, th, w), w3_ref[kh])
    conv3 = acc3 + b3_ref[...]                                      # (m, CP) f32

    # ---- fused tail: conv1 + cat([conv5,conv3,conv1,x]) + 1x1 `c` folded into
    #      three K=CP matmuls (exact algebraic rewrite), then LeakyReLU in f32.
    conv5_c = conv5_ext[1:1 + th].reshape(m, cp).astype(jnp.bfloat16)
    x_c = xs[3:3 + th, 2:2 + w, :].reshape(m, cp)                   # bf16
    out = (dot(conv5_c, wA_ref[...])
           + dot(conv3.astype(jnp.bfloat16), wB_ref[...])
           + dot(x_c, wD_ref[...])
           + bF_ref[...])
    out = jnp.where(out >= 0, out, NEG_SLOPE * out)
    o_ref[...] = out.reshape(o_ref.shape)


def init_params(key):
    ks = jax.random.split(key, 8)
    # conv weights stored HWIO (kh, kw, Cin, Cout); 1x1 weights stored (Cin, Cout)
    w5 = jax.random.normal(ks[0], (5, 5, C, C), jnp.float32) * 0.05
    b5 = jax.random.normal(ks[1], (C,), jnp.float32) * 0.05
    w3 = jax.random.normal(ks[2], (3, 3, C, C), jnp.float32) * 0.05
    b3 = jax.random.normal(ks[3], (C,), jnp.float32) * 0.05
    w1 = jax.random.normal(ks[4], (C, C), jnp.float32) * 0.05
    b1 = jax.random.normal(ks[5], (C,), jnp.float32) * 0.05
    wc = jax.random.normal(ks[6], (4 * C, C), jnp.float32) * 0.05
    bc = jax.random.normal(ks[7], (C,), jnp.float32) * 0.05
    return (w5, b5, w3, b3, w1, b1, wc, bc)


def _prepare_params(params, cp):
    """Fold conv1 + final 1x1 `c`, pad channels 50->cp, cast MXU weights to bf16."""
    w5, b5, w3, b3, w1, b1, wc, bc = params
    c = w5.shape[-1]
    pc = cp - c
    hi = lax.Precision.HIGHEST

    wcA, wcB, wcC, wcD = wc[:c], wc[c:2 * c], wc[2 * c:3 * c], wc[3 * c:]
    w1c = jnp.dot(w1, wcC, precision=hi)
    wA, wB, wD = wcA, wcB + w1c, wcD + w1c
    bF = bc + jnp.dot(b1, wcC, precision=hi)

    pad2 = lambda a: jnp.pad(a, ((0, pc), (0, pc))).astype(jnp.bfloat16)
    padb = lambda a: jnp.pad(a, ((0, pc),)).reshape(1, cp).astype(jnp.float32)

    w5p = jnp.pad(w5, ((0, 0), (0, 0), (0, pc), (0, pc))
                  ).reshape(5, 5 * cp, cp).astype(jnp.bfloat16)
    w3p = jnp.pad(w3, ((0, 0), (0, 0), (0, pc), (0, pc))
                  ).reshape(3, 3 * cp, cp).astype(jnp.bfloat16)

    return w5p, padb(b5), w3p, padb(b3), pad2(wA), pad2(wB), pad2(wD), padb(bF)


def cascade_forward(x_nchw, params, *, tile_h=32):
    n, cin, h, w = x_nchw.shape
    assert cin == C
    cp = CP

    w5p, b5p, w3p, b3p, wAp, wBp, wDp, bFp = _prepare_params(params, cp)

    # NCHW -> NHWC, channels padded 50 -> 64, bf16 activations for the MXU.
    x = jnp.transpose(x_nchw, (0, 2, 3, 1))
    x = jnp.pad(x, ((0, 0), (0, 0), (0, 0), (0, cp - cin))).astype(jnp.bfloat16)

    tile_h = int(min(tile_h, max(8, ((h + 7) // 8) * 8)))   # clamp for small inputs
    n_t = pl.cdiv(h, tile_h)
    hp = n_t * tile_h

    # Zero-pad: 3 rows each side (2 for conv5 + 1 halo row of `extra` for
    # conv3), 2 cols each side (conv5); round H up to a tile_h multiple.
    xpad = jnp.pad(x, ((0, 0), (3, 3 + hp - h), (2, 2), (0, 0)))

    # Overlapping H-slabs (tile + 3-row halo each side) so every grid step's
    # input is a contiguous BlockSpec block (auto-pipelined, double-buffered).
    # TODO(synk): for large W, add a W grid axis (2-3 col halo) and/or replace
    # this duplicated-slab gather with manual windowed DMA (memory_space=pl.ANY).
    row_idx = jnp.arange(n_t)[:, None] * tile_h + jnp.arange(tile_h + 6)[None, :]
    xslabs = xpad[:, row_idx]                    # (N, nT, tile_h+6, W+4, CP)

    kernel = functools.partial(_cascade_kernel, h_img=h, tile_h=tile_h)
    const3 = lambda i, j: (0, 0, 0)              # weights: full blocks, never re-fetched
    const2 = lambda i, j: (0, 0)

    flops = 2 * n * hp * w * cp * cp * (25 + 9 + 3)
    bytes_accessed = (xslabs.size * 2 + n * hp * w * cp * 4
                      + 2 * (w5p.size + w3p.size + wAp.size + wBp.size + wDp.size))

    out = pl.pallas_call(
        kernel,
        out_shape=jax.ShapeDtypeStruct((n, hp, w, cp), jnp.float32),
        grid=(n, n_t),
        in_specs=[
            pl.BlockSpec((1, 1, tile_h + 6, w + 4, cp), lambda i, j: (i, j, 0, 0, 0)),
            pl.BlockSpec((5, 5 * cp, cp), const3),
            pl.BlockSpec((1, cp), const2),
            pl.BlockSpec((3, 3 * cp, cp), const3),
            pl.BlockSpec((1, cp), const2),
            pl.BlockSpec((cp, cp), const2),
            pl.BlockSpec((cp, cp), const2),
            pl.BlockSpec((cp, cp), const2),
            pl.BlockSpec((1, cp), const2),
        ],
        out_specs=pl.BlockSpec((1, tile_h, w, cp), lambda i, j: (i, j, 0, 0)),
        compiler_params=pltpu.CompilerParams(
            dimension_semantics=("parallel", "parallel"),
            vmem_limit_bytes=48 * 1024 * 1024),
        cost_estimate=pl.CostEstimate(flops=flops, transcendentals=0,
                                      bytes_accessed=bytes_accessed),
    )(xslabs, w5p, b5p, w3p, b3p, wAp, wBp, wDp, bFp)

    out = out[:, :h, :, :C]                      # drop H round-up rows & channel pad
    return jnp.transpose(out, (0, 3, 1, 2))      # NHWC -> NCHW


# ---------------- pure-JAX reference (true f32 module semantics) ----------------
def _conv_nhwc(x, w, b, pad):
    y = lax.conv_general_dilated(
        x, w, window_strides=(1, 1), padding=pad,
        dimension_numbers=('NHWC', 'HWIO', 'NHWC'),
        precision=lax.Precision.HIGHEST)
    return y + b


def cascade_reference(x_nchw, params):
    w5, b5, w3, b3, w1, b1, wc, bc = params
    x = jnp.transpose(x_nchw, (0, 2, 3, 1)).astype(jnp.float32)
    conv5 = _conv_nhwc(x, w5, b5, [(2, 2), (2, 2)])
    extra = x + conv5
    conv3 = _conv_nhwc(extra, w3, b3, [(1, 1), (1, 1)])
    extra = x + conv3
    conv1 = _conv_nhwc(extra, w1.reshape(1, 1, C, C), b1, [(0, 0), (0, 0)])
    cat = jnp.concatenate([conv5, conv3, conv1, x], axis=-1)
    out = _conv_nhwc(cat, wc.reshape(1, 1, 4 * C, C), bc, [(0, 0), (0, 0)])
    out = jnp.where(out >= 0, out, NEG_SLOPE * out)
    return jnp.transpose(out, (0, 3, 1, 2))


if __name__ == "__main__":
    key = jax.random.PRNGKey(0)
    kx, kp = jax.random.split(key)
    n, h, w = 2, 16, 16
    x = jax.random.normal(kx, (n, C, h, w), jnp.float32)   # NCHW, 50 channels fixed
    params = init_params(kp)

    fwd = jax.jit(cascade_forward)
    out = jax.block_until_ready(fwd(x, params))

    ref = cascade_reference(x, params)
    max_diff = float(jnp.max(jnp.abs(out - ref)))
    assert out.shape == (n, C, h, w), out.shape
    # bf16 MXU operands (f32 accumulate) vs f32-HIGHEST reference: expected
    # max abs error ~1e-2 at these scales; real bugs produce O(1) errors.
    assert max_diff < 8e-2, f"mismatch vs reference: {max_diff}"
    print("KERNEL_OK")
</pallas_src>

<mosaic_0001>
module attributes {stable_mosaic.version = 11 : i64} {
  func.func @_cascade_kernel(%arg0: i32, %arg1: i32, %arg2: memref<1x1x22x20x64xbf16, #tpu.memory_space<vmem>>, %arg3: memref<5x320x64xbf16, #tpu.memory_space<vmem>>, %arg4: memref<1x64xf32, #tpu.memory_space<vmem>>, %arg5: memref<3x192x64xbf16, #tpu.memory_space<vmem>>, %arg6: memref<1x64xf32, #tpu.memory_space<vmem>>, %arg7: memref<64x64xbf16, #tpu.memory_space<vmem>>, %arg8: memref<64x64xbf16, #tpu.memory_space<vmem>>, %arg9: memref<64x64xbf16, #tpu.memory_space<vmem>>, %arg10: memref<1x64xf32, #tpu.memory_space<vmem>>, %arg11: memref<1x16x16x64xf32, #tpu.memory_space<vmem>>) attributes {dimension_semantics = [#tpu.dimension_semantics<parallel>, #tpu.dimension_semantics<parallel>], iteration_bounds = array<i64: 2, 1>, scalar_prefetch = 0 : i64, scratch_operands = 0 : i64, tpu.core_type = #tpu.core_type<tc>, window_params = [{transform_indices = @transform_0, window_bounds = array<i64: 1, 1, 22, 20, 64>}, {pipeline_mode = #tpu.pipeline_mode<synchronous>, transform_indices = @transform_1, window_bounds = array<i64: 5, 320, 64>}, {pipeline_mode = #tpu.pipeline_mode<synchronous>, transform_indices = @transform_2, window_bounds = array<i64: 1, 64>}, {pipeline_mode = #tpu.pipeline_mode<synchronous>, transform_indices = @transform_3, window_bounds = array<i64: 3, 192, 64>}, {pipeline_mode = #tpu.pipeline_mode<synchronous>, transform_indices = @transform_4, window_bounds = array<i64: 1, 64>}, {pipeline_mode = #tpu.pipeline_mode<synchronous>, transform_indices = @transform_5, window_bounds = array<i64: 64, 64>}, {pipeline_mode = #tpu.pipeline_mode<synchronous>, transform_indices = @transform_6, window_bounds = array<i64: 64, 64>}, {pipeline_mode = #tpu.pipeline_mode<synchronous>, transform_indices = @transform_7, window_bounds = array<i64: 64, 64>}, {pipeline_mode = #tpu.pipeline_mode<synchronous>, transform_indices = @transform_8, window_bounds = array<i64: 1, 64>}, {transform_indices = @transform_9, window_bounds = array<i64: 1, 16, 16, 64>}]} {
    %c0 = arith.constant 0 : index
    %c0_0 = arith.constant 0 : index
    %c0_1 = arith.constant 0 : index
    %c0_2 = arith.constant 0 : index
    %c0_3 = arith.constant 0 : index
    %0 = vector.load %arg2[%c0, %c0_0, %c0_1, %c0_2, %c0_3] : memref<1x1x22x20x64xbf16, #tpu.memory_space<vmem>>, vector<1x1x22x20x64xbf16>
    %1 = vector.shape_cast %0 : vector<1x1x22x20x64xbf16> to vector<22x20x64xbf16>
    %2 = vector.extract_strided_slice %1 {offsets = [0, 0, 0], sizes = [18, 16, 64], strides = [1, 1, 1]} : vector<22x20x64xbf16> to vector<18x16x64xbf16>
    %3 = vector.shape_cast %2 : vector<18x16x64xbf16> to vector<288x64xbf16>
    %4 = vector.extract_strided_slice %1 {offsets = [0, 1, 0], sizes = [18, 16, 64], strides = [1, 1, 1]} : vector<22x20x64xbf16> to vector<18x16x64xbf16>
    %5 = vector.shape_cast %4 : vector<18x16x64xbf16> to vector<288x64xbf16>
    %6 = vector.extract_strided_slice %1 {offsets = [0, 2, 0], sizes = [18, 16, 64], strides = [1, 1, 1]} : vector<22x20x64xbf16> to vector<18x16x64xbf16>
    %7 = vector.shape_cast %6 : vector<18x16x64xbf16> to vector<288x64xbf16>
    %8 = vector.extract_strided_slice %1 {offsets = [0, 3, 0], sizes = [18, 16, 64], strides = [1, 1, 1]} : vector<22x20x64xbf16> to vector<18x16x64xbf16>
    %9 = vector.shape_cast %8 : vector<18x16x64xbf16> to vector<288x64xbf16>
    %10 = vector.extract_strided_slice %1 {offsets = [0, 4, 0], sizes = [18, 16, 64], strides = [1, 1, 1]} : vector<22x20x64xbf16> to vector<18x16x64xbf16>
    %11 = vector.shape_cast %10 : vector<18x16x64xbf16> to vector<288x64xbf16>
    %12 = tpu.concatenate %3, %5, %7, %9, %11 in 1 : vector<288x64xbf16>, vector<288x64xbf16>, vector<288x64xbf16>, vector<288x64xbf16>, vector<288x64xbf16> -> vector<288x320xbf16>
    %c0_4 = arith.constant 0 : index
    %c0_5 = arith.constant 0 : index
    %c0_6 = arith.constant 0 : index
    %13 = vector.load %arg3[%c0_4, %c0_5, %c0_6] : memref<5x320x64xbf16, #tpu.memory_space<vmem>>, vector<1x320x64xbf16>
    %14 = vector.shape_cast %13 : vector<1x320x64xbf16> to vector<320x64xbf16>
    %cst = arith.constant dense<0.000000e+00> : vector<288x64xf32>
    %15 = tpu.matmul %12, %14, %cst {dimension_numbers = #tpu.dot_dimension_numbers<[1], [0], [0], [1], [0, 0, 1, 1], [], []>} : vector<288x320xbf16>, vector<320x64xbf16>, vector<288x64xf32> -> vector<288x64xf32>
    %16 = vector.extract_strided_slice %1 {offsets = [1, 0, 0], sizes = [18, 16, 64], strides = [1, 1, 1]} : vector<22x20x64xbf16> to vector<18x16x64xbf16>
    %17 = vector.shape_cast %16 : vector<18x16x64xbf16> to vector<288x64xbf16>
    %18 = vector.extract_strided_slice %1 {offsets = [1, 1, 0], sizes = [18, 16, 64], strides = [1, 1, 1]} : vector<22x20x64xbf16> to vector<18x16x64xbf16>
    %19 = vector.shape_cast %18 : vector<18x16x64xbf16> to vector<288x64xbf16>
    %20 = vector.extract_strided_slice %1 {offsets = [1, 2, 0], sizes = [18, 16, 64], strides = [1, 1, 1]} : vector<22x20x64xbf16> to vector<18x16x64xbf16>
    %21 = vector.shape_cast %20 : vector<18x16x64xbf16> to vector<288x64xbf16>
    %22 = vector.extract_strided_slice %1 {offsets = [1, 3, 0], sizes = [18, 16, 64], strides = [1, 1, 1]} : vector<22x20x64xbf16> to vector<18x16x64xbf16>
    %23 = vector.shape_cast %22 : vector<18x16x64xbf16> to vector<288x64xbf16>
    %24 = vector.extract_strided_slice %1 {offsets = [1, 4, 0], sizes = [18, 16, 64], strides = [1, 1, 1]} : vector<22x20x64xbf16> to vector<18x16x64xbf16>
    %25 = vector.shape_cast %24 : vector<18x16x64xbf16> to vector<288x64xbf16>
    %26 = tpu.concatenate %17, %19, %21, %23, %25 in 1 : vector<288x64xbf16>, vector<288x64xbf16>, vector<288x64xbf16>, vector<288x64xbf16>, vector<288x64xbf16> -> vector<288x320xbf16>
    %c1 = arith.constant 1 : index
    %c0_7 = arith.constant 0 : index
    %c0_8 = arith.constant 0 : index
    %27 = vector.load %arg3[%c1, %c0_7, %c0_8] : memref<5x320x64xbf16, #tpu.memory_space<vmem>>, vector<1x320x64xbf16>
    %28 = vector.shape_cast %27 : vector<1x320x64xbf16> to vector<320x64xbf16>
    %cst_9 = arith.constant dense<0.000000e+00> : vector<288x64xf32>
    %29 = tpu.matmul %26, %28, %cst_9 {dimension_numbers = #tpu.dot_dimension_numbers<[1], [0], [0], [1], [0, 0, 1, 1], [], []>} : vector<288x320xbf16>, vector<320x64xbf16>, vector<288x64xf32> -> vector<288x64xf32>
    %30 = arith.addf %15, %29 : vector<288x64xf32>
    %31 = vector.extract_strided_slice %1 {offsets = [2, 0, 0], sizes = [18, 16, 64], strides = [1, 1, 1]} : vector<22x20x64xbf16> to vector<18x16x64xbf16>
    %32 = vector.shape_cast %31 : vector<18x16x64xbf16> to vector<288x64xbf16>
    %33 = vector.extract_strided_slice %1 {offsets = [2, 1, 0], sizes = [18, 16, 64], strides = [1, 1, 1]} : vector<22x20x64xbf16> to vector<18x16x64xbf16>
    %34 = vector.shape_cast %33 : vector<18x16x64xbf16> to vector<288x64xbf16>
    %35 = vector.extract_strided_slice %1 {offsets = [2, 2, 0], sizes = [18, 16, 64], strides = [1, 1, 1]} : vector<22x20x64xbf16> to vector<18x16x64xbf16>
    %36 = vector.shape_cast %35 : vector<18x16x64xbf16> to vector<288x64xbf16>
    %37 = vector.extract_strided_slice %1 {offsets = [2, 3, 0], sizes = [18, 16, 64], strides = [1, 1, 1]} : vector<22x20x64xbf16> to vector<18x16x64xbf16>
    %38 = vector.shape_cast %37 : vector<18x16x64xbf16> to vector<288x64xbf16>
    %39 = vector.extract_strided_slice %1 {offsets = [2, 4, 0], sizes = [18, 16, 64], strides = [1, 1, 1]} : vector<22x20x64xbf16> to vector<18x16x64xbf16>
    %40 = vector.shape_cast %39 : vector<18x16x64xbf16> to vector<288x64xbf16>
    %41 = tpu.concatenate %32, %34, %36, %38, %40 in 1 : vector<288x64xbf16>, vector<288x64xbf16>, vector<288x64xbf16>, vector<288x64xbf16>, vector<288x64xbf16> -> vector<288x320xbf16>
    %c2 = arith.constant 2 : index
    %c0_10 = arith.constant 0 : index
    %c0_11 = arith.constant 0 : index
    %42 = vector.load %arg3[%c2, %c0_10, %c0_11] : memref<5x320x64xbf16, #tpu.memory_space<vmem>>, vector<1x320x64xbf16>
    %43 = vector.shape_cast %42 : vector<1x320x64xbf16> to vector<320x64xbf16>
    %cst_12 = arith.constant dense<0.000000e+00> : vector<288x64xf32>
    %44 = tpu.matmul %41, %43, %cst_12 {dimension_numbers = #tpu.dot_dimension_numbers<[1], [0], [0], [1], [0, 0, 1, 1], [], []>} : vector<288x320xbf16>, vector<320x64xbf16>, vector<288x64xf32> -> vector<288x64xf32>
    %45 = arith.addf %30, %44 : vector<288x64xf32>
    %46 = vector.extract_strided_slice %1 {offsets = [3, 0, 0], sizes = [18, 16, 64], strides = [1, 1, 1]} : vector<22x20x64xbf16> to vector<18x16x64xbf16>
    %47 = vector.shape_cast %46 : vector<18x16x64xbf16> to vector<288x64xbf16>
    %48 = vector.extract_strided_slice %1 {offsets = [3, 1, 0], sizes = [18, 16, 64], strides = [1, 1, 1]} : vector<22x20x64xbf16> to vector<18x16x64xbf16>
    %49 = vector.shape_cast %48 : vector<18x16x64xbf16> to vector<288x64xbf16>
    %50 = vector.extract_strided_slice %1 {offsets = [3, 2, 0], sizes = [18, 16, 64], strides = [1, 1, 1]} : vector<22x20x64xbf16> to vector<18x16x64xbf16>
    %51 = vector.shape_cast %50 : vector<18x16x64xbf16> to vector<288x64xbf16>
    %52 = vector.extract_strided_slice %1 {offsets = [3, 3, 0], sizes = [18, 16, 64], strides = [1, 1, 1]} : vector<22x20x64xbf16> to vector<18x16x64xbf16>
    %53 = vector.shape_cast %52 : vector<18x16x64xbf16> to vector<288x64xbf16>
    %54 = vector.extract_strided_slice %1 {offsets = [3, 4, 0], sizes = [18, 16, 64], strides = [1, 1, 1]} : vector<22x20x64xbf16> to vector<18x16x64xbf16>
    %55 = vector.shape_cast %54 : vector<18x16x64xbf16> to vector<288x64xbf16>
    %56 = tpu.concatenate %47, %49, %51, %53, %55 in 1 : vector<288x64xbf16>, vector<288x64xbf16>, vector<288x64xbf16>, vector<288x64xbf16>, vector<288x64xbf16> -> vector<288x320xbf16>
    %c3 = arith.constant 3 : index
    %c0_13 = arith.constant 0 : index
    %c0_14 = arith.constant 0 : index
    %57 = vector.load %arg3[%c3, %c0_13, %c0_14] : memref<5x320x64xbf16, #tpu.memory_space<vmem>>, vector<1x320x64xbf16>
    %58 = vector.shape_cast %57 : vector<1x320x64xbf16> to vector<320x64xbf16>
    %cst_15 = arith.constant dense<0.000000e+00> : vector<288x64xf32>
    %59 = tpu.matmul %56, %58, %cst_15 {dimension_numbers = #tpu.dot_dimension_numbers<[1], [0], [0], [1], [0, 0, 1, 1], [], []>} : vector<288x320xbf16>, vector<320x64xbf16>, vector<288x64xf32> -> vector<288x64xf32>
    %60 = arith.addf %45, %59 : vector<288x64xf32>
    %61 = vector.extract_strided_slice %1 {offsets = [4, 0, 0], sizes = [18, 16, 64], strides = [1, 1, 1]} : vector<22x20x64xbf16> to vector<18x16x64xbf16>
    %62 = vector.shape_cast %61 : vector<18x16x64xbf16> to vector<288x64xbf16>
    %63 = vector.extract_strided_slice %1 {offsets = [4, 1, 0], sizes = [18, 16, 64], strides = [1, 1, 1]} : vector<22x20x64xbf16> to vector<18x16x64xbf16>
    %64 = vector.shape_cast %63 : vector<18x16x64xbf16> to vector<288x64xbf16>
    %65 = vector.extract_strided_slice %1 {offsets = [4, 2, 0], sizes = [18, 16, 64], strides = [1, 1, 1]} : vector<22x20x64xbf16> to vector<18x16x64xbf16>
    %66 = vector.shape_cast %65 : vector<18x16x64xbf16> to vector<288x64xbf16>
    %67 = vector.extract_strided_slice %1 {offsets = [4, 3, 0], sizes = [18, 16, 64], strides = [1, 1, 1]} : vector<22x20x64xbf16> to vector<18x16x64xbf16>
    %68 = vector.shape_cast %67 : vector<18x16x64xbf16> to vector<288x64xbf16>
    %69 = vector.extract_strided_slice %1 {offsets = [4, 4, 0], sizes = [18, 16, 64], strides = [1, 1, 1]} : vector<22x20x64xbf16> to vector<18x16x64xbf16>
    %70 = vector.shape_cast %69 : vector<18x16x64xbf16> to vector<288x64xbf16>
    %71 = tpu.concatenate %62, %64, %66, %68, %70 in 1 : vector<288x64xbf16>, vector<288x64xbf16>, vector<288x64xbf16>, vector<288x64xbf16>, vector<288x64xbf16> -> vector<288x320xbf16>
    %c4 = arith.constant 4 : index
    %c0_16 = arith.constant 0 : index
    %c0_17 = arith.constant 0 : index
    %72 = vector.load %arg3[%c4, %c0_16, %c0_17] : memref<5x320x64xbf16, #tpu.memory_space<vmem>>, vector<1x320x64xbf16>
    %73 = vector.shape_cast %72 : vector<1x320x64xbf16> to vector<320x64xbf16>
    %cst_18 = arith.constant dense<0.000000e+00> : vector<288x64xf32>
    %74 = tpu.matmul %71, %73, %cst_18 {dimension_numbers = #tpu.dot_dimension_numbers<[1], [0], [0], [1], [0, 0, 1, 1], [], []>} : vector<288x320xbf16>, vector<320x64xbf16>, vector<288x64xf32> -> vector<288x64xf32>
    %75 = arith.addf %60, %74 : vector<288x64xf32>
    %c0_19 = arith.constant 0 : index
    %c0_20 = arith.constant 0 : index
    %76 = vector.load %arg4[%c0_19, %c0_20] : memref<1x64xf32, #tpu.memory_space<vmem>>, vector<1x64xf32>
    %77 = vector.broadcast %76 : vector<1x64xf32> to vector<288x64xf32>
    %78 = arith.addf %75, %77 : vector<288x64xf32>
    %79 = vector.shape_cast %78 : vector<288x64xf32> to vector<18x16x64xf32>
    %80 = vector.extract_strided_slice %1 {offsets = [2, 2, 0], sizes = [18, 16, 64], strides = [1, 1, 1]} : vector<22x20x64xbf16> to vector<18x16x64xbf16>
    %81 = arith.extf %80 : vector<18x16x64xbf16> to vector<18x16x64xf32>
    %c16_i32 = arith.constant 16 : i32
    %82 = arith.muli %arg1, %c16_i32 : i32
    %c1_i32 = arith.constant 1 : i32
    %83 = arith.subi %82, %c1_i32 : i32
    %84 = tpu.iota {dimensions = array<i32: 0>} : vector<18x1x1xi32>
    %85 = vector.broadcast %83 : i32 to vector<18x1x1xi32>
    %86 = arith.addi %85, %84 : vector<18x1x1xi32>
    %c0_i32 = arith.constant 0 : i32
    %87 = vector.broadcast %c0_i32 : i32 to vector<18x1x1xi32>
    %88 = arith.cmpi sge, %86, %87 : vector<18x1x1xi32>
    %c16_i32_21 = arith.constant 16 : i32
    %89 = vector.broadcast %c16_i32_21 : i32 to vector<18x1x1xi32>
    %90 = arith.cmpi slt, %86, %89 : vector<18x1x1xi32>
    %91 = arith.andi %88, %90 : vector<18x1x1xi1>
    %92 = arith.addf %81, %79 : vector<18x16x64xf32>
    %cst_22 = arith.constant 0.000000e+00 : f32
    %93 = vector.shape_cast %91 : vector<18x1x1xi1> to vector<18x1x1xi1>
    %94 = vector.broadcast %93 : vector<18x1x1xi1> to vector<18x16x64xi1>
    %95 = vector.broadcast %cst_22 : f32 to vector<18x16x64xf32>
    %96 = arith.select %94, %92, %95 : vector<18x16x64xi1>, vector<18x16x64xf32>
    %97 = arith.truncf %96 : vector<18x16x64xf32> to vector<18x16x64xbf16>
    %cst_23 = arith.constant 0.000000e+00 : bf16
    %98 = vector.broadcast %cst_23 : bf16 to vector<18x1x64xbf16>
    %99 = tpu.concatenate %98, %97, %98 in 1 : vector<18x1x64xbf16>, vector<18x16x64xbf16>, vector<18x1x64xbf16> -> vector<18x18x64xbf16>
    %100 = vector.extract_strided_slice %99 {offsets = [0, 0, 0], sizes = [16, 16, 64], strides = [1, 1, 1]} : vector<18x18x64xbf16> to vector<16x16x64xbf16>
    %101 = vector.shape_cast %100 : vector<16x16x64xbf16> to vector<256x64xbf16>
    %102 = vector.extract_strided_slice %99 {offsets = [0, 1, 0], sizes = [16, 16, 64], strides = [1, 1, 1]} : vector<18x18x64xbf16> to vector<16x16x64xbf16>
    %103 = vector.shape_cast %102 : vector<16x16x64xbf16> to vector<256x64xbf16>
    %104 = vector.extract_strided_slice %99 {offsets = [0, 2, 0], sizes = [16, 16, 64], strides = [1, 1, 1]} : vector<18x18x64xbf16> to vector<16x16x64xbf16>
    %105 = vector.shape_cast %104 : vector<16x16x64xbf16> to vector<256x64xbf16>
    %106 = tpu.concatenate %101, %103, %105 in 1 : vector<256x64xbf16>, vector<256x64xbf16>, vector<256x64xbf16> -> vector<256x192xbf16>
    %c0_24 = arith.constant 0 : index
    %c0_25 = arith.constant 0 : index
    %c0_26 = arith.constant 0 : index
    %107 = vector.load %arg5[%c0_24, %c0_25, %c0_26] : memref<3x192x64xbf16, #tpu.memory_space<vmem>>, vector<1x192x64xbf16>
    %108 = vector.shape_cast %107 : vector<1x192x64xbf16> to vector<192x64xbf16>
    %cst_27 = arith.constant dense<0.000000e+00> : vector<256x64xf32>
    %109 = tpu.matmul %106, %108, %cst_27 {dimension_numbers = #tpu.dot_dimension_numbers<[1], [0], [0], [1], [0, 0, 1, 1], [], []>} : vector<256x192xbf16>, vector<192x64xbf16>, vector<256x64xf32> -> vector<256x64xf32>
    %110 = vector.extract_strided_slice %99 {offsets = [1, 0, 0], sizes = [16, 16, 64], strides = [1, 1, 1]} : vector<18x18x64xbf16> to vector<16x16x64xbf16>
    %111 = vector.shape_cast %110 : vector<16x16x64xbf16> to vector<256x64xbf16>
    %112 = vector.extract_strided_slice %99 {offsets = [1, 1, 0], sizes = [16, 16, 64], strides = [1, 1, 1]} : vector<18x18x64xbf16> to vector<16x16x64xbf16>
    %113 = vector.shape_cast %112 : vector<16x16x64xbf16> to vector<256x64xbf16>
    %114 = vector.extract_strided_slice %99 {offsets = [1, 2, 0], sizes = [16, 16, 64], strides = [1, 1, 1]} : vector<18x18x64xbf16> to vector<16x16x64xbf16>
    %115 = vector.shape_cast %114 : vector<16x16x64xbf16> to vector<256x64xbf16>
    %116 = tpu.concatenate %111, %113, %115 in 1 : vector<256x64xbf16>, vector<256x64xbf16>, vector<256x64xbf16> -> vector<256x192xbf16>
    %c1_28 = arith.constant 1 : index
    %c0_29 = arith.constant 0 : index
    %c0_30 = arith.constant 0 : index
    %117 = vector.load %arg5[%c1_28, %c0_29, %c0_30] : memref<3x192x64xbf16, #tpu.memory_space<vmem>>, vector<1x192x64xbf16>
    %118 = vector.shape_cast %117 : vector<1x192x64xbf16> to vector<192x64xbf16>
    %cst_31 = arith.constant dense<0.000000e+00> : vector<256x64xf32>
    %119 = tpu.matmul %116, %118, %cst_31 {dimension_numbers = #tpu.dot_dimension_numbers<[1], [0], [0], [1], [0, 0, 1, 1], [], []>} : vector<256x192xbf16>, vector<192x64xbf16>, vector<256x64xf32> -> vector<256x64xf32>
    %120 = arith.addf %109, %119 : vector<256x64xf32>
    %121 = vector.extract_strided_slice %99 {offsets = [2, 0, 0], sizes = [16, 16, 64], strides = [1, 1, 1]} : vector<18x18x64xbf16> to vector<16x16x64xbf16>
    %122 = vector.shape_cast %121 : vector<16x16x64xbf16> to vector<256x64xbf16>
    %123 = vector.extract_strided_slice %99 {offsets = [2, 1, 0], sizes = [16, 16, 64], strides = [1, 1, 1]} : vector<18x18x64xbf16> to vector<16x16x64xbf16>
    %124 = vector.shape_cast %123 : vector<16x16x64xbf16> to vector<256x64xbf16>
    %125 = vector.extract_strided_slice %99 {offsets = [2, 2, 0], sizes = [16, 16, 64], strides = [1, 1, 1]} : vector<18x18x64xbf16> to vector<16x16x64xbf16>
    %126 = vector.shape_cast %125 : vector<16x16x64xbf16> to vector<256x64xbf16>
    %127 = tpu.concatenate %122, %124, %126 in 1 : vector<256x64xbf16>, vector<256x64xbf16>, vector<256x64xbf16> -> vector<256x192xbf16>
    %c2_32 = arith.constant 2 : index
    %c0_33 = arith.constant 0 : index
    %c0_34 = arith.constant 0 : index
    %128 = vector.load %arg5[%c2_32, %c0_33, %c0_34] : memref<3x192x64xbf16, #tpu.memory_space<vmem>>, vector<1x192x64xbf16>
    %129 = vector.shape_cast %128 : vector<1x192x64xbf16> to vector<192x64xbf16>
    %cst_35 = arith.constant dense<0.000000e+00> : vector<256x64xf32>
    %130 = tpu.matmul %127, %129, %cst_35 {dimension_numbers = #tpu.dot_dimension_numbers<[1], [0], [0], [1], [0, 0, 1, 1], [], []>} : vector<256x192xbf16>, vector<192x64xbf16>, vector<256x64xf32> -> vector<256x64xf32>
    %131 = arith.addf %120, %130 : vector<256x64xf32>
    %c0_36 = arith.constant 0 : index
    %c0_37 = arith.constant 0 : index
    %132 = vector.load %arg6[%c0_36, %c0_37] : memref<1x64xf32, #tpu.memory_space<vmem>>, vector<1x64xf32>
    %133 = vector.broadcast %132 : vector<1x64xf32> to vector<256x64xf32>
    %134 = arith.addf %131, %133 : vector<256x64xf32>
    %135 = vector.extract_strided_slice %79 {offsets = [1, 0, 0], sizes = [16, 16, 64], strides = [1, 1, 1]} : vector<18x16x64xf32> to vector<16x16x64xf32>
    %136 = vector.shape_cast %135 : vector<16x16x64xf32> to vector<256x64xf32>
    %137 = arith.truncf %136 : vector<256x64xf32> to vector<256x64xbf16>
    %138 = vector.extract_strided_slice %1 {offsets = [3, 2, 0], sizes = [16, 16, 64], strides = [1, 1, 1]} : vector<22x20x64xbf16> to vector<16x16x64xbf16>
    %139 = vector.shape_cast %138 : vector<16x16x64xbf16> to vector<256x64xbf16>
    %c0_38 = arith.constant 0 : index
    %c0_39 = arith.constant 0 : index
    %140 = vector.load %arg7[%c0_38, %c0_39] : memref<64x64xbf16, #tpu.memory_space<vmem>>, vector<64x64xbf16>
    %cst_40 = arith.constant dense<0.000000e+00> : vector<256x64xf32>
    %141 = tpu.matmul %137, %140, %cst_40 {dimension_numbers = #tpu.dot_dimension_numbers<[1], [0], [0], [1], [0, 0, 1, 1], [], []>} : vector<256x64xbf16>, vector<64x64xbf16>, vector<256x64xf32> -> vector<256x64xf32>
    %142 = arith.truncf %134 : vector<256x64xf32> to vector<256x64xbf16>
    %c0_41 = arith.constant 0 : index
    %c0_42 = arith.constant 0 : index
    %143 = vector.load %arg8[%c0_41, %c0_42] : memref<64x64xbf16, #tpu.memory_space<vmem>>, vector<64x64xbf16>
    %cst_43 = arith.constant dense<0.000000e+00> : vector<256x64xf32>
    %144 = tpu.matmul %142, %143, %cst_43 {dimension_numbers = #tpu.dot_dimension_numbers<[1], [0], [0], [1], [0, 0, 1, 1], [], []>} : vector<256x64xbf16>, vector<64x64xbf16>, vector<256x64xf32> -> vector<256x64xf32>
    %145 = arith.addf %141, %144 : vector<256x64xf32>
    %c0_44 = arith.constant 0 : index
    %c0_45 = arith.constant 0 : index
    %146 = vector.load %arg9[%c0_44, %c0_45] : memref<64x64xbf16, #tpu.memory_space<vmem>>, vector<64x64xbf16>
    %cst_46 = arith.constant dense<0.000000e+00> : vector<256x64xf32>
    %147 = tpu.matmul %139, %146, %cst_46 {dimension_numbers = #tpu.dot_dimension_numbers<[1], [0], [0], [1], [0, 0, 1, 1], [], []>} : vector<256x64xbf16>, vector<64x64xbf16>, vector<256x64xf32> -> vector<256x64xf32>
    %148 = arith.addf %145, %147 : vector<256x64xf32>
    %c0_47 = arith.constant 0 : index
    %c0_48 = arith.constant 0 : index
    %149 = vector.load %arg10[%c0_47, %c0_48] : memref<1x64xf32, #tpu.memory_space<vmem>>, vector<1x64xf32>
    %150 = vector.broadcast %149 : vector<1x64xf32> to vector<256x64xf32>
    %151 = arith.addf %148, %150 : vector<256x64xf32>
    %cst_49 = arith.constant 0.000000e+00 : f32
    %152 = vector.broadcast %cst_49 : f32 to vector<256x64xf32>
    %153 = arith.cmpf oge, %151, %152 : vector<256x64xf32>
    %cst_50 = arith.constant 5.000000e-02 : f32
    %154 = vector.broadcast %cst_50 : f32 to vector<256x64xf32>
    %155 = arith.mulf %154, %151 : vector<256x64xf32>
    %156 = arith.select %153, %151, %155 : vector<256x64xi1>, vector<256x64xf32>
    %157 = vector.shape_cast %156 : vector<256x64xf32> to vector<1x16x16x64xf32>
    %c0_51 = arith.constant 0 : index
    %c0_52 = arith.constant 0 : index
    %c0_53 = arith.constant 0 : index
    %c0_54 = arith.constant 0 : index
    %158 = vector.load %arg11[%c0_51, %c0_52, %c0_53, %c0_54] : memref<1x16x16x64xf32, #tpu.memory_space<vmem>>, vector<1x16x16x64xf32>
    tpu.vector_store %arg11[%c0_51, %c0_52, %c0_53, %c0_54], %157 {strides = array<i32>} : memref<1x16x16x64xf32, #tpu.memory_space<vmem>>, vector<1x16x16x64xf32>,
    return
  }
  func.func @transform_0(%arg0: i32, %arg1: i32) -> (i32, i32, i32, i32, i32) {
    %c0_i32 = arith.constant 0 : i32
    %c0_i32_0 = arith.constant 0 : i32
    %c0_i32_1 = arith.constant 0 : i32
    %c0_i32_2 = arith.constant 0 : i32
    return %arg0, %arg1, %c0_i32, %c0_i32_0, %c0_i32_1 : i32, i32, i32, i32, i32
  }
  func.func @transform_1(%arg0: i32, %arg1: i32) -> (i32, i32, i32) {
    %c0_i32 = arith.constant 0 : i32
    %c0_i32_0 = arith.constant 0 : i32
    %c0_i32_1 = arith.constant 0 : i32
    %c0_i32_2 = arith.constant 0 : i32
    return %c0_i32, %c0_i32_0, %c0_i32_1 : i32, i32, i32
  }
  func.func @transform_2(%arg0: i32, %arg1: i32) -> (i32, i32) {
    %c0_i32 = arith.constant 0 : i32
    %c0_i32_0 = arith.constant 0 : i32
    %c0_i32_1 = arith.constant 0 : i32
    return %c0_i32, %c0_i32_0 : i32, i32
  }
  func.func @transform_3(%arg0: i32, %arg1: i32) -> (i32, i32, i32) {
    %c0_i32 = arith.constant 0 : i32
    %c0_i32_0 = arith.constant 0 : i32
    %c0_i32_1 = arith.constant 0 : i32
    %c0_i32_2 = arith.constant 0 : i32
    return %c0_i32, %c0_i32_0, %c0_i32_1 : i32, i32, i32
  }
  func.func @transform_4(%arg0: i32, %arg1: i32) -> (i32, i32) {
    %c0_i32 = arith.constant 0 : i32
    %c0_i32_0 = arith.constant 0 : i32
    %c0_i32_1 = arith.constant 0 : i32
    return %c0_i32, %c0_i32_0 : i32, i32
  }
  func.func @transform_5(%arg0: i32, %arg1: i32) -> (i32, i32) {
    %c0_i32 = arith.constant 0 : i32
    %c0_i32_0 = arith.constant 0 : i32
    %c0_i32_1 = arith.constant 0 : i32
    return %c0_i32, %c0_i32_0 : i32, i32
  }
  func.func @transform_6(%arg0: i32, %arg1: i32) -> (i32, i32) {
    %c0_i32 = arith.constant 0 : i32
    %c0_i32_0 = arith.constant 0 : i32
    %c0_i32_1 = arith.constant 0 : i32
    return %c0_i32, %c0_i32_0 : i32, i32
  }
  func.func @transform_7(%arg0: i32, %arg1: i32) -> (i32, i32) {
    %c0_i32 = arith.constant 0 : i32
    %c0_i32_0 = arith.constant 0 : i32
    %c0_i32_1 = arith.constant 0 : i32
    return %c0_i32, %c0_i32_0 : i32, i32
  }
  func.func @transform_8(%arg0: i32, %arg1: i32) -> (i32, i32) {
    %c0_i32 = arith.constant 0 : i32
    %c0_i32_0 = arith.constant 0 : i32
    %c0_i32_1 = arith.constant 0 : i32
    return %c0_i32, %c0_i32_0 : i32, i32
  }
  func.func @transform_9(%arg0: i32, %arg1: i32) -> (i32, i32, i32, i32) {
    %c0_i32 = arith.constant 0 : i32
    %c0_i32_0 = arith.constant 0 : i32
    %c0_i32_1 = arith.constant 0 : i32
    return %arg0, %arg1, %c0_i32, %c0_i32_0 : i32, i32, i32, i32
  }
}

</mosaic_0001>

<llo_original>
// kernel: cascade_forward.1
$region0: #{cascade_forward.1}
  #allocation0 [shape = 'u32[]', space=smem, size = 0x4, offset = 0x4, fixed_abs, tag = 'smem constant byte address 0x4 - core index']
  #allocation1 [shape = 'u32[144,128]{1,0:T(1,128)}', space=vmem, size = 0x12000, scoped, tag = 'internal scratch']
  %s0 = inlined_call_operand.vmem [shape: bf16[2,1,22,20,64], index: 0, kind: input, shape index: {}]
  %s1 = inlined_call_operand.vmem [shape: bf16[5,320,64], index: 1, kind: input, shape index: {}]
  %s2 = inlined_call_operand.vmem [shape: f32[1,64], index: 2, kind: input, shape index: {}]
  %s3 = inlined_call_operand.vmem [shape: bf16[3,192,64], index: 3, kind: input, shape index: {}]
  %s4 = inlined_call_operand.vmem [shape: f32[1,64], index: 4, kind: input, shape index: {}]
  %s5 = inlined_call_operand.vmem [shape: bf16[64,64], index: 5, kind: input, shape index: {}]
  %s6 = inlined_call_operand.vmem [shape: bf16[64,64], index: 6, kind: input, shape index: {}]
  %s7 = inlined_call_operand.vmem [shape: bf16[64,64], index: 7, kind: input, shape index: {}]
  %s8 = inlined_call_operand.vmem [shape: f32[1,64], index: 8, kind: input, shape index: {}]
  %s9 = inlined_call_operand.vmem [shape: f32[2,16,16,64], index: 9, kind: output, shape index: {}]
  %s10 = sld [smem:[#allocation0]]
  $region69: #{cascade_forward.1} parent=0
    _
  %s12 = ssub.s32 1, %s10
  %s13 = scalar_select 0, %s12, %s10
  loop: start=0, step=1, limit=4
  $region2: #{cascade_forward.1} parent=0 // loop_pre_header
    _
  $region3: #{cascade_forward.1} parent=0 // loop_header
    %s15 = sphi 0, %s19
    %p16 = scmp.ge.s32.totalorder %s15, 4
    %s22 = sphi 0, %s34
    %s23 = sphi 0, %s30
    %s24 = sphi 0, %s22
    %s25 = sphi 0, %s23
    %s26 = sphi 0, %s24
    %s27 = sphi 0, %s25
    %s39 = sphi 0, %s41
    %s42 = sphi 0, %s39
    %s43 = sphi 0, %s42
    %s59 = sphi 0, %s43
    %s63 = sphi 0, %s63
    %s65 = sphi 0, %s63
    %s66 = sphi 0, %s65
    %s80 = sphi 0, %s66
    %s84 = sphi 0, %s84
    %s86 = sphi 0, %s84
    %s87 = sphi 0, %s86
    %s101 = sphi 0, %s87
    %s105 = sphi 0, %s105
    %s107 = sphi 0, %s105
    %s108 = sphi 0, %s107
    %s122 = sphi 0, %s108
    %s126 = sphi 0, %s126
    %s128 = sphi 0, %s126
    %s129 = sphi 0, %s128
    %s143 = sphi 0, %s129
    %s147 = sphi 0, %s147
    %s149 = sphi 0, %s147
    %s150 = sphi 0, %s149
    %s164 = sphi 0, %s150
    %s168 = sphi 0, %s168
    %s170 = sphi 0, %s168
    %s171 = sphi 0, %s170
    %s185 = sphi 0, %s171
    %s189 = sphi 0, %s189
    %s191 = sphi 0, %s189
    %s192 = sphi 0, %s191
    %s206 = sphi 0, %s192
    %s210 = sphi 0, %s210
    %s212 = sphi 0, %s210
    %s213 = sphi 0, %s212
    %s227 = sphi 0, %s213
    %s235 = sphi 0, %s237
    %s238 = sphi 0, %s235
    %s239 = sphi 0, %s238
    %s255 = sphi 0, %s239
  $region4: #{cascade_forward.1} parent=0 // loop_header_branch
    %18 = sbr.rel (%p16) target = $region8
  $region5: #{cascade_forward.1} parent=0 // loop_body
    %s20 = ssub.s32 %s15, 1
    %s21 = ssub.s32 %s15, 2
    %s28 = sadd.s32 1, %s23
    %p29 = scmp.ge.s32.totalorder %s28, 1
    %s30 = scalar_select %p29, 0, %s28
    %s31 = sadd.s32 1, %s22
    %s32 = scalar_select %p29, %s31, %s22
    %p33 = scmp.ge.s32.totalorder %s32, 2
    %s34 = scalar_select %p33, 0, %s32
    %s35 = ssub.s32 %s22, %s34
    %s36 = ssub.s32 %s23, %s30
    %s37 = sor.u32 %s35, %s36
    %p38 = scmp.eq.s32.totalorder %s37, 0
    %s40 = sadd.s32 %s39, 1
    %s41 = scalar_select %p38, %s39, %s40
    %p44 = pneg %p38
    %p45 = scmp.eq.s32.totalorder %s15, 1
    %p46 = por %p44, %p45
    %p47 = scmp.ne.s32.totalorder %s39, %s42
    %p48 = scmp.eq.s32.totalorder %s15, 0
    %p49 = por %p47, %p48
    %p50 = scmp.ne.s32.totalorder %s39, %s42
    %p51 = scmp.eq.s32.totalorder %s20, 1
    %p52 = por %p50, %p51
    %p53 = scmp.ne.s32.totalorder %s42, %s43
    %p54 = scmp.eq.s32.totalorder %s20, 0
    %p55 = por %p53, %p54
    %p56 = scmp.ne.s32.totalorder %s42, %s43
    %p57 = scmp.eq.s32.totalorder %s21, 1
    %p58 = por %p56, %p57
    %p60 = scmp.ne.s32.totalorder %s43, %s59
    %p61 = scmp.eq.s32.totalorder %s21, 0
    %p62 = por %p60, %p61
    %s64 = sadd.s32 %s63, 1
    %p67 = scmp.eq.s32.totalorder %s15, 1
    %p68 = scmp.ne.s32.totalorder %s63, %s65
    %p69 = scmp.eq.s32.totalorder %s15, 0
    %p70 = por %p68, %p69
    %p71 = scmp.ne.s32.totalorder %s63, %s65
    %p72 = scmp.eq.s32.totalorder %s20, 1
    %p73 = por %p71, %p72
    %p74 = scmp.ne.s32.totalorder %s65, %s66
    %p75 = scmp.eq.s32.totalorder %s20, 0
    %p76 = por %p74, %p75
    %p77 = scmp.ne.s32.totalorder %s65, %s66
    %p78 = scmp.eq.s32.totalorder %s21, 1
    %p79 = por %p77, %p78
    %p81 = scmp.ne.s32.totalorder %s66, %s80
    %p82 = scmp.eq.s32.totalorder %s21, 0
    %p83 = por %p81, %p82
    %s85 = sadd.s32 %s84, 1
    %p88 = scmp.eq.s32.totalorder %s15, 1
    %p89 = scmp.ne.s32.totalorder %s84, %s86
    %p90 = scmp.eq.s32.totalorder %s15, 0
    %p91 = por %p89, %p90
    %p92 = scmp.ne.s32.totalorder %s84, %s86
    %p93 = scmp.eq.s32.totalorder %s20, 1
    %p94 = por %p92, %p93
    %p95 = scmp.ne.s32.totalorder %s86, %s87
    %p96 = scmp.eq.s32.totalorder %s20, 0
    %p97 = por %p95, %p96
    %p98 = scmp.ne.s32.totalorder %s86, %s87
    %p99 = scmp.eq.s32.totalorder %s21, 1
    %p100 = por %p98, %p99
    %p102 = scmp.ne.s32.totalorder %s87, %s101
    %p103 = scmp.eq.s32.totalorder %s21, 0
    %p104 = por %p102, %p103
    %s106 = sadd.s32 %s105, 1
    %p109 = scmp.eq.s32.totalorder %s15, 1
    %p110 = scmp.ne.s32.totalorder %s105, %s107
    %p111 = scmp.eq.s32.totalorder %s15, 0
    %p112 = por %p110, %p111
    %p113 = scmp.ne.s32.totalorder %s105, %s107
    %p114 = scmp.eq.s32.totalorder %s20, 1
    %p115 = por %p113, %p114
    %p116 = scmp.ne.s32.totalorder %s107, %s108
    %p117 = scmp.eq.s32.totalorder %s20, 0
    %p118 = por %p116, %p117
    %p119 = scmp.ne.s32.totalorder %s107, %s108
    %p120 = scmp.eq.s32.totalorder %s21, 1
    %p121 = por %p119, %p120
    %p123 = scmp.ne.s32.totalorder %s108, %s122
    %p124 = scmp.eq.s32.totalorder %s21, 0
    %p125 = por %p123, %p124
    %s127 = sadd.s32 %s126, 1
    %p130 = scmp.eq.s32.totalorder %s15, 1
    %p131 = scmp.ne.s32.totalorder %s126, %s128
    %p132 = scmp.eq.s32.totalorder %s15, 0
    %p133 = por %p131, %p132
    %p134 = scmp.ne.s32.totalorder %s126, %s128
    %p135 = scmp.eq.s32.totalorder %s20, 1
    %p136 = por %p134, %p135
    %p137 = scmp.ne.s32.totalorder %s128, %s129
    %p138 = scmp.eq.s32.totalorder %s20, 0
    %p139 = por %p137, %p138
    %p140 = scmp.ne.s32.totalorder %s128, %s129
    %p141 = scmp.eq.s32.totalorder %s21, 1
    %p142 = por %p140, %p141
    %p144 = scmp.ne.s32.totalorder %s129, %s143
    %p145 = scmp.eq.s32.totalorder %s21, 0
    %p146 = por %p144, %p145
    %s148 = sadd.s32 %s147, 1
    %p151 = scmp.eq.s32.totalorder %s15, 1
    %p152 = scmp.ne.s32.totalorder %s147, %s149
    %p153 = scmp.eq.s32.totalorder %s15, 0
    %p154 = por %p152, %p153
    %p155 = scmp.ne.s32.totalorder %s147, %s149
    %p156 = scmp.eq.s32.totalorder %s20, 1
    %p157 = por %p155, %p156
    %p158 = scmp.ne.s32.totalorder %s149, %s150
    %p159 = scmp.eq.s32.totalorder %s20, 0
    %p160 = por %p158, %p159
    %p161 = scmp.ne.s32.totalorder %s149, %s150
    %p162 = scmp.eq.s32.totalorder %s21, 1
    %p163 = por %p161, %p162
    %p165 = scmp.ne.s32.totalorder %s150, %s164
    %p166 = scmp.eq.s32.totalorder %s21, 0
    %p167 = por %p165, %p166
    %s169 = sadd.s32 %s168, 1
    %p172 = scmp.eq.s32.totalorder %s15, 1
    %p173 = scmp.ne.s32.totalorder %s168, %s170
    %p174 = scmp.eq.s32.totalorder %s15, 0
    %p175 = por %p173, %p174
    %p176 = scmp.ne.s32.totalorder %s168, %s170
    %p177 = scmp.eq.s32.totalorder %s20, 1
    %p178 = por %p176, %p177
    %p179 = scmp.ne.s32.totalorder %s170, %s171
    %p180 = scmp.eq.s32.totalorder %s20, 0
    %p181 = por %p179, %p180
    %p182 = scmp.ne.s32.totalorder %s170, %s171
    %p183 = scmp.eq.s32.totalorder %s21, 1
    %p184 = por %p182, %p183
    %p186 = scmp.ne.s32.totalorder %s171, %s185
    %p187 = scmp.eq.s32.totalorder %s21, 0
    %p188 = por %p186, %p187
    %s190 = sadd.s32 %s189, 1
    %p193 = scmp.eq.s32.totalorder %s15, 1
    %p194 = scmp.ne.s32.totalorder %s189, %s191
    %p195 = scmp.eq.s32.totalorder %s15, 0
    %p196 = por %p194, %p195
    %p197 = scmp.ne.s32.totalorder %s189, %s191
    %p198 = scmp.eq.s32.totalorder %s20, 1
    %p199 = por %p197, %p198
    %p200 = scmp.ne.s32.totalorder %s191, %s192
    %p201 = scmp.eq.s32.totalorder %s20, 0
    %p202 = por %p200, %p201
    %p203 = scmp.ne.s32.totalorder %s191, %s192
    %p204 = scmp.eq.s32.totalorder %s21, 1
    %p205 = por %p203, %p204
    %p207 = scmp.ne.s32.totalorder %s192, %s206
    %p208 = scmp.eq.s32.totalorder %s21, 0
    %p209 = por %p207, %p208
    %s211 = sadd.s32 %s210, 1
    %p214 = scmp.eq.s32.totalorder %s15, 1
    %p215 = scmp.ne.s32.totalorder %s210, %s212
    %p216 = scmp.eq.s32.totalorder %s15, 0
    %p217 = por %p215, %p216
    %p218 = scmp.ne.s32.totalorder %s210, %s212
    %p219 = scmp.eq.s32.totalorder %s20, 1
    %p220 = por %p218, %p219
    %p221 = scmp.ne.s32.totalorder %s212, %s213
    %p222 = scmp.eq.s32.totalorder %s20, 0
    %p223 = por %p221, %p222
    %p224 = scmp.ne.s32.totalorder %s212, %s213
    %p225 = scmp.eq.s32.totalorder %s21, 1
    %p226 = por %p224, %p225
    %p228 = scmp.ne.s32.totalorder %s213, %s227
    %p229 = scmp.eq.s32.totalorder %s21, 0
    %p230 = por %p228, %p229
    %s231 = ssub.s32 %s22, %s34
    %s232 = ssub.s32 %s23, %s30
    %s233 = sor.u32 %s231, %s232
    %p234 = scmp.eq.s32.totalorder %s233, 0
    %s236 = sadd.s32 %s235, 1
    %s237 = scalar_select %p234, %s235, %s236
    %p240 = pneg %p234
    %p241 = scmp.eq.s32.totalorder %s15, 1
    %p242 = por %p240, %p241
    %p243 = scmp.ne.s32.totalorder %s235, %s238
    %p244 = scmp.eq.s32.totalorder %s15, 0
    %p245 = por %p243, %p244
    %p246 = scmp.ne.s32.totalorder %s235, %s238
    %p247 = scmp.eq.s32.totalorder %s20, 1
    %p248 = por %p246, %p247
    %p249 = scmp.ne.s32.totalorder %s238, %s239
    %p250 = scmp.eq.s32.totalorder %s20, 0
    %p251 = por %p249, %p250
    %p252 = scmp.ne.s32.totalorder %s238, %s239
    %p253 = scmp.eq.s32.totalorder %s21, 1
    %p254 = por %p252, %p253
    %p256 = scmp.ne.s32.totalorder %s239, %s255
    %p257 = scmp.eq.s32.totalorder %s21, 0
    %p258 = por %p256, %p257
    %p259 = scmp.le.s32.totalorder 1, %s15
    %p260 = scmp.lt.s32.totalorder %s15, 3
    %p261 = pnand %p259, %p260
    %p262 = pneg %p261
    // Predicated region
    $region9: #{cascade_forward.1} parent=5 // pred_check
      _
    $region10: #{cascade_forward.1} parent=5 // pred_check_branch
      %264 = sbr.rel (%p261) target = $region12
    $region11: #{cascade_forward.1} parent=5 // pred_region
      %s265 = ssub.s32 %s15, 1
      // Predicated region
      $region13: #{cascade_forward.1} parent=11 // pred_check
        %p266 = pneg %p76
      $region14: #{cascade_forward.1} parent=11 // pred_check_branch
        %268 = sbr.rel (%p266) target = $region16
      $region15: #{cascade_forward.1} parent=11 // pred_region
        _
      $region16: #{cascade_forward.1} parent=11 // pred_fallthru
        _
      // Predicated region
      $region17: #{cascade_forward.1} parent=11 // pred_check
        %p269 = pneg %p97
      $region18: #{cascade_forward.1} parent=11 // pred_check_branch
        %271 = sbr.rel (%p269) target = $region20
      $region19: #{cascade_forward.1} parent=11 // pred_region
        _
      $region20: #{cascade_forward.1} parent=11 // pred_fallthru
        _
      // Predicated region
      $region21: #{cascade_forward.1} parent=11 // pred_check
        %p272 = pneg %p118
      $region22: #{cascade_forward.1} parent=11 // pred_check_branch
        %274 = sbr.rel (%p272) target = $region24
      $region23: #{cascade_forward.1} parent=11 // pred_region
        _
      $region24: #{cascade_forward.1} parent=11 // pred_fallthru
        _
      // Predicated region
      $region25: #{cascade_forward.1} parent=11 // pred_check
        %p275 = pneg %p139
      $region26: #{cascade_forward.1} parent=11 // pred_check_branch
        %277 = sbr.rel (%p275) target = $region28
      $region27: #{cascade_forward.1} parent=11 // pred_region
        _
      $region28: #{cascade_forward.1} parent=11 // pred_fallthru
        _
      // Predicated region
      $region29: #{cascade_forward.1} parent=11 // pred_check
        %p278 = pneg %p160
      $region30: #{cascade_forward.1} parent=11 // pred_check_branch
        %280 = sbr.rel (%p278) target = $region32
      $region31: #{cascade_forward.1} parent=11 // pred_region
        _
      $region32: #{cascade_forward.1} parent=11 // pred_fallthru
        _
      // Predicated region
      $region33: #{cascade_forward.1} parent=11 // pred_check
        %p281 = pneg %p181
      $region34: #{cascade_forward.1} parent=11 // pred_check_branch
        %283 = sbr.rel (%p281) target = $region36
      $region35: #{cascade_forward.1} parent=11 // pred_region
        _
      $region36: #{cascade_forward.1} parent=11 // pred_fallthru
        _
      // Predicated region
      $region37: #{cascade_forward.1} parent=11 // pred_check
        %p284 = pneg %p202
      $region38: #{cascade_forward.1} parent=11 // pred_check_branch
        %286 = sbr.rel (%p284) target = $region40
      $region39: #{cascade_forward.1} parent=11 // pred_region
        _
      $region40: #{cascade_forward.1} parent=11 // pred_fallthru
        _
      // Predicated region
      $region41: #{cascade_forward.1} parent=11 // pred_check
        %p287 = pneg %p223
      $region42: #{cascade_forward.1} parent=11 // pred_check_branch
        %289 = sbr.rel (%p287) target = $region44
      $region43: #{cascade_forward.1} parent=11 // pred_region
        _
      $region44: #{cascade_forward.1} parent=11 // pred_fallthru
        _
    $region12: #{cascade_forward.1} parent=5 // pred_fallthru
      _
    %p290 = scmp.lt.s32.totalorder %s15, 2
    // Predicated region
    $region45: #{cascade_forward.1} parent=5 // pred_check
      %p291 = pneg %p290
    $region46: #{cascade_forward.1} parent=5 // pred_check_branch
      %293 = sbr.rel (%p291) target = $region48
    $region47: #{cascade_forward.1} parent=5 // pred_region
      // Predicated region
      $region49: #{cascade_forward.1} parent=47 // pred_check
        %p294 = pneg %p49
      $region50: #{cascade_forward.1} parent=47 // pred_check_branch
        %296 = sbr.rel (%p294) target = $region52
      $region51: #{cascade_forward.1} parent=47 // pred_region
        %p297 = scmp.lt.s32.totalorder %s22, 1
        %s298 = scalar_select %p297, %s22, 1
        %p299 = scmp.lt.s32.totalorder %s23, 0
        %s300 = scalar_select %p299, %s23, 0
        %s301 = smul.addr %s300, 66
        %s302 = smul.addr %s298, 66
        %s303 = sadd.s32 %s301, %s302
        %s304 = smul.addr %s303, 4
        %s305 = scalar_lea.vmem %s0, %s304
      $region52: #{cascade_forward.1} parent=47 // pred_fallthru
        _
    $region48: #{cascade_forward.1} parent=5 // pred_fallthru
      _
    %p306 = scmp.le.s32.totalorder 1, %s15
    %p307 = scmp.lt.s32.totalorder %s15, 3
    %p308 = pnand %p306, %p307
    %p309 = pneg %p308
    // Predicated region
    $region53: #{cascade_forward.1} parent=5 // pred_check
      _
    $region54: #{cascade_forward.1} parent=5 // pred_check_branch
      %311 = sbr.rel (%p308) target = $region56
    $region55: #{cascade_forward.1} parent=5 // pred_region
      %s312 = ssub.s32 %s15, 1
      %p313 = scmp.lt.s32.totalorder %s24, 1
      %s314 = scalar_select %p313, %s24, 1
      %p315 = scmp.lt.s32.totalorder %s25, 0
      %s316 = scalar_select %p315, %s25, 0
      %s317 = smul.addr %s316, 66
      %s318 = smul.addr %s314, 66
      %s319 = sadd.s32 %s317, %s318
      %s320 = smul.addr %s319, 4
      %s321 = scalar_lea.vmem %s0, %s320
      %p322 = pneg %p55
      %p323 = pneg %p52
      %p324 = pneg %p76
      %p325 = pneg %p73
      %p326 = pneg %p97
      %p327 = pneg %p94
      %p328 = pneg %p118
      %p329 = pneg %p115
      %p330 = pneg %p139
      %p331 = pneg %p136
      %p332 = pneg %p160
      %p333 = pneg %p157
      %p334 = pneg %p181
      %p335 = pneg %p178
      %p336 = pneg %p202
      %p337 = pneg %p199
      %p338 = pneg %p223
      %p339 = pneg %p220
      %p340 = pneg %p251
      %p341 = pneg %p248
      %s342 = smul.u32 16, %s25
      %p343 = scmp.lt.s32.totalorder %s24, 1
      %s344 = scalar_select %p343, %s24, 1
      %p345 = scmp.lt.s32.totalorder %s342, 15
      %s346 = scalar_select %p345, %s342, 15
      %s347 = smul.addr %s346, 2
      %s348 = smul.addr %s344, 32
      %s349 = sadd.s32 %s347, %s348
      %s350 = smul.addr %s349, 8
      %s351 = scalar_lea.vmem %s9, %s350
      %p352 = scmp.lt.s32.totalorder %s24, 1
      %s353 = scalar_select %p352, %s24, 1
      %p354 = scmp.lt.s32.totalorder %s25, 0
      %s355 = scalar_select %p354, %s25, 0
      %s356 = smul.addr %s355, 66
      %s357 = smul.addr %s353, 66
      %s358 = sadd.s32 %s356, %s357
      %s359 = smul.addr %s358, 4
      %s360 = scalar_lea.vmem %s0, %s359
      %s361 = smul.u32 16, %s25
      %p362 = scmp.lt.s32.totalorder %s24, 1
      %s363 = scalar_select %p362, %s24, 1
      %p364 = scmp.lt.s32.totalorder %s361, 15
      %s365 = scalar_select %p364, %s361, 15
      %s366 = smul.addr %s365, 2
      %s367 = smul.addr %s363, 32
      %s368 = sadd.s32 %s366, %s367
      %s369 = smul.addr %s368, 8
      %s370 = scalar_lea.vmem %s9, %s369
      %s371 = smul.u32 16, %s25
      %v373 = vld [vmem:[%s360] sm:$0xf]
      %v374 = vld [vmem:[%s360 + $0x4] sm:$0xf]
      %v375 = vld [vmem:[%s360 + $0x8] sm:$0x3]
      %v376 = vld [vmem:[%s360 + $0xc] sm:$0xf]
      %v377 = vld [vmem:[%s360 + $0x10] sm:$0xf]
      %v378 = vld [vmem:[%s360 + $0x14] sm:$0x3]
      %v379 = vld [vmem:[%s360 + $0x18] sm:$0xf]
      %v380 = vld [vmem:[%s360 + $0x1c] sm:$0xf]
      %v381 = vld [vmem:[%s360 + $0x20] sm:$0x3]
      %v382 = vld [vmem:[%s360 + $0x24] sm:$0xf]
      %v383 = vld [vmem:[%s360 + $0x28] sm:$0xf]
      %v384 = vld [vmem:[%s360 + $0x2c] sm:$0x3]
      %v385 = vld [vmem:[%s360 + $0x30] sm:$0xf]
      %v386 = vld [vmem:[%s360 + $0x34] sm:$0xf]
      %v387 = vld [vmem:[%s360 + $0x38] sm:$0x3]
      %v388 = vld [vmem:[%s360 + $0x3c] sm:$0xf]
      %v389 = vld [vmem:[%s360 + $0x40] sm:$0xf]
      %v390 = vld [vmem:[%s360 + $0x44] sm:$0x3]
      %v391 = vld [vmem:[%s360 + $0x48] sm:$0xf]
      %v392 = vld [vmem:[%s360 + $0x4c] sm:$0xf]
      %v393 = vld [vmem:[%s360 + $0x50] sm:$0x3]
      %v394 = vld [vmem:[%s360 + $0x54] sm:$0xf]
      %v395 = vld [vmem:[%s360 + $0x58] sm:$0xf]
      %v396 = vld [vmem:[%s360 + $0x5c] sm:$0x3]
      %v397 = vld [vmem:[%s360 + $0x60] sm:$0xf]
      %v398 = vld [vmem:[%s360 + $0x64] sm:$0xf]
      %v399 = vld [vmem:[%s360 + $0x68] sm:$0x3]
      %v400 = vld [vmem:[%s360 + $0x6c] sm:$0xf]
      %v401 = vld [vmem:[%s360 + $0x70] sm:$0xf]
      %v402 = vld [vmem:[%s360 + $0x74] sm:$0x3]
      %v403 = vld [vmem:[%s360 + $0x78] sm:$0xf]
      %v404 = vld [vmem:[%s360 + $0x7c] sm:$0xf]
      %v405 = vld [vmem:[%s360 + $0x80] sm:$0x3]
      %v406 = vld [vmem:[%s360 + $0x84] sm:$0xf]
      %v407 = vld [vmem:[%s360 + $0x88] sm:$0xf]
      %v408 = vld [vmem:[%s360 + $0x8c] sm:$0x3]
      %v409 = vld [vmem:[%s360 + $0x90] sm:$0xf]
      %v410 = vld [vmem:[%s360 + $0x94] sm:$0xf]
      %v411 = vld [vmem:[%s360 + $0x98] sm:$0x3]
      %v412 = vld [vmem:[%s360 + $0x9c] sm:$0xf]
      %v413 = vld [vmem:[%s360 + $0xa0] sm:$0xf]
      %v414 = vld [vmem:[%s360 + $0xa4] sm:$0x3]
      %v415 = vld [vmem:[%s360 + $0xa8] sm:$0xf]
      %v416 = vld [vmem:[%s360 + $0xac] sm:$0xf]
      %v417 = vld [vmem:[%s360 + $0xb0] sm:$0x3]
      %v418 = vld [vmem:[%s360 + $0xb4] sm:$0xf]
      %v419 = vld [vmem:[%s360 + $0xb8] sm:$0xf]
      %v420 = vld [vmem:[%s360 + $0xbc] sm:$0x3]
      %v421 = vld [vmem:[%s360 + $0xc0] sm:$0xf]
      %v422 = vld [vmem:[%s360 + $0xc4] sm:$0xf]
      %v423 = vld [vmem:[%s360 + $0xc8] sm:$0x3]
      %v424 = vld [vmem:[%s360 + $0xcc] sm:$0xf]
      %v425 = vld [vmem:[%s360 + $0xd0] sm:$0xf]
      %v426 = vld [vmem:[%s360 + $0xd4] sm:$0x3]
      %v427 = vld [vmem:[%s360 + $0xd8] sm:$0xf]
      %v428 = vld [vmem:[%s360 + $0xdc] sm:$0xf]
      %v429 = vld [vmem:[%s360 + $0xe0] sm:$0x3]
      %v430 = vld [vmem:[%s360 + $0xe4] sm:$0xf]
      %v431 = vld [vmem:[%s360 + $0xe8] sm:$0xf]
      %v432 = vld [vmem:[%s360 + $0xec] sm:$0x3]
      %v433 = vld [vmem:[%s360 + $0xf0] sm:$0xf]
      %v434 = vld [vmem:[%s360 + $0xf4] sm:$0xf]
      %v435 = vld [vmem:[%s360 + $0xf8] sm:$0x3]
      %v436 = vld [vmem:[%s360 + $0xfc] sm:$0xf]
      %v437 = vld [vmem:[%s360 + $0x100] sm:$0xf]
      %v438 = vld [vmem:[%s360 + $0x104] sm:$0x3]
      %vm439 = vsmask.f32 3328
      %vm440 = vsmask.f32 7440
      %vm441 = vmor %vm439, %vm440
      %v443 = vshrl.u32 %v373, 16
      %v445 = vrot.slane %v443, 4
      %v446 = vshll.u32 %v373, 16
      %v448 = vrot.slane %v446, 5
      %v449 = vor.u32 %v445, %v448
      %v450 = vrot.slane %v449, 4
      %v452 = vshll.u32 %v374, 16
      %v454 = vrot.slane %v452, 5
      %v455 = vsel %vm441, %v450, %v454
      %v456 = vshrl.u32 %v374, 16
      %v458 = vrot.slane %v456, 4
      %v459 = vor.u32 %v458, %v454
      %v460 = vrot.slane %v459, 4
      %v462 = vshll.u32 %v375, 16
      %v464 = vrot.slane %v462, 5
      %v465 = vsel %vm441, %v460, %v464
      %v467 = vshrl.u32 %v376, 16
      %v469 = vrot.slane %v467, 4
      %v470 = vshll.u32 %v376, 16
      %v472 = vrot.slane %v470, 5
      %v473 = vor.u32 %v469, %v472
      %v474 = vrot.slane %v473, 4
      %v476 = vshll.u32 %v377, 16
      %v478 = vrot.slane %v476, 5
      %v479 = vsel %vm441, %v474, %v478
      %v480 = vshrl.u32 %v377, 16
      %v482 = vrot.slane %v480, 4
      %v483 = vor.u32 %v482, %v478
      %v484 = vrot.slane %v483, 4
      %v486 = vshll.u32 %v378, 16
      %v488 = vrot.slane %v486, 5
      %v489 = vsel %vm441, %v484, %v488
      %v491 = vshrl.u32 %v379, 16
      %v493 = vrot.slane %v491, 4
      %v494 = vshll.u32 %v379, 16
      %v496 = vrot.slane %v494, 5
      %v497 = vor.u32 %v493, %v496
      %v498 = vrot.slane %v497, 4
      %v500 = vshll.u32 %v380, 16
      %v502 = vrot.slane %v500, 5
      %v503 = vsel %vm441, %v498, %v502
      %v504 = vshrl.u32 %v380, 16
      %v506 = vrot.slane %v504, 4
      %v507 = vor.u32 %v506, %v502
      %v508 = vrot.slane %v507, 4
      %v510 = vshll.u32 %v381, 16
      %v512 = vrot.slane %v510, 5
      %v513 = vsel %vm441, %v508, %v512
      %v515 = vshrl.u32 %v382, 16
      %v517 = vrot.slane %v515, 4
      %v518 = vshll.u32 %v382, 16
      %v520 = vrot.slane %v518, 5
      %v521 = vor.u32 %v517, %v520
      %v522 = vrot.slane %v521, 4
      %v524 = vshll.u32 %v383, 16
      %v526 = vrot.slane %v524, 5
      %v527 = vsel %vm441, %v522, %v526
      %v528 = vshrl.u32 %v383, 16
      %v530 = vrot.slane %v528, 4
      %v531 = vor.u32 %v530, %v526
      %v532 = vrot.slane %v531, 4
      %v534 = vshll.u32 %v384, 16
      %v536 = vrot.slane %v534, 5
      %v537 = vsel %vm441, %v532, %v536
      %v539 = vshrl.u32 %v385, 16
      %v541 = vrot.slane %v539, 4
      %v542 = vshll.u32 %v385, 16
      %v544 = vrot.slane %v542, 5
      %v545 = vor.u32 %v541, %v544
      %v546 = vrot.slane %v545, 4
      %v548 = vshll.u32 %v386, 16
      %v550 = vrot.slane %v548, 5
      %v551 = vsel %vm441, %v546, %v550
      %v552 = vshrl.u32 %v386, 16
      %v554 = vrot.slane %v552, 4
      %v555 = vor.u32 %v554, %v550
      %v556 = vrot.slane %v555, 4
      %v558 = vshll.u32 %v387, 16
      %v560 = vrot.slane %v558, 5
      %v561 = vsel %vm441, %v556, %v560
      %v563 = vshrl.u32 %v388, 16
      %v565 = vrot.slane %v563, 4
      %v566 = vshll.u32 %v388, 16
      %v568 = vrot.slane %v566, 5
      %v569 = vor.u32 %v565, %v568
      %v570 = vrot.slane %v569, 4
      %v572 = vshll.u32 %v389, 16
      %v574 = vrot.slane %v572, 5
      %v575 = vsel %vm441, %v570, %v574
      %v576 = vshrl.u32 %v389, 16
      %v578 = vrot.slane %v576, 4
      %v579 = vor.u32 %v578, %v574
      %v580 = vrot.slane %v579, 4
      %v582 = vshll.u32 %v390, 16
      %v584 = vrot.slane %v582, 5
      %v585 = vsel %vm441, %v580, %v584
      %v587 = vshrl.u32 %v391, 16
      %v589 = vrot.slane %v587, 4
      %v590 = vshll.u32 %v391, 16
      %v592 = vrot.slane %v590, 5
      %v593 = vor.u32 %v589, %v592
      %v594 = vrot.slane %v593, 4
      %v596 = vshll.u32 %v392, 16
      %v598 = vrot.slane %v596, 5
      %v599 = vsel %vm441, %v594, %v598
      %v600 = vshrl.u32 %v392, 16
      %v602 = vrot.slane %v600, 4
      %v603 = vor.u32 %v602, %v598
      %v604 = vrot.slane %v603, 4
      %v606 = vshll.u32 %v393, 16
      %v608 = vrot.slane %v606, 5
      %v609 = vsel %vm441, %v604, %v608
      %v611 = vshrl.u32 %v394, 16
      %v613 = vrot.slane %v611, 4
      %v614 = vshll.u32 %v394, 16
      %v616 = vrot.slane %v614, 5
      %v617 = vor.u32 %v613, %v616
      %v618 = vrot.slane %v617, 4
      %v620 = vshll.u32 %v395, 16
      %v622 = vrot.slane %v620, 5
      %v623 = vsel %vm441, %v618, %v622
      %v624 = vshrl.u32 %v395, 16
      %v626 = vrot.slane %v624, 4
      %v627 = vor.u32 %v626, %v622
      %v628 = vrot.slane %v627, 4
      %v630 = vshll.u32 %v396, 16
      %v632 = vrot.slane %v630, 5
      %v633 = vsel %vm441, %v628, %v632
      %v635 = vshrl.u32 %v397, 16
      %v637 = vrot.slane %v635, 4
      %v638 = vshll.u32 %v397, 16
      %v640 = vrot.slane %v638, 5
      %v641 = vor.u32 %v637, %v640
      %v642 = vrot.slane %v641, 4
      %v644 = vshll.u32 %v398, 16
      %v646 = vrot.slane %v644, 5
      %v647 = vsel %vm441, %v642, %v646
      %v648 = vshrl.u32 %v398, 16
      %v650 = vrot.slane %v648, 4
      %v651 = vor.u32 %v650, %v646
      %v652 = vrot.slane %v651, 4
      %v654 = vshll.u32 %v399, 16
      %v656 = vrot.slane %v654, 5
      %v657 = vsel %vm441, %v652, %v656
      %v659 = vshrl.u32 %v400, 16
      %v661 = vrot.slane %v659, 4
      %v662 = vshll.u32 %v400, 16
      %v664 = vrot.slane %v662, 5
      %v665 = vor.u32 %v661, %v664
      %v666 = vrot.slane %v665, 4
      %v668 = vshll.u32 %v401, 16
      %v670 = vrot.slane %v668, 5
      %v671 = vsel %vm441, %v666, %v670
      %v672 = vshrl.u32 %v401, 16
      %v674 = vrot.slane %v672, 4
      %v675 = vor.u32 %v674, %v670
      %v676 = vrot.slane %v675, 4
      %v678 = vshll.u32 %v402, 16
      %v680 = vrot.slane %v678, 5
      %v681 = vsel %vm441, %v676, %v680
      %v683 = vshrl.u32 %v403, 16
      %v685 = vrot.slane %v683, 4
      %v686 = vshll.u32 %v403, 16
      %v688 = vrot.slane %v686, 5
      %v689 = vor.u32 %v685, %v688
      %v690 = vrot.slane %v689, 4
      %v692 = vshll.u32 %v404, 16
      %v694 = vrot.slane %v692, 5
      %v695 = vsel %vm441, %v690, %v694
      %v696 = vshrl.u32 %v404, 16
      %v698 = vrot.slane %v696, 4
      %v699 = vor.u32 %v698, %v694
      %v700 = vrot.slane %v699, 4
      %v702 = vshll.u32 %v405, 16
      %v704 = vrot.slane %v702, 5
      %v705 = vsel %vm441, %v700, %v704
      %v707 = vshrl.u32 %v406, 16
      %v709 = vrot.slane %v707, 4
      %v710 = vshll.u32 %v406, 16
      %v712 = vrot.slane %v710, 5
      %v713 = vor.u32 %v709, %v712
      %v714 = vrot.slane %v713, 4
      %v716 = vshll.u32 %v407, 16
      %v718 = vrot.slane %v716, 5
      %v719 = vsel %vm441, %v714, %v718
      %v720 = vshrl.u32 %v407, 16
      %v722 = vrot.slane %v720, 4
      %v723 = vor.u32 %v722, %v718
      %v724 = vrot.slane %v723, 4
      %v726 = vshll.u32 %v408, 16
      %v728 = vrot.slane %v726, 5
      %v729 = vsel %vm441, %v724, %v728
      %v731 = vshrl.u32 %v409, 16
      %v733 = vrot.slane %v731, 4
      %v734 = vshll.u32 %v409, 16
      %v736 = vrot.slane %v734, 5
      %v737 = vor.u32 %v733, %v736
      %v738 = vrot.slane %v737, 4
      %v740 = vshll.u32 %v410, 16
      %v742 = vrot.slane %v740, 5
      %v743 = vsel %vm441, %v738, %v742
      %v744 = vshrl.u32 %v410, 16
      %v746 = vrot.slane %v744, 4
      %v747 = vor.u32 %v746, %v742
      %v748 = vrot.slane %v747, 4
      %v750 = vshll.u32 %v411, 16
      %v752 = vrot.slane %v750, 5
      %v753 = vsel %vm441, %v748, %v752
      %v755 = vshrl.u32 %v412, 16
      %v757 = vrot.slane %v755, 4
      %v758 = vshll.u32 %v412, 16
      %v760 = vrot.slane %v758, 5
      %v761 = vor.u32 %v757, %v760
      %v762 = vrot.slane %v761, 4
      %v764 = vshll.u32 %v413, 16
      %v766 = vrot.slane %v764, 5
      %v767 = vsel %vm441, %v762, %v766
      %v768 = vshrl.u32 %v413, 16
      %v770 = vrot.slane %v768, 4
      %v771 = vor.u32 %v770, %v766
      %v772 = vrot.slane %v771, 4
      %v774 = vshll.u32 %v414, 16
      %v776 = vrot.slane %v774, 5
      %v777 = vsel %vm441, %v772, %v776
      %v779 = vshrl.u32 %v415, 16
      %v781 = vrot.slane %v779, 4
      %v782 = vshll.u32 %v415, 16
      %v784 = vrot.slane %v782, 5
      %v785 = vor.u32 %v781, %v784
      %v786 = vrot.slane %v785, 4
      %v788 = vshll.u32 %v416, 16
      %v790 = vrot.slane %v788, 5
      %v791 = vsel %vm441, %v786, %v790
      %v792 = vshrl.u32 %v416, 16
      %v794 = vrot.slane %v792, 4
      %v795 = vor.u32 %v794, %v790
      %v796 = vrot.slane %v795, 4
      %v798 = vshll.u32 %v417, 16
      %v800 = vrot.slane %v798, 5
      %v801 = vsel %vm441, %v796, %v800
      %v803 = vshrl.u32 %v418, 16
      %v805 = vrot.slane %v803, 4
      %v806 = vshll.u32 %v418, 16
      %v808 = vrot.slane %v806, 5
      %v809 = vor.u32 %v805, %v808
      %v810 = vrot.slane %v809, 4
      %v812 = vshll.u32 %v419, 16
      %v814 = vrot.slane %v812, 5
      %v815 = vsel %vm441, %v810, %v814
      %v816 = vshrl.u32 %v419, 16
      %v818 = vrot.slane %v816, 4
      %v819 = vor.u32 %v818, %v814
      %v820 = vrot.slane %v819, 4
      %v822 = vshll.u32 %v420, 16
      %v824 = vrot.slane %v822, 5
      %v825 = vsel %vm441, %v820, %v824
      %v827 = vshrl.u32 %v421, 16
      %v829 = vrot.slane %v827, 4
      %v830 = vshll.u32 %v421, 16
      %v832 = vrot.slane %v830, 5
      %v833 = vor.u32 %v829, %v832
      %v834 = vrot.slane %v833, 4
      %v836 = vshll.u32 %v422, 16
      %v838 = vrot.slane %v836, 5
      %v839 = vsel %vm441, %v834, %v838
      %v840 = vshrl.u32 %v422, 16
      %v842 = vrot.slane %v840, 4
      %v843 = vor.u32 %v842, %v838
      %v844 = vrot.slane %v843, 4
      %v846 = vshll.u32 %v423, 16
      %v848 = vrot.slane %v846, 5
      %v849 = vsel %vm441, %v844, %v848
      %v851 = vshrl.u32 %v424, 16
      %v853 = vrot.slane %v851, 4
      %v854 = vshll.u32 %v424, 16
      %v856 = vrot.slane %v854, 5
      %v857 = vor.u32 %v853, %v856
      %v858 = vrot.slane %v857, 4
      %v860 = vshll.u32 %v425, 16
      %v862 = vrot.slane %v860, 5
      %v863 = vsel %vm441, %v858, %v862
      %v864 = vshrl.u32 %v425, 16
      %v866 = vrot.slane %v864, 4
      %v867 = vor.u32 %v866, %v862
      %v868 = vrot.slane %v867, 4
      %v870 = vshll.u32 %v426, 16
      %v872 = vrot.slane %v870, 5
      %v873 = vsel %vm441, %v868, %v872
      %vm928 = vcmask 1042432
      %vm929 = vcmask 1046532
      %vm930 = vmor %vm928, %vm929
      %v931 = vrot.slane %v373, 5
      %v932 = vrot.slane %v931, 4
      %v933 = vrot.slane %v374, 5
      %v934 = vsel %vm930, %v932, %v933
      %v935 = vrot.slane %v933, 4
      %v936 = vrot.slane %v375, 5
      %v937 = vsel %vm930, %v935, %v936
      %v938 = vrot.slane %v376, 5
      %v939 = vrot.slane %v938, 4
      %v940 = vrot.slane %v377, 5
      %v941 = vsel %vm930, %v939, %v940
      %v942 = vrot.slane %v940, 4
      %v943 = vrot.slane %v378, 5
      %v944 = vsel %vm930, %v942, %v943
      %v945 = vrot.slane %v379, 5
      %v946 = vrot.slane %v945, 4
      %v947 = vrot.slane %v380, 5
      %v948 = vsel %vm930, %v946, %v947
      %v949 = vrot.slane %v947, 4
      %v950 = vrot.slane %v381, 5
      %v951 = vsel %vm930, %v949, %v950
      %v952 = vrot.slane %v382, 5
      %v953 = vrot.slane %v952, 4
      %v954 = vrot.slane %v383, 5
      %v955 = vsel %vm930, %v953, %v954
      %v956 = vrot.slane %v954, 4
      %v957 = vrot.slane %v384, 5
      %v958 = vsel %vm930, %v956, %v957
      %v959 = vrot.slane %v385, 5
      %v960 = vrot.slane %v959, 4
      %v961 = vrot.slane %v386, 5
      %v962 = vsel %vm930, %v960, %v961
      %v963 = vrot.slane %v961, 4
      %v964 = vrot.slane %v387, 5
      %v965 = vsel %vm930, %v963, %v964
      %v966 = vrot.slane %v388, 5
      %v967 = vrot.slane %v966, 4
      %v968 = vrot.slane %v389, 5
      %v969 = vsel %vm930, %v967, %v968
      %v970 = vrot.slane %v968, 4
      %v971 = vrot.slane %v390, 5
      %v972 = vsel %vm930, %v970, %v971
      %v973 = vrot.slane %v391, 5
      %v974 = vrot.slane %v973, 4
      %v975 = vrot.slane %v392, 5
      %v976 = vsel %vm930, %v974, %v975
      %v977 = vrot.slane %v975, 4
      %v978 = vrot.slane %v393, 5
      %v979 = vsel %vm930, %v977, %v978
      %v980 = vrot.slane %v394, 5
      %v981 = vrot.slane %v980, 4
      %v982 = vrot.slane %v395, 5
      %v983 = vsel %vm930, %v981, %v982
      %v984 = vrot.slane %v982, 4
      %v985 = vrot.slane %v396, 5
      %v986 = vsel %vm930, %v984, %v985
      %v987 = vrot.slane %v397, 5
      %v988 = vrot.slane %v987, 4
      %v989 = vrot.slane %v398, 5
      %v990 = vsel %vm930, %v988, %v989
      %v991 = vrot.slane %v989, 4
      %v992 = vrot.slane %v399, 5
      %v993 = vsel %vm930, %v991, %v992
      %v994 = vrot.slane %v400, 5
      %v995 = vrot.slane %v994, 4
      %v996 = vrot.slane %v401, 5
      %v997 = vsel %vm930, %v995, %v996
      %v998 = vrot.slane %v996, 4
      %v999 = vrot.slane %v402, 5
      %v1000 = vsel %vm930, %v998, %v999
      %v1001 = vrot.slane %v403, 5
      %v1002 = vrot.slane %v1001, 4
      %v1003 = vrot.slane %v404, 5
      %v1004 = vsel %vm930, %v1002, %v1003
      %v1005 = vrot.slane %v1003, 4
      %v1006 = vrot.slane %v405, 5
      %v1007 = vsel %vm930, %v1005, %v1006
      %v1008 = vrot.slane %v406, 5
      %v1009 = vrot.slane %v1008, 4
      %v1010 = vrot.slane %v407, 5
      %v1011 = vsel %vm930, %v1009, %v1010
      %v1012 = vrot.slane %v1010, 4
      %v1013 = vrot.slane %v408, 5
      %v1014 = vsel %vm930, %v1012, %v1013
      %v1015 = vrot.slane %v409, 5
      %v1016 = vrot.slane %v1015, 4
      %v1017 = vrot.slane %v410, 5
      %v1018 = vsel %vm930, %v1016, %v1017
      %v1019 = vrot.slane %v1017, 4
      %v1020 = vrot.slane %v411, 5
      %v1021 = vsel %vm930, %v1019, %v1020
      %v1022 = vrot.slane %v412, 5
      %v1023 = vrot.slane %v1022, 4
      %v1024 = vrot.slane %v413, 5
      %v1025 = vsel %vm930, %v1023, %v1024
      %v1026 = vrot.slane %v1024, 4
      %v1027 = vrot.slane %v414, 5
      %v1028 = vsel %vm930, %v1026, %v1027
      %v1029 = vrot.slane %v415, 5
      %v1030 = vrot.slane %v1029, 4
      %v1031 = vrot.slane %v416, 5
      %v1032 = vsel %vm930, %v1030, %v1031
      %v1033 = vrot.slane %v1031, 4
      %v1034 = vrot.slane %v417, 5
      %v1035 = vsel %vm930, %v1033, %v1034
      %v1036 = vrot.slane %v418, 5
      %v1037 = vrot.slane %v1036, 4
      %v1038 = vrot.slane %v419, 5
      %v1039 = vsel %vm930, %v1037, %v1038
      %v1040 = vrot.slane %v1038, 4
      %v1041 = vrot.slane %v420, 5
      %v1042 = vsel %vm930, %v1040, %v1041
      %v1043 = vrot.slane %v421, 5
      %v1044 = vrot.slane %v1043, 4
      %v1045 = vrot.slane %v422, 5
      %v1046 = vsel %vm930, %v1044, %v1045
      %v1047 = vrot.slane %v1045, 4
      %v1048 = vrot.slane %v423, 5
      %v1049 = vsel %vm930, %v1047, %v1048
      %v1050 = vrot.slane %v424, 5
      %v1051 = vrot.slane %v1050, 4
      %v1052 = vrot.slane %v425, 5
      %v1053 = vsel %vm930, %v1051, %v1052
      %v1054 = vrot.slane %v1052, 4
      %v1055 = vrot.slane %v426, 5
      %v1056 = vsel %vm930, %v1054, %v1055
      %vm1057 = vsmask.f32 2304
      %vm1058 = vsmask.f32 6416
      %vm1059 = vmor %vm1057, %vm1058
      %v1060 = vrot.slane %v443, 5
      %v1061 = vrot.slane %v446, 6
      %v1062 = vor.u32 %v1060, %v1061
      %v1063 = vrot.slane %v1062, 4
      %v1064 = vrot.slane %v456, 5
      %v1065 = vrot.slane %v452, 6
      %v1066 = vor.u32 %v1064, %v1065
      %v1067 = vsel %vm1059, %v1063, %v1066
      %v1068 = vrot.slane %v1066, 4
      %v1069 = vshrl.u32 %v375, 16
      %v1071 = vrot.slane %v1069, 5
      %v1072 = vrot.slane %v462, 6
      %v1073 = vor.u32 %v1071, %v1072
      %v1074 = vsel %vm1059, %v1068, %v1073
      %v1075 = vrot.slane %v467, 5
      %v1076 = vrot.slane %v470, 6
      %v1077 = vor.u32 %v1075, %v1076
      %v1078 = vrot.slane %v1077, 4
      %v1079 = vrot.slane %v480, 5
      %v1080 = vrot.slane %v476, 6
      %v1081 = vor.u32 %v1079, %v1080
      %v1082 = vsel %vm1059, %v1078, %v1081
      %v1083 = vrot.slane %v1081, 4
      %v1084 = vshrl.u32 %v378, 16
      %v1086 = vrot.slane %v1084, 5
      %v1087 = vrot.slane %v486, 6
      %v1088 = vor.u32 %v1086, %v1087
      %v1089 = vsel %vm1059, %v1083, %v1088
      %v1090 = vrot.slane %v491, 5
      %v1091 = vrot.slane %v494, 6
      %v1092 = vor.u32 %v1090, %v1091
      %v1093 = vrot.slane %v1092, 4
      %v1094 = vrot.slane %v504, 5
      %v1095 = vrot.slane %v500, 6
      %v1096 = vor.u32 %v1094, %v1095
      %v1097 = vsel %vm1059, %v1093, %v1096
      %v1098 = vrot.slane %v1096, 4
      %v1099 = vshrl.u32 %v381, 16
      %v1101 = vrot.slane %v1099, 5
      %v1102 = vrot.slane %v510, 6
      %v1103 = vor.u32 %v1101, %v1102
      %v1104 = vsel %vm1059, %v1098, %v1103
      %v1105 = vrot.slane %v515, 5
      %v1106 = vrot.slane %v518, 6
      %v1107 = vor.u32 %v1105, %v1106
      %v1108 = vrot.slane %v1107, 4
      %v1109 = vrot.slane %v528, 5
      %v1110 = vrot.slane %v524, 6
      %v1111 = vor.u32 %v1109, %v1110
      %v1112 = vsel %vm1059, %v1108, %v1111
      %v1113 = vrot.slane %v1111, 4
      %v1114 = vshrl.u32 %v384, 16
      %v1116 = vrot.slane %v1114, 5
      %v1117 = vrot.slane %v534, 6
      %v1118 = vor.u32 %v1116, %v1117
      %v1119 = vsel %vm1059, %v1113, %v1118
      %v1120 = vrot.slane %v539, 5
      %v1121 = vrot.slane %v542, 6
      %v1122 = vor.u32 %v1120, %v1121
      %v1123 = vrot.slane %v1122, 4
      %v1124 = vrot.slane %v552, 5
      %v1125 = vrot.slane %v548, 6
      %v1126 = vor.u32 %v1124, %v1125
      %v1127 = vsel %vm1059, %v1123, %v1126
      %v1128 = vrot.slane %v1126, 4
      %v1129 = vshrl.u32 %v387, 16
      %v1131 = vrot.slane %v1129, 5
      %v1132 = vrot.slane %v558, 6
      %v1133 = vor.u32 %v1131, %v1132
      %v1134 = vsel %vm1059, %v1128, %v1133
      %v1135 = vrot.slane %v563, 5
      %v1136 = vrot.slane %v566, 6
      %v1137 = vor.u32 %v1135, %v1136
      %v1138 = vrot.slane %v1137, 4
      %v1139 = vrot.slane %v576, 5
      %v1140 = vrot.slane %v572, 6
      %v1141 = vor.u32 %v1139, %v1140
      %v1142 = vsel %vm1059, %v1138, %v1141
      %v1143 = vrot.slane %v1141, 4
      %v1144 = vshrl.u32 %v390, 16
      %v1146 = vrot.slane %v1144, 5
      %v1147 = vrot.slane %v582, 6
      %v1148 = vor.u32 %v1146, %v1147
      %v1149 = vsel %vm1059, %v1143, %v1148
      %v1150 = vrot.slane %v587, 5
      %v1151 = vrot.slane %v590, 6
      %v1152 = vor.u32 %v1150, %v1151
      %v1153 = vrot.slane %v1152, 4
      %v1154 = vrot.slane %v600, 5
      %v1155 = vrot.slane %v596, 6
      %v1156 = vor.u32 %v1154, %v1155
      %v1157 = vsel %vm1059, %v1153, %v1156
      %v1158 = vrot.slane %v1156, 4
      %v1159 = vshrl.u32 %v393, 16
      %v1161 = vrot.slane %v1159, 5
      %v1162 = vrot.slane %v606, 6
      %v1163 = vor.u32 %v1161, %v1162
      %v1164 = vsel %vm1059, %v1158, %v1163
      %v1165 = vrot.slane %v611, 5
      %v1166 = vrot.slane %v614, 6
      %v1167 = vor.u32 %v1165, %v1166
      %v1168 = vrot.slane %v1167, 4
      %v1169 = vrot.slane %v624, 5
      %v1170 = vrot.slane %v620, 6
      %v1171 = vor.u32 %v1169, %v1170
      %v1172 = vsel %vm1059, %v1168, %v1171
      %v1173 = vrot.slane %v1171, 4
      %v1174 = vshrl.u32 %v396, 16
      %v1176 = vrot.slane %v1174, 5
      %v1177 = vrot.slane %v630, 6
      %v1178 = vor.u32 %v1176, %v1177
      %v1179 = vsel %vm1059, %v1173, %v1178
      %v1180 = vrot.slane %v635, 5
      %v1181 = vrot.slane %v638, 6
      %v1182 = vor.u32 %v1180, %v1181
      %v1183 = vrot.slane %v1182, 4
      %v1184 = vrot.slane %v648, 5
      %v1185 = vrot.slane %v644, 6
      %v1186 = vor.u32 %v1184, %v1185
      %v1187 = vsel %vm1059, %v1183, %v1186
      %v1188 = vrot.slane %v1186, 4
      %v1189 = vshrl.u32 %v399, 16
      %v1191 = vrot.slane %v1189, 5
      %v1192 = vrot.slane %v654, 6
      %v1193 = vor.u32 %v1191, %v1192
      %v1194 = vsel %vm1059, %v1188, %v1193
      %v1195 = vrot.slane %v659, 5
      %v1196 = vrot.slane %v662, 6
      %v1197 = vor.u32 %v1195, %v1196
      %v1198 = vrot.slane %v1197, 4
      %v1199 = vrot.slane %v672, 5
      %v1200 = vrot.slane %v668, 6
      %v1201 = vor.u32 %v1199, %v1200
      %v1202 = vsel %vm1059, %v1198, %v1201
      %v1203 = vrot.slane %v1201, 4
      %v1204 = vshrl.u32 %v402, 16
      %v1206 = vrot.slane %v1204, 5
      %v1207 = vrot.slane %v678, 6
      %v1208 = vor.u32 %v1206, %v1207
      %v1209 = vsel %vm1059, %v1203, %v1208
      %v1210 = vrot.slane %v683, 5
      %v1211 = vrot.slane %v686, 6
      %v1212 = vor.u32 %v1210, %v1211
      %v1213 = vrot.slane %v1212, 4
      %v1214 = vrot.slane %v696, 5
      %v1215 = vrot.slane %v692, 6
      %v1216 = vor.u32 %v1214, %v1215
      %v1217 = vsel %vm1059, %v1213, %v1216
      %v1218 = vrot.slane %v1216, 4
      %v1219 = vshrl.u32 %v405, 16
      %v1221 = vrot.slane %v1219, 5
      %v1222 = vrot.slane %v702, 6
      %v1223 = vor.u32 %v1221, %v1222
      %v1224 = vsel %vm1059, %v1218, %v1223
      %v1225 = vrot.slane %v707, 5
      %v1226 = vrot.slane %v710, 6
      %v1227 = vor.u32 %v1225, %v1226
      %v1228 = vrot.slane %v1227, 4
      %v1229 = vrot.slane %v720, 5
      %v1230 = vrot.slane %v716, 6
      %v1231 = vor.u32 %v1229, %v1230
      %v1232 = vsel %vm1059, %v1228, %v1231
      %v1233 = vrot.slane %v1231, 4
      %v1234 = vshrl.u32 %v408, 16
      %v1236 = vrot.slane %v1234, 5
      %v1237 = vrot.slane %v726, 6
      %v1238 = vor.u32 %v1236, %v1237
      %v1239 = vsel %vm1059, %v1233, %v1238
      %v1240 = vrot.slane %v731, 5
      %v1241 = vrot.slane %v734, 6
      %v1242 = vor.u32 %v1240, %v1241
      %v1243 = vrot.slane %v1242, 4
      %v1244 = vrot.slane %v744, 5
      %v1245 = vrot.slane %v740, 6
      %v1246 = vor.u32 %v1244, %v1245
      %v1247 = vsel %vm1059, %v1243, %v1246
      %v1248 = vrot.slane %v1246, 4
      %v1249 = vshrl.u32 %v411, 16
      %v1251 = vrot.slane %v1249, 5
      %v1252 = vrot.slane %v750, 6
      %v1253 = vor.u32 %v1251, %v1252
      %v1254 = vsel %vm1059, %v1248, %v1253
      %v1255 = vrot.slane %v755, 5
      %v1256 = vrot.slane %v758, 6
      %v1257 = vor.u32 %v1255, %v1256
      %v1258 = vrot.slane %v1257, 4
      %v1259 = vrot.slane %v768, 5
      %v1260 = vrot.slane %v764, 6
      %v1261 = vor.u32 %v1259, %v1260
      %v1262 = vsel %vm1059, %v1258, %v1261
      %v1263 = vrot.slane %v1261, 4
      %v1264 = vshrl.u32 %v414, 16
      %v1266 = vrot.slane %v1264, 5
      %v1267 = vrot.slane %v774, 6
      %v1268 = vor.u32 %v1266, %v1267
      %v1269 = vsel %vm1059, %v1263, %v1268
      %v1270 = vrot.slane %v779, 5
      %v1271 = vrot.slane %v782, 6
      %v1272 = vor.u32 %v1270, %v1271
      %v1273 = vrot.slane %v1272, 4
      %v1274 = vrot.slane %v792, 5
      %v1275 = vrot.slane %v788, 6
      %v1276 = vor.u32 %v1274, %v1275
      %v1277 = vsel %vm1059, %v1273, %v1276
      %v1278 = vrot.slane %v1276, 4
      %v1279 = vshrl.u32 %v417, 16
      %v1281 = vrot.slane %v1279, 5
      %v1282 = vrot.slane %v798, 6
      %v1283 = vor.u32 %v1281, %v1282
      %v1284 = vsel %vm1059, %v1278, %v1283
      %v1285 = vrot.slane %v803, 5
      %v1286 = vrot.slane %v806, 6
      %v1287 = vor.u32 %v1285, %v1286
      %v1288 = vrot.slane %v1287, 4
      %v1289 = vrot.slane %v816, 5
      %v1290 = vrot.slane %v812, 6
      %v1291 = vor.u32 %v1289, %v1290
      %v1292 = vsel %vm1059, %v1288, %v1291
      %v1293 = vrot.slane %v1291, 4
      %v1294 = vshrl.u32 %v420, 16
      %v1296 = vrot.slane %v1294, 5
      %v1297 = vrot.slane %v822, 6
      %v1298 = vor.u32 %v1296, %v1297
      %v1299 = vsel %vm1059, %v1293, %v1298
      %v1300 = vrot.slane %v827, 5
      %v1301 = vrot.slane %v830, 6
      %v1302 = vor.u32 %v1300, %v1301
      %v1303 = vrot.slane %v1302, 4
      %v1304 = vrot.slane %v840, 5
      %v1305 = vrot.slane %v836, 6
      %v1306 = vor.u32 %v1304, %v1305
      %v1307 = vsel %vm1059, %v1303, %v1306
      %v1308 = vrot.slane %v1306, 4
      %v1309 = vshrl.u32 %v423, 16
      %v1311 = vrot.slane %v1309, 5
      %v1312 = vrot.slane %v846, 6
      %v1313 = vor.u32 %v1311, %v1312
      %v1314 = vsel %vm1059, %v1308, %v1313
      %v1315 = vrot.slane %v851, 5
      %v1316 = vrot.slane %v854, 6
      %v1317 = vor.u32 %v1315, %v1316
      %v1318 = vrot.slane %v1317, 4
      %v1319 = vrot.slane %v864, 5
      %v1320 = vrot.slane %v860, 6
      %v1321 = vor.u32 %v1319, %v1320
      %v1322 = vsel %vm1059, %v1318, %v1321
      %v1323 = vrot.slane %v1321, 4
      %v1324 = vshrl.u32 %v426, 16
      %v1326 = vrot.slane %v1324, 5
      %v1327 = vrot.slane %v870, 6
      %v1328 = vor.u32 %v1326, %v1327
      %v1329 = vsel %vm1059, %v1323, %v1328
      %vm1330 = vcmask 1041408
      %vm1331 = vcmask 1045508
      %vm1332 = vmor %vm1330, %vm1331
      %v1333 = vrot.slane %v373, 6
      %v1334 = vrot.slane %v1333, 4
      %v1335 = vrot.slane %v374, 6
      %v1336 = vsel %vm1332, %v1334, %v1335
      %v1337 = vrot.slane %v1335, 4
      %v1338 = vrot.slane %v375, 6
      %v1339 = vsel %vm1332, %v1337, %v1338
      %v1340 = vrot.slane %v376, 6
      %v1341 = vrot.slane %v1340, 4
      %v1342 = vrot.slane %v377, 6
      %v1343 = vsel %vm1332, %v1341, %v1342
      %v1344 = vrot.slane %v1342, 4
      %v1345 = vrot.slane %v378, 6
      %v1346 = vsel %vm1332, %v1344, %v1345
      %v1347 = vrot.slane %v379, 6
      %v1348 = vrot.slane %v1347, 4
      %v1349 = vrot.slane %v380, 6
      %v1350 = vsel %vm1332, %v1348, %v1349
      %v1351 = vrot.slane %v1349, 4
      %v1352 = vrot.slane %v381, 6
      %v1353 = vsel %vm1332, %v1351, %v1352
      %v1354 = vrot.slane %v382, 6
      %v1355 = vrot.slane %v1354, 4
      %v1356 = vrot.slane %v383, 6
      %v1357 = vsel %vm1332, %v1355, %v1356
      %v1358 = vrot.slane %v1356, 4
      %v1359 = vrot.slane %v384, 6
      %v1360 = vsel %vm1332, %v1358, %v1359
      %v1361 = vrot.slane %v385, 6
      %v1362 = vrot.slane %v1361, 4
      %v1363 = vrot.slane %v386, 6
      %v1364 = vsel %vm1332, %v1362, %v1363
      %v1365 = vrot.slane %v1363, 4
      %v1366 = vrot.slane %v387, 6
      %v1367 = vsel %vm1332, %v1365, %v1366
      %v1368 = vrot.slane %v388, 6
      %v1369 = vrot.slane %v1368, 4
      %v1370 = vrot.slane %v389, 6
      %v1371 = vsel %vm1332, %v1369, %v1370
      %v1372 = vrot.slane %v1370, 4
      %v1373 = vrot.slane %v390, 6
      %v1374 = vsel %vm1332, %v1372, %v1373
      %v1375 = vrot.slane %v391, 6
      %v1376 = vrot.slane %v1375, 4
      %v1377 = vrot.slane %v392, 6
      %v1378 = vsel %vm1332, %v1376, %v1377
      %v1379 = vrot.slane %v1377, 4
      %v1380 = vrot.slane %v393, 6
      %v1381 = vsel %vm1332, %v1379, %v1380
      %v1382 = vrot.slane %v394, 6
      %v1383 = vrot.slane %v1382, 4
      %v1384 = vrot.slane %v395, 6
      %v1385 = vsel %vm1332, %v1383, %v1384
      %v1386 = vrot.slane %v1384, 4
      %v1387 = vrot.slane %v396, 6
      %v1388 = vsel %vm1332, %v1386, %v1387
      %v1389 = vrot.slane %v397, 6
      %v1390 = vrot.slane %v1389, 4
      %v1391 = vrot.slane %v398, 6
      %v1392 = vsel %vm1332, %v1390, %v1391
      %v1393 = vrot.slane %v1391, 4
      %v1394 = vrot.slane %v399, 6
      %v1395 = vsel %vm1332, %v1393, %v1394
      %v1396 = vrot.slane %v400, 6
      %v1397 = vrot.slane %v1396, 4
      %v1398 = vrot.slane %v401, 6
      %v1399 = vsel %vm1332, %v1397, %v1398
      %v1400 = vrot.slane %v1398, 4
      %v1401 = vrot.slane %v402, 6
      %v1402 = vsel %vm1332, %v1400, %v1401
      %v1403 = vrot.slane %v403, 6
      %v1404 = vrot.slane %v1403, 4
      %v1405 = vrot.slane %v404, 6
      %v1406 = vsel %vm1332, %v1404, %v1405
      %v1407 = vrot.slane %v1405, 4
      %v1408 = vrot.slane %v405, 6
      %v1409 = vsel %vm1332, %v1407, %v1408
      %v1410 = vrot.slane %v406, 6
      %v1411 = vrot.slane %v1410, 4
      %v1412 = vrot.slane %v407, 6
      %v1413 = vsel %vm1332, %v1411, %v1412
      %v1414 = vrot.slane %v1412, 4
      %v1415 = vrot.slane %v408, 6
      %v1416 = vsel %vm1332, %v1414, %v1415
      %v1417 = vrot.slane %v409, 6
      %v1418 = vrot.slane %v1417, 4
      %v1419 = vrot.slane %v410, 6
      %v1420 = vsel %vm1332, %v1418, %v1419
      %v1421 = vrot.slane %v1419, 4
      %v1422 = vrot.slane %v411, 6
      %v1423 = vsel %vm1332, %v1421, %v1422
      %v1424 = vrot.slane %v412, 6
      %v1425 = vrot.slane %v1424, 4
      %v1426 = vrot.slane %v413, 6
      %v1427 = vsel %vm1332, %v1425, %v1426
      %v1428 = vrot.slane %v1426, 4
      %v1429 = vrot.slane %v414, 6
      %v1430 = vsel %vm1332, %v1428, %v1429
      %v1431 = vrot.slane %v415, 6
      %v1432 = vrot.slane %v1431, 4
      %v1433 = vrot.slane %v416, 6
      %v1434 = vsel %vm1332, %v1432, %v1433
      %v1435 = vrot.slane %v1433, 4
      %v1436 = vrot.slane %v417, 6
      %v1437 = vsel %vm1332, %v1435, %v1436
      %v1438 = vrot.slane %v418, 6
      %v1439 = vrot.slane %v1438, 4
      %v1440 = vrot.slane %v419, 6
      %v1441 = vsel %vm1332, %v1439, %v1440
      %v1442 = vrot.slane %v1440, 4
      %v1443 = vrot.slane %v420, 6
      %v1444 = vsel %vm1332, %v1442, %v1443
      %v1445 = vrot.slane %v421, 6
      %v1446 = vrot.slane %v1445, 4
      %v1447 = vrot.slane %v422, 6
      %v1448 = vsel %vm1332, %v1446, %v1447
      %v1449 = vrot.slane %v1447, 4
      %v1450 = vrot.slane %v423, 6
      %v1451 = vsel %vm1332, %v1449, %v1450
      %v1452 = vrot.slane %v424, 6
      %v1453 = vrot.slane %v1452, 4
      %v1454 = vrot.slane %v425, 6
      %v1455 = vsel %vm1332, %v1453, %v1454
      %v1456 = vrot.slane %v1454, 4
      %v1457 = vrot.slane %v426, 6
      %v1458 = vsel %vm1332, %v1456, %v1457
      %v1459 = vunpack.c.l.b16 %v373
      %v1460 = vunpack.c.l.b16 %v374
      %v1461 = vunpack.c.l.b16 %v376
      %v1462 = vunpack.c.l.b16 %v377
      %v1463 = vunpack.c.l.b16 %v379
      %v1464 = vunpack.c.l.b16 %v380
      %v1465 = vunpack.c.l.b16 %v382
      %v1466 = vunpack.c.l.b16 %v383
      %v1467 = vunpack.c.l.b16 %v385
      %v1468 = vunpack.c.l.b16 %v386
      %v1469 = vunpack.c.l.b16 %v388
      %v1470 = vunpack.c.l.b16 %v389
      %v1471 = vunpack.c.l.b16 %v391
      %v1472 = vunpack.c.l.b16 %v392
      %v1473 = vunpack.c.l.b16 %v394
      %v1474 = vunpack.c.l.b16 %v395
      %v1475 = vunpack.c.l.b16 %v397
      %v1476 = vunpack.c.l.b16 %v398
      %v1477 = vunpack.c.l.b16 %v400
      %v1478 = vunpack.c.l.b16 %v401
      %v1479 = vunpack.c.l.b16 %v403
      %v1480 = vunpack.c.l.b16 %v404
      %v1481 = vunpack.c.l.b16 %v406
      %v1482 = vunpack.c.l.b16 %v407
      %v1483 = vunpack.c.l.b16 %v409
      %v1484 = vunpack.c.l.b16 %v410
      %v1485 = vunpack.c.l.b16 %v412
      %v1486 = vunpack.c.l.b16 %v413
      %v1487 = vunpack.c.l.b16 %v415
      %v1488 = vunpack.c.l.b16 %v416
      %v1489 = vunpack.c.l.b16 %v418
      %v1490 = vunpack.c.l.b16 %v419
      %v1491 = vunpack.c.l.b16 %v421
      %v1492 = vunpack.c.l.b16 %v422
      %v1493 = vunpack.c.l.b16 %v424
      %v1494 = vunpack.c.l.b16 %v425
      %v1495 = vpack.c.b16 %v1460, %v1459
      %v1496 = vpack.c.b16 %v1462, %v1461
      %v1497 = vpack.c.b16 %v1464, %v1463
      %v1498 = vpack.c.b16 %v1466, %v1465
      %v1499 = vpack.c.b16 %v1468, %v1467
      %v1500 = vpack.c.b16 %v1470, %v1469
      %v1501 = vpack.c.b16 %v1472, %v1471
      %v1502 = vpack.c.b16 %v1474, %v1473
      %v1503 = vpack.c.b16 %v1476, %v1475
      %v1504 = vpack.c.b16 %v1478, %v1477
      %v1505 = vpack.c.b16 %v1480, %v1479
      %v1506 = vpack.c.b16 %v1482, %v1481
      %v1507 = vpack.c.b16 %v1484, %v1483
      %v1508 = vpack.c.b16 %v1486, %v1485
      %v1509 = vpack.c.b16 %v1488, %v1487
      %v1510 = vpack.c.b16 %v1490, %v1489
      %v1511 = vpack.c.b16 %v1492, %v1491
      %v1512 = vpack.c.b16 %v1494, %v1493
      %v1513 = vunpack.c.l.b16 %v455
      %v1514 = vunpack.c.l.b16 %v465
      %v1515 = vunpack.c.l.b16 %v479
      %v1516 = vunpack.c.l.b16 %v489
      %v1517 = vunpack.c.l.b16 %v503
      %v1518 = vunpack.c.l.b16 %v513
      %v1519 = vunpack.c.l.b16 %v527
      %v1520 = vunpack.c.l.b16 %v537
      %v1521 = vunpack.c.l.b16 %v551
      %v1522 = vunpack.c.l.b16 %v561
      %v1523 = vunpack.c.l.b16 %v575
      %v1524 = vunpack.c.l.b16 %v585
      %v1525 = vunpack.c.l.b16 %v599
      %v1526 = vunpack.c.l.b16 %v609
      %v1527 = vunpack.c.l.b16 %v623
      %v1528 = vunpack.c.l.b16 %v633
      %v1529 = vunpack.c.l.b16 %v647
      %v1530 = vunpack.c.l.b16 %v657
      %v1531 = vunpack.c.l.b16 %v671
      %v1532 = vunpack.c.l.b16 %v681
      %v1533 = vunpack.c.l.b16 %v695
      %v1534 = vunpack.c.l.b16 %v705
      %v1535 = vunpack.c.l.b16 %v719
      %v1536 = vunpack.c.l.b16 %v729
      %v1537 = vunpack.c.l.b16 %v743
      %v1538 = vunpack.c.l.b16 %v753
      %v1539 = vunpack.c.l.b16 %v767
      %v1540 = vunpack.c.l.b16 %v777
      %v1541 = vunpack.c.l.b16 %v791
      %v1542 = vunpack.c.l.b16 %v801
      %v1543 = vunpack.c.l.b16 %v815
      %v1544 = vunpack.c.l.b16 %v825
      %v1545 = vunpack.c.l.b16 %v839
      %v1546 = vunpack.c.l.b16 %v849
      %v1547 = vunpack.c.l.b16 %v863
      %v1548 = vunpack.c.l.b16 %v873
      %v1549 = vpack.c.b16 %v1514, %v1513
      %v1550 = vpack.c.b16 %v1516, %v1515
      %v1551 = vpack.c.b16 %v1518, %v1517
      %v1552 = vpack.c.b16 %v1520, %v1519
      %v1553 = vpack.c.b16 %v1522, %v1521
      %v1554 = vpack.c.b16 %v1524, %v1523
      %v1555 = vpack.c.b16 %v1526, %v1525
      %v1556 = vpack.c.b16 %v1528, %v1527
      %v1557 = vpack.c.b16 %v1530, %v1529
      %v1558 = vpack.c.b16 %v1532, %v1531
      %v1559 = vpack.c.b16 %v1534, %v1533
      %v1560 = vpack.c.b16 %v1536, %v1535
      %v1561 = vpack.c.b16 %v1538, %v1537
      %v1562 = vpack.c.b16 %v1540, %v1539
      %v1563 = vpack.c.b16 %v1542, %v1541
      %v1564 = vpack.c.b16 %v1544, %v1543
      %v1565 = vpack.c.b16 %v1546, %v1545
      %v1566 = vpack.c.b16 %v1548, %v1547
      %1567 = vrot.lane.b32.xlu0 %v1549, 64
      %v1568 = vpop.permute.xlu0 %1567
      %1569 = vrot.lane.b32.xlu0 %v1550, 64
      %v1570 = vpop.permute.xlu0 %1569
      %1571 = vrot.lane.b32.xlu0 %v1551, 64
      %v1572 = vpop.permute.xlu0 %1571
      %1573 = vrot.lane.b32.xlu0 %v1552, 64
      %v1574 = vpop.permute.xlu0 %1573
      %1575 = vrot.lane.b32.xlu0 %v1553, 64
      %v1576 = vpop.permute.xlu0 %1575
      %1577 = vrot.lane.b32.xlu0 %v1554, 64
      %v1578 = vpop.permute.xlu0 %1577
      %1579 = vrot.lane.b32.xlu0 %v1555, 64
      %v1580 = vpop.permute.xlu0 %1579
      %1581 = vrot.lane.b32.xlu0 %v1556, 64
      %v1582 = vpop.permute.xlu0 %1581
      %1583 = vrot.lane.b32.xlu0 %v1557, 64
      %v1584 = vpop.permute.xlu0 %1583
      %1585 = vrot.lane.b32.xlu0 %v1558, 64
      %v1586 = vpop.permute.xlu0 %1585
      %1587 = vrot.lane.b32.xlu0 %v1559, 64
      %v1588 = vpop.permute.xlu0 %1587
      %1589 = vrot.lane.b32.xlu0 %v1560, 64
      %v1590 = vpop.permute.xlu0 %1589
      %1591 = vrot.lane.b32.xlu0 %v1561, 64
      %v1592 = vpop.permute.xlu0 %1591
      %1593 = vrot.lane.b32.xlu0 %v1562, 64
      %v1594 = vpop.permute.xlu0 %1593
      %1595 = vrot.lane.b32.xlu0 %v1563, 64
      %v1596 = vpop.permute.xlu0 %1595
      %1597 = vrot.lane.b32.xlu0 %v1564, 64
      %v1598 = vpop.permute.xlu0 %1597
      %1599 = vrot.lane.b32.xlu0 %v1565, 64
      %v1600 = vpop.permute.xlu0 %1599
      %1601 = vrot.lane.b32.xlu0 %v1566, 64
      %v1602 = vpop.permute.xlu0 %1601
      %v1603 = vunpack.c.l.b16 %v934
      %v1604 = vunpack.c.l.b16 %v937
      %v1605 = vunpack.c.l.b16 %v941
      %v1606 = vunpack.c.l.b16 %v944
      %v1607 = vunpack.c.l.b16 %v948
      %v1608 = vunpack.c.l.b16 %v951
      %v1609 = vunpack.c.l.b16 %v955
      %v1610 = vunpack.c.l.b16 %v958
      %v1611 = vunpack.c.l.b16 %v962
      %v1612 = vunpack.c.l.b16 %v965
      %v1613 = vunpack.c.l.b16 %v969
      %v1614 = vunpack.c.l.b16 %v972
      %v1615 = vunpack.c.l.b16 %v976
      %v1616 = vunpack.c.l.b16 %v979
      %v1617 = vunpack.c.l.b16 %v983
      %v1618 = vunpack.c.l.b16 %v986
      %v1619 = vunpack.c.l.b16 %v990
      %v1620 = vunpack.c.l.b16 %v993
      %v1621 = vunpack.c.l.b16 %v997
      %v1622 = vunpack.c.l.b16 %v1000
      %v1623 = vunpack.c.l.b16 %v1004
      %v1624 = vunpack.c.l.b16 %v1007
      %v1625 = vunpack.c.l.b16 %v1011
      %v1626 = vunpack.c.l.b16 %v1014
      %v1627 = vunpack.c.l.b16 %v1018
      %v1628 = vunpack.c.l.b16 %v1021
      %v1629 = vunpack.c.l.b16 %v1025
      %v1630 = vunpack.c.l.b16 %v1028
      %v1631 = vunpack.c.l.b16 %v1032
      %v1632 = vunpack.c.l.b16 %v1035
      %v1633 = vunpack.c.l.b16 %v1039
      %v1634 = vunpack.c.l.b16 %v1042
      %v1635 = vunpack.c.l.b16 %v1046
      %v1636 = vunpack.c.l.b16 %v1049
      %v1637 = vunpack.c.l.b16 %v1053
      %v1638 = vunpack.c.l.b16 %v1056
      %v1639 = vpack.c.b16 %v1604, %v1603
      %v1640 = vpack.c.b16 %v1606, %v1605
      %v1641 = vpack.c.b16 %v1608, %v1607
      %v1642 = vpack.c.b16 %v1610, %v1609
      %v1643 = vpack.c.b16 %v1612, %v1611
      %v1644 = vpack.c.b16 %v1614, %v1613
      %v1645 = vpack.c.b16 %v1616, %v1615
      %v1646 = vpack.c.b16 %v1618, %v1617
      %v1647 = vpack.c.b16 %v1620, %v1619
      %v1648 = vpack.c.b16 %v1622, %v1621
      %v1649 = vpack.c.b16 %v1624, %v1623
      %v1650 = vpack.c.b16 %v1626, %v1625
      %v1651 = vpack.c.b16 %v1628, %v1627
      %v1652 = vpack.c.b16 %v1630, %v1629
      %v1653 = vpack.c.b16 %v1632, %v1631
      %v1654 = vpack.c.b16 %v1634, %v1633
      %v1655 = vpack.c.b16 %v1636, %v1635
      %v1656 = vpack.c.b16 %v1638, %v1637
      %v1657 = vunpack.c.l.b16 %v1067
      %v1658 = vunpack.c.l.b16 %v1074
      %v1659 = vunpack.c.l.b16 %v1082
      %v1660 = vunpack.c.l.b16 %v1089
      %v1661 = vunpack.c.l.b16 %v1097
      %v1662 = vunpack.c.l.b16 %v1104
      %v1663 = vunpack.c.l.b16 %v1112
      %v1664 = vunpack.c.l.b16 %v1119
      %v1665 = vunpack.c.l.b16 %v1127
      %v1666 = vunpack.c.l.b16 %v1134
      %v1667 = vunpack.c.l.b16 %v1142
      %v1668 = vunpack.c.l.b16 %v1149
      %v1669 = vunpack.c.l.b16 %v1157
      %v1670 = vunpack.c.l.b16 %v1164
      %v1671 = vunpack.c.l.b16 %v1172
      %v1672 = vunpack.c.l.b16 %v1179
      %v1673 = vunpack.c.l.b16 %v1187
      %v1674 = vunpack.c.l.b16 %v1194
      %v1675 = vunpack.c.l.b16 %v1202
      %v1676 = vunpack.c.l.b16 %v1209
      %v1677 = vunpack.c.l.b16 %v1217
      %v1678 = vunpack.c.l.b16 %v1224
      %v1679 = vunpack.c.l.b16 %v1232
      %v1680 = vunpack.c.l.b16 %v1239
      %v1681 = vunpack.c.l.b16 %v1247
      %v1682 = vunpack.c.l.b16 %v1254
      %v1683 = vunpack.c.l.b16 %v1262
      %v1684 = vunpack.c.l.b16 %v1269
      %v1685 = vunpack.c.l.b16 %v1277
      %v1686 = vunpack.c.l.b16 %v1284
      %v1687 = vunpack.c.l.b16 %v1292
      %v1688 = vunpack.c.l.b16 %v1299
      %v1689 = vunpack.c.l.b16 %v1307
      %v1690 = vunpack.c.l.b16 %v1314
      %v1691 = vunpack.c.l.b16 %v1322
      %v1692 = vunpack.c.l.b16 %v1329
      %v1693 = vpack.c.b16 %v1658, %v1657
      %v1694 = vpack.c.b16 %v1660, %v1659
      %v1695 = vpack.c.b16 %v1662, %v1661
      %v1696 = vpack.c.b16 %v1664, %v1663
      %v1697 = vpack.c.b16 %v1666, %v1665
      %v1698 = vpack.c.b16 %v1668, %v1667
      %v1699 = vpack.c.b16 %v1670, %v1669
      %v1700 = vpack.c.b16 %v1672, %v1671
      %v1701 = vpack.c.b16 %v1674, %v1673
      %v1702 = vpack.c.b16 %v1676, %v1675
      %v1703 = vpack.c.b16 %v1678, %v1677
      %v1704 = vpack.c.b16 %v1680, %v1679
      %v1705 = vpack.c.b16 %v1682, %v1681
      %v1706 = vpack.c.b16 %v1684, %v1683
      %v1707 = vpack.c.b16 %v1686, %v1685
      %v1708 = vpack.c.b16 %v1688, %v1687
      %v1709 = vpack.c.b16 %v1690, %v1689
      %v1710 = vpack.c.b16 %v1692, %v1691
      %1711 = vrot.lane.b32.xlu0 %v1693, 64
      %v1712 = vpop.permute.xlu0 %1711
      %1713 = vrot.lane.b32.xlu0 %v1694, 64
      %v1714 = vpop.permute.xlu0 %1713
      %1715 = vrot.lane.b32.xlu0 %v1695, 64
      %v1716 = vpop.permute.xlu0 %1715
      %1717 = vrot.lane.b32.xlu0 %v1696, 64
      %v1718 = vpop.permute.xlu0 %1717
      %1719 = vrot.lane.b32.xlu0 %v1697, 64
      %v1720 = vpop.permute.xlu0 %1719
      %1721 = vrot.lane.b32.xlu0 %v1698, 64
      %v1722 = vpop.permute.xlu0 %1721
      %1723 = vrot.lane.b32.xlu0 %v1699, 64
      %v1724 = vpop.permute.xlu0 %1723
      %1725 = vrot.lane.b32.xlu0 %v1700, 64
      %v1726 = vpop.permute.xlu0 %1725
      %1727 = vrot.lane.b32.xlu0 %v1701, 64
      %v1728 = vpop.permute.xlu0 %1727
      %1729 = vrot.lane.b32.xlu0 %v1702, 64
      %v1730 = vpop.permute.xlu0 %1729
      %1731 = vrot.lane.b32.xlu0 %v1703, 64
      %v1732 = vpop.permute.xlu0 %1731
      %1733 = vrot.lane.b32.xlu0 %v1704, 64
      %v1734 = vpop.permute.xlu0 %1733
      %1735 = vrot.lane.b32.xlu0 %v1705, 64
      %v1736 = vpop.permute.xlu0 %1735
      %1737 = vrot.lane.b32.xlu0 %v1706, 64
      %v1738 = vpop.permute.xlu0 %1737
      %1739 = vrot.lane.b32.xlu0 %v1707, 64
      %v1740 = vpop.permute.xlu0 %1739
      %1741 = vrot.lane.b32.xlu0 %v1708, 64
      %v1742 = vpop.permute.xlu0 %1741
      %1743 = vrot.lane.b32.xlu0 %v1709, 64
      %v1744 = vpop.permute.xlu0 %1743
      %1745 = vrot.lane.b32.xlu0 %v1710, 64
      %v1746 = vpop.permute.xlu0 %1745
      %v1747 = vunpack.c.l.b16 %v1336
      %v1748 = vunpack.c.l.b16 %v1339
      %v1749 = vunpack.c.l.b16 %v1343
      %v1750 = vunpack.c.l.b16 %v1346
      %v1751 = vunpack.c.l.b16 %v1350
      %v1752 = vunpack.c.l.b16 %v1353
      %v1753 = vunpack.c.l.b16 %v1357
      %v1754 = vunpack.c.l.b16 %v1360
      %v1755 = vunpack.c.l.b16 %v1364
      %v1756 = vunpack.c.l.b16 %v1367
      %v1757 = vunpack.c.l.b16 %v1371
      %v1758 = vunpack.c.l.b16 %v1374
      %v1759 = vunpack.c.l.b16 %v1378
      %v1760 = vunpack.c.l.b16 %v1381
      %v1761 = vunpack.c.l.b16 %v1385
      %v1762 = vunpack.c.l.b16 %v1388
      %v1763 = vunpack.c.l.b16 %v1392
      %v1764 = vunpack.c.l.b16 %v1395
      %v1765 = vunpack.c.l.b16 %v1399
      %v1766 = vunpack.c.l.b16 %v1402
      %v1767 = vunpack.c.l.b16 %v1406
      %v1768 = vunpack.c.l.b16 %v1409
      %v1769 = vunpack.c.l.b16 %v1413
      %v1770 = vunpack.c.l.b16 %v1416
      %v1771 = vunpack.c.l.b16 %v1420
      %v1772 = vunpack.c.l.b16 %v1423
      %v1773 = vunpack.c.l.b16 %v1427
      %v1774 = vunpack.c.l.b16 %v1430
      %v1775 = vunpack.c.l.b16 %v1434
      %v1776 = vunpack.c.l.b16 %v1437
      %v1777 = vunpack.c.l.b16 %v1441
      %v1778 = vunpack.c.l.b16 %v1444
      %v1779 = vunpack.c.l.b16 %v1448
      %v1780 = vunpack.c.l.b16 %v1451
      %v1781 = vunpack.c.l.b16 %v1455
      %v1782 = vunpack.c.l.b16 %v1458
      %v1783 = vpack.c.b16 %v1748, %v1747
      %v1784 = vpack.c.b16 %v1750, %v1749
      %v1785 = vpack.c.b16 %v1752, %v1751
      %v1786 = vpack.c.b16 %v1754, %v1753
      %v1787 = vpack.c.b16 %v1756, %v1755
      %v1788 = vpack.c.b16 %v1758, %v1757
      %v1789 = vpack.c.b16 %v1760, %v1759
      %v1790 = vpack.c.b16 %v1762, %v1761
      %v1791 = vpack.c.b16 %v1764, %v1763
      %v1792 = vpack.c.b16 %v1766, %v1765
      %v1793 = vpack.c.b16 %v1768, %v1767
      %v1794 = vpack.c.b16 %v1770, %v1769
      %v1795 = vpack.c.b16 %v1772, %v1771
      %v1796 = vpack.c.b16 %v1774, %v1773
      %v1797 = vpack.c.b16 %v1776, %v1775
      %v1798 = vpack.c.b16 %v1778, %v1777
      %v1799 = vpack.c.b16 %v1780, %v1779
      %v1800 = vpack.c.b16 %v1782, %v1781
      %vm1801 = vcmask 523264
      %v1804 = vsel %vm1801, %v1495, %v1568
      %v1808 = vsel %vm1801, %v1496, %v1570
      %v1812 = vsel %vm1801, %v1497, %v1572
      %v1816 = vsel %vm1801, %v1498, %v1574
      %v1820 = vsel %vm1801, %v1499, %v1576
      %v1824 = vsel %vm1801, %v1500, %v1578
      %v1828 = vsel %vm1801, %v1501, %v1580
      %v1832 = vsel %vm1801, %v1502, %v1582
      %v1836 = vsel %vm1801, %v1503, %v1584
      %v1840 = vsel %vm1801, %v1504, %v1586
      %v1844 = vsel %vm1801, %v1505, %v1588
      %v1848 = vsel %vm1801, %v1506, %v1590
      %v1852 = vsel %vm1801, %v1507, %v1592
      %v1856 = vsel %vm1801, %v1508, %v1594
      %v1860 = vsel %vm1801, %v1509, %v1596
      %v1864 = vsel %vm1801, %v1510, %v1598
      %v1868 = vsel %vm1801, %v1511, %v1600
      %v1872 = vsel %vm1801, %v1512, %v1602
      %v1876 = vsel %vm1801, %v1639, %v1712
      %v1880 = vsel %vm1801, %v1640, %v1714
      %v1884 = vsel %vm1801, %v1641, %v1716
      %v1888 = vsel %vm1801, %v1642, %v1718
      %v1892 = vsel %vm1801, %v1643, %v1720
      %v1896 = vsel %vm1801, %v1644, %v1722
      %v1900 = vsel %vm1801, %v1645, %v1724
      %v1904 = vsel %vm1801, %v1646, %v1726
      %v1908 = vsel %vm1801, %v1647, %v1728
      %v1912 = vsel %vm1801, %v1648, %v1730
      %v1916 = vsel %vm1801, %v1649, %v1732
      %v1920 = vsel %vm1801, %v1650, %v1734
      %v1924 = vsel %vm1801, %v1651, %v1736
      %v1928 = vsel %vm1801, %v1652, %v1738
      %v1932 = vsel %vm1801, %v1653, %v1740
      %v1936 = vsel %vm1801, %v1654, %v1742
      %v1940 = vsel %vm1801, %v1655, %v1744
      %v1944 = vsel %vm1801, %v1656, %v1746
      %v1946 = vld [vmem:[%s1] sm:$0xf]
      %v1947 = vld [vmem:[%s1 + $0x4] sm:$0xf]
      %v1948 = vld [vmem:[%s1 + $0x8] sm:$0xf]
      %v1949 = vld [vmem:[%s1 + $0xc] sm:$0xf]
      %v1950 = vld [vmem:[%s1 + $0x10] sm:$0xf]
      %v1951 = vld [vmem:[%s1 + $0x14] sm:$0xf]
      %v1952 = vld [vmem:[%s1 + $0x18] sm:$0xf]
      %v1953 = vld [vmem:[%s1 + $0x1c] sm:$0xf]
      %v1954 = vld [vmem:[%s1 + $0x20] sm:$0xf]
      %v1955 = vld [vmem:[%s1 + $0x24] sm:$0xf]
      %v1956 = vld [vmem:[%s1 + $0x28] sm:$0xf]
      %v1957 = vld [vmem:[%s1 + $0x2c] sm:$0xf]
      %v1958 = vld [vmem:[%s1 + $0x30] sm:$0xf]
      %v1959 = vld [vmem:[%s1 + $0x34] sm:$0xf]
      %v1960 = vld [vmem:[%s1 + $0x38] sm:$0xf]
      %v1961 = vld [vmem:[%s1 + $0x3c] sm:$0xf]
      %v1962 = vld [vmem:[%s1 + $0x40] sm:$0xf]
      %v1963 = vld [vmem:[%s1 + $0x44] sm:$0xf]
      %v1964 = vld [vmem:[%s1 + $0x48] sm:$0xf]
      %v1965 = vld [vmem:[%s1 + $0x4c] sm:$0xf]
      %v1966 = vld [vmem:[%s1 + $0x50] sm:$0xf]
      %v1967 = vld [vmem:[%s1 + $0x54] sm:$0xf]
      %v1968 = vld [vmem:[%s1 + $0x58] sm:$0xf]
      %v1969 = vld [vmem:[%s1 + $0x5c] sm:$0xf]
      %v1970 = vld [vmem:[%s1 + $0x60] sm:$0xf]
      %v1971 = vld [vmem:[%s1 + $0x64] sm:$0xf]
      %v1972 = vld [vmem:[%s1 + $0x68] sm:$0xf]
      %v1973 = vld [vmem:[%s1 + $0x6c] sm:$0xf]
      %v1974 = vld [vmem:[%s1 + $0x70] sm:$0xf]
      %v1975 = vld [vmem:[%s1 + $0x74] sm:$0xf]
      %v1976 = vld [vmem:[%s1 + $0x78] sm:$0xf]
      %v1977 = vld [vmem:[%s1 + $0x7c] sm:$0xf]
      %v1978 = vld [vmem:[%s1 + $0x80] sm:$0xf]
      %v1979 = vld [vmem:[%s1 + $0x84] sm:$0xf]
      %v1980 = vld [vmem:[%s1 + $0x88] sm:$0xf]
      %v1981 = vld [vmem:[%s1 + $0x8c] sm:$0xf]
      %v1982 = vld [vmem:[%s1 + $0x90] sm:$0xf]
      %v1983 = vld [vmem:[%s1 + $0x94] sm:$0xf]
      %v1984 = vld [vmem:[%s1 + $0x98] sm:$0xf]
      %v1985 = vld [vmem:[%s1 + $0x9c] sm:$0xf]
      %v1987 = vshrl.u32 %v427, 16
      %v1989 = vrot.slane %v1987, 4
      %v1990 = vshll.u32 %v427, 16
      %v1992 = vrot.slane %v1990, 5
      %v1993 = vor.u32 %v1989, %v1992
      %v1994 = vrot.slane %v1993, 4
      %v1996 = vshll.u32 %v428, 16
      %v1998 = vrot.slane %v1996, 5
      %v1999 = vsel %vm441, %v1994, %v1998
      %v2000 = vshrl.u32 %v428, 16
      %v2002 = vrot.slane %v2000, 4
      %v2003 = vor.u32 %v2002, %v1998
      %v2004 = vrot.slane %v2003, 4
      %v2006 = vshll.u32 %v429, 16
      %v2008 = vrot.slane %v2006, 5
      %v2009 = vsel %vm441, %v2004, %v2008
      %v2013 = vrot.slane %v427, 5
      %v2014 = vrot.slane %v2013, 4
      %v2015 = vrot.slane %v428, 5
      %v2016 = vsel %vm930, %v2014, %v2015
      %v2017 = vrot.slane %v2015, 4
      %v2018 = vrot.slane %v429, 5
      %v2019 = vsel %vm930, %v2017, %v2018
      %v2020 = vrot.slane %v1987, 5
      %v2021 = vrot.slane %v1990, 6
      %v2022 = vor.u32 %v2020, %v2021
      %v2023 = vrot.slane %v2022, 4
      %v2024 = vrot.slane %v2000, 5
      %v2025 = vrot.slane %v1996, 6
      %v2026 = vor.u32 %v2024, %v2025
      %v2027 = vsel %vm1059, %v2023, %v2026
      %v2028 = vrot.slane %v2026, 4
      %v2029 = vshrl.u32 %v429, 16
      %v2031 = vrot.slane %v2029, 5
      %v2032 = vrot.slane %v2006, 6
      %v2033 = vor.u32 %v2031, %v2032
      %v2034 = vsel %vm1059, %v2028, %v2033
      %v2035 = vrot.slane %v427, 6
      %v2036 = vrot.slane %v2035, 4
      %v2037 = vrot.slane %v428, 6
      %v2038 = vsel %vm1332, %v2036, %v2037
      %v2039 = vrot.slane %v2037, 4
      %v2040 = vrot.slane %v429, 6
      %v2041 = vsel %vm1332, %v2039, %v2040
      %v2042 = vunpack.c.l.b16 %v427
      %v2043 = vunpack.c.l.b16 %v428
      %v2044 = vpack.c.b16 %v2043, %v2042
      %v2045 = vunpack.c.l.b16 %v1999
      %v2046 = vunpack.c.l.b16 %v2009
      %v2047 = vpack.c.b16 %v2046, %v2045
      %2048 = vrot.lane.b32.xlu0 %v2047, 64
      %v2049 = vpop.permute.xlu0 %2048
      %v2050 = vunpack.c.l.b16 %v2016
      %v2051 = vunpack.c.l.b16 %v2019
      %v2052 = vpack.c.b16 %v2051, %v2050
      %v2053 = vunpack.c.l.b16 %v2027
      %v2054 = vunpack.c.l.b16 %v2034
      %v2055 = vpack.c.b16 %v2054, %v2053
      %2056 = vrot.lane.b32.xlu0 %v2055, 64
      %v2057 = vpop.permute.xlu0 %2056
      %v2058 = vunpack.c.l.b16 %v2038
      %v2059 = vunpack.c.l.b16 %v2041
      %v2060 = vpack.c.b16 %v2059, %v2058
      %v2063 = vsel %vm1801, %v2044, %v2049
      %v2067 = vsel %vm1801, %v2052, %v2057
      %s2069 = scalar_lea.vmem %s1, 160
      %v2070 = vld [vmem:[%s2069] sm:$0xf]
      %v2071 = vld [vmem:[%s2069 + $0x4] sm:$0xf]
      %v2072 = vld [vmem:[%s2069 + $0x8] sm:$0xf]
      %v2073 = vld [vmem:[%s2069 + $0xc] sm:$0xf]
      %v2074 = vld [vmem:[%s2069 + $0x10] sm:$0xf]
      %v2075 = vld [vmem:[%s2069 + $0x14] sm:$0xf]
      %v2076 = vld [vmem:[%s2069 + $0x18] sm:$0xf]
      %v2077 = vld [vmem:[%s2069 + $0x1c] sm:$0xf]
      %v2078 = vld [vmem:[%s2069 + $0x20] sm:$0xf]
      %v2079 = vld [vmem:[%s2069 + $0x24] sm:$0xf]
      %v2080 = vld [vmem:[%s2069 + $0x28] sm:$0xf]
      %v2081 = vld [vmem:[%s2069 + $0x2c] sm:$0xf]
      %v2082 = vld [vmem:[%s2069 + $0x30] sm:$0xf]
      %v2083 = vld [vmem:[%s2069 + $0x34] sm:$0xf]
      %v2084 = vld [vmem:[%s2069 + $0x38] sm:$0xf]
      %v2085 = vld [vmem:[%s2069 + $0x3c] sm:$0xf]
      %v2086 = vld [vmem:[%s2069 + $0x40] sm:$0xf]
      %v2087 = vld [vmem:[%s2069 + $0x44] sm:$0xf]
      %v2088 = vld [vmem:[%s2069 + $0x48] sm:$0xf]
      %v2089 = vld [vmem:[%s2069 + $0x4c] sm:$0xf]
      %v2090 = vld [vmem:[%s2069 + $0x50] sm:$0xf]
      %v2091 = vld [vmem:[%s2069 + $0x54] sm:$0xf]
      %v2092 = vld [vmem:[%s2069 + $0x58] sm:$0xf]
      %v2093 = vld [vmem:[%s2069 + $0x5c] sm:$0xf]
      %v2094 = vld [vmem:[%s2069 + $0x60] sm:$0xf]
      %v2095 = vld [vmem:[%s2069 + $0x64] sm:$0xf]
      %v2096 = vld [vmem:[%s2069 + $0x68] sm:$0xf]
      %v2097 = vld [vmem:[%s2069 + $0x6c] sm:$0xf]
      %v2098 = vld [vmem:[%s2069 + $0x70] sm:$0xf]
      %v2099 = vld [vmem:[%s2069 + $0x74] sm:$0xf]
      %v2100 = vld [vmem:[%s2069 + $0x78] sm:$0xf]
      %v2101 = vld [vmem:[%s2069 + $0x7c] sm:$0xf]
      %v2102 = vld [vmem:[%s2069 + $0x80] sm:$0xf]
      %v2103 = vld [vmem:[%s2069 + $0x84] sm:$0xf]
      %v2104 = vld [vmem:[%s2069 + $0x88] sm:$0xf]
      %v2105 = vld [vmem:[%s2069 + $0x8c] sm:$0xf]
      %v2106 = vld [vmem:[%s2069 + $0x90] sm:$0xf]
      %v2107 = vld [vmem:[%s2069 + $0x94] sm:$0xf]
      %v2108 = vld [vmem:[%s2069 + $0x98] sm:$0xf]
      %v2109 = vld [vmem:[%s2069 + $0x9c] sm:$0xf]
      %v2150 = vunpack.c.l.b16 %v2070
      %v2151 = vunpack.c.l.b16 %v2071
      %v2152 = vunpack.c.l.b16 %v2072
      %v2153 = vunpack.c.l.b16 %v2073
      %v2154 = vunpack.c.l.b16 %v2074
      %v2155 = vunpack.c.l.b16 %v2075
      %v2156 = vunpack.c.l.b16 %v2076
      %v2157 = vunpack.c.l.b16 %v2077
      %v2158 = vunpack.c.l.b16 %v2078
      %v2159 = vunpack.c.l.b16 %v2079
      %v2160 = vunpack.c.l.b16 %v2080
      %v2161 = vunpack.c.l.b16 %v2081
      %v2162 = vunpack.c.l.b16 %v2082
      %v2163 = vunpack.c.l.b16 %v2083
      %v2164 = vunpack.c.l.b16 %v2084
      %v2165 = vunpack.c.l.b16 %v2085
      %v2166 = vunpack.c.l.b16 %v2086
      %v2167 = vunpack.c.l.b16 %v2087
      %v2168 = vunpack.c.l.b16 %v2088
      %v2169 = vunpack.c.l.b16 %v2089
      %v2170 = vunpack.c.l.b16 %v2090
      %v2171 = vunpack.c.l.b16 %v2091
      %v2172 = vunpack.c.l.b16 %v2092
      %v2173 = vunpack.c.l.b16 %v2093
      %v2174 = vunpack.c.l.b16 %v2094
      %v2175 = vunpack.c.l.b16 %v2095
      %v2176 = vunpack.c.l.b16 %v2096
      %v2177 = vunpack.c.l.b16 %v2097
      %v2178 = vunpack.c.l.b16 %v2098
      %v2179 = vunpack.c.l.b16 %v2099
      %v2180 = vunpack.c.l.b16 %v2100
      %v2181 = vunpack.c.l.b16 %v2101
      %v2182 = vunpack.c.l.b16 %v2102
      %v2183 = vunpack.c.l.b16 %v2103
      %v2184 = vunpack.c.l.b16 %v2104
      %v2185 = vunpack.c.l.b16 %v2105
      %v2186 = vunpack.c.l.b16 %v2106
      %v2187 = vunpack.c.l.b16 %v2107
      %v2188 = vunpack.c.l.b16 %v2108
      %v2189 = vunpack.c.l.b16 %v2109
      %v2190 = vpack.c.b16 %v2151, %v2150
      %v2191 = vpack.c.b16 %v2153, %v2152
      %v2192 = vpack.c.b16 %v2155, %v2154
      %v2193 = vpack.c.b16 %v2157, %v2156
      %v2194 = vpack.c.b16 %v2159, %v2158
      %v2195 = vpack.c.b16 %v2161, %v2160
      %v2196 = vpack.c.b16 %v2163, %v2162
      %v2197 = vpack.c.b16 %v2165, %v2164
      %v2198 = vpack.c.b16 %v2167, %v2166
      %v2199 = vpack.c.b16 %v2169, %v2168
      %v2200 = vpack.c.b16 %v2171, %v2170
      %v2201 = vpack.c.b16 %v2173, %v2172
      %v2202 = vpack.c.b16 %v2175, %v2174
      %v2203 = vpack.c.b16 %v2177, %v2176
      %v2204 = vpack.c.b16 %v2179, %v2178
      %v2205 = vpack.c.b16 %v2181, %v2180
      %v2206 = vpack.c.b16 %v2183, %v2182
      %v2207 = vpack.c.b16 %v2185, %v2184
      %v2208 = vpack.c.b16 %v2187, %v2186
      %v2209 = vpack.c.b16 %v2189, %v2188
      %v2231 = vsel %vm1801, %v1784, 0
      %v2234 = vsel %vm1801, %v1785, 0
      %v2237 = vsel %vm1801, %v1786, 0
      %v2240 = vsel %vm1801, %v1787, 0
      %v2243 = vsel %vm1801, %v1788, 0
      %v2246 = vsel %vm1801, %v1789, 0
      %v2249 = vsel %vm1801, %v1790, 0
      %v2252 = vsel %vm1801, %v1791, 0
      %v2255 = vsel %vm1801, %v1792, 0
      %v2258 = vsel %vm1801, %v1793, 0
      %v2261 = vsel %vm1801, %v1794, 0
      %v2264 = vsel %vm1801, %v1795, 0
      %v2267 = vsel %vm1801, %v1796, 0
      %v2270 = vsel %vm1801, %v1797, 0
      %v2273 = vsel %vm1801, %v1798, 0
      %v2276 = vsel %vm1801, %v1799, 0
      %v2279 = vsel %vm1801, %v1800, 0
      %v2282 = vsel %vm1801, %v2060, 0
      %2284 = vmatprep.subr.bf16.mxu0 0
      %2285 = vmatpush1.bf16.msra.mxu0 %v2197
      %2286 = vmatprep.subr.bf16.mxu0 0
      %2287 = vmatpush1.bf16.msra.mxu0 %v2196
      %2288 = vmatprep.subr.bf16.mxu0 0
      %2289 = vmatpush1.bf16.msra.mxu0 %v2195
      %2290 = vmatprep.subr.bf16.mxu0 0
      %2291 = vmatpush1.bf16.msra.mxu0 %v2194
      %2292 = vmatprep.subr.bf16.mxu0 0
      %2293 = vmatpush1.bf16.msra.mxu0 %v2193
      %2294 = vmatprep.subr.bf16.mxu0 0
      %2295 = vmatpush1.bf16.msra.mxu0 %v2192
      %2296 = vmatprep.subr.bf16.mxu0 0
      %2297 = vmatpush1.bf16.msra.mxu0 %v2191
      %2298 = vmatprep.subr.bf16.mxu0 0
      %2299 = vmatpush1.bf16.msra.mxu0 %v2190
      %2300 = vmatprep.subr.bf16.mxu0 0
      %2301 = vmatpush2.bf16.msra.mxu0 %v2205
      %2302 = vmatprep.subr.bf16.mxu0 0
      %2303 = vmatpush2.bf16.msra.mxu0 %v2204
      %2304 = vmatprep.subr.bf16.mxu0 0
      %2305 = vmatpush2.bf16.msra.mxu0 %v2203
      %2306 = vmatprep.subr.bf16.mxu0 0
      %2307 = vmatpush2.bf16.msra.mxu0 %v2202
      %2308 = vmatprep.subr.bf16.mxu0 0
      %2309 = vmatpush2.bf16.msra.mxu0 %v2201
      %2310 = vmatprep.subr.bf16.mxu0 0
      %2311 = vmatpush2.bf16.msra.mxu0 %v2200
      %2312 = vmatprep.subr.bf16.mxu0 0
      %2313 = vmatpush2.bf16.msra.mxu0 %v2199
      %2314 = vmatprep.subr.bf16.mxu0 0
      %2315 = vmatpush2.bf16.msra.mxu0 %v2198
      %2316 = vmatprep.mubr.bf16.mxu0 %v1880
      %2317 = vmatmul.mubr.bf16.gmra.mxu0 %v1808
      %v2318 = vpop.f32.mrf.mxu0
      %v2319 = vadd.f32 0.0, %v2318
      %v2320 = vpop.f32.mrf.mxu0
      %v2321 = vpop.f32.mrf.mxu0
      %v2322 = vadd.f32 0.0, %v2321
      %v2323 = vpop.f32.mrf.mxu0
      %2324 = vmatprep.mubr.bf16.mxu0 %v1884
      %2325 = vmatmul.mubr.bf16.gmra.mxu0 %v1812
      %v2326 = vpop.f32.mrf.mxu0
      %v2327 = vadd.f32 0.0, %v2326
      %v2328 = vpop.f32.mrf.mxu0
      %v2329 = vpop.f32.mrf.mxu0
      %v2330 = vadd.f32 0.0, %v2329
      %v2331 = vpop.f32.mrf.mxu0
      %2332 = vmatprep.mubr.bf16.mxu0 %v1888
      %2333 = vmatmul.mubr.bf16.gmra.mxu0 %v1816
      %v2334 = vpop.f32.mrf.mxu0
      %v2335 = vadd.f32 0.0, %v2334
      %v2336 = vpop.f32.mrf.mxu0
      %v2337 = vpop.f32.mrf.mxu0
      %v2338 = vadd.f32 0.0, %v2337
      %v2339 = vpop.f32.mrf.mxu0
      %2340 = vmatprep.mubr.bf16.mxu0 %v1892
      %2341 = vmatmul.mubr.bf16.gmra.mxu0 %v1820
      %v2342 = vpop.f32.mrf.mxu0
      %v2343 = vadd.f32 0.0, %v2342
      %v2344 = vpop.f32.mrf.mxu0
      %v2345 = vpop.f32.mrf.mxu0
      %v2346 = vadd.f32 0.0, %v2345
      %v2347 = vpop.f32.mrf.mxu0
      %2348 = vmatprep.mubr.bf16.mxu0 %v1896
      %2349 = vmatmul.mubr.bf16.gmra.mxu0 %v1824
      %v2350 = vpop.f32.mrf.mxu0
      %v2351 = vadd.f32 0.0, %v2350
      %v2352 = vpop.f32.mrf.mxu0
      %v2353 = vpop.f32.mrf.mxu0
      %v2354 = vadd.f32 0.0, %v2353
      %v2355 = vpop.f32.mrf.mxu0
      %2356 = vmatprep.mubr.bf16.mxu0 %v1900
      %2357 = vmatmul.mubr.bf16.gmra.mxu0 %v1828
      %v2358 = vpop.f32.mrf.mxu0
      %v2359 = vadd.f32 0.0, %v2358
      %v2360 = vpop.f32.mrf.mxu0
      %v2361 = vpop.f32.mrf.mxu0
      %v2362 = vadd.f32 0.0, %v2361
      %v2363 = vpop.f32.mrf.mxu0
      %2364 = vmatprep.mubr.bf16.mxu0 %v1904
      %2365 = vmatmul.mubr.bf16.gmra.mxu0 %v1832
      %v2366 = vpop.f32.mrf.mxu0
      %v2367 = vadd.f32 0.0, %v2366
      %v2368 = vpop.f32.mrf.mxu0
      %v2369 = vpop.f32.mrf.mxu0
      %v2370 = vadd.f32 0.0, %v2369
      %v2371 = vpop.f32.mrf.mxu0
      %2372 = vmatprep.mubr.bf16.mxu0 %v1908
      %2373 = vmatmul.mubr.bf16.gmra.mxu0 %v1836
      %v2374 = vpop.f32.mrf.mxu0
      %v2375 = vadd.f32 0.0, %v2374
      %v2376 = vpop.f32.mrf.mxu0
      %v2377 = vpop.f32.mrf.mxu0
      %v2378 = vadd.f32 0.0, %v2377
      %v2379 = vpop.f32.mrf.mxu0
      %2380 = vmatprep.mubr.bf16.mxu0 %v1912
      %2381 = vmatmul.mubr.bf16.gmra.mxu0 %v1840
      %v2382 = vpop.f32.mrf.mxu0
      %v2383 = vadd.f32 0.0, %v2382
      %v2384 = vpop.f32.mrf.mxu0
      %v2385 = vpop.f32.mrf.mxu0
      %v2386 = vadd.f32 0.0, %v2385
      %v2387 = vpop.f32.mrf.mxu0
      %2388 = vmatprep.mubr.bf16.mxu0 %v1916
      %2389 = vmatmul.mubr.bf16.gmra.mxu0 %v1844
      %v2390 = vpop.f32.mrf.mxu0
      %v2391 = vadd.f32 0.0, %v2390
      %v2392 = vpop.f32.mrf.mxu0
      %v2393 = vpop.f32.mrf.mxu0
      %v2394 = vadd.f32 0.0, %v2393
      %v2395 = vpop.f32.mrf.mxu0
      %2396 = vmatprep.mubr.bf16.mxu0 %v1920
      %2397 = vmatmul.mubr.bf16.gmra.mxu0 %v1848
      %v2398 = vpop.f32.mrf.mxu0
      %v2399 = vadd.f32 0.0, %v2398
      %v2400 = vpop.f32.mrf.mxu0
      %v2401 = vpop.f32.mrf.mxu0
      %v2402 = vadd.f32 0.0, %v2401
      %v2403 = vpop.f32.mrf.mxu0
      %2404 = vmatprep.mubr.bf16.mxu0 %v1924
      %2405 = vmatmul.mubr.bf16.gmra.mxu0 %v1852
      %v2406 = vpop.f32.mrf.mxu0
      %v2407 = vadd.f32 0.0, %v2406
      %v2408 = vpop.f32.mrf.mxu0
      %v2409 = vpop.f32.mrf.mxu0
      %v2410 = vadd.f32 0.0, %v2409
      %v2411 = vpop.f32.mrf.mxu0
      %2412 = vmatprep.mubr.bf16.mxu0 %v1928
      %2413 = vmatmul.mubr.bf16.gmra.mxu0 %v1856
      %v2414 = vpop.f32.mrf.mxu0
      %v2415 = vadd.f32 0.0, %v2414
      %v2416 = vpop.f32.mrf.mxu0
      %v2417 = vpop.f32.mrf.mxu0
      %v2418 = vadd.f32 0.0, %v2417
      %v2419 = vpop.f32.mrf.mxu0
      %2420 = vmatprep.mubr.bf16.mxu0 %v1932
      %2421 = vmatmul.mubr.bf16.gmra.mxu0 %v1860
      %v2422 = vpop.f32.mrf.mxu0
      %v2423 = vadd.f32 0.0, %v2422
      %v2424 = vpop.f32.mrf.mxu0
      %v2425 = vpop.f32.mrf.mxu0
      %v2426 = vadd.f32 0.0, %v2425
      %v2427 = vpop.f32.mrf.mxu0
      %2428 = vmatprep.mubr.bf16.mxu0 %v1936
      %2429 = vmatmul.mubr.bf16.gmra.mxu0 %v1864
      %v2430 = vpop.f32.mrf.mxu0
      %v2431 = vadd.f32 0.0, %v2430
      %v2432 = vpop.f32.mrf.mxu0
      %v2433 = vpop.f32.mrf.mxu0
      %v2434 = vadd.f32 0.0, %v2433
      %v2435 = vpop.f32.mrf.mxu0
      %2436 = vmatprep.mubr.bf16.mxu0 %v1940
      %2437 = vmatmul.mubr.bf16.gmra.mxu0 %v1868
      %v2438 = vpop.f32.mrf.mxu0
      %v2439 = vadd.f32 0.0, %v2438
      %v2440 = vpop.f32.mrf.mxu0
      %v2441 = vpop.f32.mrf.mxu0
      %v2442 = vadd.f32 0.0, %v2441
      %v2443 = vpop.f32.mrf.mxu0
      %2444 = vmatprep.mubr.bf16.mxu0 %v1944
      %2445 = vmatmul.mubr.bf16.gmra.mxu0 %v1872
      %v2446 = vpop.f32.mrf.mxu0
      %v2447 = vadd.f32 0.0, %v2446
      %v2448 = vpop.f32.mrf.mxu0
      %v2449 = vpop.f32.mrf.mxu0
      %v2450 = vadd.f32 0.0, %v2449
      %v2451 = vpop.f32.mrf.mxu0
      %2452 = vmatprep.mubr.bf16.mxu0 %v2067
      %2453 = vmatmul.mubr.bf16.gmra.mxu0 %v2063
      %v2454 = vpop.f32.mrf.mxu0
      %v2455 = vadd.f32 0.0, %v2454
      %v2456 = vpop.f32.mrf.mxu0
      %v2457 = vpop.f32.mrf.mxu0
      %v2458 = vadd.f32 0.0, %v2457
      %v2459 = vpop.f32.mrf.mxu0
      %2460 = vdwg.mxu0
      %2461 = vmatprep.subr.bf16.mxu0 0
      %2462 = vmatpush1.bf16.msra.mxu0 0
      %2463 = vmatprep.subr.bf16.mxu0 0
      %2464 = vmatpush1.bf16.msra.mxu0 0
      %2465 = vmatprep.subr.bf16.mxu0 0
      %2466 = vmatpush1.bf16.msra.mxu0 0
      %2467 = vmatprep.subr.bf16.mxu0 0
      %2468 = vmatpush1.bf16.msra.mxu0 0
      %2469 = vmatprep.subr.bf16.mxu0 0
      %2470 = vmatpush1.bf16.msra.mxu0 %v2209
      %2471 = vmatprep.subr.bf16.mxu0 0
      %2472 = vmatpush1.bf16.msra.mxu0 %v2208
      %2473 = vmatprep.subr.bf16.mxu0 0
      %2474 = vmatpush1.bf16.msra.mxu0 %v2207
      %2475 = vmatprep.subr.bf16.mxu0 0
      %2476 = vmatpush1.bf16.msra.mxu0 %v2206
      %2477 = vmatprep.subr.bf16.mxu0 0
      %2478 = vmatpush2.bf16.msra.mxu0 0
      %2479 = vmatprep.subr.bf16.mxu0 0
      %2480 = vmatpush2.bf16.msra.mxu0 0
      %2481 = vmatprep.subr.bf16.mxu0 0
      %2482 = vmatpush2.bf16.msra.mxu0 0
      %2483 = vmatprep.subr.bf16.mxu0 0
      %2484 = vmatpush2.bf16.msra.mxu0 0
      %2485 = vmatprep.subr.bf16.mxu0 0
      %2486 = vmatpush2.bf16.msra.mxu0 0
      %2487 = vmatprep.subr.bf16.mxu0 0
      %2488 = vmatpush2.bf16.msra.mxu0 0
      %2489 = vmatprep.subr.bf16.mxu0 0
      %2490 = vmatpush2.bf16.msra.mxu0 0
      %2491 = vmatprep.subr.bf16.mxu0 0
      %2492 = vmatpush2.bf16.msra.mxu0 0
      %2493 = vmatprep.mubr.bf16.mxu0 0
      %2494 = vmatmul.mubr.bf16.gmra.mxu0 %v2231
      %v2495 = vpop.f32.mrf.mxu0
      %v2496 = vadd.f32 %v2319, %v2495
      %v2497 = vpop.f32.mrf.mxu0
      %v2498 = vpop.f32.mrf.mxu0
      %v2499 = vadd.f32 %v2322, %v2498
      %v2500 = vpop.f32.mrf.mxu0
      %2501 = vmatprep.mubr.bf16.mxu0 0
      %2502 = vmatmul.mubr.bf16.gmra.mxu0 %v2234
      %v2503 = vpop.f32.mrf.mxu0
      %v2504 = vadd.f32 %v2327, %v2503
      %v2505 = vpop.f32.mrf.mxu0
      %v2506 = vpop.f32.mrf.mxu0
      %v2507 = vadd.f32 %v2330, %v2506
      %v2508 = vpop.f32.mrf.mxu0
      %2509 = vmatprep.mubr.bf16.mxu0 0
      %2510 = vmatmul.mubr.bf16.gmra.mxu0 %v2237
      %v2511 = vpop.f32.mrf.mxu0
      %v2512 = vadd.f32 %v2335, %v2511
      %v2513 = vpop.f32.mrf.mxu0
      %v2514 = vpop.f32.mrf.mxu0
      %v2515 = vadd.f32 %v2338, %v2514
      %v2516 = vpop.f32.mrf.mxu0
      %2517 = vmatprep.mubr.bf16.mxu0 0
      %2518 = vmatmul.mubr.bf16.gmra.mxu0 %v2240
      %v2519 = vpop.f32.mrf.mxu0
      %v2520 = vadd.f32 %v2343, %v2519
      %v2521 = vpop.f32.mrf.mxu0
      %v2522 = vpop.f32.mrf.mxu0
      %v2523 = vadd.f32 %v2346, %v2522
      %v2524 = vpop.f32.mrf.mxu0
      %2525 = vmatprep.mubr.bf16.mxu0 0
      %2526 = vmatmul.mubr.bf16.gmra.mxu0 %v2243
      %v2527 = vpop.f32.mrf.mxu0
      %v2528 = vadd.f32 %v2351, %v2527
      %v2529 = vpop.f32.mrf.mxu0
      %v2530 = vpop.f32.mrf.mxu0
      %v2531 = vadd.f32 %v2354, %v2530
      %v2532 = vpop.f32.mrf.mxu0
      %2533 = vmatprep.mubr.bf16.mxu0 0
      %2534 = vmatmul.mubr.bf16.gmra.mxu0 %v2246
      %v2535 = vpop.f32.mrf.mxu0
      %v2536 = vadd.f32 %v2359, %v2535
      %v2537 = vpop.f32.mrf.mxu0
      %v2538 = vpop.f32.mrf.mxu0
      %v2539 = vadd.f32 %v2362, %v2538
      %v2540 = vpop.f32.mrf.mxu0
      %2541 = vmatprep.mubr.bf16.mxu0 0
      %2542 = vmatmul.mubr.bf16.gmra.mxu0 %v2249
      %v2543 = vpop.f32.mrf.mxu0
      %v2544 = vadd.f32 %v2367, %v2543
      %v2545 = vpop.f32.mrf.mxu0
      %v2546 = vpop.f32.mrf.mxu0
      %v2547 = vadd.f32 %v2370, %v2546
      %v2548 = vpop.f32.mrf.mxu0
      %2549 = vmatprep.mubr.bf16.mxu0 0
      %2550 = vmatmul.mubr.bf16.gmra.mxu0 %v2252
      %v2551 = vpop.f32.mrf.mxu0
      %v2552 = vadd.f32 %v2375, %v2551
      %v2553 = vpop.f32.mrf.mxu0
      %v2554 = vpop.f32.mrf.mxu0
      %v2555 = vadd.f32 %v2378, %v2554
      %v2556 = vpop.f32.mrf.mxu0
      %2557 = vmatprep.mubr.bf16.mxu0 0
      %2558 = vmatmul.mubr.bf16.gmra.mxu0 %v2255
      %v2559 = vpop.f32.mrf.mxu0
      %v2560 = vadd.f32 %v2383, %v2559
      %v2561 = vpop.f32.mrf.mxu0
      %v2562 = vpop.f32.mrf.mxu0
      %v2563 = vadd.f32 %v2386, %v2562
      %v2564 = vpop.f32.mrf.mxu0
      %2565 = vmatprep.mubr.bf16.mxu0 0
      %2566 = vmatmul.mubr.bf16.gmra.mxu0 %v2258
      %v2567 = vpop.f32.mrf.mxu0
      %v2568 = vadd.f32 %v2391, %v2567
      %v2569 = vpop.f32.mrf.mxu0
      %v2570 = vpop.f32.mrf.mxu0
      %v2571 = vadd.f32 %v2394, %v2570
      %v2572 = vpop.f32.mrf.mxu0
      %2573 = vmatprep.mubr.bf16.mxu0 0
      %2574 = vmatmul.mubr.bf16.gmra.mxu0 %v2261
      %v2575 = vpop.f32.mrf.mxu0
      %v2576 = vadd.f32 %v2399, %v2575
      %v2577 = vpop.f32.mrf.mxu0
      %v2578 = vpop.f32.mrf.mxu0
      %v2579 = vadd.f32 %v2402, %v2578
      %v2580 = vpop.f32.mrf.mxu0
      %2581 = vmatprep.mubr.bf16.mxu0 0
      %2582 = vmatmul.mubr.bf16.gmra.mxu0 %v2264
      %v2583 = vpop.f32.mrf.mxu0
      %v2584 = vadd.f32 %v2407, %v2583
      %v2585 = vpop.f32.mrf.mxu0
      %v2586 = vpop.f32.mrf.mxu0
      %v2587 = vadd.f32 %v2410, %v2586
      %v2588 = vpop.f32.mrf.mxu0
      %2589 = vmatprep.mubr.bf16.mxu0 0
      %2590 = vmatmul.mubr.bf16.gmra.mxu0 %v2267
      %v2591 = vpop.f32.mrf.mxu0
      %v2592 = vadd.f32 %v2415, %v2591
      %v2593 = vpop.f32.mrf.mxu0
      %v2594 = vpop.f32.mrf.mxu0
      %v2595 = vadd.f32 %v2418, %v2594
      %v2596 = vpop.f32.mrf.mxu0
      %2597 = vmatprep.mubr.bf16.mxu0 0
      %2598 = vmatmul.mubr.bf16.gmra.mxu0 %v2270
      %v2599 = vpop.f32.mrf.mxu0
      %v2600 = vadd.f32 %v2423, %v2599
      %v2601 = vpop.f32.mrf.mxu0
      %v2602 = vpop.f32.mrf.mxu0
      %v2603 = vadd.f32 %v2426, %v2602
      %v2604 = vpop.f32.mrf.mxu0
      %2605 = vmatprep.mubr.bf16.mxu0 0
      %2606 = vmatmul.mubr.bf16.gmra.mxu0 %v2273
      %v2607 = vpop.f32.mrf.mxu0
      %v2608 = vadd.f32 %v2431, %v2607
      %v2609 = vpop.f32.mrf.mxu0
      %v2610 = vpop.f32.mrf.mxu0
      %v2611 = vadd.f32 %v2434, %v2610
      %v2612 = vpop.f32.mrf.mxu0
      %2613 = vmatprep.mubr.bf16.mxu0 0
      %2614 = vmatmul.mubr.bf16.gmra.mxu0 %v2276
      %v2615 = vpop.f32.mrf.mxu0
      %v2616 = vadd.f32 %v2439, %v2615
      %v2617 = vpop.f32.mrf.mxu0
      %v2618 = vpop.f32.mrf.mxu0
      %v2619 = vadd.f32 %v2442, %v2618
      %v2620 = vpop.f32.mrf.mxu0
      %2621 = vmatprep.mubr.bf16.mxu0 0
      %2622 = vmatmul.mubr.bf16.gmra.mxu0 %v2279
      %v2623 = vpop.f32.mrf.mxu0
      %v2624 = vadd.f32 %v2447, %v2623
      %v2625 = vpop.f32.mrf.mxu0
      %v2626 = vpop.f32.mrf.mxu0
      %v2627 = vadd.f32 %v2450, %v2626
      %v2628 = vpop.f32.mrf.mxu0
      %2629 = vmatprep.mubr.bf16.mxu0 0
      %2630 = vmatmul.mubr.bf16.gmra.mxu0 %v2282
      %v2631 = vpop.f32.mrf.mxu0
      %v2632 = vadd.f32 %v2455, %v2631
      %v2633 = vpop.f32.mrf.mxu0
      %v2634 = vpop.f32.mrf.mxu0
      %v2635 = vadd.f32 %v2458, %v2634
      %v2636 = vpop.f32.mrf.mxu0
      %2637 = vdwg.mxu0
      %v2678 = vunpack.c.l.b16 %v1946
      %v2679 = vunpack.c.l.b16 %v1947
      %v2680 = vunpack.c.l.b16 %v1948
      %v2681 = vunpack.c.l.b16 %v1949
      %v2682 = vunpack.c.l.b16 %v1950
      %v2683 = vunpack.c.l.b16 %v1951
      %v2684 = vunpack.c.l.b16 %v1952
      %v2685 = vunpack.c.l.b16 %v1953
      %v2686 = vunpack.c.l.b16 %v1954
      %v2687 = vunpack.c.l.b16 %v1955
      %v2688 = vunpack.c.l.b16 %v1956
      %v2689 = vunpack.c.l.b16 %v1957
      %v2690 = vunpack.c.l.b16 %v1958
      %v2691 = vunpack.c.l.b16 %v1959
      %v2692 = vunpack.c.l.b16 %v1960
      %v2693 = vunpack.c.l.b16 %v1961
      %v2694 = vunpack.c.l.b16 %v1962
      %v2695 = vunpack.c.l.b16 %v1963
      %v2696 = vunpack.c.l.b16 %v1964
      %v2697 = vunpack.c.l.b16 %v1965
      %v2698 = vunpack.c.l.b16 %v1966
      %v2699 = vunpack.c.l.b16 %v1967
      %v2700 = vunpack.c.l.b16 %v1968
      %v2701 = vunpack.c.l.b16 %v1969
      %v2702 = vunpack.c.l.b16 %v1970
      %v2703 = vunpack.c.l.b16 %v1971
      %v2704 = vunpack.c.l.b16 %v1972
      %v2705 = vunpack.c.l.b16 %v1973
      %v2706 = vunpack.c.l.b16 %v1974
      %v2707 = vunpack.c.l.b16 %v1975
      %v2708 = vunpack.c.l.b16 %v1976
      %v2709 = vunpack.c.l.b16 %v1977
      %v2710 = vunpack.c.l.b16 %v1978
      %v2711 = vunpack.c.l.b16 %v1979
      %v2712 = vunpack.c.l.b16 %v1980
      %v2713 = vunpack.c.l.b16 %v1981
      %v2714 = vunpack.c.l.b16 %v1982
      %v2715 = vunpack.c.l.b16 %v1983
      %v2716 = vunpack.c.l.b16 %v1984
      %v2717 = vunpack.c.l.b16 %v1985
      %v2718 = vpack.c.b16 %v2679, %v2678
      %v2719 = vpack.c.b16 %v2681, %v2680
      %v2720 = vpack.c.b16 %v2683, %v2682
      %v2721 = vpack.c.b16 %v2685, %v2684
      %v2722 = vpack.c.b16 %v2687, %v2686
      %v2723 = vpack.c.b16 %v2689, %v2688
      %v2724 = vpack.c.b16 %v2691, %v2690
      %v2725 = vpack.c.b16 %v2693, %v2692
      %v2726 = vpack.c.b16 %v2695, %v2694
      %v2727 = vpack.c.b16 %v2697, %v2696
      %v2728 = vpack.c.b16 %v2699, %v2698
      %v2729 = vpack.c.b16 %v2701, %v2700
      %v2730 = vpack.c.b16 %v2703, %v2702
      %v2731 = vpack.c.b16 %v2705, %v2704
      %v2732 = vpack.c.b16 %v2707, %v2706
      %v2733 = vpack.c.b16 %v2709, %v2708
      %v2734 = vpack.c.b16 %v2711, %v2710
      %v2735 = vpack.c.b16 %v2713, %v2712
      %v2736 = vpack.c.b16 %v2715, %v2714
      %v2737 = vpack.c.b16 %v2717, %v2716
      %v2759 = vsel %vm1801, %v1783, 0
      %2761 = vmatprep.subr.bf16.mxu0 0
      %2762 = vmatpush1.bf16.msra.mxu0 %v2725
      %2763 = vmatprep.subr.bf16.mxu0 0
      %2764 = vmatpush1.bf16.msra.mxu0 %v2724
      %2765 = vmatprep.subr.bf16.mxu0 0
      %2766 = vmatpush1.bf16.msra.mxu0 %v2723
      %2767 = vmatprep.subr.bf16.mxu0 0
      %2768 = vmatpush1.bf16.msra.mxu0 %v2722
      %2769 = vmatprep.subr.bf16.mxu0 0
      %2770 = vmatpush1.bf16.msra.mxu0 %v2721
      %2771 = vmatprep.subr.bf16.mxu0 0
      %2772 = vmatpush1.bf16.msra.mxu0 %v2720
      %2773 = vmatprep.subr.bf16.mxu0 0
      %2774 = vmatpush1.bf16.msra.mxu0 %v2719
      %2775 = vmatprep.subr.bf16.mxu0 0
      %2776 = vmatpush1.bf16.msra.mxu0 %v2718
      %2777 = vmatprep.subr.bf16.mxu0 0
      %2778 = vmatpush2.bf16.msra.mxu0 %v2733
      %2779 = vmatprep.subr.bf16.mxu0 0
      %2780 = vmatpush2.bf16.msra.mxu0 %v2732
      %2781 = vmatprep.subr.bf16.mxu0 0
      %2782 = vmatpush2.bf16.msra.mxu0 %v2731
      %2783 = vmatprep.subr.bf16.mxu0 0
      %2784 = vmatpush2.bf16.msra.mxu0 %v2730
      %2785 = vmatprep.subr.bf16.mxu0 0
      %2786 = vmatpush2.bf16.msra.mxu0 %v2729
      %2787 = vmatprep.subr.bf16.mxu0 0
      %2788 = vmatpush2.bf16.msra.mxu0 %v2728
      %2789 = vmatprep.subr.bf16.mxu0 0
      %2790 = vmatpush2.bf16.msra.mxu0 %v2727
      %2791 = vmatprep.subr.bf16.mxu0 0
      %2792 = vmatpush2.bf16.msra.mxu0 %v2726
      %2793 = vmatprep.mubr.bf16.mxu0 %v1876
      %2794 = vmatmul.mubr.bf16.gmra.mxu0 %v1804
      %v2795 = vpop.f32.mrf.mxu0
      %v2796 = vadd.f32 %v2496, %v2795
      %v2797 = vpop.f32.mrf.mxu0
      %v2798 = vpop.f32.mrf.mxu0
      %v2799 = vadd.f32 %v2499, %v2798
      %v2800 = vpop.f32.mrf.mxu0
      %2801 = vmatprep.mubr.bf16.mxu0 %v1880
      %2802 = vmatmul.mubr.bf16.gmra.mxu0 %v1808
      %v2803 = vpop.f32.mrf.mxu0
      %v2804 = vadd.f32 %v2504, %v2803
      %v2805 = vpop.f32.mrf.mxu0
      %v2806 = vpop.f32.mrf.mxu0
      %v2807 = vadd.f32 %v2507, %v2806
      %v2808 = vpop.f32.mrf.mxu0
      %2809 = vmatprep.mubr.bf16.mxu0 %v1884
      %2810 = vmatmul.mubr.bf16.gmra.mxu0 %v1812
      %v2811 = vpop.f32.mrf.mxu0
      %v2812 = vadd.f32 %v2512, %v2811
      %v2813 = vpop.f32.mrf.mxu0
      %v2814 = vpop.f32.mrf.mxu0
      %v2815 = vadd.f32 %v2515, %v2814
      %v2816 = vpop.f32.mrf.mxu0
      %2817 = vmatprep.mubr.bf16.mxu0 %v1888
      %2818 = vmatmul.mubr.bf16.gmra.mxu0 %v1816
      %v2819 = vpop.f32.mrf.mxu0
      %v2820 = vadd.f32 %v2520, %v2819
      %v2821 = vpop.f32.mrf.mxu0
      %v2822 = vpop.f32.mrf.mxu0
      %v2823 = vadd.f32 %v2523, %v2822
      %v2824 = vpop.f32.mrf.mxu0
      %2825 = vmatprep.mubr.bf16.mxu0 %v1892
      %2826 = vmatmul.mubr.bf16.gmra.mxu0 %v1820
      %v2827 = vpop.f32.mrf.mxu0
      %v2828 = vadd.f32 %v2528, %v2827
      %v2829 = vpop.f32.mrf.mxu0
      %v2830 = vpop.f32.mrf.mxu0
      %v2831 = vadd.f32 %v2531, %v2830
      %v2832 = vpop.f32.mrf.mxu0
      %2833 = vmatprep.mubr.bf16.mxu0 %v1896
      %2834 = vmatmul.mubr.bf16.gmra.mxu0 %v1824
      %v2835 = vpop.f32.mrf.mxu0
      %v2836 = vadd.f32 %v2536, %v2835
      %v2837 = vpop.f32.mrf.mxu0
      %v2838 = vpop.f32.mrf.mxu0
      %v2839 = vadd.f32 %v2539, %v2838
      %v2840 = vpop.f32.mrf.mxu0
      %2841 = vmatprep.mubr.bf16.mxu0 %v1900
      %2842 = vmatmul.mubr.bf16.gmra.mxu0 %v1828
      %v2843 = vpop.f32.mrf.mxu0
      %v2844 = vadd.f32 %v2544, %v2843
      %v2845 = vpop.f32.mrf.mxu0
      %v2846 = vpop.f32.mrf.mxu0
      %v2847 = vadd.f32 %v2547, %v2846
      %v2848 = vpop.f32.mrf.mxu0
      %2849 = vmatprep.mubr.bf16.mxu0 %v1904
      %2850 = vmatmul.mubr.bf16.gmra.mxu0 %v1832
      %v2851 = vpop.f32.mrf.mxu0
      %v2852 = vadd.f32 %v2552, %v2851
      %v2853 = vpop.f32.mrf.mxu0
      %v2854 = vpop.f32.mrf.mxu0
      %v2855 = vadd.f32 %v2555, %v2854
      %v2856 = vpop.f32.mrf.mxu0
      %2857 = vmatprep.mubr.bf16.mxu0 %v1908
      %2858 = vmatmul.mubr.bf16.gmra.mxu0 %v1836
      %v2859 = vpop.f32.mrf.mxu0
      %v2860 = vadd.f32 %v2560, %v2859
      %v2861 = vpop.f32.mrf.mxu0
      %v2862 = vpop.f32.mrf.mxu0
      %v2863 = vadd.f32 %v2563, %v2862
      %v2864 = vpop.f32.mrf.mxu0
      %2865 = vmatprep.mubr.bf16.mxu0 %v1912
      %2866 = vmatmul.mubr.bf16.gmra.mxu0 %v1840
      %v2867 = vpop.f32.mrf.mxu0
      %v2868 = vadd.f32 %v2568, %v2867
      %v2869 = vpop.f32.mrf.mxu0
      %v2870 = vpop.f32.mrf.mxu0
      %v2871 = vadd.f32 %v2571, %v2870
      %v2872 = vpop.f32.mrf.mxu0
      %2873 = vmatprep.mubr.bf16.mxu0 %v1916
      %2874 = vmatmul.mubr.bf16.gmra.mxu0 %v1844
      %v2875 = vpop.f32.mrf.mxu0
      %v2876 = vadd.f32 %v2576, %v2875
      %v2877 = vpop.f32.mrf.mxu0
      %v2878 = vpop.f32.mrf.mxu0
      %v2879 = vadd.f32 %v2579, %v2878
      %v2880 = vpop.f32.mrf.mxu0
      %2881 = vmatprep.mubr.bf16.mxu0 %v1920
      %2882 = vmatmul.mubr.bf16.gmra.mxu0 %v1848
      %v2883 = vpop.f32.mrf.mxu0
      %v2884 = vadd.f32 %v2584, %v2883
      %v2885 = vpop.f32.mrf.mxu0
      %v2886 = vpop.f32.mrf.mxu0
      %v2887 = vadd.f32 %v2587, %v2886
      %v2888 = vpop.f32.mrf.mxu0
      %2889 = vmatprep.mubr.bf16.mxu0 %v1924
      %2890 = vmatmul.mubr.bf16.gmra.mxu0 %v1852
      %v2891 = vpop.f32.mrf.mxu0
      %v2892 = vadd.f32 %v2592, %v2891
      %v2893 = vpop.f32.mrf.mxu0
      %v2894 = vpop.f32.mrf.mxu0
      %v2895 = vadd.f32 %v2595, %v2894
      %v2896 = vpop.f32.mrf.mxu0
      %2897 = vmatprep.mubr.bf16.mxu0 %v1928
      %2898 = vmatmul.mubr.bf16.gmra.mxu0 %v1856
      %v2899 = vpop.f32.mrf.mxu0
      %v2900 = vadd.f32 %v2600, %v2899
      %v2901 = vpop.f32.mrf.mxu0
      %v2902 = vpop.f32.mrf.mxu0
      %v2903 = vadd.f32 %v2603, %v2902
      %v2904 = vpop.f32.mrf.mxu0
      %2905 = vmatprep.mubr.bf16.mxu0 %v1932
      %2906 = vmatmul.mubr.bf16.gmra.mxu0 %v1860
      %v2907 = vpop.f32.mrf.mxu0
      %v2908 = vadd.f32 %v2608, %v2907
      %v2909 = vpop.f32.mrf.mxu0
      %v2910 = vpop.f32.mrf.mxu0
      %v2911 = vadd.f32 %v2611, %v2910
      %v2912 = vpop.f32.mrf.mxu0
      %2913 = vmatprep.mubr.bf16.mxu0 %v1936
      %2914 = vmatmul.mubr.bf16.gmra.mxu0 %v1864
      %v2915 = vpop.f32.mrf.mxu0
      %v2916 = vadd.f32 %v2616, %v2915
      %v2917 = vpop.f32.mrf.mxu0
      %v2918 = vpop.f32.mrf.mxu0
      %v2919 = vadd.f32 %v2619, %v2918
      %v2920 = vpop.f32.mrf.mxu0
      %2921 = vmatprep.mubr.bf16.mxu0 %v1940
      %2922 = vmatmul.mubr.bf16.gmra.mxu0 %v1868
      %v2923 = vpop.f32.mrf.mxu0
      %v2924 = vadd.f32 %v2624, %v2923
      %v2925 = vpop.f32.mrf.mxu0
      %v2926 = vpop.f32.mrf.mxu0
      %v2927 = vadd.f32 %v2627, %v2926
      %v2928 = vpop.f32.mrf.mxu0
      %2929 = vmatprep.mubr.bf16.mxu0 %v1944
      %2930 = vmatmul.mubr.bf16.gmra.mxu0 %v1872
      %v2931 = vpop.f32.mrf.mxu0
      %v2932 = vadd.f32 %v2632, %v2931
      %v2933 = vpop.f32.mrf.mxu0
      %v2934 = vpop.f32.mrf.mxu0
      %v2935 = vadd.f32 %v2635, %v2934
      %v2936 = vpop.f32.mrf.mxu0
      %2937 = vdwg.mxu0
      %2938 = vmatprep.subr.bf16.mxu0 0
      %2939 = vmatpush1.bf16.msra.mxu0 0
      %2940 = vmatprep.subr.bf16.mxu0 0
      %2941 = vmatpush1.bf16.msra.mxu0 0
      %2942 = vmatprep.subr.bf16.mxu0 0
      %2943 = vmatpush1.bf16.msra.mxu0 0
      %2944 = vmatprep.subr.bf16.mxu0 0
      %2945 = vmatpush1.bf16.msra.mxu0 0
      %2946 = vmatprep.subr.bf16.mxu0 0
      %2947 = vmatpush1.bf16.msra.mxu0 %v2737
      %2948 = vmatprep.subr.bf16.mxu0 0
      %2949 = vmatpush1.bf16.msra.mxu0 %v2736
      %2950 = vmatprep.subr.bf16.mxu0 0
      %2951 = vmatpush1.bf16.msra.mxu0 %v2735
      %2952 = vmatprep.subr.bf16.mxu0 0
      %2953 = vmatpush1.bf16.msra.mxu0 %v2734
      %2954 = vmatprep.subr.bf16.mxu0 0
      %2955 = vmatpush2.bf16.msra.mxu0 0
      %2956 = vmatprep.subr.bf16.mxu0 0
      %2957 = vmatpush2.bf16.msra.mxu0 0
      %2958 = vmatprep.subr.bf16.mxu0 0
      %2959 = vmatpush2.bf16.msra.mxu0 0
      %2960 = vmatprep.subr.bf16.mxu0 0
      %2961 = vmatpush2.bf16.msra.mxu0 0
      %2962 = vmatprep.subr.bf16.mxu0 0
      %2963 = vmatpush2.bf16.msra.mxu0 0
      %2964 = vmatprep.subr.bf16.mxu0 0
      %2965 = vmatpush2.bf16.msra.mxu0 0
      %2966 = vmatprep.subr.bf16.mxu0 0
      %2967 = vmatpush2.bf16.msra.mxu0 0
      %2968 = vmatprep.subr.bf16.mxu0 0
      %2969 = vmatpush2.bf16.msra.mxu0 0
      %2970 = vmatprep.mubr.bf16.mxu0 0
      %2971 = vmatmul.mubr.bf16.gmra.mxu0 %v2759
      %v2972 = vpop.f32.mrf.mxu0
      %v2973 = vadd.f32 %v2796, %v2972
      %v2974 = vpop.f32.mrf.mxu0
      %v2975 = vpop.f32.mrf.mxu0
      %v2976 = vadd.f32 %v2799, %v2975
      %v2977 = vpop.f32.mrf.mxu0
      %2978 = vmatprep.mubr.bf16.mxu0 0
      %2979 = vmatmul.mubr.bf16.gmra.mxu0 %v2231
      %v2980 = vpop.f32.mrf.mxu0
      %v2981 = vadd.f32 %v2804, %v2980
      %v2982 = vpop.f32.mrf.mxu0
      %v2983 = vpop.f32.mrf.mxu0
      %v2984 = vadd.f32 %v2807, %v2983
      %v2985 = vpop.f32.mrf.mxu0
      %2986 = vmatprep.mubr.bf16.mxu0 0
      %2987 = vmatmul.mubr.bf16.gmra.mxu0 %v2234
      %v2988 = vpop.f32.mrf.mxu0
      %v2989 = vadd.f32 %v2812, %v2988
      %v2990 = vpop.f32.mrf.mxu0
      %v2991 = vpop.f32.mrf.mxu0
      %v2992 = vadd.f32 %v2815, %v2991
      %v2993 = vpop.f32.mrf.mxu0
      %2994 = vmatprep.mubr.bf16.mxu0 0
      %2995 = vmatmul.mubr.bf16.gmra.mxu0 %v2237
      %v2996 = vpop.f32.mrf.mxu0
      %v2997 = vadd.f32 %v2820, %v2996
      %v2998 = vpop.f32.mrf.mxu0
      %v2999 = vpop.f32.mrf.mxu0
      %v3000 = vadd.f32 %v2823, %v2999
      %v3001 = vpop.f32.mrf.mxu0
      %3002 = vmatprep.mubr.bf16.mxu0 0
      %3003 = vmatmul.mubr.bf16.gmra.mxu0 %v2240
      %v3004 = vpop.f32.mrf.mxu0
      %v3005 = vadd.f32 %v2828, %v3004
      %v3006 = vpop.f32.mrf.mxu0
      %v3007 = vpop.f32.mrf.mxu0
      %v3008 = vadd.f32 %v2831, %v3007
      %v3009 = vpop.f32.mrf.mxu0
      %3010 = vmatprep.mubr.bf16.mxu0 0
      %3011 = vmatmul.mubr.bf16.gmra.mxu0 %v2243
      %v3012 = vpop.f32.mrf.mxu0
      %v3013 = vadd.f32 %v2836, %v3012
      %v3014 = vpop.f32.mrf.mxu0
      %v3015 = vpop.f32.mrf.mxu0
      %v3016 = vadd.f32 %v2839, %v3015
      %v3017 = vpop.f32.mrf.mxu0
      %3018 = vmatprep.mubr.bf16.mxu0 0
      %3019 = vmatmul.mubr.bf16.gmra.mxu0 %v2246
      %v3020 = vpop.f32.mrf.mxu0
      %v3021 = vadd.f32 %v2844, %v3020
      %v3022 = vpop.f32.mrf.mxu0
      %v3023 = vpop.f32.mrf.mxu0
      %v3024 = vadd.f32 %v2847, %v3023
      %v3025 = vpop.f32.mrf.mxu0
      %3026 = vmatprep.mubr.bf16.mxu0 0
      %3027 = vmatmul.mubr.bf16.gmra.mxu0 %v2249
      %v3028 = vpop.f32.mrf.mxu0
      %v3029 = vadd.f32 %v2852, %v3028
      %v3030 = vpop.f32.mrf.mxu0
      %v3031 = vpop.f32.mrf.mxu0
      %v3032 = vadd.f32 %v2855, %v3031
      %v3033 = vpop.f32.mrf.mxu0
      %3034 = vmatprep.mubr.bf16.mxu0 0
      %3035 = vmatmul.mubr.bf16.gmra.mxu0 %v2252
      %v3036 = vpop.f32.mrf.mxu0
      %v3037 = vadd.f32 %v2860, %v3036
      %v3038 = vpop.f32.mrf.mxu0
      %v3039 = vpop.f32.mrf.mxu0
      %v3040 = vadd.f32 %v2863, %v3039
      %v3041 = vpop.f32.mrf.mxu0
      %3042 = vmatprep.mubr.bf16.mxu0 0
      %3043 = vmatmul.mubr.bf16.gmra.mxu0 %v2255
      %v3044 = vpop.f32.mrf.mxu0
      %v3045 = vadd.f32 %v2868, %v3044
      %v3046 = vpop.f32.mrf.mxu0
      %v3047 = vpop.f32.mrf.mxu0
      %v3048 = vadd.f32 %v2871, %v3047
      %v3049 = vpop.f32.mrf.mxu0
      %3050 = vmatprep.mubr.bf16.mxu0 0
      %3051 = vmatmul.mubr.bf16.gmra.mxu0 %v2258
      %v3052 = vpop.f32.mrf.mxu0
      %v3053 = vadd.f32 %v2876, %v3052
      %v3054 = vpop.f32.mrf.mxu0
      %v3055 = vpop.f32.mrf.mxu0
      %v3056 = vadd.f32 %v2879, %v3055
      %v3057 = vpop.f32.mrf.mxu0
      %3058 = vmatprep.mubr.bf16.mxu0 0
      %3059 = vmatmul.mubr.bf16.gmra.mxu0 %v2261
      %v3060 = vpop.f32.mrf.mxu0
      %v3061 = vadd.f32 %v2884, %v3060
      %v3062 = vpop.f32.mrf.mxu0
      %v3063 = vpop.f32.mrf.mxu0
      %v3064 = vadd.f32 %v2887, %v3063
      %v3065 = vpop.f32.mrf.mxu0
      %3066 = vmatprep.mubr.bf16.mxu0 0
      %3067 = vmatmul.mubr.bf16.gmra.mxu0 %v2264
      %v3068 = vpop.f32.mrf.mxu0
      %v3069 = vadd.f32 %v2892, %v3068
      %v3070 = vpop.f32.mrf.mxu0
      %v3071 = vpop.f32.mrf.mxu0
      %v3072 = vadd.f32 %v2895, %v3071
      %v3073 = vpop.f32.mrf.mxu0
      %3074 = vmatprep.mubr.bf16.mxu0 0
      %3075 = vmatmul.mubr.bf16.gmra.mxu0 %v2267
      %v3076 = vpop.f32.mrf.mxu0
      %v3077 = vadd.f32 %v2900, %v3076
      %v3078 = vpop.f32.mrf.mxu0
      %v3079 = vpop.f32.mrf.mxu0
      %v3080 = vadd.f32 %v2903, %v3079
      %v3081 = vpop.f32.mrf.mxu0
      %3082 = vmatprep.mubr.bf16.mxu0 0
      %3083 = vmatmul.mubr.bf16.gmra.mxu0 %v2270
      %v3084 = vpop.f32.mrf.mxu0
      %v3085 = vadd.f32 %v2908, %v3084
      %v3086 = vpop.f32.mrf.mxu0
      %v3087 = vpop.f32.mrf.mxu0
      %v3088 = vadd.f32 %v2911, %v3087
      %v3089 = vpop.f32.mrf.mxu0
      %3090 = vmatprep.mubr.bf16.mxu0 0
      %3091 = vmatmul.mubr.bf16.gmra.mxu0 %v2273
      %v3092 = vpop.f32.mrf.mxu0
      %v3093 = vadd.f32 %v2916, %v3092
      %v3094 = vpop.f32.mrf.mxu0
      %v3095 = vpop.f32.mrf.mxu0
      %v3096 = vadd.f32 %v2919, %v3095
      %v3097 = vpop.f32.mrf.mxu0
      %3098 = vmatprep.mubr.bf16.mxu0 0
      %3099 = vmatmul.mubr.bf16.gmra.mxu0 %v2276
      %v3100 = vpop.f32.mrf.mxu0
      %v3101 = vadd.f32 %v2924, %v3100
      %v3102 = vpop.f32.mrf.mxu0
      %v3103 = vpop.f32.mrf.mxu0
      %v3104 = vadd.f32 %v2927, %v3103
      %v3105 = vpop.f32.mrf.mxu0
      %3106 = vmatprep.mubr.bf16.mxu0 0
      %3107 = vmatmul.mubr.bf16.gmra.mxu0 %v2279
      %v3108 = vpop.f32.mrf.mxu0
      %v3109 = vadd.f32 %v2932, %v3108
      %v3110 = vpop.f32.mrf.mxu0
      %v3111 = vpop.f32.mrf.mxu0
      %v3112 = vadd.f32 %v2935, %v3111
      %v3113 = vpop.f32.mrf.mxu0
      %3114 = vdwg.mxu0
      %v3116 = vshrl.u32 %v430, 16
      %v3118 = vrot.slane %v3116, 4
      %v3119 = vshll.u32 %v430, 16
      %v3121 = vrot.slane %v3119, 5
      %v3122 = vor.u32 %v3118, %v3121
      %v3123 = vrot.slane %v3122, 4
      %v3125 = vshll.u32 %v431, 16
      %v3127 = vrot.slane %v3125, 5
      %v3128 = vsel %vm441, %v3123, %v3127
      %v3129 = vshrl.u32 %v431, 16
      %v3131 = vrot.slane %v3129, 4
      %v3132 = vor.u32 %v3131, %v3127
      %v3133 = vrot.slane %v3132, 4
      %v3135 = vshll.u32 %v432, 16
      %v3137 = vrot.slane %v3135, 5
      %v3138 = vsel %vm441, %v3133, %v3137
      %v3142 = vrot.slane %v430, 5
      %v3143 = vrot.slane %v3142, 4
      %v3144 = vrot.slane %v431, 5
      %v3145 = vsel %vm930, %v3143, %v3144
      %v3146 = vrot.slane %v3144, 4
      %v3147 = vrot.slane %v432, 5
      %v3148 = vsel %vm930, %v3146, %v3147
      %v3149 = vrot.slane %v3116, 5
      %v3150 = vrot.slane %v3119, 6
      %v3151 = vor.u32 %v3149, %v3150
      %v3152 = vrot.slane %v3151, 4
      %v3153 = vrot.slane %v3129, 5
      %v3154 = vrot.slane %v3125, 6
      %v3155 = vor.u32 %v3153, %v3154
      %v3156 = vsel %vm1059, %v3152, %v3155
      %v3157 = vrot.slane %v3155, 4
      %v3158 = vshrl.u32 %v432, 16
      %v3160 = vrot.slane %v3158, 5
      %v3161 = vrot.slane %v3135, 6
      %v3162 = vor.u32 %v3160, %v3161
      %v3163 = vsel %vm1059, %v3157, %v3162
      %v3164 = vrot.slane %v430, 6
      %v3165 = vrot.slane %v3164, 4
      %v3166 = vrot.slane %v431, 6
      %v3167 = vsel %vm1332, %v3165, %v3166
      %v3168 = vrot.slane %v3166, 4
      %v3169 = vrot.slane %v432, 6
      %v3170 = vsel %vm1332, %v3168, %v3169
      %v3171 = vunpack.c.l.b16 %v430
      %v3172 = vunpack.c.l.b16 %v431
      %v3173 = vpack.c.b16 %v3172, %v3171
      %v3174 = vunpack.c.l.b16 %v3128
      %v3175 = vunpack.c.l.b16 %v3138
      %v3176 = vpack.c.b16 %v3175, %v3174
      %3177 = vrot.lane.b32.xlu0 %v3176, 64
      %v3178 = vpop.permute.xlu0 %3177
      %v3179 = vunpack.c.l.b16 %v3145
      %v3180 = vunpack.c.l.b16 %v3148
      %v3181 = vpack.c.b16 %v3180, %v3179
      %v3182 = vunpack.c.l.b16 %v3156
      %v3183 = vunpack.c.l.b16 %v3163
      %v3184 = vpack.c.b16 %v3183, %v3182
      %3185 = vrot.lane.b32.xlu0 %v3184, 64
      %v3186 = vpop.permute.xlu0 %3185
      %v3187 = vunpack.c.l.b16 %v3167
      %v3188 = vunpack.c.l.b16 %v3170
      %v3189 = vpack.c.b16 %v3188, %v3187
      %v3192 = vsel %vm1801, %v3173, %v3178
      %v3196 = vsel %vm1801, %v3181, %v3186
      %s3198 = scalar_lea.vmem %s1, 320
      %v3199 = vld [vmem:[%s3198] sm:$0xf]
      %v3200 = vld [vmem:[%s3198 + $0x4] sm:$0xf]
      %v3201 = vld [vmem:[%s3198 + $0x8] sm:$0xf]
      %v3202 = vld [vmem:[%s3198 + $0xc] sm:$0xf]
      %v3203 = vld [vmem:[%s3198 + $0x10] sm:$0xf]
      %v3204 = vld [vmem:[%s3198 + $0x14] sm:$0xf]
      %v3205 = vld [vmem:[%s3198 + $0x18] sm:$0xf]
      %v3206 = vld [vmem:[%s3198 + $0x1c] sm:$0xf]
      %v3207 = vld [vmem:[%s3198 + $0x20] sm:$0xf]
      %v3208 = vld [vmem:[%s3198 + $0x24] sm:$0xf]
      %v3209 = vld [vmem:[%s3198 + $0x28] sm:$0xf]
      %v3210 = vld [vmem:[%s3198 + $0x2c] sm:$0xf]
      %v3211 = vld [vmem:[%s3198 + $0x30] sm:$0xf]
      %v3212 = vld [vmem:[%s3198 + $0x34] sm:$0xf]
      %v3213 = vld [vmem:[%s3198 + $0x38] sm:$0xf]
      %v3214 = vld [vmem:[%s3198 + $0x3c] sm:$0xf]
      %v3215 = vld [vmem:[%s3198 + $0x40] sm:$0xf]
      %v3216 = vld [vmem:[%s3198 + $0x44] sm:$0xf]
      %v3217 = vld [vmem:[%s3198 + $0x48] sm:$0xf]
      %v3218 = vld [vmem:[%s3198 + $0x4c] sm:$0xf]
      %v3219 = vld [vmem:[%s3198 + $0x50] sm:$0xf]
      %v3220 = vld [vmem:[%s3198 + $0x54] sm:$0xf]
      %v3221 = vld [vmem:[%s3198 + $0x58] sm:$0xf]
      %v3222 = vld [vmem:[%s3198 + $0x5c] sm:$0xf]
      %v3223 = vld [vmem:[%s3198 + $0x60] sm:$0xf]
      %v3224 = vld [vmem:[%s3198 + $0x64] sm:$0xf]
      %v3225 = vld [vmem:[%s3198 + $0x68] sm:$0xf]
      %v3226 = vld [vmem:[%s3198 + $0x6c] sm:$0xf]
      %v3227 = vld [vmem:[%s3198 + $0x70] sm:$0xf]
      %v3228 = vld [vmem:[%s3198 + $0x74] sm:$0xf]
      %v3229 = vld [vmem:[%s3198 + $0x78] sm:$0xf]
      %v3230 = vld [vmem:[%s3198 + $0x7c] sm:$0xf]
      %v3231 = vld [vmem:[%s3198 + $0x80] sm:$0xf]
      %v3232 = vld [vmem:[%s3198 + $0x84] sm:$0xf]
      %v3233 = vld [vmem:[%s3198 + $0x88] sm:$0xf]
      %v3234 = vld [vmem:[%s3198 + $0x8c] sm:$0xf]
      %v3235 = vld [vmem:[%s3198 + $0x90] sm:$0xf]
      %v3236 = vld [vmem:[%s3198 + $0x94] sm:$0xf]
      %v3237 = vld [vmem:[%s3198 + $0x98] sm:$0xf]
      %v3238 = vld [vmem:[%s3198 + $0x9c] sm:$0xf]
      %v3279 = vunpack.c.l.b16 %v3199
      %v3280 = vunpack.c.l.b16 %v3200
      %v3281 = vunpack.c.l.b16 %v3201
      %v3282 = vunpack.c.l.b16 %v3202
      %v3283 = vunpack.c.l.b16 %v3203
      %v3284 = vunpack.c.l.b16 %v3204
      %v3285 = vunpack.c.l.b16 %v3205
      %v3286 = vunpack.c.l.b16 %v3206
      %v3287 = vunpack.c.l.b16 %v3207
      %v3288 = vunpack.c.l.b16 %v3208
      %v3289 = vunpack.c.l.b16 %v3209
      %v3290 = vunpack.c.l.b16 %v3210
      %v3291 = vunpack.c.l.b16 %v3211
      %v3292 = vunpack.c.l.b16 %v3212
      %v3293 = vunpack.c.l.b16 %v3213
      %v3294 = vunpack.c.l.b16 %v3214
      %v3295 = vunpack.c.l.b16 %v3215
      %v3296 = vunpack.c.l.b16 %v3216
      %v3297 = vunpack.c.l.b16 %v3217
      %v3298 = vunpack.c.l.b16 %v3218
      %v3299 = vunpack.c.l.b16 %v3219
      %v3300 = vunpack.c.l.b16 %v3220
      %v3301 = vunpack.c.l.b16 %v3221
      %v3302 = vunpack.c.l.b16 %v3222
      %v3303 = vunpack.c.l.b16 %v3223
      %v3304 = vunpack.c.l.b16 %v3224
      %v3305 = vunpack.c.l.b16 %v3225
      %v3306 = vunpack.c.l.b16 %v3226
      %v3307 = vunpack.c.l.b16 %v3227
      %v3308 = vunpack.c.l.b16 %v3228
      %v3309 = vunpack.c.l.b16 %v3229
      %v3310 = vunpack.c.l.b16 %v3230
      %v3311 = vunpack.c.l.b16 %v3231
      %v3312 = vunpack.c.l.b16 %v3232
      %v3313 = vunpack.c.l.b16 %v3233
      %v3314 = vunpack.c.l.b16 %v3234
      %v3315 = vunpack.c.l.b16 %v3235
      %v3316 = vunpack.c.l.b16 %v3236
      %v3317 = vunpack.c.l.b16 %v3237
      %v3318 = vunpack.c.l.b16 %v3238
      %v3319 = vpack.c.b16 %v3280, %v3279
      %v3320 = vpack.c.b16 %v3282, %v3281
      %v3321 = vpack.c.b16 %v3284, %v3283
      %v3322 = vpack.c.b16 %v3286, %v3285
      %v3323 = vpack.c.b16 %v3288, %v3287
      %v3324 = vpack.c.b16 %v3290, %v3289
      %v3325 = vpack.c.b16 %v3292, %v3291
      %v3326 = vpack.c.b16 %v3294, %v3293
      %v3327 = vpack.c.b16 %v3296, %v3295
      %v3328 = vpack.c.b16 %v3298, %v3297
      %v3329 = vpack.c.b16 %v3300, %v3299
      %v3330 = vpack.c.b16 %v3302, %v3301
      %v3331 = vpack.c.b16 %v3304, %v3303
      %v3332 = vpack.c.b16 %v3306, %v3305
      %v3333 = vpack.c.b16 %v3308, %v3307
      %v3334 = vpack.c.b16 %v3310, %v3309
      %v3335 = vpack.c.b16 %v3312, %v3311
      %v3336 = vpack.c.b16 %v3314, %v3313
      %v3337 = vpack.c.b16 %v3316, %v3315
      %v3338 = vpack.c.b16 %v3318, %v3317
      %v3360 = vsel %vm1801, %v3189, 0
      %3362 = vmatprep.subr.bf16.mxu0 0
      %3363 = vmatpush1.bf16.msra.mxu0 %v3326
      %3364 = vmatprep.subr.bf16.mxu0 0
      %3365 = vmatpush1.bf16.msra.mxu0 %v3325
      %3366 = vmatprep.subr.bf16.mxu0 0
      %3367 = vmatpush1.bf16.msra.mxu0 %v3324
      %3368 = vmatprep.subr.bf16.mxu0 0
      %3369 = vmatpush1.bf16.msra.mxu0 %v3323
      %3370 = vmatprep.subr.bf16.mxu0 0
      %3371 = vmatpush1.bf16.msra.mxu0 %v3322
      %3372 = vmatprep.subr.bf16.mxu0 0
      %3373 = vmatpush1.bf16.msra.mxu0 %v3321
      %3374 = vmatprep.subr.bf16.mxu0 0
      %3375 = vmatpush1.bf16.msra.mxu0 %v3320
      %3376 = vmatprep.subr.bf16.mxu0 0
      %3377 = vmatpush1.bf16.msra.mxu0 %v3319
      %3378 = vmatprep.subr.bf16.mxu0 0
      %3379 = vmatpush2.bf16.msra.mxu0 %v3334
      %3380 = vmatprep.subr.bf16.mxu0 0
      %3381 = vmatpush2.bf16.msra.mxu0 %v3333
      %3382 = vmatprep.subr.bf16.mxu0 0
      %3383 = vmatpush2.bf16.msra.mxu0 %v3332
      %3384 = vmatprep.subr.bf16.mxu0 0
      %3385 = vmatpush2.bf16.msra.mxu0 %v3331
      %3386 = vmatprep.subr.bf16.mxu0 0
      %3387 = vmatpush2.bf16.msra.mxu0 %v3330
      %3388 = vmatprep.subr.bf16.mxu0 0
      %3389 = vmatpush2.bf16.msra.mxu0 %v3329
      %3390 = vmatprep.subr.bf16.mxu0 0
      %3391 = vmatpush2.bf16.msra.mxu0 %v3328
      %3392 = vmatprep.subr.bf16.mxu0 0
      %3393 = vmatpush2.bf16.msra.mxu0 %v3327
      %3394 = vmatprep.mubr.bf16.mxu0 %v1884
      %3395 = vmatmul.mubr.bf16.gmra.mxu0 %v1812
      %v3396 = vpop.f32.mrf.mxu0
      %v3397 = vadd.f32 0.0, %v3396
      %v3398 = vpop.f32.mrf.mxu0
      %v3399 = vpop.f32.mrf.mxu0
      %v3400 = vadd.f32 0.0, %v3399
      %v3401 = vpop.f32.mrf.mxu0
      %3402 = vmatprep.mubr.bf16.mxu0 %v1888
      %3403 = vmatmul.mubr.bf16.gmra.mxu0 %v1816
      %v3404 = vpop.f32.mrf.mxu0
      %v3405 = vadd.f32 0.0, %v3404
      %v3406 = vpop.f32.mrf.mxu0
      %v3407 = vpop.f32.mrf.mxu0
      %v3408 = vadd.f32 0.0, %v3407
      %v3409 = vpop.f32.mrf.mxu0
      %3410 = vmatprep.mubr.bf16.mxu0 %v1892
      %3411 = vmatmul.mubr.bf16.gmra.mxu0 %v1820
      %v3412 = vpop.f32.mrf.mxu0
      %v3413 = vadd.f32 0.0, %v3412
      %v3414 = vpop.f32.mrf.mxu0
      %v3415 = vpop.f32.mrf.mxu0
      %v3416 = vadd.f32 0.0, %v3415
      %v3417 = vpop.f32.mrf.mxu0
      %3418 = vmatprep.mubr.bf16.mxu0 %v1896
      %3419 = vmatmul.mubr.bf16.gmra.mxu0 %v1824
      %v3420 = vpop.f32.mrf.mxu0
      %v3421 = vadd.f32 0.0, %v3420
      %v3422 = vpop.f32.mrf.mxu0
      %v3423 = vpop.f32.mrf.mxu0
      %v3424 = vadd.f32 0.0, %v3423
      %v3425 = vpop.f32.mrf.mxu0
      %3426 = vmatprep.mubr.bf16.mxu0 %v1900
      %3427 = vmatmul.mubr.bf16.gmra.mxu0 %v1828
      %v3428 = vpop.f32.mrf.mxu0
      %v3429 = vadd.f32 0.0, %v3428
      %v3430 = vpop.f32.mrf.mxu0
      %v3431 = vpop.f32.mrf.mxu0
      %v3432 = vadd.f32 0.0, %v3431
      %v3433 = vpop.f32.mrf.mxu0
      %3434 = vmatprep.mubr.bf16.mxu0 %v1904
      %3435 = vmatmul.mubr.bf16.gmra.mxu0 %v1832
      %v3436 = vpop.f32.mrf.mxu0
      %v3437 = vadd.f32 0.0, %v3436
      %v3438 = vpop.f32.mrf.mxu0
      %v3439 = vpop.f32.mrf.mxu0
      %v3440 = vadd.f32 0.0, %v3439
      %v3441 = vpop.f32.mrf.mxu0
      %3442 = vmatprep.mubr.bf16.mxu0 %v1908
      %3443 = vmatmul.mubr.bf16.gmra.mxu0 %v1836
      %v3444 = vpop.f32.mrf.mxu0
      %v3445 = vadd.f32 0.0, %v3444
      %v3446 = vpop.f32.mrf.mxu0
      %v3447 = vpop.f32.mrf.mxu0
      %v3448 = vadd.f32 0.0, %v3447
      %v3449 = vpop.f32.mrf.mxu0
      %3450 = vmatprep.mubr.bf16.mxu0 %v1912
      %3451 = vmatmul.mubr.bf16.gmra.mxu0 %v1840
      %v3452 = vpop.f32.mrf.mxu0
      %v3453 = vadd.f32 0.0, %v3452
      %v3454 = vpop.f32.mrf.mxu0
      %v3455 = vpop.f32.mrf.mxu0
      %v3456 = vadd.f32 0.0, %v3455
      %v3457 = vpop.f32.mrf.mxu0
      %3458 = vmatprep.mubr.bf16.mxu0 %v1916
      %3459 = vmatmul.mubr.bf16.gmra.mxu0 %v1844
      %v3460 = vpop.f32.mrf.mxu0
      %v3461 = vadd.f32 0.0, %v3460
      %v3462 = vpop.f32.mrf.mxu0
      %v3463 = vpop.f32.mrf.mxu0
      %v3464 = vadd.f32 0.0, %v3463
      %v3465 = vpop.f32.mrf.mxu0
      %3466 = vmatprep.mubr.bf16.mxu0 %v1920
      %3467 = vmatmul.mubr.bf16.gmra.mxu0 %v1848
      %v3468 = vpop.f32.mrf.mxu0
      %v3469 = vadd.f32 0.0, %v3468
      %v3470 = vpop.f32.mrf.mxu0
      %v3471 = vpop.f32.mrf.mxu0
      %v3472 = vadd.f32 0.0, %v3471
      %v3473 = vpop.f32.mrf.mxu0
      %3474 = vmatprep.mubr.bf16.mxu0 %v1924
      %3475 = vmatmul.mubr.bf16.gmra.mxu0 %v1852
      %v3476 = vpop.f32.mrf.mxu0
      %v3477 = vadd.f32 0.0, %v3476
      %v3478 = vpop.f32.mrf.mxu0
      %v3479 = vpop.f32.mrf.mxu0
      %v3480 = vadd.f32 0.0, %v3479
      %v3481 = vpop.f32.mrf.mxu0
      %3482 = vmatprep.mubr.bf16.mxu0 %v1928
      %3483 = vmatmul.mubr.bf16.gmra.mxu0 %v1856
      %v3484 = vpop.f32.mrf.mxu0
      %v3485 = vadd.f32 0.0, %v3484
      %v3486 = vpop.f32.mrf.mxu0
      %v3487 = vpop.f32.mrf.mxu0
      %v3488 = vadd.f32 0.0, %v3487
      %v3489 = vpop.f32.mrf.mxu0
      %3490 = vmatprep.mubr.bf16.mxu0 %v1932
      %3491 = vmatmul.mubr.bf16.gmra.mxu0 %v1860
      %v3492 = vpop.f32.mrf.mxu0
      %v3493 = vadd.f32 0.0, %v3492
      %v3494 = vpop.f32.mrf.mxu0
      %v3495 = vpop.f32.mrf.mxu0
      %v3496 = vadd.f32 0.0, %v3495
      %v3497 = vpop.f32.mrf.mxu0
      %3498 = vmatprep.mubr.bf16.mxu0 %v1936
      %3499 = vmatmul.mubr.bf16.gmra.mxu0 %v1864
      %v3500 = vpop.f32.mrf.mxu0
      %v3501 = vadd.f32 0.0, %v3500
      %v3502 = vpop.f32.mrf.mxu0
      %v3503 = vpop.f32.mrf.mxu0
      %v3504 = vadd.f32 0.0, %v3503
      %v3505 = vpop.f32.mrf.mxu0
      %3506 = vmatprep.mubr.bf16.mxu0 %v1940
      %3507 = vmatmul.mubr.bf16.gmra.mxu0 %v1868
      %v3508 = vpop.f32.mrf.mxu0
      %v3509 = vadd.f32 0.0, %v3508
      %v3510 = vpop.f32.mrf.mxu0
      %v3511 = vpop.f32.mrf.mxu0
      %v3512 = vadd.f32 0.0, %v3511
      %v3513 = vpop.f32.mrf.mxu0
      %3514 = vmatprep.mubr.bf16.mxu0 %v1944
      %3515 = vmatmul.mubr.bf16.gmra.mxu0 %v1872
      %v3516 = vpop.f32.mrf.mxu0
      %v3517 = vadd.f32 0.0, %v3516
      %v3518 = vpop.f32.mrf.mxu0
      %v3519 = vpop.f32.mrf.mxu0
      %v3520 = vadd.f32 0.0, %v3519
      %v3521 = vpop.f32.mrf.mxu0
      %3522 = vmatprep.mubr.bf16.mxu0 %v2067
      %3523 = vmatmul.mubr.bf16.gmra.mxu0 %v2063
      %v3524 = vpop.f32.mrf.mxu0
      %v3525 = vadd.f32 0.0, %v3524
      %v3526 = vpop.f32.mrf.mxu0
      %v3527 = vpop.f32.mrf.mxu0
      %v3528 = vadd.f32 0.0, %v3527
      %v3529 = vpop.f32.mrf.mxu0
      %3530 = vmatprep.mubr.bf16.mxu0 %v3196
      %3531 = vmatmul.mubr.bf16.gmra.mxu0 %v3192
      %v3532 = vpop.f32.mrf.mxu0
      %v3533 = vadd.f32 0.0, %v3532
      %v3534 = vpop.f32.mrf.mxu0
      %v3535 = vpop.f32.mrf.mxu0
      %v3536 = vadd.f32 0.0, %v3535
      %v3537 = vpop.f32.mrf.mxu0
      %3538 = vdwg.mxu0
      %3539 = vmatprep.subr.bf16.mxu0 0
      %3540 = vmatpush1.bf16.msra.mxu0 0
      %3541 = vmatprep.subr.bf16.mxu0 0
      %3542 = vmatpush1.bf16.msra.mxu0 0
      %3543 = vmatprep.subr.bf16.mxu0 0
      %3544 = vmatpush1.bf16.msra.mxu0 0
      %3545 = vmatprep.subr.bf16.mxu0 0
      %3546 = vmatpush1.bf16.msra.mxu0 0
      %3547 = vmatprep.subr.bf16.mxu0 0
      %3548 = vmatpush1.bf16.msra.mxu0 %v3338
      %3549 = vmatprep.subr.bf16.mxu0 0
      %3550 = vmatpush1.bf16.msra.mxu0 %v3337
      %3551 = vmatprep.subr.bf16.mxu0 0
      %3552 = vmatpush1.bf16.msra.mxu0 %v3336
      %3553 = vmatprep.subr.bf16.mxu0 0
      %3554 = vmatpush1.bf16.msra.mxu0 %v3335
      %3555 = vmatprep.subr.bf16.mxu0 0
      %3556 = vmatpush2.bf16.msra.mxu0 0
      %3557 = vmatprep.subr.bf16.mxu0 0
      %3558 = vmatpush2.bf16.msra.mxu0 0
      %3559 = vmatprep.subr.bf16.mxu0 0
      %3560 = vmatpush2.bf16.msra.mxu0 0
      %3561 = vmatprep.subr.bf16.mxu0 0
      %3562 = vmatpush2.bf16.msra.mxu0 0
      %3563 = vmatprep.subr.bf16.mxu0 0
      %3564 = vmatpush2.bf16.msra.mxu0 0
      %3565 = vmatprep.subr.bf16.mxu0 0
      %3566 = vmatpush2.bf16.msra.mxu0 0
      %3567 = vmatprep.subr.bf16.mxu0 0
      %3568 = vmatpush2.bf16.msra.mxu0 0
      %3569 = vmatprep.subr.bf16.mxu0 0
      %3570 = vmatpush2.bf16.msra.mxu0 0
      %3571 = vmatprep.mubr.bf16.mxu0 0
      %3572 = vmatmul.mubr.bf16.gmra.mxu0 %v2234
      %v3573 = vpop.f32.mrf.mxu0
      %v3574 = vadd.f32 %v3397, %v3573
      %v3575 = vpop.f32.mrf.mxu0
      %v3576 = vpop.f32.mrf.mxu0
      %v3577 = vadd.f32 %v3400, %v3576
      %v3578 = vpop.f32.mrf.mxu0
      %3579 = vmatprep.mubr.bf16.mxu0 0
      %3580 = vmatmul.mubr.bf16.gmra.mxu0 %v2237
      %v3581 = vpop.f32.mrf.mxu0
      %v3582 = vadd.f32 %v3405, %v3581
      %v3583 = vpop.f32.mrf.mxu0
      %v3584 = vpop.f32.mrf.mxu0
      %v3585 = vadd.f32 %v3408, %v3584
      %v3586 = vpop.f32.mrf.mxu0
      %3587 = vmatprep.mubr.bf16.mxu0 0
      %3588 = vmatmul.mubr.bf16.gmra.mxu0 %v2240
      %v3589 = vpop.f32.mrf.mxu0
      %v3590 = vadd.f32 %v3413, %v3589
      %v3591 = vpop.f32.mrf.mxu0
      %v3592 = vpop.f32.mrf.mxu0
      %v3593 = vadd.f32 %v3416, %v3592
      %v3594 = vpop.f32.mrf.mxu0
      %3595 = vmatprep.mubr.bf16.mxu0 0
      %3596 = vmatmul.mubr.bf16.gmra.mxu0 %v2243
      %v3597 = vpop.f32.mrf.mxu0
      %v3598 = vadd.f32 %v3421, %v3597
      %v3599 = vpop.f32.mrf.mxu0
      %v3600 = vpop.f32.mrf.mxu0
      %v3601 = vadd.f32 %v3424, %v3600
      %v3602 = vpop.f32.mrf.mxu0
      %3603 = vmatprep.mubr.bf16.mxu0 0
      %3604 = vmatmul.mubr.bf16.gmra.mxu0 %v2246
      %v3605 = vpop.f32.mrf.mxu0
      %v3606 = vadd.f32 %v3429, %v3605
      %v3607 = vpop.f32.mrf.mxu0
      %v3608 = vpop.f32.mrf.mxu0
      %v3609 = vadd.f32 %v3432, %v3608
      %v3610 = vpop.f32.mrf.mxu0
      %3611 = vmatprep.mubr.bf16.mxu0 0
      %3612 = vmatmul.mubr.bf16.gmra.mxu0 %v2249
      %v3613 = vpop.f32.mrf.mxu0
      %v3614 = vadd.f32 %v3437, %v3613
      %v3615 = vpop.f32.mrf.mxu0
      %v3616 = vpop.f32.mrf.mxu0
      %v3617 = vadd.f32 %v3440, %v3616
      %v3618 = vpop.f32.mrf.mxu0
      %3619 = vmatprep.mubr.bf16.mxu0 0
      %3620 = vmatmul.mubr.bf16.gmra.mxu0 %v2252
      %v3621 = vpop.f32.mrf.mxu0
      %v3622 = vadd.f32 %v3445, %v3621
      %v3623 = vpop.f32.mrf.mxu0
      %v3624 = vpop.f32.mrf.mxu0
      %v3625 = vadd.f32 %v3448, %v3624
      %v3626 = vpop.f32.mrf.mxu0
      %3627 = vmatprep.mubr.bf16.mxu0 0
      %3628 = vmatmul.mubr.bf16.gmra.mxu0 %v2255
      %v3629 = vpop.f32.mrf.mxu0
      %v3630 = vadd.f32 %v3453, %v3629
      %v3631 = vpop.f32.mrf.mxu0
      %v3632 = vpop.f32.mrf.mxu0
      %v3633 = vadd.f32 %v3456, %v3632
      %v3634 = vpop.f32.mrf.mxu0
      %3635 = vmatprep.mubr.bf16.mxu0 0
      %3636 = vmatmul.mubr.bf16.gmra.mxu0 %v2258
      %v3637 = vpop.f32.mrf.mxu0
      %v3638 = vadd.f32 %v3461, %v3637
      %v3639 = vpop.f32.mrf.mxu0
      %v3640 = vpop.f32.mrf.mxu0
      %v3641 = vadd.f32 %v3464, %v3640
      %v3642 = vpop.f32.mrf.mxu0
      %3643 = vmatprep.mubr.bf16.mxu0 0
      %3644 = vmatmul.mubr.bf16.gmra.mxu0 %v2261
      %v3645 = vpop.f32.mrf.mxu0
      %v3646 = vadd.f32 %v3469, %v3645
      %v3647 = vpop.f32.mrf.mxu0
      %v3648 = vpop.f32.mrf.mxu0
      %v3649 = vadd.f32 %v3472, %v3648
      %v3650 = vpop.f32.mrf.mxu0
      %3651 = vmatprep.mubr.bf16.mxu0 0
      %3652 = vmatmul.mubr.bf16.gmra.mxu0 %v2264
      %v3653 = vpop.f32.mrf.mxu0
      %v3654 = vadd.f32 %v3477, %v3653
      %v3655 = vpop.f32.mrf.mxu0
      %v3656 = vpop.f32.mrf.mxu0
      %v3657 = vadd.f32 %v3480, %v3656
      %v3658 = vpop.f32.mrf.mxu0
      %3659 = vmatprep.mubr.bf16.mxu0 0
      %3660 = vmatmul.mubr.bf16.gmra.mxu0 %v2267
      %v3661 = vpop.f32.mrf.mxu0
      %v3662 = vadd.f32 %v3485, %v3661
      %v3663 = vpop.f32.mrf.mxu0
      %v3664 = vpop.f32.mrf.mxu0
      %v3665 = vadd.f32 %v3488, %v3664
      %v3666 = vpop.f32.mrf.mxu0
      %3667 = vmatprep.mubr.bf16.mxu0 0
      %3668 = vmatmul.mubr.bf16.gmra.mxu0 %v2270
      %v3669 = vpop.f32.mrf.mxu0
      %v3670 = vadd.f32 %v3493, %v3669
      %v3671 = vpop.f32.mrf.mxu0
      %v3672 = vpop.f32.mrf.mxu0
      %v3673 = vadd.f32 %v3496, %v3672
      %v3674 = vpop.f32.mrf.mxu0
      %3675 = vmatprep.mubr.bf16.mxu0 0
      %3676 = vmatmul.mubr.bf16.gmra.mxu0 %v2273
      %v3677 = vpop.f32.mrf.mxu0
      %v3678 = vadd.f32 %v3501, %v3677
      %v3679 = vpop.f32.mrf.mxu0
      %v3680 = vpop.f32.mrf.mxu0
      %v3681 = vadd.f32 %v3504, %v3680
      %v3682 = vpop.f32.mrf.mxu0
      %3683 = vmatprep.mubr.bf16.mxu0 0
      %3684 = vmatmul.mubr.bf16.gmra.mxu0 %v2276
      %v3685 = vpop.f32.mrf.mxu0
      %v3686 = vadd.f32 %v3509, %v3685
      %v3687 = vpop.f32.mrf.mxu0
      %v3688 = vpop.f32.mrf.mxu0
      %v3689 = vadd.f32 %v3512, %v3688
      %v3690 = vpop.f32.mrf.mxu0
      %3691 = vmatprep.mubr.bf16.mxu0 0
      %3692 = vmatmul.mubr.bf16.gmra.mxu0 %v2279
      %v3693 = vpop.f32.mrf.mxu0
      %v3694 = vadd.f32 %v3517, %v3693
      %v3695 = vpop.f32.mrf.mxu0
      %v3696 = vpop.f32.mrf.mxu0
      %v3697 = vadd.f32 %v3520, %v3696
      %v3698 = vpop.f32.mrf.mxu0
      %3699 = vmatprep.mubr.bf16.mxu0 0
      %3700 = vmatmul.mubr.bf16.gmra.mxu0 %v2282
      %v3701 = vpop.f32.mrf.mxu0
      %v3702 = vadd.f32 %v3525, %v3701
      %v3703 = vpop.f32.mrf.mxu0
      %v3704 = vpop.f32.mrf.mxu0
      %v3705 = vadd.f32 %v3528, %v3704
      %v3706 = vpop.f32.mrf.mxu0
      %3707 = vmatprep.mubr.bf16.mxu0 0
      %3708 = vmatmul.mubr.bf16.gmra.mxu0 %v3360
      %v3709 = vpop.f32.mrf.mxu0
      %v3710 = vadd.f32 %v3533, %v3709
      %v3711 = vpop.f32.mrf.mxu0
      %v3712 = vpop.f32.mrf.mxu0
      %v3713 = vadd.f32 %v3536, %v3712
      %v3714 = vpop.f32.mrf.mxu0
      %3715 = vdwg.mxu0
      %v3716 = vadd.f32 %v2973, %v3574
      %v3717 = vadd.f32 %v2976, %v3577
      %v3718 = vadd.f32 %v2981, %v3582
      %v3719 = vadd.f32 %v2984, %v3585
      %v3720 = vadd.f32 %v2989, %v3590
      %v3721 = vadd.f32 %v2992, %v3593
      %v3722 = vadd.f32 %v2997, %v3598
      %v3723 = vadd.f32 %v3000, %v3601
      %v3724 = vadd.f32 %v3005, %v3606
      %v3725 = vadd.f32 %v3008, %v3609
      %v3726 = vadd.f32 %v3013, %v3614
      %v3727 = vadd.f32 %v3016, %v3617
      %v3728 = vadd.f32 %v3021, %v3622
      %v3729 = vadd.f32 %v3024, %v3625
      %v3730 = vadd.f32 %v3029, %v3630
      %v3731 = vadd.f32 %v3032, %v3633
      %v3732 = vadd.f32 %v3037, %v3638
      %v3733 = vadd.f32 %v3040, %v3641
      %v3734 = vadd.f32 %v3045, %v3646
      %v3735 = vadd.f32 %v3048, %v3649
      %v3736 = vadd.f32 %v3053, %v3654
      %v3737 = vadd.f32 %v3056, %v3657
      %v3738 = vadd.f32 %v3061, %v3662
      %v3739 = vadd.f32 %v3064, %v3665
      %v3740 = vadd.f32 %v3069, %v3670
      %v3741 = vadd.f32 %v3072, %v3673
      %v3742 = vadd.f32 %v3077, %v3678
      %v3743 = vadd.f32 %v3080, %v3681
      %v3744 = vadd.f32 %v3085, %v3686
      %v3745 = vadd.f32 %v3088, %v3689
      %v3746 = vadd.f32 %v3093, %v3694
      %v3747 = vadd.f32 %v3096, %v3697
      %v3748 = vadd.f32 %v3101, %v3702
      %v3749 = vadd.f32 %v3104, %v3705
      %v3750 = vadd.f32 %v3109, %v3710
      %v3751 = vadd.f32 %v3112, %v3713
      %v3753 = vshrl.u32 %v433, 16
      %v3755 = vrot.slane %v3753, 4
      %v3756 = vshll.u32 %v433, 16
      %v3758 = vrot.slane %v3756, 5
      %v3759 = vor.u32 %v3755, %v3758
      %v3760 = vrot.slane %v3759, 4
      %v3762 = vshll.u32 %v434, 16
      %v3764 = vrot.slane %v3762, 5
      %v3765 = vsel %vm441, %v3760, %v3764
      %v3766 = vshrl.u32 %v434, 16
      %v3768 = vrot.slane %v3766, 4
      %v3769 = vor.u32 %v3768, %v3764
      %v3770 = vrot.slane %v3769, 4
      %v3772 = vshll.u32 %v435, 16
      %v3774 = vrot.slane %v3772, 5
      %v3775 = vsel %vm441, %v3770, %v3774
      %v3779 = vrot.slane %v433, 5
      %v3780 = vrot.slane %v3779, 4
      %v3781 = vrot.slane %v434, 5
      %v3782 = vsel %vm930, %v3780, %v3781
      %v3783 = vrot.slane %v3781, 4
      %v3784 = vrot.slane %v435, 5
      %v3785 = vsel %vm930, %v3783, %v3784
      %v3786 = vrot.slane %v3753, 5
      %v3787 = vrot.slane %v3756, 6
      %v3788 = vor.u32 %v3786, %v3787
      %v3789 = vrot.slane %v3788, 4
      %v3790 = vrot.slane %v3766, 5
      %v3791 = vrot.slane %v3762, 6
      %v3792 = vor.u32 %v3790, %v3791
      %v3793 = vsel %vm1059, %v3789, %v3792
      %v3794 = vrot.slane %v3792, 4
      %v3795 = vshrl.u32 %v435, 16
      %v3797 = vrot.slane %v3795, 5
      %v3798 = vrot.slane %v3772, 6
      %v3799 = vor.u32 %v3797, %v3798
      %v3800 = vsel %vm1059, %v3794, %v3799
      %v3801 = vrot.slane %v433, 6
      %v3802 = vrot.slane %v3801, 4
      %v3803 = vrot.slane %v434, 6
      %v3804 = vsel %vm1332, %v3802, %v3803
      %v3805 = vrot.slane %v3803, 4
      %v3806 = vrot.slane %v435, 6
      %v3807 = vsel %vm1332, %v3805, %v3806
      %v3808 = vunpack.c.l.b16 %v433
      %v3809 = vunpack.c.l.b16 %v434
      %v3810 = vpack.c.b16 %v3809, %v3808
      %v3811 = vunpack.c.l.b16 %v3765
      %v3812 = vunpack.c.l.b16 %v3775
      %v3813 = vpack.c.b16 %v3812, %v3811
      %3814 = vrot.lane.b32.xlu0 %v3813, 64
      %v3815 = vpop.permute.xlu0 %3814
      %v3816 = vunpack.c.l.b16 %v3782
      %v3817 = vunpack.c.l.b16 %v3785
      %v3818 = vpack.c.b16 %v3817, %v3816
      %v3819 = vunpack.c.l.b16 %v3793
      %v3820 = vunpack.c.l.b16 %v3800
      %v3821 = vpack.c.b16 %v3820, %v3819
      %3822 = vrot.lane.b32.xlu0 %v3821, 64
      %v3823 = vpop.permute.xlu0 %3822
      %v3824 = vunpack.c.l.b16 %v3804
      %v3825 = vunpack.c.l.b16 %v3807
      %v3826 = vpack.c.b16 %v3825, %v3824
      %v3829 = vsel %vm1801, %v3810, %v3815
      %v3833 = vsel %vm1801, %v3818, %v3823
      %s3835 = scalar_lea.vmem %s1, 480
      %v3836 = vld [vmem:[%s3835] sm:$0xf]
      %v3837 = vld [vmem:[%s3835 + $0x4] sm:$0xf]
      %v3838 = vld [vmem:[%s3835 + $0x8] sm:$0xf]
      %v3839 = vld [vmem:[%s3835 + $0xc] sm:$0xf]
      %v3840 = vld [vmem:[%s3835 + $0x10] sm:$0xf]
      %v3841 = vld [vmem:[%s3835 + $0x14] sm:$0xf]
      %v3842 = vld [vmem:[%s3835 + $0x18] sm:$0xf]
      %v3843 = vld [vmem:[%s3835 + $0x1c] sm:$0xf]
      %v3844 = vld [vmem:[%s3835 + $0x20] sm:$0xf]
      %v3845 = vld [vmem:[%s3835 + $0x24] sm:$0xf]
      %v3846 = vld [vmem:[%s3835 + $0x28] sm:$0xf]
      %v3847 = vld [vmem:[%s3835 + $0x2c] sm:$0xf]
      %v3848 = vld [vmem:[%s3835 + $0x30] sm:$0xf]
      %v3849 = vld [vmem:[%s3835 + $0x34] sm:$0xf]
      %v3850 = vld [vmem:[%s3835 + $0x38] sm:$0xf]
      %v3851 = vld [vmem:[%s3835 + $0x3c] sm:$0xf]
      %v3852 = vld [vmem:[%s3835 + $0x40] sm:$0xf]
      %v3853 = vld [vmem:[%s3835 + $0x44] sm:$0xf]
      %v3854 = vld [vmem:[%s3835 + $0x48] sm:$0xf]
      %v3855 = vld [vmem:[%s3835 + $0x4c] sm:$0xf]
      %v3856 = vld [vmem:[%s3835 + $0x50] sm:$0xf]
      %v3857 = vld [vmem:[%s3835 + $0x54] sm:$0xf]
      %v3858 = vld [vmem:[%s3835 + $0x58] sm:$0xf]
      %v3859 = vld [vmem:[%s3835 + $0x5c] sm:$0xf]
      %v3860 = vld [vmem:[%s3835 + $0x60] sm:$0xf]
      %v3861 = vld [vmem:[%s3835 + $0x64] sm:$0xf]
      %v3862 = vld [vmem:[%s3835 + $0x68] sm:$0xf]
      %v3863 = vld [vmem:[%s3835 + $0x6c] sm:$0xf]
      %v3864 = vld [vmem:[%s3835 + $0x70] sm:$0xf]
      %v3865 = vld [vmem:[%s3835 + $0x74] sm:$0xf]
      %v3866 = vld [vmem:[%s3835 + $0x78] sm:$0xf]
      %v3867 = vld [vmem:[%s3835 + $0x7c] sm:$0xf]
      %v3868 = vld [vmem:[%s3835 + $0x80] sm:$0xf]
      %v3869 = vld [vmem:[%s3835 + $0x84] sm:$0xf]
      %v3870 = vld [vmem:[%s3835 + $0x88] sm:$0xf]
      %v3871 = vld [vmem:[%s3835 + $0x8c] sm:$0xf]
      %v3872 = vld [vmem:[%s3835 + $0x90] sm:$0xf]
      %v3873 = vld [vmem:[%s3835 + $0x94] sm:$0xf]
      %v3874 = vld [vmem:[%s3835 + $0x98] sm:$0xf]
      %v3875 = vld [vmem:[%s3835 + $0x9c] sm:$0xf]
      %v3916 = vunpack.c.l.b16 %v3836
      %v3917 = vunpack.c.l.b16 %v3837
      %v3918 = vunpack.c.l.b16 %v3838
      %v3919 = vunpack.c.l.b16 %v3839
      %v3920 = vunpack.c.l.b16 %v3840
      %v3921 = vunpack.c.l.b16 %v3841
      %v3922 = vunpack.c.l.b16 %v3842
      %v3923 = vunpack.c.l.b16 %v3843
      %v3924 = vunpack.c.l.b16 %v3844
      %v3925 = vunpack.c.l.b16 %v3845
      %v3926 = vunpack.c.l.b16 %v3846
      %v3927 = vunpack.c.l.b16 %v3847
      %v3928 = vunpack.c.l.b16 %v3848
      %v3929 = vunpack.c.l.b16 %v3849
      %v3930 = vunpack.c.l.b16 %v3850
      %v3931 = vunpack.c.l.b16 %v3851
      %v3932 = vunpack.c.l.b16 %v3852
      %v3933 = vunpack.c.l.b16 %v3853
      %v3934 = vunpack.c.l.b16 %v3854
      %v3935 = vunpack.c.l.b16 %v3855
      %v3936 = vunpack.c.l.b16 %v3856
      %v3937 = vunpack.c.l.b16 %v3857
      %v3938 = vunpack.c.l.b16 %v3858
      %v3939 = vunpack.c.l.b16 %v3859
      %v3940 = vunpack.c.l.b16 %v3860
      %v3941 = vunpack.c.l.b16 %v3861
      %v3942 = vunpack.c.l.b16 %v3862
      %v3943 = vunpack.c.l.b16 %v3863
      %v3944 = vunpack.c.l.b16 %v3864
      %v3945 = vunpack.c.l.b16 %v3865
      %v3946 = vunpack.c.l.b16 %v3866
      %v3947 = vunpack.c.l.b16 %v3867
      %v3948 = vunpack.c.l.b16 %v3868
      %v3949 = vunpack.c.l.b16 %v3869
      %v3950 = vunpack.c.l.b16 %v3870
      %v3951 = vunpack.c.l.b16 %v3871
      %v3952 = vunpack.c.l.b16 %v3872
      %v3953 = vunpack.c.l.b16 %v3873
      %v3954 = vunpack.c.l.b16 %v3874
      %v3955 = vunpack.c.l.b16 %v3875
      %v3956 = vpack.c.b16 %v3917, %v3916
      %v3957 = vpack.c.b16 %v3919, %v3918
      %v3958 = vpack.c.b16 %v3921, %v3920
      %v3959 = vpack.c.b16 %v3923, %v3922
      %v3960 = vpack.c.b16 %v3925, %v3924
      %v3961 = vpack.c.b16 %v3927, %v3926
      %v3962 = vpack.c.b16 %v3929, %v3928
      %v3963 = vpack.c.b16 %v3931, %v3930
      %v3964 = vpack.c.b16 %v3933, %v3932
      %v3965 = vpack.c.b16 %v3935, %v3934
      %v3966 = vpack.c.b16 %v3937, %v3936
      %v3967 = vpack.c.b16 %v3939, %v3938
      %v3968 = vpack.c.b16 %v3941, %v3940
      %v3969 = vpack.c.b16 %v3943, %v3942
      %v3970 = vpack.c.b16 %v3945, %v3944
      %v3971 = vpack.c.b16 %v3947, %v3946
      %v3972 = vpack.c.b16 %v3949, %v3948
      %v3973 = vpack.c.b16 %v3951, %v3950
      %v3974 = vpack.c.b16 %v3953, %v3952
      %v3975 = vpack.c.b16 %v3955, %v3954
      %v3997 = vsel %vm1801, %v3826, 0
      %3999 = vmatprep.subr.bf16.mxu0 0
      %4000 = vmatpush1.bf16.msra.mxu0 %v3963
      %4001 = vmatprep.subr.bf16.mxu0 0
      %4002 = vmatpush1.bf16.msra.mxu0 %v3962
      %4003 = vmatprep.subr.bf16.mxu0 0
      %4004 = vmatpush1.bf16.msra.mxu0 %v3961
      %4005 = vmatprep.subr.bf16.mxu0 0
      %4006 = vmatpush1.bf16.msra.mxu0 %v3960
      %4007 = vmatprep.subr.bf16.mxu0 0
      %4008 = vmatpush1.bf16.msra.mxu0 %v3959
      %4009 = vmatprep.subr.bf16.mxu0 0
      %4010 = vmatpush1.bf16.msra.mxu0 %v3958
      %4011 = vmatprep.subr.bf16.mxu0 0
      %4012 = vmatpush1.bf16.msra.mxu0 %v3957
      %4013 = vmatprep.subr.bf16.mxu0 0
      %4014 = vmatpush1.bf16.msra.mxu0 %v3956
      %4015 = vmatprep.subr.bf16.mxu0 0
      %4016 = vmatpush2.bf16.msra.mxu0 %v3971
      %4017 = vmatprep.subr.bf16.mxu0 0
      %4018 = vmatpush2.bf16.msra.mxu0 %v3970
      %4019 = vmatprep.subr.bf16.mxu0 0
      %4020 = vmatpush2.bf16.msra.mxu0 %v3969
      %4021 = vmatprep.subr.bf16.mxu0 0
      %4022 = vmatpush2.bf16.msra.mxu0 %v3968
      %4023 = vmatprep.subr.bf16.mxu0 0
      %4024 = vmatpush2.bf16.msra.mxu0 %v3967
      %4025 = vmatprep.subr.bf16.mxu0 0
      %4026 = vmatpush2.bf16.msra.mxu0 %v3966
      %4027 = vmatprep.subr.bf16.mxu0 0
      %4028 = vmatpush2.bf16.msra.mxu0 %v3965
      %4029 = vmatprep.subr.bf16.mxu0 0
      %4030 = vmatpush2.bf16.msra.mxu0 %v3964
      %4031 = vmatprep.mubr.bf16.mxu0 %v1888
      %4032 = vmatmul.mubr.bf16.gmra.mxu0 %v1816
      %v4033 = vpop.f32.mrf.mxu0
      %v4034 = vadd.f32 0.0, %v4033
      %v4035 = vpop.f32.mrf.mxu0
      %v4036 = vpop.f32.mrf.mxu0
      %v4037 = vadd.f32 0.0, %v4036
      %v4038 = vpop.f32.mrf.mxu0
      %4039 = vmatprep.mubr.bf16.mxu0 %v1892
      %4040 = vmatmul.mubr.bf16.gmra.mxu0 %v1820
      %v4041 = vpop.f32.mrf.mxu0
      %v4042 = vadd.f32 0.0, %v4041
      %v4043 = vpop.f32.mrf.mxu0
      %v4044 = vpop.f32.mrf.mxu0
      %v4045 = vadd.f32 0.0, %v4044
      %v4046 = vpop.f32.mrf.mxu0
      %4047 = vmatprep.mubr.bf16.mxu0 %v1896
      %4048 = vmatmul.mubr.bf16.gmra.mxu0 %v1824
      %v4049 = vpop.f32.mrf.mxu0
      %v4050 = vadd.f32 0.0, %v4049
      %v4051 = vpop.f32.mrf.mxu0
      %v4052 = vpop.f32.mrf.mxu0
      %v4053 = vadd.f32 0.0, %v4052
      %v4054 = vpop.f32.mrf.mxu0
      %4055 = vmatprep.mubr.bf16.mxu0 %v1900
      %4056 = vmatmul.mubr.bf16.gmra.mxu0 %v1828
      %v4057 = vpop.f32.mrf.mxu0
      %v4058 = vadd.f32 0.0, %v4057
      %v4059 = vpop.f32.mrf.mxu0
      %v4060 = vpop.f32.mrf.mxu0
      %v4061 = vadd.f32 0.0, %v4060
      %v4062 = vpop.f32.mrf.mxu0
      %4063 = vmatprep.mubr.bf16.mxu0 %v1904
      %4064 = vmatmul.mubr.bf16.gmra.mxu0 %v1832
      %v4065 = vpop.f32.mrf.mxu0
      %v4066 = vadd.f32 0.0, %v4065
      %v4067 = vpop.f32.mrf.mxu0
      %v4068 = vpop.f32.mrf.mxu0
      %v4069 = vadd.f32 0.0, %v4068
      %v4070 = vpop.f32.mrf.mxu0
      %4071 = vmatprep.mubr.bf16.mxu0 %v1908
      %4072 = vmatmul.mubr.bf16.gmra.mxu0 %v1836
      %v4073 = vpop.f32.mrf.mxu0
      %v4074 = vadd.f32 0.0, %v4073
      %v4075 = vpop.f32.mrf.mxu0
      %v4076 = vpop.f32.mrf.mxu0
      %v4077 = vadd.f32 0.0, %v4076
      %v4078 = vpop.f32.mrf.mxu0
      %4079 = vmatprep.mubr.bf16.mxu0 %v1912
      %4080 = vmatmul.mubr.bf16.gmra.mxu0 %v1840
      %v4081 = vpop.f32.mrf.mxu0
      %v4082 = vadd.f32 0.0, %v4081
      %v4083 = vpop.f32.mrf.mxu0
      %v4084 = vpop.f32.mrf.mxu0
      %v4085 = vadd.f32 0.0, %v4084
      %v4086 = vpop.f32.mrf.mxu0
      %4087 = vmatprep.mubr.bf16.mxu0 %v1916
      %4088 = vmatmul.mubr.bf16.gmra.mxu0 %v1844
      %v4089 = vpop.f32.mrf.mxu0
      %v4090 = vadd.f32 0.0, %v4089
      %v4091 = vpop.f32.mrf.mxu0
      %v4092 = vpop.f32.mrf.mxu0
      %v4093 = vadd.f32 0.0, %v4092
      %v4094 = vpop.f32.mrf.mxu0
      %4095 = vmatprep.mubr.bf16.mxu0 %v1920
      %4096 = vmatmul.mubr.bf16.gmra.mxu0 %v1848
      %v4097 = vpop.f32.mrf.mxu0
      %v4098 = vadd.f32 0.0, %v4097
      %v4099 = vpop.f32.mrf.mxu0
      %v4100 = vpop.f32.mrf.mxu0
      %v4101 = vadd.f32 0.0, %v4100
      %v4102 = vpop.f32.mrf.mxu0
      %4103 = vmatprep.mubr.bf16.mxu0 %v1924
      %4104 = vmatmul.mubr.bf16.gmra.mxu0 %v1852
      %v4105 = vpop.f32.mrf.mxu0
      %v4106 = vadd.f32 0.0, %v4105
      %v4107 = vpop.f32.mrf.mxu0
      %v4108 = vpop.f32.mrf.mxu0
      %v4109 = vadd.f32 0.0, %v4108
      %v4110 = vpop.f32.mrf.mxu0
      %4111 = vmatprep.mubr.bf16.mxu0 %v1928
      %4112 = vmatmul.mubr.bf16.gmra.mxu0 %v1856
      %v4113 = vpop.f32.mrf.mxu0
      %v4114 = vadd.f32 0.0, %v4113
      %v4115 = vpop.f32.mrf.mxu0
      %v4116 = vpop.f32.mrf.mxu0
      %v4117 = vadd.f32 0.0, %v4116
      %v4118 = vpop.f32.mrf.mxu0
      %4119 = vmatprep.mubr.bf16.mxu0 %v1932
      %4120 = vmatmul.mubr.bf16.gmra.mxu0 %v1860
      %v4121 = vpop.f32.mrf.mxu0
      %v4122 = vadd.f32 0.0, %v4121
      %v4123 = vpop.f32.mrf.mxu0
      %v4124 = vpop.f32.mrf.mxu0
      %v4125 = vadd.f32 0.0, %v4124
      %v4126 = vpop.f32.mrf.mxu0
      %4127 = vmatprep.mubr.bf16.mxu0 %v1936
      %4128 = vmatmul.mubr.bf16.gmra.mxu0 %v1864
      %v4129 = vpop.f32.mrf.mxu0
      %v4130 = vadd.f32 0.0, %v4129
      %v4131 = vpop.f32.mrf.mxu0
      %v4132 = vpop.f32.mrf.mxu0
      %v4133 = vadd.f32 0.0, %v4132
      %v4134 = vpop.f32.mrf.mxu0
      %4135 = vmatprep.mubr.bf16.mxu0 %v1940
      %4136 = vmatmul.mubr.bf16.gmra.mxu0 %v1868
      %v4137 = vpop.f32.mrf.mxu0
      %v4138 = vadd.f32 0.0, %v4137
      %v4139 = vpop.f32.mrf.mxu0
      %v4140 = vpop.f32.mrf.mxu0
      %v4141 = vadd.f32 0.0, %v4140
      %v4142 = vpop.f32.mrf.mxu0
      %4143 = vmatprep.mubr.bf16.mxu0 %v1944
      %4144 = vmatmul.mubr.bf16.gmra.mxu0 %v1872
      %v4145 = vpop.f32.mrf.mxu0
      %v4146 = vadd.f32 0.0, %v4145
      %v4147 = vpop.f32.mrf.mxu0
      %v4148 = vpop.f32.mrf.mxu0
      %v4149 = vadd.f32 0.0, %v4148
      %v4150 = vpop.f32.mrf.mxu0
      %4151 = vmatprep.mubr.bf16.mxu0 %v2067
      %4152 = vmatmul.mubr.bf16.gmra.mxu0 %v2063
      %v4153 = vpop.f32.mrf.mxu0
      %v4154 = vadd.f32 0.0, %v4153
      %v4155 = vpop.f32.mrf.mxu0
      %v4156 = vpop.f32.mrf.mxu0
      %v4157 = vadd.f32 0.0, %v4156
      %v4158 = vpop.f32.mrf.mxu0
      %4159 = vmatprep.mubr.bf16.mxu0 %v3196
      %4160 = vmatmul.mubr.bf16.gmra.mxu0 %v3192
      %v4161 = vpop.f32.mrf.mxu0
      %v4162 = vadd.f32 0.0, %v4161
      %v4163 = vpop.f32.mrf.mxu0
      %v4164 = vpop.f32.mrf.mxu0
      %v4165 = vadd.f32 0.0, %v4164
      %v4166 = vpop.f32.mrf.mxu0
      %4167 = vmatprep.mubr.bf16.mxu0 %v3833
      %4168 = vmatmul.mubr.bf16.gmra.mxu0 %v3829
      %v4169 = vpop.f32.mrf.mxu0
      %v4170 = vadd.f32 0.0, %v4169
      %v4171 = vpop.f32.mrf.mxu0
      %v4172 = vpop.f32.mrf.mxu0
      %v4173 = vadd.f32 0.0, %v4172
      %v4174 = vpop.f32.mrf.mxu0
      %4175 = vdwg.mxu0
      %4176 = vmatprep.subr.bf16.mxu0 0
      %4177 = vmatpush1.bf16.msra.mxu0 0
      %4178 = vmatprep.subr.bf16.mxu0 0
      %4179 = vmatpush1.bf16.msra.mxu0 0
      %4180 = vmatprep.subr.bf16.mxu0 0
      %4181 = vmatpush1.bf16.msra.mxu0 0
      %4182 = vmatprep.subr.bf16.mxu0 0
      %4183 = vmatpush1.bf16.msra.mxu0 0
      %4184 = vmatprep.subr.bf16.mxu0 0
      %4185 = vmatpush1.bf16.msra.mxu0 %v3975
      %4186 = vmatprep.subr.bf16.mxu0 0
      %4187 = vmatpush1.bf16.msra.mxu0 %v3974
      %4188 = vmatprep.subr.bf16.mxu0 0
      %4189 = vmatpush1.bf16.msra.mxu0 %v3973
      %4190 = vmatprep.subr.bf16.mxu0 0
      %4191 = vmatpush1.bf16.msra.mxu0 %v3972
      %4192 = vmatprep.subr.bf16.mxu0 0
      %4193 = vmatpush2.bf16.msra.mxu0 0
      %4194 = vmatprep.subr.bf16.mxu0 0
      %4195 = vmatpush2.bf16.msra.mxu0 0
      %4196 = vmatprep.subr.bf16.mxu0 0
      %4197 = vmatpush2.bf16.msra.mxu0 0
      %4198 = vmatprep.subr.bf16.mxu0 0
      %4199 = vmatpush2.bf16.msra.mxu0 0
      %4200 = vmatprep.subr.bf16.mxu0 0
      %4201 = vmatpush2.bf16.msra.mxu0 0
      %4202 = vmatprep.subr.bf16.mxu0 0
      %4203 = vmatpush2.bf16.msra.mxu0 0
      %4204 = vmatprep.subr.bf16.mxu0 0
      %4205 = vmatpush2.bf16.msra.mxu0 0
      %4206 = vmatprep.subr.bf16.mxu0 0
      %4207 = vmatpush2.bf16.msra.mxu0 0
      %4208 = vmatprep.mubr.bf16.mxu0 0
      %4209 = vmatmul.mubr.bf16.gmra.mxu0 %v2237
      %v4210 = vpop.f32.mrf.mxu0
      %v4211 = vadd.f32 %v4034, %v4210
      %v4212 = vpop.f32.mrf.mxu0
      %v4213 = vpop.f32.mrf.mxu0
      %v4214 = vadd.f32 %v4037, %v4213
      %v4215 = vpop.f32.mrf.mxu0
      %4216 = vmatprep.mubr.bf16.mxu0 0
      %4217 = vmatmul.mubr.bf16.gmra.mxu0 %v2240
      %v4218 = vpop.f32.mrf.mxu0
      %v4219 = vadd.f32 %v4042, %v4218
      %v4220 = vpop.f32.mrf.mxu0
      %v4221 = vpop.f32.mrf.mxu0
      %v4222 = vadd.f32 %v4045, %v4221
      %v4223 = vpop.f32.mrf.mxu0
      %4224 = vmatprep.mubr.bf16.mxu0 0
      %4225 = vmatmul.mubr.bf16.gmra.mxu0 %v2243
      %v4226 = vpop.f32.mrf.mxu0
      %v4227 = vadd.f32 %v4050, %v4226
      %v4228 = vpop.f32.mrf.mxu0
      %v4229 = vpop.f32.mrf.mxu0
      %v4230 = vadd.f32 %v4053, %v4229
      %v4231 = vpop.f32.mrf.mxu0
      %4232 = vmatprep.mubr.bf16.mxu0 0
      %4233 = vmatmul.mubr.bf16.gmra.mxu0 %v2246
      %v4234 = vpop.f32.mrf.mxu0
      %v4235 = vadd.f32 %v4058, %v4234
      %v4236 = vpop.f32.mrf.mxu0
      %v4237 = vpop.f32.mrf.mxu0
      %v4238 = vadd.f32 %v4061, %v4237
      %v4239 = vpop.f32.mrf.mxu0
      %4240 = vmatprep.mubr.bf16.mxu0 0
      %4241 = vmatmul.mubr.bf16.gmra.mxu0 %v2249
      %v4242 = vpop.f32.mrf.mxu0
      %v4243 = vadd.f32 %v4066, %v4242
      %v4244 = vpop.f32.mrf.mxu0
      %v4245 = vpop.f32.mrf.mxu0
      %v4246 = vadd.f32 %v4069, %v4245
      %v4247 = vpop.f32.mrf.mxu0
      %4248 = vmatprep.mubr.bf16.mxu0 0
      %4249 = vmatmul.mubr.bf16.gmra.mxu0 %v2252
      %v4250 = vpop.f32.mrf.mxu0
      %v4251 = vadd.f32 %v4074, %v4250
      %v4252 = vpop.f32.mrf.mxu0
      %v4253 = vpop.f32.mrf.mxu0
      %v4254 = vadd.f32 %v4077, %v4253
      %v4255 = vpop.f32.mrf.mxu0
      %4256 = vmatprep.mubr.bf16.mxu0 0
      %4257 = vmatmul.mubr.bf16.gmra.mxu0 %v2255
      %v4258 = vpop.f32.mrf.mxu0
      %v4259 = vadd.f32 %v4082, %v4258
      %v4260 = vpop.f32.mrf.mxu0
      %v4261 = vpop.f32.mrf.mxu0
      %v4262 = vadd.f32 %v4085, %v4261
      %v4263 = vpop.f32.mrf.mxu0
      %4264 = vmatprep.mubr.bf16.mxu0 0
      %4265 = vmatmul.mubr.bf16.gmra.mxu0 %v2258
      %v4266 = vpop.f32.mrf.mxu0
      %v4267 = vadd.f32 %v4090, %v4266
      %v4268 = vpop.f32.mrf.mxu0
      %v4269 = vpop.f32.mrf.mxu0
      %v4270 = vadd.f32 %v4093, %v4269
      %v4271 = vpop.f32.mrf.mxu0
      %4272 = vmatprep.mubr.bf16.mxu0 0
      %4273 = vmatmul.mubr.bf16.gmra.mxu0 %v2261
      %v4274 = vpop.f32.mrf.mxu0
      %v4275 = vadd.f32 %v4098, %v4274
      %v4276 = vpop.f32.mrf.mxu0
      %v4277 = vpop.f32.mrf.mxu0
      %v4278 = vadd.f32 %v4101, %v4277
      %v4279 = vpop.f32.mrf.mxu0
      %4280 = vmatprep.mubr.bf16.mxu0 0
      %4281 = vmatmul.mubr.bf16.gmra.mxu0 %v2264
      %v4282 = vpop.f32.mrf.mxu0
      %v4283 = vadd.f32 %v4106, %v4282
      %v4284 = vpop.f32.mrf.mxu0
      %v4285 = vpop.f32.mrf.mxu0
      %v4286 = vadd.f32 %v4109, %v4285
      %v4287 = vpop.f32.mrf.mxu0
      %4288 = vmatprep.mubr.bf16.mxu0 0
      %4289 = vmatmul.mubr.bf16.gmra.mxu0 %v2267
      %v4290 = vpop.f32.mrf.mxu0
      %v4291 = vadd.f32 %v4114, %v4290
      %v4292 = vpop.f32.mrf.mxu0
      %v4293 = vpop.f32.mrf.mxu0
      %v4294 = vadd.f32 %v4117, %v4293
      %v4295 = vpop.f32.mrf.mxu0
      %4296 = vmatprep.mubr.bf16.mxu0 0
      %4297 = vmatmul.mubr.bf16.gmra.mxu0 %v2270
      %v4298 = vpop.f32.mrf.mxu0
      %v4299 = vadd.f32 %v4122, %v4298
      %v4300 = vpop.f32.mrf.mxu0
      %v4301 = vpop.f32.mrf.mxu0
      %v4302 = vadd.f32 %v4125, %v4301
      %v4303 = vpop.f32.mrf.mxu0
      %4304 = vmatprep.mubr.bf16.mxu0 0
      %4305 = vmatmul.mubr.bf16.gmra.mxu0 %v2273
      %v4306 = vpop.f32.mrf.mxu0
      %v4307 = vadd.f32 %v4130, %v4306
      %v4308 = vpop.f32.mrf.mxu0
      %v4309 = vpop.f32.mrf.mxu0
      %v4310 = vadd.f32 %v4133, %v4309
      %v4311 = vpop.f32.mrf.mxu0
      %4312 = vmatprep.mubr.bf16.mxu0 0
      %4313 = vmatmul.mubr.bf16.gmra.mxu0 %v2276
      %v4314 = vpop.f32.mrf.mxu0
      %v4315 = vadd.f32 %v4138, %v4314
      %v4316 = vpop.f32.mrf.mxu0
      %v4317 = vpop.f32.mrf.mxu0
      %v4318 = vadd.f32 %v4141, %v4317
      %v4319 = vpop.f32.mrf.mxu0
      %4320 = vmatprep.mubr.bf16.mxu0 0
      %4321 = vmatmul.mubr.bf16.gmra.mxu0 %v2279
      %v4322 = vpop.f32.mrf.mxu0
      %v4323 = vadd.f32 %v4146, %v4322
      %v4324 = vpop.f32.mrf.mxu0
      %v4325 = vpop.f32.mrf.mxu0
      %v4326 = vadd.f32 %v4149, %v4325
      %v4327 = vpop.f32.mrf.mxu0
      %4328 = vmatprep.mubr.bf16.mxu0 0
      %4329 = vmatmul.mubr.bf16.gmra.mxu0 %v2282
      %v4330 = vpop.f32.mrf.mxu0
      %v4331 = vadd.f32 %v4154, %v4330
      %v4332 = vpop.f32.mrf.mxu0
      %v4333 = vpop.f32.mrf.mxu0
      %v4334 = vadd.f32 %v4157, %v4333
      %v4335 = vpop.f32.mrf.mxu0
      %4336 = vmatprep.mubr.bf16.mxu0 0
      %4337 = vmatmul.mubr.bf16.gmra.mxu0 %v3360
      %v4338 = vpop.f32.mrf.mxu0
      %v4339 = vadd.f32 %v4162, %v4338
      %v4340 = vpop.f32.mrf.mxu0
      %v4341 = vpop.f32.mrf.mxu0
      %v4342 = vadd.f32 %v4165, %v4341
      %v4343 = vpop.f32.mrf.mxu0
      %4344 = vmatprep.mubr.bf16.mxu0 0
      %4345 = vmatmul.mubr.bf16.gmra.mxu0 %v3997
      %v4346 = vpop.f32.mrf.mxu0
      %v4347 = vadd.f32 %v4170, %v4346
      %v4348 = vpop.f32.mrf.mxu0
      %v4349 = vpop.f32.mrf.mxu0
      %v4350 = vadd.f32 %v4173, %v4349
      %v4351 = vpop.f32.mrf.mxu0
      %4352 = vdwg.mxu0
      %v4353 = vadd.f32 %v3716, %v4211
      %v4354 = vadd.f32 %v3717, %v4214
      %v4355 = vadd.f32 %v3718, %v4219
      %v4356 = vadd.f32 %v3719, %v4222
      %v4357 = vadd.f32 %v3720, %v4227
      %v4358 = vadd.f32 %v3721, %v4230
      %v4359 = vadd.f32 %v3722, %v4235
      %v4360 = vadd.f32 %v3723, %v4238
      %v4361 = vadd.f32 %v3724, %v4243
      %v4362 = vadd.f32 %v3725, %v4246
      %v4363 = vadd.f32 %v3726, %v4251
      %v4364 = vadd.f32 %v3727, %v4254
      %v4365 = vadd.f32 %v3728, %v4259
      %v4366 = vadd.f32 %v3729, %v4262
      %v4367 = vadd.f32 %v3730, %v4267
      %v4368 = vadd.f32 %v3731, %v4270
      %v4369 = vadd.f32 %v3732, %v4275
      %v4370 = vadd.f32 %v3733, %v4278
      %v4371 = vadd.f32 %v3734, %v4283
      %v4372 = vadd.f32 %v3735, %v4286
      %v4373 = vadd.f32 %v3736, %v4291
      %v4374 = vadd.f32 %v3737, %v4294
      %v4375 = vadd.f32 %v3738, %v4299
      %v4376 = vadd.f32 %v3739, %v4302
      %v4377 = vadd.f32 %v3740, %v4307
      %v4378 = vadd.f32 %v3741, %v4310
      %v4379 = vadd.f32 %v3742, %v4315
      %v4380 = vadd.f32 %v3743, %v4318
      %v4381 = vadd.f32 %v3744, %v4323
      %v4382 = vadd.f32 %v3745, %v4326
      %v4383 = vadd.f32 %v3746, %v4331
      %v4384 = vadd.f32 %v3747, %v4334
      %v4385 = vadd.f32 %v3748, %v4339
      %v4386 = vadd.f32 %v3749, %v4342
      %v4387 = vadd.f32 %v3750, %v4347
      %v4388 = vadd.f32 %v3751, %v4350
      %v4390 = vshrl.u32 %v436, 16
      %v4392 = vrot.slane %v4390, 4
      %v4393 = vshll.u32 %v436, 16
      %v4395 = vrot.slane %v4393, 5
      %v4396 = vor.u32 %v4392, %v4395
      %v4397 = vrot.slane %v4396, 4
      %v4399 = vshll.u32 %v437, 16
      %v4401 = vrot.slane %v4399, 5
      %v4402 = vsel %vm441, %v4397, %v4401
      %v4403 = vshrl.u32 %v437, 16
      %v4405 = vrot.slane %v4403, 4
      %v4406 = vor.u32 %v4405, %v4401
      %v4407 = vrot.slane %v4406, 4
      %v4409 = vshll.u32 %v438, 16
      %v4411 = vrot.slane %v4409, 5
      %v4412 = vsel %vm441, %v4407, %v4411
      %v4416 = vrot.slane %v436, 5
      %v4417 = vrot.slane %v4416, 4
      %v4418 = vrot.slane %v437, 5
      %v4419 = vsel %vm930, %v4417, %v4418
      %v4420 = vrot.slane %v4418, 4
      %v4421 = vrot.slane %v438, 5
      %v4422 = vsel %vm930, %v4420, %v4421
      %v4423 = vrot.slane %v4390, 5
      %v4424 = vrot.slane %v4393, 6
      %v4425 = vor.u32 %v4423, %v4424
      %v4426 = vrot.slane %v4425, 4
      %v4427 = vrot.slane %v4403, 5
      %v4428 = vrot.slane %v4399, 6
      %v4429 = vor.u32 %v4427, %v4428
      %v4430 = vsel %vm1059, %v4426, %v4429
      %v4431 = vrot.slane %v4429, 4
      %v4432 = vshrl.u32 %v438, 16
      %v4434 = vrot.slane %v4432, 5
      %v4435 = vrot.slane %v4409, 6
      %v4436 = vor.u32 %v4434, %v4435
      %v4437 = vsel %vm1059, %v4431, %v4436
      %v4438 = vrot.slane %v436, 6
      %v4439 = vrot.slane %v4438, 4
      %v4440 = vrot.slane %v437, 6
      %v4441 = vsel %vm1332, %v4439, %v4440
      %v4442 = vrot.slane %v4440, 4
      %v4443 = vrot.slane %v438, 6
      %v4444 = vsel %vm1332, %v4442, %v4443
      %v4445 = vunpack.c.l.b16 %v436
      %v4446 = vunpack.c.l.b16 %v437
      %v4447 = vpack.c.b16 %v4446, %v4445
      %v4448 = vunpack.c.l.b16 %v4402
      %v4449 = vunpack.c.l.b16 %v4412
      %v4450 = vpack.c.b16 %v4449, %v4448
      %4451 = vrot.lane.b32.xlu0 %v4450, 64
      %v4452 = vpop.permute.xlu0 %4451
      %v4453 = vunpack.c.l.b16 %v4419
      %v4454 = vunpack.c.l.b16 %v4422
      %v4455 = vpack.c.b16 %v4454, %v4453
      %v4456 = vunpack.c.l.b16 %v4430
      %v4457 = vunpack.c.l.b16 %v4437
      %v4458 = vpack.c.b16 %v4457, %v4456
      %4459 = vrot.lane.b32.xlu0 %v4458, 64
      %v4460 = vpop.permute.xlu0 %4459
      %v4461 = vunpack.c.l.b16 %v4441
      %v4462 = vunpack.c.l.b16 %v4444
      %v4463 = vpack.c.b16 %v4462, %v4461
      %v4466 = vsel %vm1801, %v4447, %v4452
      %v4470 = vsel %vm1801, %v4455, %v4460
      %s4472 = scalar_lea.vmem %s1, 640
      %v4473 = vld [vmem:[%s4472] sm:$0xf]
      %v4474 = vld [vmem:[%s4472 + $0x4] sm:$0xf]
      %v4475 = vld [vmem:[%s4472 + $0x8] sm:$0xf]
      %v4476 = vld [vmem:[%s4472 + $0xc] sm:$0xf]
      %v4477 = vld [vmem:[%s4472 + $0x10] sm:$0xf]
      %v4478 = vld [vmem:[%s4472 + $0x14] sm:$0xf]
      %v4479 = vld [vmem:[%s4472 + $0x18] sm:$0xf]
      %v4480 = vld [vmem:[%s4472 + $0x1c] sm:$0xf]
      %v4481 = vld [vmem:[%s4472 + $0x20] sm:$0xf]
      %v4482 = vld [vmem:[%s4472 + $0x24] sm:$0xf]
      %v4483 = vld [vmem:[%s4472 + $0x28] sm:$0xf]
      %v4484 = vld [vmem:[%s4472 + $0x2c] sm:$0xf]
      %v4485 = vld [vmem:[%s4472 + $0x30] sm:$0xf]
      %v4486 = vld [vmem:[%s4472 + $0x34] sm:$0xf]
      %v4487 = vld [vmem:[%s4472 + $0x38] sm:$0xf]
      %v4488 = vld [vmem:[%s4472 + $0x3c] sm:$0xf]
      %v4489 = vld [vmem:[%s4472 + $0x40] sm:$0xf]
      %v4490 = vld [vmem:[%s4472 + $0x44] sm:$0xf]
      %v4491 = vld [vmem:[%s4472 + $0x48] sm:$0xf]
      %v4492 = vld [vmem:[%s4472 + $0x4c] sm:$0xf]
      %v4493 = vld [vmem:[%s4472 + $0x50] sm:$0xf]
      %v4494 = vld [vmem:[%s4472 + $0x54] sm:$0xf]
      %v4495 = vld [vmem:[%s4472 + $0x58] sm:$0xf]
      %v4496 = vld [vmem:[%s4472 + $0x5c] sm:$0xf]
      %v4497 = vld [vmem:[%s4472 + $0x60] sm:$0xf]
      %v4498 = vld [vmem:[%s4472 + $0x64] sm:$0xf]
      %v4499 = vld [vmem:[%s4472 + $0x68] sm:$0xf]
      %v4500 = vld [vmem:[%s4472 + $0x6c] sm:$0xf]
      %v4501 = vld [vmem:[%s4472 + $0x70] sm:$0xf]
      %v4502 = vld [vmem:[%s4472 + $0x74] sm:$0xf]
      %v4503 = vld [vmem:[%s4472 + $0x78] sm:$0xf]
      %v4504 = vld [vmem:[%s4472 + $0x7c] sm:$0xf]
      %v4505 = vld [vmem:[%s4472 + $0x80] sm:$0xf]
      %v4506 = vld [vmem:[%s4472 + $0x84] sm:$0xf]
      %v4507 = vld [vmem:[%s4472 + $0x88] sm:$0xf]
      %v4508 = vld [vmem:[%s4472 + $0x8c] sm:$0xf]
      %v4509 = vld [vmem:[%s4472 + $0x90] sm:$0xf]
      %v4510 = vld [vmem:[%s4472 + $0x94] sm:$0xf]
      %v4511 = vld [vmem:[%s4472 + $0x98] sm:$0xf]
      %v4512 = vld [vmem:[%s4472 + $0x9c] sm:$0xf]
      %v4553 = vunpack.c.l.b16 %v4473
      %v4554 = vunpack.c.l.b16 %v4474
      %v4555 = vunpack.c.l.b16 %v4475
      %v4556 = vunpack.c.l.b16 %v4476
      %v4557 = vunpack.c.l.b16 %v4477
      %v4558 = vunpack.c.l.b16 %v4478
      %v4559 = vunpack.c.l.b16 %v4479
      %v4560 = vunpack.c.l.b16 %v4480
      %v4561 = vunpack.c.l.b16 %v4481
      %v4562 = vunpack.c.l.b16 %v4482
      %v4563 = vunpack.c.l.b16 %v4483
      %v4564 = vunpack.c.l.b16 %v4484
      %v4565 = vunpack.c.l.b16 %v4485
      %v4566 = vunpack.c.l.b16 %v4486
      %v4567 = vunpack.c.l.b16 %v4487
      %v4568 = vunpack.c.l.b16 %v4488
      %v4569 = vunpack.c.l.b16 %v4489
      %v4570 = vunpack.c.l.b16 %v4490
      %v4571 = vunpack.c.l.b16 %v4491
      %v4572 = vunpack.c.l.b16 %v4492
      %v4573 = vunpack.c.l.b16 %v4493
      %v4574 = vunpack.c.l.b16 %v4494
      %v4575 = vunpack.c.l.b16 %v4495
      %v4576 = vunpack.c.l.b16 %v4496
      %v4577 = vunpack.c.l.b16 %v4497
      %v4578 = vunpack.c.l.b16 %v4498
      %v4579 = vunpack.c.l.b16 %v4499
      %v4580 = vunpack.c.l.b16 %v4500
      %v4581 = vunpack.c.l.b16 %v4501
      %v4582 = vunpack.c.l.b16 %v4502
      %v4583 = vunpack.c.l.b16 %v4503
      %v4584 = vunpack.c.l.b16 %v4504
      %v4585 = vunpack.c.l.b16 %v4505
      %v4586 = vunpack.c.l.b16 %v4506
      %v4587 = vunpack.c.l.b16 %v4507
      %v4588 = vunpack.c.l.b16 %v4508
      %v4589 = vunpack.c.l.b16 %v4509
      %v4590 = vunpack.c.l.b16 %v4510
      %v4591 = vunpack.c.l.b16 %v4511
      %v4592 = vunpack.c.l.b16 %v4512
      %v4593 = vpack.c.b16 %v4554, %v4553
      %v4594 = vpack.c.b16 %v4556, %v4555
      %v4595 = vpack.c.b16 %v4558, %v4557
      %v4596 = vpack.c.b16 %v4560, %v4559
      %v4597 = vpack.c.b16 %v4562, %v4561
      %v4598 = vpack.c.b16 %v4564, %v4563
      %v4599 = vpack.c.b16 %v4566, %v4565
      %v4600 = vpack.c.b16 %v4568, %v4567
      %v4601 = vpack.c.b16 %v4570, %v4569
      %v4602 = vpack.c.b16 %v4572, %v4571
      %v4603 = vpack.c.b16 %v4574, %v4573
      %v4604 = vpack.c.b16 %v4576, %v4575
      %v4605 = vpack.c.b16 %v4578, %v4577
      %v4606 = vpack.c.b16 %v4580, %v4579
      %v4607 = vpack.c.b16 %v4582, %v4581
      %v4608 = vpack.c.b16 %v4584, %v4583
      %v4609 = vpack.c.b16 %v4586, %v4585
      %v4610 = vpack.c.b16 %v4588, %v4587
      %v4611 = vpack.c.b16 %v4590, %v4589
      %v4612 = vpack.c.b16 %v4592, %v4591
      %v4634 = vsel %vm1801, %v4463, 0
      %4636 = vmatprep.subr.bf16.mxu0 0
      %4637 = vmatpush1.bf16.msra.mxu0 %v4600
      %4638 = vmatprep.subr.bf16.mxu0 0
      %4639 = vmatpush1.bf16.msra.mxu0 %v4599
      %4640 = vmatprep.subr.bf16.mxu0 0
      %4641 = vmatpush1.bf16.msra.mxu0 %v4598
      %4642 = vmatprep.subr.bf16.mxu0 0
      %4643 = vmatpush1.bf16.msra.mxu0 %v4597
      %4644 = vmatprep.subr.bf16.mxu0 0
      %4645 = vmatpush1.bf16.msra.mxu0 %v4596
      %4646 = vmatprep.subr.bf16.mxu0 0
      %4647 = vmatpush1.bf16.msra.mxu0 %v4595
      %4648 = vmatprep.subr.bf16.mxu0 0
      %4649 = vmatpush1.bf16.msra.mxu0 %v4594
      %4650 = vmatprep.subr.bf16.mxu0 0
      %4651 = vmatpush1.bf16.msra.mxu0 %v4593
      %4652 = vmatprep.subr.bf16.mxu0 0
      %4653 = vmatpush2.bf16.msra.mxu0 %v4608
      %4654 = vmatprep.subr.bf16.mxu0 0
      %4655 = vmatpush2.bf16.msra.mxu0 %v4607
      %4656 = vmatprep.subr.bf16.mxu0 0
      %4657 = vmatpush2.bf16.msra.mxu0 %v4606
      %4658 = vmatprep.subr.bf16.mxu0 0
      %4659 = vmatpush2.bf16.msra.mxu0 %v4605
      %4660 = vmatprep.subr.bf16.mxu0 0
      %4661 = vmatpush2.bf16.msra.mxu0 %v4604
      %4662 = vmatprep.subr.bf16.mxu0 0
      %4663 = vmatpush2.bf16.msra.mxu0 %v4603
      %4664 = vmatprep.subr.bf16.mxu0 0
      %4665 = vmatpush2.bf16.msra.mxu0 %v4602
      %4666 = vmatprep.subr.bf16.mxu0 0
      %4667 = vmatpush2.bf16.msra.mxu0 %v4601
      %4668 = vmatprep.mubr.bf16.mxu0 %v1892
      %4669 = vmatmul.mubr.bf16.gmra.mxu0 %v1820
      %v4670 = vpop.f32.mrf.mxu0
      %v4671 = vadd.f32 0.0, %v4670
      %v4672 = vpop.f32.mrf.mxu0
      %v4673 = vpop.f32.mrf.mxu0
      %v4674 = vadd.f32 0.0, %v4673
      %v4675 = vpop.f32.mrf.mxu0
      %4676 = vmatprep.mubr.bf16.mxu0 %v1896
      %4677 = vmatmul.mubr.bf16.gmra.mxu0 %v1824
      %v4678 = vpop.f32.mrf.mxu0
      %v4679 = vadd.f32 0.0, %v4678
      %v4680 = vpop.f32.mrf.mxu0
      %v4681 = vpop.f32.mrf.mxu0
      %v4682 = vadd.f32 0.0, %v4681
      %v4683 = vpop.f32.mrf.mxu0
      %4684 = vmatprep.mubr.bf16.mxu0 %v1900
      %4685 = vmatmul.mubr.bf16.gmra.mxu0 %v1828
      %v4686 = vpop.f32.mrf.mxu0
      %v4687 = vadd.f32 0.0, %v4686
      %v4688 = vpop.f32.mrf.mxu0
      %v4689 = vpop.f32.mrf.mxu0
      %v4690 = vadd.f32 0.0, %v4689
      %v4691 = vpop.f32.mrf.mxu0
      %4692 = vmatprep.mubr.bf16.mxu0 %v1904
      %4693 = vmatmul.mubr.bf16.gmra.mxu0 %v1832
      %v4694 = vpop.f32.mrf.mxu0
      %v4695 = vadd.f32 0.0, %v4694
      %v4696 = vpop.f32.mrf.mxu0
      %v4697 = vpop.f32.mrf.mxu0
      %v4698 = vadd.f32 0.0, %v4697
      %v4699 = vpop.f32.mrf.mxu0
      %4700 = vmatprep.mubr.bf16.mxu0 %v1908
      %4701 = vmatmul.mubr.bf16.gmra.mxu0 %v1836
      %v4702 = vpop.f32.mrf.mxu0
      %v4703 = vadd.f32 0.0, %v4702
      %v4704 = vpop.f32.mrf.mxu0
      %v4705 = vpop.f32.mrf.mxu0
      %v4706 = vadd.f32 0.0, %v4705
      %v4707 = vpop.f32.mrf.mxu0
      %4708 = vmatprep.mubr.bf16.mxu0 %v1912
      %4709 = vmatmul.mubr.bf16.gmra.mxu0 %v1840
      %v4710 = vpop.f32.mrf.mxu0
      %v4711 = vadd.f32 0.0, %v4710
      %v4712 = vpop.f32.mrf.mxu0
      %v4713 = vpop.f32.mrf.mxu0
      %v4714 = vadd.f32 0.0, %v4713
      %v4715 = vpop.f32.mrf.mxu0
      %4716 = vmatprep.mubr.bf16.mxu0 %v1916
      %4717 = vmatmul.mubr.bf16.gmra.mxu0 %v1844
      %v4718 = vpop.f32.mrf.mxu0
      %v4719 = vadd.f32 0.0, %v4718
      %v4720 = vpop.f32.mrf.mxu0
      %v4721 = vpop.f32.mrf.mxu0
      %v4722 = vadd.f32 0.0, %v4721
      %v4723 = vpop.f32.mrf.mxu0
      %4724 = vmatprep.mubr.bf16.mxu0 %v1920
      %4725 = vmatmul.mubr.bf16.gmra.mxu0 %v1848
      %v4726 = vpop.f32.mrf.mxu0
      %v4727 = vadd.f32 0.0, %v4726
      %v4728 = vpop.f32.mrf.mxu0
      %v4729 = vpop.f32.mrf.mxu0
      %v4730 = vadd.f32 0.0, %v4729
      %v4731 = vpop.f32.mrf.mxu0
      %4732 = vmatprep.mubr.bf16.mxu0 %v1924
      %4733 = vmatmul.mubr.bf16.gmra.mxu0 %v1852
      %v4734 = vpop.f32.mrf.mxu0
      %v4735 = vadd.f32 0.0, %v4734
      %v4736 = vpop.f32.mrf.mxu0
      %v4737 = vpop.f32.mrf.mxu0
      %v4738 = vadd.f32 0.0, %v4737
      %v4739 = vpop.f32.mrf.mxu0
      %4740 = vmatprep.mubr.bf16.mxu0 %v1928
      %4741 = vmatmul.mubr.bf16.gmra.mxu0 %v1856
      %v4742 = vpop.f32.mrf.mxu0
      %v4743 = vadd.f32 0.0, %v4742
      %v4744 = vpop.f32.mrf.mxu0
      %v4745 = vpop.f32.mrf.mxu0
      %v4746 = vadd.f32 0.0, %v4745
      %v4747 = vpop.f32.mrf.mxu0
      %4748 = vmatprep.mubr.bf16.mxu0 %v1932
      %4749 = vmatmul.mubr.bf16.gmra.mxu0 %v1860
      %v4750 = vpop.f32.mrf.mxu0
      %v4751 = vadd.f32 0.0, %v4750
      %v4752 = vpop.f32.mrf.mxu0
      %v4753 = vpop.f32.mrf.mxu0
      %v4754 = vadd.f32 0.0, %v4753
      %v4755 = vpop.f32.mrf.mxu0
      %4756 = vmatprep.mubr.bf16.mxu0 %v1936
      %4757 = vmatmul.mubr.bf16.gmra.mxu0 %v1864
      %v4758 = vpop.f32.mrf.mxu0
      %v4759 = vadd.f32 0.0, %v4758
      %v4760 = vpop.f32.mrf.mxu0
      %v4761 = vpop.f32.mrf.mxu0
      %v4762 = vadd.f32 0.0, %v4761
      %v4763 = vpop.f32.mrf.mxu0
      %4764 = vmatprep.mubr.bf16.mxu0 %v1940
      %4765 = vmatmul.mubr.bf16.gmra.mxu0 %v1868
      %v4766 = vpop.f32.mrf.mxu0
      %v4767 = vadd.f32 0.0, %v4766
      %v4768 = vpop.f32.mrf.mxu0
      %v4769 = vpop.f32.mrf.mxu0
      %v4770 = vadd.f32 0.0, %v4769
      %v4771 = vpop.f32.mrf.mxu0
      %4772 = vmatprep.mubr.bf16.mxu0 %v1944
      %4773 = vmatmul.mubr.bf16.gmra.mxu0 %v1872
      %v4774 = vpop.f32.mrf.mxu0
      %v4775 = vadd.f32 0.0, %v4774
      %v4776 = vpop.f32.mrf.mxu0
      %v4777 = vpop.f32.mrf.mxu0
      %v4778 = vadd.f32 0.0, %v4777
      %v4779 = vpop.f32.mrf.mxu0
      %4780 = vmatprep.mubr.bf16.mxu0 %v2067
      %4781 = vmatmul.mubr.bf16.gmra.mxu0 %v2063
      %v4782 = vpop.f32.mrf.mxu0
      %v4783 = vadd.f32 0.0, %v4782
      %v4784 = vpop.f32.mrf.mxu0
      %v4785 = vpop.f32.mrf.mxu0
      %v4786 = vadd.f32 0.0, %v4785
      %v4787 = vpop.f32.mrf.mxu0
      %4788 = vmatprep.mubr.bf16.mxu0 %v3196
      %4789 = vmatmul.mubr.bf16.gmra.mxu0 %v3192
      %v4790 = vpop.f32.mrf.mxu0
      %v4791 = vadd.f32 0.0, %v4790
      %v4792 = vpop.f32.mrf.mxu0
      %v4793 = vpop.f32.mrf.mxu0
      %v4794 = vadd.f32 0.0, %v4793
      %v4795 = vpop.f32.mrf.mxu0
      %4796 = vmatprep.mubr.bf16.mxu0 %v3833
      %4797 = vmatmul.mubr.bf16.gmra.mxu0 %v3829
      %v4798 = vpop.f32.mrf.mxu0
      %v4799 = vadd.f32 0.0, %v4798
      %v4800 = vpop.f32.mrf.mxu0
      %v4801 = vpop.f32.mrf.mxu0
      %v4802 = vadd.f32 0.0, %v4801
      %v4803 = vpop.f32.mrf.mxu0
      %4804 = vmatprep.mubr.bf16.mxu0 %v4470
      %4805 = vmatmul.mubr.bf16.gmra.mxu0 %v4466
      %v4806 = vpop.f32.mrf.mxu0
      %v4807 = vadd.f32 0.0, %v4806
      %v4808 = vpop.f32.mrf.mxu0
      %v4809 = vpop.f32.mrf.mxu0
      %v4810 = vadd.f32 0.0, %v4809
      %v4811 = vpop.f32.mrf.mxu0
      %4812 = vdwg.mxu0
      %4813 = vmatprep.subr.bf16.mxu0 0
      %4814 = vmatpush1.bf16.msra.mxu0 0
      %4815 = vmatprep.subr.bf16.mxu0 0
      %4816 = vmatpush1.bf16.msra.mxu0 0
      %4817 = vmatprep.subr.bf16.mxu0 0
      %4818 = vmatpush1.bf16.msra.mxu0 0
      %4819 = vmatprep.subr.bf16.mxu0 0
      %4820 = vmatpush1.bf16.msra.mxu0 0
      %4821 = vmatprep.subr.bf16.mxu0 0
      %4822 = vmatpush1.bf16.msra.mxu0 %v4612
      %4823 = vmatprep.subr.bf16.mxu0 0
      %4824 = vmatpush1.bf16.msra.mxu0 %v4611
      %4825 = vmatprep.subr.bf16.mxu0 0
      %4826 = vmatpush1.bf16.msra.mxu0 %v4610
      %4827 = vmatprep.subr.bf16.mxu0 0
      %4828 = vmatpush1.bf16.msra.mxu0 %v4609
      %4829 = vmatprep.subr.bf16.mxu0 0
      %4830 = vmatpush2.bf16.msra.mxu0 0
      %4831 = vmatprep.subr.bf16.mxu0 0
      %4832 = vmatpush2.bf16.msra.mxu0 0
      %4833 = vmatprep.subr.bf16.mxu0 0
      %4834 = vmatpush2.bf16.msra.mxu0 0
      %4835 = vmatprep.subr.bf16.mxu0 0
      %4836 = vmatpush2.bf16.msra.mxu0 0
      %4837 = vmatprep.subr.bf16.mxu0 0
      %4838 = vmatpush2.bf16.msra.mxu0 0
      %4839 = vmatprep.subr.bf16.mxu0 0
      %4840 = vmatpush2.bf16.msra.mxu0 0
      %4841 = vmatprep.subr.bf16.mxu0 0
      %4842 = vmatpush2.bf16.msra.mxu0 0
      %4843 = vmatprep.subr.bf16.mxu0 0
      %4844 = vmatpush2.bf16.msra.mxu0 0
      %4845 = vmatprep.mubr.bf16.mxu0 0
      %4846 = vmatmul.mubr.bf16.gmra.mxu0 %v2240
      %v4847 = vpop.f32.mrf.mxu0
      %v4848 = vadd.f32 %v4671, %v4847
      %v4849 = vpop.f32.mrf.mxu0
      %v4850 = vpop.f32.mrf.mxu0
      %v4851 = vadd.f32 %v4674, %v4850
      %v4852 = vpop.f32.mrf.mxu0
      %4853 = vmatprep.mubr.bf16.mxu0 0
      %4854 = vmatmul.mubr.bf16.gmra.mxu0 %v2243
      %v4855 = vpop.f32.mrf.mxu0
      %v4856 = vadd.f32 %v4679, %v4855
      %v4857 = vpop.f32.mrf.mxu0
      %v4858 = vpop.f32.mrf.mxu0
      %v4859 = vadd.f32 %v4682, %v4858
      %v4860 = vpop.f32.mrf.mxu0
      %4861 = vmatprep.mubr.bf16.mxu0 0
      %4862 = vmatmul.mubr.bf16.gmra.mxu0 %v2246
      %v4863 = vpop.f32.mrf.mxu0
      %v4864 = vadd.f32 %v4687, %v4863
      %v4865 = vpop.f32.mrf.mxu0
      %v4866 = vpop.f32.mrf.mxu0
      %v4867 = vadd.f32 %v4690, %v4866
      %v4868 = vpop.f32.mrf.mxu0
      %4869 = vmatprep.mubr.bf16.mxu0 0
      %4870 = vmatmul.mubr.bf16.gmra.mxu0 %v2249
      %v4871 = vpop.f32.mrf.mxu0
      %v4872 = vadd.f32 %v4695, %v4871
      %v4873 = vpop.f32.mrf.mxu0
      %v4874 = vpop.f32.mrf.mxu0
      %v4875 = vadd.f32 %v4698, %v4874
      %v4876 = vpop.f32.mrf.mxu0
      %4877 = vmatprep.mubr.bf16.mxu0 0
      %4878 = vmatmul.mubr.bf16.gmra.mxu0 %v2252
      %v4879 = vpop.f32.mrf.mxu0
      %v4880 = vadd.f32 %v4703, %v4879
      %v4881 = vpop.f32.mrf.mxu0
      %v4882 = vpop.f32.mrf.mxu0
      %v4883 = vadd.f32 %v4706, %v4882
      %v4884 = vpop.f32.mrf.mxu0
      %4885 = vmatprep.mubr.bf16.mxu0 0
      %4886 = vmatmul.mubr.bf16.gmra.mxu0 %v2255
      %v4887 = vpop.f32.mrf.mxu0
      %v4888 = vadd.f32 %v4711, %v4887
      %v4889 = vpop.f32.mrf.mxu0
      %v4890 = vpop.f32.mrf.mxu0
      %v4891 = vadd.f32 %v4714, %v4890
      %v4892 = vpop.f32.mrf.mxu0
      %4893 = vmatprep.mubr.bf16.mxu0 0
      %4894 = vmatmul.mubr.bf16.gmra.mxu0 %v2258
      %v4895 = vpop.f32.mrf.mxu0
      %v4896 = vadd.f32 %v4719, %v4895
      %v4897 = vpop.f32.mrf.mxu0
      %v4898 = vpop.f32.mrf.mxu0
      %v4899 = vadd.f32 %v4722, %v4898
      %v4900 = vpop.f32.mrf.mxu0
      %4901 = vmatprep.mubr.bf16.mxu0 0
      %4902 = vmatmul.mubr.bf16.gmra.mxu0 %v2261
      %v4903 = vpop.f32.mrf.mxu0
      %v4904 = vadd.f32 %v4727, %v4903
      %v4905 = vpop.f32.mrf.mxu0
      %v4906 = vpop.f32.mrf.mxu0
      %v4907 = vadd.f32 %v4730, %v4906
      %v4908 = vpop.f32.mrf.mxu0
      %4909 = vmatprep.mubr.bf16.mxu0 0
      %4910 = vmatmul.mubr.bf16.gmra.mxu0 %v2264
      %v4911 = vpop.f32.mrf.mxu0
      %v4912 = vadd.f32 %v4735, %v4911
      %v4913 = vpop.f32.mrf.mxu0
      %v4914 = vpop.f32.mrf.mxu0
      %v4915 = vadd.f32 %v4738, %v4914
      %v4916 = vpop.f32.mrf.mxu0
      %4917 = vmatprep.mubr.bf16.mxu0 0
      %4918 = vmatmul.mubr.bf16.gmra.mxu0 %v2267
      %v4919 = vpop.f32.mrf.mxu0
      %v4920 = vadd.f32 %v4743, %v4919
      %v4921 = vpop.f32.mrf.mxu0
      %v4922 = vpop.f32.mrf.mxu0
      %v4923 = vadd.f32 %v4746, %v4922
      %v4924 = vpop.f32.mrf.mxu0
      %4925 = vmatprep.mubr.bf16.mxu0 0
      %4926 = vmatmul.mubr.bf16.gmra.mxu0 %v2270
      %v4927 = vpop.f32.mrf.mxu0
      %v4928 = vadd.f32 %v4751, %v4927
      %v4929 = vpop.f32.mrf.mxu0
      %v4930 = vpop.f32.mrf.mxu0
      %v4931 = vadd.f32 %v4754, %v4930
      %v4932 = vpop.f32.mrf.mxu0
      %4933 = vmatprep.mubr.bf16.mxu0 0
      %4934 = vmatmul.mubr.bf16.gmra.mxu0 %v2273
      %v4935 = vpop.f32.mrf.mxu0
      %v4936 = vadd.f32 %v4759, %v4935
      %v4937 = vpop.f32.mrf.mxu0
      %v4938 = vpop.f32.mrf.mxu0
      %v4939 = vadd.f32 %v4762, %v4938
      %v4940 = vpop.f32.mrf.mxu0
      %4941 = vmatprep.mubr.bf16.mxu0 0
      %4942 = vmatmul.mubr.bf16.gmra.mxu0 %v2276
      %v4943 = vpop.f32.mrf.mxu0
      %v4944 = vadd.f32 %v4767, %v4943
      %v4945 = vpop.f32.mrf.mxu0
      %v4946 = vpop.f32.mrf.mxu0
      %v4947 = vadd.f32 %v4770, %v4946
      %v4948 = vpop.f32.mrf.mxu0
      %4949 = vmatprep.mubr.bf16.mxu0 0
      %4950 = vmatmul.mubr.bf16.gmra.mxu0 %v2279
      %v4951 = vpop.f32.mrf.mxu0
      %v4952 = vadd.f32 %v4775, %v4951
      %v4953 = vpop.f32.mrf.mxu0
      %v4954 = vpop.f32.mrf.mxu0
      %v4955 = vadd.f32 %v4778, %v4954
      %v4956 = vpop.f32.mrf.mxu0
      %4957 = vmatprep.mubr.bf16.mxu0 0
      %4958 = vmatmul.mubr.bf16.gmra.mxu0 %v2282
      %v4959 = vpop.f32.mrf.mxu0
      %v4960 = vadd.f32 %v4783, %v4959
      %v4961 = vpop.f32.mrf.mxu0
      %v4962 = vpop.f32.mrf.mxu0
      %v4963 = vadd.f32 %v4786, %v4962
      %v4964 = vpop.f32.mrf.mxu0
      %4965 = vmatprep.mubr.bf16.mxu0 0
      %4966 = vmatmul.mubr.bf16.gmra.mxu0 %v3360
      %v4967 = vpop.f32.mrf.mxu0
      %v4968 = vadd.f32 %v4791, %v4967
      %v4969 = vpop.f32.mrf.mxu0
      %v4970 = vpop.f32.mrf.mxu0
      %v4971 = vadd.f32 %v4794, %v4970
      %v4972 = vpop.f32.mrf.mxu0
      %4973 = vmatprep.mubr.bf16.mxu0 0
      %4974 = vmatmul.mubr.bf16.gmra.mxu0 %v3997
      %v4975 = vpop.f32.mrf.mxu0
      %v4976 = vadd.f32 %v4799, %v4975
      %v4977 = vpop.f32.mrf.mxu0
      %v4978 = vpop.f32.mrf.mxu0
      %v4979 = vadd.f32 %v4802, %v4978
      %v4980 = vpop.f32.mrf.mxu0
      %4981 = vmatprep.mubr.bf16.mxu0 0
      %4982 = vmatmul.mubr.bf16.gmra.mxu0 %v4634
      %v4983 = vpop.f32.mrf.mxu0
      %v4984 = vadd.f32 %v4807, %v4983
      %v4985 = vpop.f32.mrf.mxu0
      %v4986 = vpop.f32.mrf.mxu0
      %v4987 = vadd.f32 %v4810, %v4986
      %v4988 = vpop.f32.mrf.mxu0
      %4989 = vdwg.mxu0
      %v4990 = vadd.f32 %v4353, %v4848
      %v4991 = vadd.f32 %v4354, %v4851
      %v4992 = vadd.f32 %v4355, %v4856
      %v4993 = vadd.f32 %v4356, %v4859
      %v4994 = vadd.f32 %v4357, %v4864
      %v4995 = vadd.f32 %v4358, %v4867
      %v4996 = vadd.f32 %v4359, %v4872
      %v4997 = vadd.f32 %v4360, %v4875
      %v4998 = vadd.f32 %v4361, %v4880
      %v4999 = vadd.f32 %v4362, %v4883
      %v5000 = vadd.f32 %v4363, %v4888
      %v5001 = vadd.f32 %v4364, %v4891
      %v5002 = vadd.f32 %v4365, %v4896
      %v5003 = vadd.f32 %v4366, %v4899
      %v5004 = vadd.f32 %v4367, %v4904
      %v5005 = vadd.f32 %v4368, %v4907
      %v5006 = vadd.f32 %v4369, %v4912
      %v5007 = vadd.f32 %v4370, %v4915
      %v5008 = vadd.f32 %v4371, %v4920
      %v5009 = vadd.f32 %v4372, %v4923
      %v5010 = vadd.f32 %v4373, %v4928
      %v5011 = vadd.f32 %v4374, %v4931
      %v5012 = vadd.f32 %v4375, %v4936
      %v5013 = vadd.f32 %v4376, %v4939
      %v5014 = vadd.f32 %v4377, %v4944
      %v5015 = vadd.f32 %v4378, %v4947
      %v5016 = vadd.f32 %v4379, %v4952
      %v5017 = vadd.f32 %v4380, %v4955
      %v5018 = vadd.f32 %v4381, %v4960
      %v5019 = vadd.f32 %v4382, %v4963
      %v5020 = vadd.f32 %v4383, %v4968
      %v5021 = vadd.f32 %v4384, %v4971
      %v5022 = vadd.f32 %v4385, %v4976
      %v5023 = vadd.f32 %v4386, %v4979
      %v5024 = vadd.f32 %v4387, %v4984
      %v5025 = vadd.f32 %v4388, %v4987
      %v5026 = vld [vmem:[%s2] sm:$0x1]
      %v5028 = vlaneseq
      %v5029 = vshrl.u32 %v5028, 7
      %v5030 = vsub.s32 0, %v5029
      %v5031 = vrot.slane %v5026, %v5030
      %v5033 = vadd.f32 %v4990, %v5031
      %v5034 = vadd.f32 %v4991, %v5031
      %v5035 = vadd.f32 %v4992, %v5031
      %v5036 = vadd.f32 %v4993, %v5031
      %v5037 = vadd.f32 %v4994, %v5031
      %v5038 = vadd.f32 %v4995, %v5031
      %v5039 = vadd.f32 %v4996, %v5031
      %v5040 = vadd.f32 %v4997, %v5031
      %v5041 = vadd.f32 %v4998, %v5031
      %v5042 = vadd.f32 %v4999, %v5031
      %v5043 = vadd.f32 %v5000, %v5031
      %v5044 = vadd.f32 %v5001, %v5031
      %v5045 = vadd.f32 %v5002, %v5031
      %v5046 = vadd.f32 %v5003, %v5031
      %v5047 = vadd.f32 %v5004, %v5031
      %v5048 = vadd.f32 %v5005, %v5031
      %v5049 = vadd.f32 %v5006, %v5031
      %v5050 = vadd.f32 %v5007, %v5031
      %v5051 = vadd.f32 %v5008, %v5031
      %v5052 = vadd.f32 %v5009, %v5031
      %v5053 = vadd.f32 %v5010, %v5031
      %v5054 = vadd.f32 %v5011, %v5031
      %v5055 = vadd.f32 %v5012, %v5031
      %v5056 = vadd.f32 %v5013, %v5031
      %v5057 = vadd.f32 %v5014, %v5031
      %v5058 = vadd.f32 %v5015, %v5031
      %v5059 = vadd.f32 %v5016, %v5031
      %v5060 = vadd.f32 %v5017, %v5031
      %v5061 = vadd.f32 %v5018, %v5031
      %v5062 = vadd.f32 %v5019, %v5031
      %v5063 = vadd.f32 %v5020, %v5031
      %v5064 = vadd.f32 %v5021, %v5031
      %v5065 = vadd.f32 %v5022, %v5031
      %v5066 = vadd.f32 %v5023, %v5031
      %v5067 = vadd.f32 %v5024, %v5031
      %v5068 = vadd.f32 %v5025, %v5031
      %v5069 = vunpack.c.l.bf16 %v379
      %v5070 = vunpack.c.l.bf16 %v380
      %v5071 = vunpack.c.l.bf16 %v381
      %v5072 = vunpack.c.l.bf16 %v382
      %v5073 = vunpack.c.l.bf16 %v383
      %v5074 = vunpack.c.l.bf16 %v384
      %v5075 = vunpack.c.l.bf16 %v385
      %v5076 = vunpack.c.l.bf16 %v386
      %v5077 = vunpack.c.l.bf16 %v387
      %v5078 = vunpack.c.l.bf16 %v388
      %v5079 = vunpack.c.l.bf16 %v389
      %v5080 = vunpack.c.l.bf16 %v390
      %v5081 = vunpack.c.l.bf16 %v391
      %v5082 = vunpack.c.l.bf16 %v392
      %v5083 = vunpack.c.l.bf16 %v393
      %v5084 = vunpack.c.l.bf16 %v394
      %v5085 = vunpack.c.l.bf16 %v395
      %v5086 = vunpack.c.l.bf16 %v396
      %v5087 = vunpack.c.l.bf16 %v397
      %v5088 = vunpack.c.l.bf16 %v398
      %v5089 = vunpack.c.l.bf16 %v399
      %v5090 = vunpack.c.l.bf16 %v400
      %v5091 = vunpack.c.l.bf16 %v401
      %v5092 = vunpack.c.l.bf16 %v402
      %v5093 = vunpack.c.l.bf16 %v403
      %v5094 = vunpack.c.l.bf16 %v404
      %v5095 = vunpack.c.l.bf16 %v405
      %v5096 = vunpack.c.l.bf16 %v406
      %v5097 = vunpack.c.l.bf16 %v407
      %v5098 = vunpack.c.l.bf16 %v408
      %v5099 = vunpack.c.l.bf16 %v409
      %v5100 = vunpack.c.l.bf16 %v410
      %v5101 = vunpack.c.l.bf16 %v411
      %v5102 = vunpack.c.l.bf16 %v412
      %v5103 = vunpack.c.l.bf16 %v413
      %v5104 = vunpack.c.l.bf16 %v414
      %v5105 = vunpack.c.l.bf16 %v415
      %v5106 = vunpack.c.l.bf16 %v416
      %v5107 = vunpack.c.l.bf16 %v417
      %v5108 = vunpack.c.l.bf16 %v418
      %v5109 = vunpack.c.l.bf16 %v419
      %v5110 = vunpack.c.l.bf16 %v420
      %v5111 = vunpack.c.l.bf16 %v421
      %v5112 = vunpack.c.l.bf16 %v422
      %v5113 = vunpack.c.l.bf16 %v423
      %v5114 = vunpack.c.l.bf16 %v424
      %v5115 = vunpack.c.l.bf16 %v425
      %v5116 = vunpack.c.l.bf16 %v426
      %v5117 = vunpack.c.l.bf16 %v427
      %v5118 = vunpack.c.l.bf16 %v428
      %v5119 = vunpack.c.l.bf16 %v429
      %v5120 = vunpack.c.l.bf16 %v430
      %v5121 = vunpack.c.l.bf16 %v431
      %v5122 = vunpack.c.l.bf16 %v432
      %s5123 = smul.u32 %s25, 16
      %s5124 = ssub.s32 %s5123, 1
      %v5125 = vstv %s5124
      %v5126 = vadd.s32 %v5125, 1
      %v5127 = vadd.s32 %v5125, 2
      %v5128 = vadd.s32 %v5125, 3
      %v5129 = vadd.s32 %v5125, 4
      %v5130 = vadd.s32 %v5125, 5
      %v5131 = vadd.s32 %v5125, 6
      %v5132 = vadd.s32 %v5125, 7
      %v5133 = vadd.s32 %v5125, 8
      %v5134 = vadd.s32 %v5125, 9
      %v5135 = vadd.s32 %v5125, 10
      %v5136 = vadd.s32 %v5125, 11
      %v5137 = vadd.s32 %v5125, 12
      %v5138 = vadd.s32 %v5125, 13
      %v5139 = vadd.s32 %v5125, 14
      %v5140 = vadd.s32 %v5125, 15
      %v5141 = vadd.s32 %v5125, 16
      %v5142 = vadd.s32 %v5125, 17
      %vm5143 = vcmp.ge.s32.totalorder %v5125, 0
      %vm5144 = vcmp.ge.s32.totalorder %v5126, 0
      %vm5145 = vcmp.ge.s32.totalorder %v5127, 0
      %vm5146 = vcmp.ge.s32.totalorder %v5128, 0
      %vm5147 = vcmp.ge.s32.totalorder %v5129, 0
      %vm5148 = vcmp.ge.s32.totalorder %v5130, 0
      %vm5149 = vcmp.ge.s32.totalorder %v5131, 0
      %vm5150 = vcmp.ge.s32.totalorder %v5132, 0
      %vm5151 = vcmp.ge.s32.totalorder %v5133, 0
      %vm5152 = vcmp.ge.s32.totalorder %v5134, 0
      %vm5153 = vcmp.ge.s32.totalorder %v5135, 0
      %vm5154 = vcmp.ge.s32.totalorder %v5136, 0
      %vm5155 = vcmp.ge.s32.totalorder %v5137, 0
      %vm5156 = vcmp.ge.s32.totalorder %v5138, 0
      %vm5157 = vcmp.ge.s32.totalorder %v5139, 0
      %vm5158 = vcmp.ge.s32.totalorder %v5140, 0
      %vm5159 = vcmp.ge.s32.totalorder %v5141, 0
      %vm5160 = vcmp.ge.s32.totalorder %v5142, 0
      %vm5161 = vcmp.lt.s32.totalorder %v5125, 16
      %vm5162 = vcmp.lt.s32.totalorder %v5126, 16
      %vm5163 = vcmp.lt.s32.totalorder %v5127, 16
      %vm5164 = vcmp.lt.s32.totalorder %v5128, 16
      %vm5165 = vcmp.lt.s32.totalorder %v5129, 16
      %vm5166 = vcmp.lt.s32.totalorder %v5130, 16
      %vm5167 = vcmp.lt.s32.totalorder %v5131, 16
      %vm5168 = vcmp.lt.s32.totalorder %v5132, 16
      %vm5169 = vcmp.lt.s32.totalorder %v5133, 16
      %vm5170 = vcmp.lt.s32.totalorder %v5134, 16
      %vm5171 = vcmp.lt.s32.totalorder %v5135, 16
      %vm5172 = vcmp.lt.s32.totalorder %v5136, 16
      %vm5173 = vcmp.lt.s32.totalorder %v5137, 16
      %vm5174 = vcmp.lt.s32.totalorder %v5138, 16
      %vm5175 = vcmp.lt.s32.totalorder %v5139, 16
      %vm5176 = vcmp.lt.s32.totalorder %v5140, 16
      %vm5177 = vcmp.lt.s32.totalorder %v5141, 16
      %vm5178 = vcmp.lt.s32.totalorder %v5142, 16
      %vm5179 = vmand %vm5143, %vm5161
      %vm5180 = vmand %vm5144, %vm5162
      %vm5181 = vmand %vm5145, %vm5163
      %vm5182 = vmand %vm5146, %vm5164
      %vm5183 = vmand %vm5147, %vm5165
      %vm5184 = vmand %vm5148, %vm5166
      %vm5185 = vmand %vm5149, %vm5167
      %vm5186 = vmand %vm5150, %vm5168
      %vm5187 = vmand %vm5151, %vm5169
      %vm5188 = vmand %vm5152, %vm5170
      %vm5189 = vmand %vm5153, %vm5171
      %vm5190 = vmand %vm5154, %vm5172
      %vm5191 = vmand %vm5155, %vm5173
      %vm5192 = vmand %vm5156, %vm5174
      %vm5193 = vmand %vm5157, %vm5175
      %vm5194 = vmand %vm5158, %vm5176
      %vm5195 = vmand %vm5159, %vm5177
      %vm5196 = vmand %vm5160, %vm5178
      %vm5233 = vcmask 1041408
      %v5234 = vrot.slane %v5033, 6
      %v5235 = vrot.slane %v5034, 6
      %v5236 = vsel %vm5233, %v5234, %v5235
      %v5237 = vrot.slane %v5035, 6
      %v5238 = vrot.slane %v5036, 6
      %v5239 = vsel %vm5233, %v5237, %v5238
      %v5240 = vrot.slane %v5037, 6
      %v5241 = vrot.slane %v5038, 6
      %v5242 = vsel %vm5233, %v5240, %v5241
      %v5243 = vrot.slane %v5039, 6
      %v5244 = vrot.slane %v5040, 6
      %v5245 = vsel %vm5233, %v5243, %v5244
      %v5246 = vrot.slane %v5041, 6
      %v5247 = vrot.slane %v5042, 6
      %v5248 = vsel %vm5233, %v5246, %v5247
      %v5249 = vrot.slane %v5043, 6
      %v5250 = vrot.slane %v5044, 6
      %v5251 = vsel %vm5233, %v5249, %v5250
      %v5252 = vrot.slane %v5045, 6
      %v5253 = vrot.slane %v5046, 6
      %v5254 = vsel %vm5233, %v5252, %v5253
      %v5255 = vrot.slane %v5047, 6
      %v5256 = vrot.slane %v5048, 6
      %v5257 = vsel %vm5233, %v5255, %v5256
      %v5258 = vrot.slane %v5049, 6
      %v5259 = vrot.slane %v5050, 6
      %v5260 = vsel %vm5233, %v5258, %v5259
      %v5261 = vrot.slane %v5051, 6
      %v5262 = vrot.slane %v5052, 6
      %v5263 = vsel %vm5233, %v5261, %v5262
      %v5264 = vrot.slane %v5053, 6
      %v5265 = vrot.slane %v5054, 6
      %v5266 = vsel %vm5233, %v5264, %v5265
      %v5267 = vrot.slane %v5055, 6
      %v5268 = vrot.slane %v5056, 6
      %v5269 = vsel %vm5233, %v5267, %v5268
      %v5270 = vrot.slane %v5057, 6
      %v5271 = vrot.slane %v5058, 6
      %v5272 = vsel %vm5233, %v5270, %v5271
      %v5273 = vrot.slane %v5059, 6
      %v5274 = vrot.slane %v5060, 6
      %v5275 = vsel %vm5233, %v5273, %v5274
      %v5276 = vrot.slane %v5061, 6
      %v5277 = vrot.slane %v5062, 6
      %v5278 = vsel %vm5233, %v5276, %v5277
      %v5279 = vrot.slane %v5063, 6
      %v5280 = vrot.slane %v5064, 6
      %v5281 = vsel %vm5233, %v5279, %v5280
      %v5282 = vrot.slane %v5065, 6
      %v5283 = vrot.slane %v5066, 6
      %v5284 = vsel %vm5233, %v5282, %v5283
      %v5285 = vrot.slane %v5067, 6
      %v5286 = vrot.slane %v5068, 6
      %v5287 = vsel %vm5233, %v5285, %v5286
      %v5342 = vadd.f32 %v5069, %v5234
      %v5343 = vadd.f32 %v5070, %v5236
      %v5344 = vadd.f32 %v5071, %v5235
      %v5345 = vadd.f32 %v5072, %v5237
      %v5346 = vadd.f32 %v5073, %v5239
      %v5347 = vadd.f32 %v5074, %v5238
      %v5348 = vadd.f32 %v5075, %v5240
      %v5349 = vadd.f32 %v5076, %v5242
      %v5350 = vadd.f32 %v5077, %v5241
      %v5351 = vadd.f32 %v5078, %v5243
      %v5352 = vadd.f32 %v5079, %v5245
      %v5353 = vadd.f32 %v5080, %v5244
      %v5354 = vadd.f32 %v5081, %v5246
      %v5355 = vadd.f32 %v5082, %v5248
      %v5356 = vadd.f32 %v5083, %v5247
      %v5357 = vadd.f32 %v5084, %v5249
      %v5358 = vadd.f32 %v5085, %v5251
      %v5359 = vadd.f32 %v5086, %v5250
      %v5360 = vadd.f32 %v5087, %v5252
      %v5361 = vadd.f32 %v5088, %v5254
      %v5362 = vadd.f32 %v5089, %v5253
      %v5363 = vadd.f32 %v5090, %v5255
      %v5364 = vadd.f32 %v5091, %v5257
      %v5365 = vadd.f32 %v5092, %v5256
      %v5366 = vadd.f32 %v5093, %v5258
      %v5367 = vadd.f32 %v5094, %v5260
      %v5368 = vadd.f32 %v5095, %v5259
      %v5369 = vadd.f32 %v5096, %v5261
      %v5370 = vadd.f32 %v5097, %v5263
      %v5371 = vadd.f32 %v5098, %v5262
      %v5372 = vadd.f32 %v5099, %v5264
      %v5373 = vadd.f32 %v5100, %v5266
      %v5374 = vadd.f32 %v5101, %v5265
      %v5375 = vadd.f32 %v5102, %v5267
      %v5376 = vadd.f32 %v5103, %v5269
      %v5377 = vadd.f32 %v5104, %v5268
      %v5378 = vadd.f32 %v5105, %v5270
      %v5379 = vadd.f32 %v5106, %v5272
      %v5380 = vadd.f32 %v5107, %v5271
      %v5381 = vadd.f32 %v5108, %v5273
      %v5382 = vadd.f32 %v5109, %v5275
      %v5383 = vadd.f32 %v5110, %v5274
      %v5384 = vadd.f32 %v5111, %v5276
      %v5385 = vadd.f32 %v5112, %v5278
      %v5386 = vadd.f32 %v5113, %v5277
      %v5387 = vadd.f32 %v5114, %v5279
      %v5388 = vadd.f32 %v5115, %v5281
      %v5389 = vadd.f32 %v5116, %v5280
      %v5390 = vadd.f32 %v5117, %v5282
      %v5391 = vadd.f32 %v5118, %v5284
      %v5392 = vadd.f32 %v5119, %v5283
      %v5393 = vadd.f32 %v5120, %v5285
      %v5394 = vadd.f32 %v5121, %v5287
      %v5395 = vadd.f32 %v5122, %v5286
      %v5396 = vsel %vm5179, 1, 0
      %v5397 = vsel %vm5180, 1, 0
      %v5398 = vsel %vm5181, 1, 0
      %v5399 = vsel %vm5182, 1, 0
      %v5400 = vsel %vm5183, 1, 0
      %v5401 = vsel %vm5184, 1, 0
      %v5402 = vsel %vm5185, 1, 0
      %v5403 = vsel %vm5186, 1, 0
      %v5404 = vsel %vm5187, 1, 0
      %v5405 = vsel %vm5188, 1, 0
      %v5406 = vsel %vm5189, 1, 0
      %v5407 = vsel %vm5190, 1, 0
      %v5408 = vsel %vm5191, 1, 0
      %v5409 = vsel %vm5192, 1, 0
      %v5410 = vsel %vm5193, 1, 0
      %v5411 = vsel %vm5194, 1, 0
      %v5412 = vsel %vm5195, 1, 0
      %v5413 = vsel %vm5196, 1, 0
      %vm5414 = vcmp.eq.s32.totalorder %v5396, 1
      %vm5415 = vcmp.eq.s32.totalorder %v5397, 1
      %vm5416 = vcmp.eq.s32.totalorder %v5398, 1
      %vm5417 = vcmp.eq.s32.totalorder %v5399, 1
      %vm5418 = vcmp.eq.s32.totalorder %v5400, 1
      %vm5419 = vcmp.eq.s32.totalorder %v5401, 1
      %vm5420 = vcmp.eq.s32.totalorder %v5402, 1
      %vm5421 = vcmp.eq.s32.totalorder %v5403, 1
      %vm5422 = vcmp.eq.s32.totalorder %v5404, 1
      %vm5423 = vcmp.eq.s32.totalorder %v5405, 1
      %vm5424 = vcmp.eq.s32.totalorder %v5406, 1
      %vm5425 = vcmp.eq.s32.totalorder %v5407, 1
      %vm5426 = vcmp.eq.s32.totalorder %v5408, 1
      %vm5427 = vcmp.eq.s32.totalorder %v5409, 1
      %vm5428 = vcmp.eq.s32.totalorder %v5410, 1
      %vm5429 = vcmp.eq.s32.totalorder %v5411, 1
      %vm5430 = vcmp.eq.s32.totalorder %v5412, 1
      %vm5431 = vcmp.eq.s32.totalorder %v5413, 1
      %v5432 = vsel %vm5414, %v5342, 0.0
      %v5433 = vsel %vm5414, %v5343, 0.0
      %v5434 = vsel %vm5414, %v5344, 0.0
      %v5435 = vsel %vm5415, %v5345, 0.0
      %v5436 = vsel %vm5415, %v5346, 0.0
      %v5437 = vsel %vm5415, %v5347, 0.0
      %v5438 = vsel %vm5416, %v5348, 0.0
      %v5439 = vsel %vm5416, %v5349, 0.0
      %v5440 = vsel %vm5416, %v5350, 0.0
      %v5441 = vsel %vm5417, %v5351, 0.0
      %v5442 = vsel %vm5417, %v5352, 0.0
      %v5443 = vsel %vm5417, %v5353, 0.0
      %v5444 = vsel %vm5418, %v5354, 0.0
      %v5445 = vsel %vm5418, %v5355, 0.0
      %v5446 = vsel %vm5418, %v5356, 0.0
      %v5447 = vsel %vm5419, %v5357, 0.0
      %v5448 = vsel %vm5419, %v5358, 0.0
      %v5449 = vsel %vm5419, %v5359, 0.0
      %v5450 = vsel %vm5420, %v5360, 0.0
      %v5451 = vsel %vm5420, %v5361, 0.0
      %v5452 = vsel %vm5420, %v5362, 0.0
      %v5453 = vsel %vm5421, %v5363, 0.0
      %v5454 = vsel %vm5421, %v5364, 0.0
      %v5455 = vsel %vm5421, %v5365, 0.0
      %v5456 = vsel %vm5422, %v5366, 0.0
      %v5457 = vsel %vm5422, %v5367, 0.0
      %v5458 = vsel %vm5422, %v5368, 0.0
      %v5459 = vsel %vm5423, %v5369, 0.0
      %v5460 = vsel %vm5423, %v5370, 0.0
      %v5461 = vsel %vm5423, %v5371, 0.0
      %v5462 = vsel %vm5424, %v5372, 0.0
      %v5463 = vsel %vm5424, %v5373, 0.0
      %v5464 = vsel %vm5424, %v5374, 0.0
      %v5465 = vsel %vm5425, %v5375, 0.0
      %v5466 = vsel %vm5425, %v5376, 0.0
      %v5467 = vsel %vm5425, %v5377, 0.0
      %v5468 = vsel %vm5426, %v5378, 0.0
      %v5469 = vsel %vm5426, %v5379, 0.0
      %v5470 = vsel %vm5426, %v5380, 0.0
      %v5471 = vsel %vm5427, %v5381, 0.0
      %v5472 = vsel %vm5427, %v5382, 0.0
      %v5473 = vsel %vm5427, %v5383, 0.0
      %v5474 = vsel %vm5428, %v5384, 0.0
      %v5475 = vsel %vm5428, %v5385, 0.0
      %v5476 = vsel %vm5428, %v5386, 0.0
      %v5477 = vsel %vm5429, %v5387, 0.0
      %v5478 = vsel %vm5429, %v5388, 0.0
      %v5479 = vsel %vm5429, %v5389, 0.0
      %v5480 = vsel %vm5430, %v5390, 0.0
      %v5481 = vsel %vm5430, %v5391, 0.0
      %v5482 = vsel %vm5430, %v5392, 0.0
      %v5483 = vsel %vm5431, %v5393, 0.0
      %v5484 = vsel %vm5431, %v5394, 0.0
      %v5485 = vsel %vm5431, %v5395, 0.0
      %v5486 = vpack.c.bf16 %v5433, %v5432
      %v5487 = vpack.c.bf16 %v5434, %v5434
      %v5488 = vpack.c.bf16 %v5436, %v5435
      %v5489 = vpack.c.bf16 %v5437, %v5437
      %v5490 = vpack.c.bf16 %v5439, %v5438
      %v5491 = vpack.c.bf16 %v5440, %v5440
      %v5492 = vpack.c.bf16 %v5442, %v5441
      %v5493 = vpack.c.bf16 %v5443, %v5443
      %v5494 = vpack.c.bf16 %v5445, %v5444
      %v5495 = vpack.c.bf16 %v5446, %v5446
      %v5496 = vpack.c.bf16 %v5448, %v5447
      %v5497 = vpack.c.bf16 %v5449, %v5449
      %v5498 = vpack.c.bf16 %v5451, %v5450
      %v5499 = vpack.c.bf16 %v5452, %v5452
      %v5500 = vpack.c.bf16 %v5454, %v5453
      %v5501 = vpack.c.bf16 %v5455, %v5455
      %v5502 = vpack.c.bf16 %v5457, %v5456
      %v5503 = vpack.c.bf16 %v5458, %v5458
      %v5504 = vpack.c.bf16 %v5460, %v5459
      %v5505 = vpack.c.bf16 %v5461, %v5461
      %v5506 = vpack.c.bf16 %v5463, %v5462
      %v5507 = vpack.c.bf16 %v5464, %v5464
      %v5508 = vpack.c.bf16 %v5466, %v5465
      %v5509 = vpack.c.bf16 %v5467, %v5467
      %v5510 = vpack.c.bf16 %v5469, %v5468
      %v5511 = vpack.c.bf16 %v5470, %v5470
      %v5512 = vpack.c.bf16 %v5472, %v5471
      %v5513 = vpack.c.bf16 %v5473, %v5473
      %v5514 = vpack.c.bf16 %v5475, %v5474
      %v5515 = vpack.c.bf16 %v5476, %v5476
      %v5516 = vpack.c.bf16 %v5478, %v5477
      %v5517 = vpack.c.bf16 %v5479, %v5479
      %v5518 = vpack.c.bf16 %v5481, %v5480
      %v5519 = vpack.c.bf16 %v5482, %v5482
      %v5520 = vpack.c.bf16 %v5484, %v5483
      %v5521 = vpack.c.bf16 %v5485, %v5485
      %vm5522 = vsmask.f32 7424
      %v5524 = vshrl.u32 %v5486, 16
      %v5526 = vshll.u32 %v5486, 16
      %v5528 = vrot.slane %v5526, 1
      %v5529 = vor.u32 %v5524, %v5528
      %v5531 = vshll.u32 %v5487, 16
      %v5533 = vrot.slane %v5531, 1
      %v5534 = vsel %vm5522, %v5529, %v5533
      %v5535 = vshrl.u32 %v5487, 16
      %v5538 = vshrl.u32 %v5488, 16
      %v5540 = vshll.u32 %v5488, 16
      %v5542 = vrot.slane %v5540, 1
      %v5543 = vor.u32 %v5538, %v5542
      %v5545 = vshll.u32 %v5489, 16
      %v5547 = vrot.slane %v5545, 1
      %v5548 = vsel %vm5522, %v5543, %v5547
      %v5549 = vshrl.u32 %v5489, 16
      %v5552 = vshrl.u32 %v5490, 16
      %v5554 = vshll.u32 %v5490, 16
      %v5556 = vrot.slane %v5554, 1
      %v5557 = vor.u32 %v5552, %v5556
      %v5559 = vshll.u32 %v5491, 16
      %v5561 = vrot.slane %v5559, 1
      %v5562 = vsel %vm5522, %v5557, %v5561
      %v5563 = vshrl.u32 %v5491, 16
      %v5566 = vshrl.u32 %v5492, 16
      %v5568 = vshll.u32 %v5492, 16
      %v5570 = vrot.slane %v5568, 1
      %v5571 = vor.u32 %v5566, %v5570
      %v5573 = vshll.u32 %v5493, 16
      %v5575 = vrot.slane %v5573, 1
      %v5576 = vsel %vm5522, %v5571, %v5575
      %v5577 = vshrl.u32 %v5493, 16
      %v5580 = vshrl.u32 %v5494, 16
      %v5582 = vshll.u32 %v5494, 16
      %v5584 = vrot.slane %v5582, 1
      %v5585 = vor.u32 %v5580, %v5584
      %v5587 = vshll.u32 %v5495, 16
      %v5589 = vrot.slane %v5587, 1
      %v5590 = vsel %vm5522, %v5585, %v5589
      %v5591 = vshrl.u32 %v5495, 16
      %v5594 = vshrl.u32 %v5496, 16
      %v5596 = vshll.u32 %v5496, 16
      %v5598 = vrot.slane %v5596, 1
      %v5599 = vor.u32 %v5594, %v5598
      %v5601 = vshll.u32 %v5497, 16
      %v5603 = vrot.slane %v5601, 1
      %v5604 = vsel %vm5522, %v5599, %v5603
      %v5605 = vshrl.u32 %v5497, 16
      %v5608 = vshrl.u32 %v5498, 16
      %v5610 = vshll.u32 %v5498, 16
      %v5612 = vrot.slane %v5610, 1
      %v5613 = vor.u32 %v5608, %v5612
      %v5615 = vshll.u32 %v5499, 16
      %v5617 = vrot.slane %v5615, 1
      %v5618 = vsel %vm5522, %v5613, %v5617
      %v5619 = vshrl.u32 %v5499, 16
      %v5622 = vshrl.u32 %v5500, 16
      %v5624 = vshll.u32 %v5500, 16
      %v5626 = vrot.slane %v5624, 1
      %v5627 = vor.u32 %v5622, %v5626
      %v5629 = vshll.u32 %v5501, 16
      %v5631 = vrot.slane %v5629, 1
      %v5632 = vsel %vm5522, %v5627, %v5631
      %v5633 = vshrl.u32 %v5501, 16
      %v5636 = vshrl.u32 %v5502, 16
      %v5638 = vshll.u32 %v5502, 16
      %v5640 = vrot.slane %v5638, 1
      %v5641 = vor.u32 %v5636, %v5640
      %v5643 = vshll.u32 %v5503, 16
      %v5645 = vrot.slane %v5643, 1
      %v5646 = vsel %vm5522, %v5641, %v5645
      %v5647 = vshrl.u32 %v5503, 16
      %v5650 = vshrl.u32 %v5504, 16
      %v5652 = vshll.u32 %v5504, 16
      %v5654 = vrot.slane %v5652, 1
      %v5655 = vor.u32 %v5650, %v5654
      %v5657 = vshll.u32 %v5505, 16
      %v5659 = vrot.slane %v5657, 1
      %v5660 = vsel %vm5522, %v5655, %v5659
      %v5661 = vshrl.u32 %v5505, 16
      %v5664 = vshrl.u32 %v5506, 16
      %v5666 = vshll.u32 %v5506, 16
      %v5668 = vrot.slane %v5666, 1
      %v5669 = vor.u32 %v5664, %v5668
      %v5671 = vshll.u32 %v5507, 16
      %v5673 = vrot.slane %v5671, 1
      %v5674 = vsel %vm5522, %v5669, %v5673
      %v5675 = vshrl.u32 %v5507, 16
      %v5678 = vshrl.u32 %v5508, 16
      %v5680 = vshll.u32 %v5508, 16
      %v5682 = vrot.slane %v5680, 1
      %v5683 = vor.u32 %v5678, %v5682
      %v5685 = vshll.u32 %v5509, 16
      %v5687 = vrot.slane %v5685, 1
      %v5688 = vsel %vm5522, %v5683, %v5687
      %v5689 = vshrl.u32 %v5509, 16
      %v5692 = vshrl.u32 %v5510, 16
      %v5694 = vshll.u32 %v5510, 16
      %v5696 = vrot.slane %v5694, 1
      %v5697 = vor.u32 %v5692, %v5696
      %v5699 = vshll.u32 %v5511, 16
      %v5701 = vrot.slane %v5699, 1
      %v5702 = vsel %vm5522, %v5697, %v5701
      %v5703 = vshrl.u32 %v5511, 16
      %v5706 = vshrl.u32 %v5512, 16
      %v5708 = vshll.u32 %v5512, 16
      %v5710 = vrot.slane %v5708, 1
      %v5711 = vor.u32 %v5706, %v5710
      %v5713 = vshll.u32 %v5513, 16
      %v5715 = vrot.slane %v5713, 1
      %v5716 = vsel %vm5522, %v5711, %v5715
      %v5717 = vshrl.u32 %v5513, 16
      %v5720 = vshrl.u32 %v5514, 16
      %v5722 = vshll.u32 %v5514, 16
      %v5724 = vrot.slane %v5722, 1
      %v5725 = vor.u32 %v5720, %v5724
      %v5727 = vshll.u32 %v5515, 16
      %v5729 = vrot.slane %v5727, 1
      %v5730 = vsel %vm5522, %v5725, %v5729
      %v5731 = vshrl.u32 %v5515, 16
      %v5734 = vshrl.u32 %v5516, 16
      %v5736 = vshll.u32 %v5516, 16
      %v5738 = vrot.slane %v5736, 1
      %v5739 = vor.u32 %v5734, %v5738
      %v5741 = vshll.u32 %v5517, 16
      %v5743 = vrot.slane %v5741, 1
      %v5744 = vsel %vm5522, %v5739, %v5743
      %v5745 = vshrl.u32 %v5517, 16
      %v5748 = vshrl.u32 %v5518, 16
      %v5750 = vshll.u32 %v5518, 16
      %v5752 = vrot.slane %v5750, 1
      %v5753 = vor.u32 %v5748, %v5752
      %v5755 = vshll.u32 %v5519, 16
      %v5757 = vrot.slane %v5755, 1
      %v5758 = vsel %vm5522, %v5753, %v5757
      %v5759 = vshrl.u32 %v5519, 16
      %v5762 = vshrl.u32 %v5520, 16
      %v5764 = vshll.u32 %v5520, 16
      %v5766 = vrot.slane %v5764, 1
      %v5767 = vor.u32 %v5762, %v5766
      %v5769 = vshll.u32 %v5521, 16
      %v5771 = vrot.slane %v5769, 1
      %v5772 = vsel %vm5522, %v5767, %v5771
      %v5773 = vshrl.u32 %v5521, 16
      %vm5811 = vcmask 1040384
      %vm5812 = vsmask.f32 256
      %vm5813 = vmand %vm5811, %vm5812
      %v5814 = vsel %vm5813, 0, %v5534
      %v5815 = vsel %vm5813, 0, %v5548
      %v5816 = vsel %vm5813, 0, %v5562
      %v5817 = vsel %vm5813, 0, %v5576
      %v5818 = vsel %vm5813, 0, %v5590
      %v5819 = vsel %vm5813, 0, %v5604
      %v5820 = vsel %vm5813, 0, %v5618
      %v5821 = vsel %vm5813, 0, %v5632
      %v5822 = vsel %vm5813, 0, %v5646
      %v5823 = vsel %vm5813, 0, %v5660
      %v5824 = vsel %vm5813, 0, %v5674
      %v5825 = vsel %vm5813, 0, %v5688
      %v5826 = vsel %vm5813, 0, %v5702
      %v5827 = vsel %vm5813, 0, %v5716
      %v5828 = vsel %vm5813, 0, %v5730
      %v5829 = vsel %vm5813, 0, %v5744
      %v5830 = vsel %vm5813, 0, %v5758
      %v5831 = vsel %vm5813, 0, %v5772
      %v5832 = vsel %vm5813, %v5535, 0
      %v5833 = vsel %vm5813, %v5549, 0
      %v5834 = vsel %vm5813, %v5563, 0
      %v5835 = vsel %vm5813, %v5577, 0
      %v5836 = vsel %vm5813, %v5591, 0
      %v5837 = vsel %vm5813, %v5605, 0
      %v5838 = vsel %vm5813, %v5619, 0
      %v5839 = vsel %vm5813, %v5633, 0
      %v5840 = vsel %vm5813, %v5647, 0
      %v5841 = vsel %vm5813, %v5661, 0
      %v5842 = vsel %vm5813, %v5675, 0
      %v5843 = vsel %vm5813, %v5689, 0
      %v5844 = vsel %vm5813, %v5703, 0
      %v5845 = vsel %vm5813, %v5717, 0
      %v5846 = vsel %vm5813, %v5731, 0
      %v5847 = vsel %vm5813, %v5745, 0
      %v5848 = vsel %vm5813, %v5759, 0
      %v5849 = vsel %vm5813, %v5773, 0
      %v5851 = vshrl.u32 %v5814, 16
      %v5853 = vshll.u32 %v5814, 16
      %v5855 = vrot.slane %v5853, 1
      %v5856 = vor.u32 %v5851, %v5855
      %v5858 = vshll.u32 %v5832, 16
      %v5860 = vrot.slane %v5858, 1
      %v5861 = vsel %vm5522, %v5856, %v5860
      %v5863 = vshrl.u32 %v5815, 16
      %v5865 = vshll.u32 %v5815, 16
      %v5867 = vrot.slane %v5865, 1
      %v5868 = vor.u32 %v5863, %v5867
      %v5870 = vshll.u32 %v5833, 16
      %v5872 = vrot.slane %v5870, 1
      %v5873 = vsel %vm5522, %v5868, %v5872
      %v5875 = vshrl.u32 %v5816, 16
      %v5877 = vshll.u32 %v5816, 16
      %v5879 = vrot.slane %v5877, 1
      %v5880 = vor.u32 %v5875, %v5879
      %v5882 = vshll.u32 %v5834, 16
      %v5884 = vrot.slane %v5882, 1
      %v5885 = vsel %vm5522, %v5880, %v5884
      %v5887 = vshrl.u32 %v5817, 16
      %v5889 = vshll.u32 %v5817, 16
      %v5891 = vrot.slane %v5889, 1
      %v5892 = vor.u32 %v5887, %v5891
      %v5894 = vshll.u32 %v5835, 16
      %v5896 = vrot.slane %v5894, 1
      %v5897 = vsel %vm5522, %v5892, %v5896
      %v5899 = vshrl.u32 %v5818, 16
      %v5901 = vshll.u32 %v5818, 16
      %v5903 = vrot.slane %v5901, 1
      %v5904 = vor.u32 %v5899, %v5903
      %v5906 = vshll.u32 %v5836, 16
      %v5908 = vrot.slane %v5906, 1
      %v5909 = vsel %vm5522, %v5904, %v5908
      %v5911 = vshrl.u32 %v5819, 16
      %v5913 = vshll.u32 %v5819, 16
      %v5915 = vrot.slane %v5913, 1
      %v5916 = vor.u32 %v5911, %v5915
      %v5918 = vshll.u32 %v5837, 16
      %v5920 = vrot.slane %v5918, 1
      %v5921 = vsel %vm5522, %v5916, %v5920
      %v5923 = vshrl.u32 %v5820, 16
      %v5925 = vshll.u32 %v5820, 16
      %v5927 = vrot.slane %v5925, 1
      %v5928 = vor.u32 %v5923, %v5927
      %v5930 = vshll.u32 %v5838, 16
      %v5932 = vrot.slane %v5930, 1
      %v5933 = vsel %vm5522, %v5928, %v5932
      %v5935 = vshrl.u32 %v5821, 16
      %v5937 = vshll.u32 %v5821, 16
      %v5939 = vrot.slane %v5937, 1
      %v5940 = vor.u32 %v5935, %v5939
      %v5942 = vshll.u32 %v5839, 16
      %v5944 = vrot.slane %v5942, 1
      %v5945 = vsel %vm5522, %v5940, %v5944
      %v5947 = vshrl.u32 %v5822, 16
      %v5949 = vshll.u32 %v5822, 16
      %v5951 = vrot.slane %v5949, 1
      %v5952 = vor.u32 %v5947, %v5951
      %v5954 = vshll.u32 %v5840, 16
      %v5956 = vrot.slane %v5954, 1
      %v5957 = vsel %vm5522, %v5952, %v5956
      %v5959 = vshrl.u32 %v5823, 16
      %v5961 = vshll.u32 %v5823, 16
      %v5963 = vrot.slane %v5961, 1
      %v5964 = vor.u32 %v5959, %v5963
      %v5966 = vshll.u32 %v5841, 16
      %v5968 = vrot.slane %v5966, 1
      %v5969 = vsel %vm5522, %v5964, %v5968
      %v5971 = vshrl.u32 %v5824, 16
      %v5973 = vshll.u32 %v5824, 16
      %v5975 = vrot.slane %v5973, 1
      %v5976 = vor.u32 %v5971, %v5975
      %v5978 = vshll.u32 %v5842, 16
      %v5980 = vrot.slane %v5978, 1
      %v5981 = vsel %vm5522, %v5976, %v5980
      %v5983 = vshrl.u32 %v5825, 16
      %v5985 = vshll.u32 %v5825, 16
      %v5987 = vrot.slane %v5985, 1
      %v5988 = vor.u32 %v5983, %v5987
      %v5990 = vshll.u32 %v5843, 16
      %v5992 = vrot.slane %v5990, 1
      %v5993 = vsel %vm5522, %v5988, %v5992
      %v5995 = vshrl.u32 %v5826, 16
      %v5997 = vshll.u32 %v5826, 16
      %v5999 = vrot.slane %v5997, 1
      %v6000 = vor.u32 %v5995, %v5999
      %v6002 = vshll.u32 %v5844, 16
      %v6004 = vrot.slane %v6002, 1
      %v6005 = vsel %vm5522, %v6000, %v6004
      %v6007 = vshrl.u32 %v5827, 16
      %v6009 = vshll.u32 %v5827, 16
      %v6011 = vrot.slane %v6009, 1
      %v6012 = vor.u32 %v6007, %v6011
      %v6014 = vshll.u32 %v5845, 16
      %v6016 = vrot.slane %v6014, 1
      %v6017 = vsel %vm5522, %v6012, %v6016
      %v6019 = vshrl.u32 %v5828, 16
      %v6021 = vshll.u32 %v5828, 16
      %v6023 = vrot.slane %v6021, 1
      %v6024 = vor.u32 %v6019, %v6023
      %v6026 = vshll.u32 %v5846, 16
      %v6028 = vrot.slane %v6026, 1
      %v6029 = vsel %vm5522, %v6024, %v6028
      %v6031 = vshrl.u32 %v5829, 16
      %v6033 = vshll.u32 %v5829, 16
      %v6035 = vrot.slane %v6033, 1
      %v6036 = vor.u32 %v6031, %v6035
      %v6038 = vshll.u32 %v5847, 16
      %v6040 = vrot.slane %v6038, 1
      %v6041 = vsel %vm5522, %v6036, %v6040
      %vm6074 = vcmask 1046528
      %v6075 = vrot.slane %v5814, 1
      %v6076 = vrot.slane %v5832, 1
      %v6077 = vsel %vm6074, %v6075, %v6076
      %v6078 = vrot.slane %v5815, 1
      %v6079 = vrot.slane %v5833, 1
      %v6080 = vsel %vm6074, %v6078, %v6079
      %v6081 = vrot.slane %v5816, 1
      %v6082 = vrot.slane %v5834, 1
      %v6083 = vsel %vm6074, %v6081, %v6082
      %v6084 = vrot.slane %v5817, 1
      %v6085 = vrot.slane %v5835, 1
      %v6086 = vsel %vm6074, %v6084, %v6085
      %v6087 = vrot.slane %v5818, 1
      %v6088 = vrot.slane %v5836, 1
      %v6089 = vsel %vm6074, %v6087, %v6088
      %v6090 = vrot.slane %v5819, 1
      %v6091 = vrot.slane %v5837, 1
      %v6092 = vsel %vm6074, %v6090, %v6091
      %v6093 = vrot.slane %v5820, 1
      %v6094 = vrot.slane %v5838, 1
      %v6095 = vsel %vm6074, %v6093, %v6094
      %v6096 = vrot.slane %v5821, 1
      %v6097 = vrot.slane %v5839, 1
      %v6098 = vsel %vm6074, %v6096, %v6097
      %v6099 = vrot.slane %v5822, 1
      %v6100 = vrot.slane %v5840, 1
      %v6101 = vsel %vm6074, %v6099, %v6100
      %v6102 = vrot.slane %v5823, 1
      %v6103 = vrot.slane %v5841, 1
      %v6104 = vsel %vm6074, %v6102, %v6103
      %v6105 = vrot.slane %v5824, 1
      %v6106 = vrot.slane %v5842, 1
      %v6107 = vsel %vm6074, %v6105, %v6106
      %v6108 = vrot.slane %v5825, 1
      %v6109 = vrot.slane %v5843, 1
      %v6110 = vsel %vm6074, %v6108, %v6109
      %v6111 = vrot.slane %v5826, 1
      %v6112 = vrot.slane %v5844, 1
      %v6113 = vsel %vm6074, %v6111, %v6112
      %v6114 = vrot.slane %v5827, 1
      %v6115 = vrot.slane %v5845, 1
      %v6116 = vsel %vm6074, %v6114, %v6115
      %v6117 = vrot.slane %v5828, 1
      %v6118 = vrot.slane %v5846, 1
      %v6119 = vsel %vm6074, %v6117, %v6118
      %v6120 = vrot.slane %v5829, 1
      %v6121 = vrot.slane %v5847, 1
      %v6122 = vsel %vm6074, %v6120, %v6121
      %6123 = vrot.lane.b32.xlu0 %v5861, 64
      %v6124 = vpop.permute.xlu0 %6123
      %6125 = vrot.lane.b32.xlu0 %v5873, 64
      %v6126 = vpop.permute.xlu0 %6125
      %6127 = vrot.lane.b32.xlu0 %v5885, 64
      %v6128 = vpop.permute.xlu0 %6127
      %6129 = vrot.lane.b32.xlu0 %v5897, 64
      %v6130 = vpop.permute.xlu0 %6129
      %6131 = vrot.lane.b32.xlu0 %v5909, 64
      %v6132 = vpop.permute.xlu0 %6131
      %6133 = vrot.lane.b32.xlu0 %v5921, 64
      %v6134 = vpop.permute.xlu0 %6133
      %6135 = vrot.lane.b32.xlu0 %v5933, 64
      %v6136 = vpop.permute.xlu0 %6135
      %6137 = vrot.lane.b32.xlu0 %v5945, 64
      %v6138 = vpop.permute.xlu0 %6137
      %6139 = vrot.lane.b32.xlu0 %v5957, 64
      %v6140 = vpop.permute.xlu0 %6139
      %6141 = vrot.lane.b32.xlu0 %v5969, 64
      %v6142 = vpop.permute.xlu0 %6141
      %6143 = vrot.lane.b32.xlu0 %v5981, 64
      %v6144 = vpop.permute.xlu0 %6143
      %6145 = vrot.lane.b32.xlu0 %v5993, 64
      %v6146 = vpop.permute.xlu0 %6145
      %6147 = vrot.lane.b32.xlu0 %v6005, 64
      %v6148 = vpop.permute.xlu0 %6147
      %6149 = vrot.lane.b32.xlu0 %v6017, 64
      %v6150 = vpop.permute.xlu0 %6149
      %6151 = vrot.lane.b32.xlu0 %v6029, 64
      %v6152 = vpop.permute.xlu0 %6151
      %6153 = vrot.lane.b32.xlu0 %v6041, 64
      %v6154 = vpop.permute.xlu0 %6153
      %v6156 = vsel %vm1801, %v5814, %v6124
      %v6159 = vsel %vm1801, %v5815, %v6126
      %v6162 = vsel %vm1801, %v5816, %v6128
      %v6165 = vsel %vm1801, %v5817, %v6130
      %v6168 = vsel %vm1801, %v5818, %v6132
      %v6171 = vsel %vm1801, %v5819, %v6134
      %v6174 = vsel %vm1801, %v5820, %v6136
      %v6177 = vsel %vm1801, %v5821, %v6138
      %v6180 = vsel %vm1801, %v5822, %v6140
      %v6183 = vsel %vm1801, %v5823, %v6142
      %v6186 = vsel %vm1801, %v5824, %v6144
      %v6189 = vsel %vm1801, %v5825, %v6146
      %v6192 = vsel %vm1801, %v5826, %v6148
      %v6195 = vsel %vm1801, %v5827, %v6150
      %v6198 = vsel %vm1801, %v5828, %v6152
      %v6201 = vsel %vm1801, %v5829, %v6154
      %v6203 = vld [vmem:[%s3] sm:$0xf]
      %v6204 = vld [vmem:[%s3 + $0x4] sm:$0xf]
      %v6205 = vld [vmem:[%s3 + $0x8] sm:$0xf]
      %v6206 = vld [vmem:[%s3 + $0xc] sm:$0xf]
      %v6207 = vld [vmem:[%s3 + $0x10] sm:$0xf]
      %v6208 = vld [vmem:[%s3 + $0x14] sm:$0xf]
      %v6209 = vld [vmem:[%s3 + $0x18] sm:$0xf]
      %v6210 = vld [vmem:[%s3 + $0x1c] sm:$0xf]
      %v6211 = vld [vmem:[%s3 + $0x20] sm:$0xf]
      %v6212 = vld [vmem:[%s3 + $0x24] sm:$0xf]
      %v6213 = vld [vmem:[%s3 + $0x28] sm:$0xf]
      %v6214 = vld [vmem:[%s3 + $0x2c] sm:$0xf]
      %v6215 = vld [vmem:[%s3 + $0x30] sm:$0xf]
      %v6216 = vld [vmem:[%s3 + $0x34] sm:$0xf]
      %v6217 = vld [vmem:[%s3 + $0x38] sm:$0xf]
      %v6218 = vld [vmem:[%s3 + $0x3c] sm:$0xf]
      %v6219 = vld [vmem:[%s3 + $0x40] sm:$0xf]
      %v6220 = vld [vmem:[%s3 + $0x44] sm:$0xf]
      %v6221 = vld [vmem:[%s3 + $0x48] sm:$0xf]
      %v6222 = vld [vmem:[%s3 + $0x4c] sm:$0xf]
      %v6223 = vld [vmem:[%s3 + $0x50] sm:$0xf]
      %v6224 = vld [vmem:[%s3 + $0x54] sm:$0xf]
      %v6225 = vld [vmem:[%s3 + $0x58] sm:$0xf]
      %v6226 = vld [vmem:[%s3 + $0x5c] sm:$0xf]
      %v6228 = vshrl.u32 %v5830, 16
      %v6230 = vshll.u32 %v5830, 16
      %v6232 = vrot.slane %v6230, 1
      %v6233 = vor.u32 %v6228, %v6232
      %v6235 = vshll.u32 %v5848, 16
      %v6237 = vrot.slane %v6235, 1
      %v6238 = vsel %vm5522, %v6233, %v6237
      %v6241 = vrot.slane %v5830, 1
      %v6242 = vrot.slane %v5848, 1
      %v6243 = vsel %vm6074, %v6241, %v6242
      %6244 = vrot.lane.b32.xlu0 %v6238, 64
      %v6245 = vpop.permute.xlu0 %6244
      %v6247 = vsel %vm1801, %v5830, %v6245
      %s6249 = scalar_lea.vmem %s3, 96
      %v6250 = vld [vmem:[%s6249] sm:$0xf]
      %v6251 = vld [vmem:[%s6249 + $0x4] sm:$0xf]
      %v6252 = vld [vmem:[%s6249 + $0x8] sm:$0xf]
      %v6253 = vld [vmem:[%s6249 + $0xc] sm:$0xf]
      %v6254 = vld [vmem:[%s6249 + $0x10] sm:$0xf]
      %v6255 = vld [vmem:[%s6249 + $0x14] sm:$0xf]
      %v6256 = vld [vmem:[%s6249 + $0x18] sm:$0xf]
      %v6257 = vld [vmem:[%s6249 + $0x1c] sm:$0xf]
      %v6258 = vld [vmem:[%s6249 + $0x20] sm:$0xf]
      %v6259 = vld [vmem:[%s6249 + $0x24] sm:$0xf]
      %v6260 = vld [vmem:[%s6249 + $0x28] sm:$0xf]
      %v6261 = vld [vmem:[%s6249 + $0x2c] sm:$0xf]
      %v6262 = vld [vmem:[%s6249 + $0x30] sm:$0xf]
      %v6263 = vld [vmem:[%s6249 + $0x34] sm:$0xf]
      %v6264 = vld [vmem:[%s6249 + $0x38] sm:$0xf]
      %v6265 = vld [vmem:[%s6249 + $0x3c] sm:$0xf]
      %v6266 = vld [vmem:[%s6249 + $0x40] sm:$0xf]
      %v6267 = vld [vmem:[%s6249 + $0x44] sm:$0xf]
      %v6268 = vld [vmem:[%s6249 + $0x48] sm:$0xf]
      %v6269 = vld [vmem:[%s6249 + $0x4c] sm:$0xf]
      %v6270 = vld [vmem:[%s6249 + $0x50] sm:$0xf]
      %v6271 = vld [vmem:[%s6249 + $0x54] sm:$0xf]
      %v6272 = vld [vmem:[%s6249 + $0x58] sm:$0xf]
      %v6273 = vld [vmem:[%s6249 + $0x5c] sm:$0xf]
      %v6298 = vunpack.c.l.b16 %v6250
      %v6299 = vunpack.c.l.b16 %v6251
      %v6300 = vunpack.c.l.b16 %v6252
      %v6301 = vunpack.c.l.b16 %v6253
      %v6302 = vunpack.c.l.b16 %v6254
      %v6303 = vunpack.c.l.b16 %v6255
      %v6304 = vunpack.c.l.b16 %v6256
      %v6305 = vunpack.c.l.b16 %v6257
      %v6306 = vunpack.c.l.b16 %v6258
      %v6307 = vunpack.c.l.b16 %v6259
      %v6308 = vunpack.c.l.b16 %v6260
      %v6309 = vunpack.c.l.b16 %v6261
      %v6310 = vunpack.c.l.b16 %v6262
      %v6311 = vunpack.c.l.b16 %v6263
      %v6312 = vunpack.c.l.b16 %v6264
      %v6313 = vunpack.c.l.b16 %v6265
      %v6314 = vunpack.c.l.b16 %v6266
      %v6315 = vunpack.c.l.b16 %v6267
      %v6316 = vunpack.c.l.b16 %v6268
      %v6317 = vunpack.c.l.b16 %v6269
      %v6318 = vunpack.c.l.b16 %v6270
      %v6319 = vunpack.c.l.b16 %v6271
      %v6320 = vunpack.c.l.b16 %v6272
      %v6321 = vunpack.c.l.b16 %v6273
      %v6322 = vpack.c.b16 %v6299, %v6298
      %v6323 = vpack.c.b16 %v6301, %v6300
      %v6324 = vpack.c.b16 %v6303, %v6302
      %v6325 = vpack.c.b16 %v6305, %v6304
      %v6326 = vpack.c.b16 %v6307, %v6306
      %v6327 = vpack.c.b16 %v6309, %v6308
      %v6328 = vpack.c.b16 %v6311, %v6310
      %v6329 = vpack.c.b16 %v6313, %v6312
      %v6330 = vpack.c.b16 %v6315, %v6314
      %v6331 = vpack.c.b16 %v6317, %v6316
      %v6332 = vpack.c.b16 %v6319, %v6318
      %v6333 = vpack.c.b16 %v6321, %v6320
      %v6347 = vsel %vm1801, %v6080, 0
      %v6350 = vsel %vm1801, %v6083, 0
      %v6353 = vsel %vm1801, %v6086, 0
      %v6356 = vsel %vm1801, %v6089, 0
      %v6359 = vsel %vm1801, %v6092, 0
      %v6362 = vsel %vm1801, %v6095, 0
      %v6365 = vsel %vm1801, %v6098, 0
      %v6368 = vsel %vm1801, %v6101, 0
      %v6371 = vsel %vm1801, %v6104, 0
      %v6374 = vsel %vm1801, %v6107, 0
      %v6377 = vsel %vm1801, %v6110, 0
      %v6380 = vsel %vm1801, %v6113, 0
      %v6383 = vsel %vm1801, %v6116, 0
      %v6386 = vsel %vm1801, %v6119, 0
      %v6389 = vsel %vm1801, %v6122, 0
      %v6392 = vsel %vm1801, %v6243, 0
      %6394 = vmatprep.subr.bf16.mxu0 0
      %6395 = vmatpush1.bf16.msra.mxu0 %v6329
      %6396 = vmatprep.subr.bf16.mxu0 0
      %6397 = vmatpush1.bf16.msra.mxu0 %v6328
      %6398 = vmatprep.subr.bf16.mxu0 0
      %6399 = vmatpush1.bf16.msra.mxu0 %v6327
      %6400 = vmatprep.subr.bf16.mxu0 0
      %6401 = vmatpush1.bf16.msra.mxu0 %v6326
      %6402 = vmatprep.subr.bf16.mxu0 0
      %6403 = vmatpush1.bf16.msra.mxu0 %v6325
      %6404 = vmatprep.subr.bf16.mxu0 0
      %6405 = vmatpush1.bf16.msra.mxu0 %v6324
      %6406 = vmatprep.subr.bf16.mxu0 0
      %6407 = vmatpush1.bf16.msra.mxu0 %v6323
      %6408 = vmatprep.subr.bf16.mxu0 0
      %6409 = vmatpush1.bf16.msra.mxu0 %v6322
      %6410 = vmatprep.subr.bf16.mxu0 0
      %6411 = vmatpush2.bf16.msra.mxu0 0
      %6412 = vmatprep.subr.bf16.mxu0 0
      %6413 = vmatpush2.bf16.msra.mxu0 0
      %6414 = vmatprep.subr.bf16.mxu0 0
      %6415 = vmatpush2.bf16.msra.mxu0 0
      %6416 = vmatprep.subr.bf16.mxu0 0
      %6417 = vmatpush2.bf16.msra.mxu0 0
      %6418 = vmatprep.subr.bf16.mxu0 0
      %6419 = vmatpush2.bf16.msra.mxu0 %v6333
      %6420 = vmatprep.subr.bf16.mxu0 0
      %6421 = vmatpush2.bf16.msra.mxu0 %v6332
      %6422 = vmatprep.subr.bf16.mxu0 0
      %6423 = vmatpush2.bf16.msra.mxu0 %v6331
      %6424 = vmatprep.subr.bf16.mxu0 0
      %6425 = vmatpush2.bf16.msra.mxu0 %v6330
      %6426 = vmatprep.mubr.bf16.mxu0 %v6347
      %6427 = vmatmul.mubr.bf16.gmra.mxu0 %v6159
      %v6428 = vpop.f32.mrf.mxu0
      %v6429 = vadd.f32 0.0, %v6428
      %v6430 = vpop.f32.mrf.mxu0
      %v6431 = vpop.f32.mrf.mxu0
      %v6432 = vadd.f32 0.0, %v6431
      %v6433 = vpop.f32.mrf.mxu0
      %6434 = vmatprep.mubr.bf16.mxu0 %v6350
      %6435 = vmatmul.mubr.bf16.gmra.mxu0 %v6162
      %v6436 = vpop.f32.mrf.mxu0
      %v6437 = vadd.f32 0.0, %v6436
      %v6438 = vpop.f32.mrf.mxu0
      %v6439 = vpop.f32.mrf.mxu0
      %v6440 = vadd.f32 0.0, %v6439
      %v6441 = vpop.f32.mrf.mxu0
      %6442 = vmatprep.mubr.bf16.mxu0 %v6353
      %6443 = vmatmul.mubr.bf16.gmra.mxu0 %v6165
      %v6444 = vpop.f32.mrf.mxu0
      %v6445 = vadd.f32 0.0, %v6444
      %v6446 = vpop.f32.mrf.mxu0
      %v6447 = vpop.f32.mrf.mxu0
      %v6448 = vadd.f32 0.0, %v6447
      %v6449 = vpop.f32.mrf.mxu0
      %6450 = vmatprep.mubr.bf16.mxu0 %v6356
      %6451 = vmatmul.mubr.bf16.gmra.mxu0 %v6168
      %v6452 = vpop.f32.mrf.mxu0
      %v6453 = vadd.f32 0.0, %v6452
      %v6454 = vpop.f32.mrf.mxu0
      %v6455 = vpop.f32.mrf.mxu0
      %v6456 = vadd.f32 0.0, %v6455
      %v6457 = vpop.f32.mrf.mxu0
      %6458 = vmatprep.mubr.bf16.mxu0 %v6359
      %6459 = vmatmul.mubr.bf16.gmra.mxu0 %v6171
      %v6460 = vpop.f32.mrf.mxu0
      %v6461 = vadd.f32 0.0, %v6460
      %v6462 = vpop.f32.mrf.mxu0
      %v6463 = vpop.f32.mrf.mxu0
      %v6464 = vadd.f32 0.0, %v6463
      %v6465 = vpop.f32.mrf.mxu0
      %6466 = vmatprep.mubr.bf16.mxu0 %v6362
      %6467 = vmatmul.mubr.bf16.gmra.mxu0 %v6174
      %v6468 = vpop.f32.mrf.mxu0
      %v6469 = vadd.f32 0.0, %v6468
      %v6470 = vpop.f32.mrf.mxu0
      %v6471 = vpop.f32.mrf.mxu0
      %v6472 = vadd.f32 0.0, %v6471
      %v6473 = vpop.f32.mrf.mxu0
      %6474 = vmatprep.mubr.bf16.mxu0 %v6365
      %6475 = vmatmul.mubr.bf16.gmra.mxu0 %v6177
      %v6476 = vpop.f32.mrf.mxu0
      %v6477 = vadd.f32 0.0, %v6476
      %v6478 = vpop.f32.mrf.mxu0
      %v6479 = vpop.f32.mrf.mxu0
      %v6480 = vadd.f32 0.0, %v6479
      %v6481 = vpop.f32.mrf.mxu0
      %6482 = vmatprep.mubr.bf16.mxu0 %v6368
      %6483 = vmatmul.mubr.bf16.gmra.mxu0 %v6180
      %v6484 = vpop.f32.mrf.mxu0
      %v6485 = vadd.f32 0.0, %v6484
      %v6486 = vpop.f32.mrf.mxu0
      %v6487 = vpop.f32.mrf.mxu0
      %v6488 = vadd.f32 0.0, %v6487
      %v6489 = vpop.f32.mrf.mxu0
      %6490 = vmatprep.mubr.bf16.mxu0 %v6371
      %6491 = vmatmul.mubr.bf16.gmra.mxu0 %v6183
      %v6492 = vpop.f32.mrf.mxu0
      %v6493 = vadd.f32 0.0, %v6492
      %v6494 = vpop.f32.mrf.mxu0
      %v6495 = vpop.f32.mrf.mxu0
      %v6496 = vadd.f32 0.0, %v6495
      %v6497 = vpop.f32.mrf.mxu0
      %6498 = vmatprep.mubr.bf16.mxu0 %v6374
      %6499 = vmatmul.mubr.bf16.gmra.mxu0 %v6186
      %v6500 = vpop.f32.mrf.mxu0
      %v6501 = vadd.f32 0.0, %v6500
      %v6502 = vpop.f32.mrf.mxu0
      %v6503 = vpop.f32.mrf.mxu0
      %v6504 = vadd.f32 0.0, %v6503
      %v6505 = vpop.f32.mrf.mxu0
      %6506 = vmatprep.mubr.bf16.mxu0 %v6377
      %6507 = vmatmul.mubr.bf16.gmra.mxu0 %v6189
      %v6508 = vpop.f32.mrf.mxu0
      %v6509 = vadd.f32 0.0, %v6508
      %v6510 = vpop.f32.mrf.mxu0
      %v6511 = vpop.f32.mrf.mxu0
      %v6512 = vadd.f32 0.0, %v6511
      %v6513 = vpop.f32.mrf.mxu0
      %6514 = vmatprep.mubr.bf16.mxu0 %v6380
      %6515 = vmatmul.mubr.bf16.gmra.mxu0 %v6192
      %v6516 = vpop.f32.mrf.mxu0
      %v6517 = vadd.f32 0.0, %v6516
      %v6518 = vpop.f32.mrf.mxu0
      %v6519 = vpop.f32.mrf.mxu0
      %v6520 = vadd.f32 0.0, %v6519
      %v6521 = vpop.f32.mrf.mxu0
      %6522 = vmatprep.mubr.bf16.mxu0 %v6383
      %6523 = vmatmul.mubr.bf16.gmra.mxu0 %v6195
      %v6524 = vpop.f32.mrf.mxu0
      %v6525 = vadd.f32 0.0, %v6524
      %v6526 = vpop.f32.mrf.mxu0
      %v6527 = vpop.f32.mrf.mxu0
      %v6528 = vadd.f32 0.0, %v6527
      %v6529 = vpop.f32.mrf.mxu0
      %6530 = vmatprep.mubr.bf16.mxu0 %v6386
      %6531 = vmatmul.mubr.bf16.gmra.mxu0 %v6198
      %v6532 = vpop.f32.mrf.mxu0
      %v6533 = vadd.f32 0.0, %v6532
      %v6534 = vpop.f32.mrf.mxu0
      %v6535 = vpop.f32.mrf.mxu0
      %v6536 = vadd.f32 0.0, %v6535
      %v6537 = vpop.f32.mrf.mxu0
      %6538 = vmatprep.mubr.bf16.mxu0 %v6389
      %6539 = vmatmul.mubr.bf16.gmra.mxu0 %v6201
      %v6540 = vpop.f32.mrf.mxu0
      %v6541 = vadd.f32 0.0, %v6540
      %v6542 = vpop.f32.mrf.mxu0
      %v6543 = vpop.f32.mrf.mxu0
      %v6544 = vadd.f32 0.0, %v6543
      %v6545 = vpop.f32.mrf.mxu0
      %6546 = vmatprep.mubr.bf16.mxu0 %v6392
      %6547 = vmatmul.mubr.bf16.gmra.mxu0 %v6247
      %v6548 = vpop.f32.mrf.mxu0
      %v6549 = vadd.f32 0.0, %v6548
      %v6550 = vpop.f32.mrf.mxu0
      %v6551 = vpop.f32.mrf.mxu0
      %v6552 = vadd.f32 0.0, %v6551
      %v6553 = vpop.f32.mrf.mxu0
      %6554 = vdwg.mxu0
      %v6579 = vunpack.c.l.b16 %v6203
      %v6580 = vunpack.c.l.b16 %v6204
      %v6581 = vunpack.c.l.b16 %v6205
      %v6582 = vunpack.c.l.b16 %v6206
      %v6583 = vunpack.c.l.b16 %v6207
      %v6584 = vunpack.c.l.b16 %v6208
      %v6585 = vunpack.c.l.b16 %v6209
      %v6586 = vunpack.c.l.b16 %v6210
      %v6587 = vunpack.c.l.b16 %v6211
      %v6588 = vunpack.c.l.b16 %v6212
      %v6589 = vunpack.c.l.b16 %v6213
      %v6590 = vunpack.c.l.b16 %v6214
      %v6591 = vunpack.c.l.b16 %v6215
      %v6592 = vunpack.c.l.b16 %v6216
      %v6593 = vunpack.c.l.b16 %v6217
      %v6594 = vunpack.c.l.b16 %v6218
      %v6595 = vunpack.c.l.b16 %v6219
      %v6596 = vunpack.c.l.b16 %v6220
      %v6597 = vunpack.c.l.b16 %v6221
      %v6598 = vunpack.c.l.b16 %v6222
      %v6599 = vunpack.c.l.b16 %v6223
      %v6600 = vunpack.c.l.b16 %v6224
      %v6601 = vunpack.c.l.b16 %v6225
      %v6602 = vunpack.c.l.b16 %v6226
      %v6603 = vpack.c.b16 %v6580, %v6579
      %v6604 = vpack.c.b16 %v6582, %v6581
      %v6605 = vpack.c.b16 %v6584, %v6583
      %v6606 = vpack.c.b16 %v6586, %v6585
      %v6607 = vpack.c.b16 %v6588, %v6587
      %v6608 = vpack.c.b16 %v6590, %v6589
      %v6609 = vpack.c.b16 %v6592, %v6591
      %v6610 = vpack.c.b16 %v6594, %v6593
      %v6611 = vpack.c.b16 %v6596, %v6595
      %v6612 = vpack.c.b16 %v6598, %v6597
      %v6613 = vpack.c.b16 %v6600, %v6599
      %v6614 = vpack.c.b16 %v6602, %v6601
      %v6628 = vsel %vm1801, %v6077, 0
      %6630 = vmatprep.subr.bf16.mxu0 0
      %6631 = vmatpush1.bf16.msra.mxu0 %v6610
      %6632 = vmatprep.subr.bf16.mxu0 0
      %6633 = vmatpush1.bf16.msra.mxu0 %v6609
      %6634 = vmatprep.subr.bf16.mxu0 0
      %6635 = vmatpush1.bf16.msra.mxu0 %v6608
      %6636 = vmatprep.subr.bf16.mxu0 0
      %6637 = vmatpush1.bf16.msra.mxu0 %v6607
      %6638 = vmatprep.subr.bf16.mxu0 0
      %6639 = vmatpush1.bf16.msra.mxu0 %v6606
      %6640 = vmatprep.subr.bf16.mxu0 0
      %6641 = vmatpush1.bf16.msra.mxu0 %v6605
      %6642 = vmatprep.subr.bf16.mxu0 0
      %6643 = vmatpush1.bf16.msra.mxu0 %v6604
      %6644 = vmatprep.subr.bf16.mxu0 0
      %6645 = vmatpush1.bf16.msra.mxu0 %v6603
      %6646 = vmatprep.subr.bf16.mxu0 0
      %6647 = vmatpush2.bf16.msra.mxu0 0
      %6648 = vmatprep.subr.bf16.mxu0 0
      %6649 = vmatpush2.bf16.msra.mxu0 0
      %6650 = vmatprep.subr.bf16.mxu0 0
      %6651 = vmatpush2.bf16.msra.mxu0 0
      %6652 = vmatprep.subr.bf16.mxu0 0
      %6653 = vmatpush2.bf16.msra.mxu0 0
      %6654 = vmatprep.subr.bf16.mxu0 0
      %6655 = vmatpush2.bf16.msra.mxu0 %v6614
      %6656 = vmatprep.subr.bf16.mxu0 0
      %6657 = vmatpush2.bf16.msra.mxu0 %v6613
      %6658 = vmatprep.subr.bf16.mxu0 0
      %6659 = vmatpush2.bf16.msra.mxu0 %v6612
      %6660 = vmatprep.subr.bf16.mxu0 0
      %6661 = vmatpush2.bf16.msra.mxu0 %v6611
      %6662 = vmatprep.mubr.bf16.mxu0 %v6628
      %6663 = vmatmul.mubr.bf16.gmra.mxu0 %v6156
      %v6664 = vpop.f32.mrf.mxu0
      %v6665 = vadd.f32 %v6429, %v6664
      %v6666 = vpop.f32.mrf.mxu0
      %v6667 = vpop.f32.mrf.mxu0
      %v6668 = vadd.f32 %v6432, %v6667
      %v6669 = vpop.f32.mrf.mxu0
      %6670 = vmatprep.mubr.bf16.mxu0 %v6347
      %6671 = vmatmul.mubr.bf16.gmra.mxu0 %v6159
      %v6672 = vpop.f32.mrf.mxu0
      %v6673 = vadd.f32 %v6437, %v6672
      %v6674 = vpop.f32.mrf.mxu0
      %v6675 = vpop.f32.mrf.mxu0
      %v6676 = vadd.f32 %v6440, %v6675
      %v6677 = vpop.f32.mrf.mxu0
      %6678 = vmatprep.mubr.bf16.mxu0 %v6350
      %6679 = vmatmul.mubr.bf16.gmra.mxu0 %v6162
      %v6680 = vpop.f32.mrf.mxu0
      %v6681 = vadd.f32 %v6445, %v6680
      %v6682 = vpop.f32.mrf.mxu0
      %v6683 = vpop.f32.mrf.mxu0
      %v6684 = vadd.f32 %v6448, %v6683
      %v6685 = vpop.f32.mrf.mxu0
      %6686 = vmatprep.mubr.bf16.mxu0 %v6353
      %6687 = vmatmul.mubr.bf16.gmra.mxu0 %v6165
      %v6688 = vpop.f32.mrf.mxu0
      %v6689 = vadd.f32 %v6453, %v6688
      %v6690 = vpop.f32.mrf.mxu0
      %v6691 = vpop.f32.mrf.mxu0
      %v6692 = vadd.f32 %v6456, %v6691
      %v6693 = vpop.f32.mrf.mxu0
      %6694 = vmatprep.mubr.bf16.mxu0 %v6356
      %6695 = vmatmul.mubr.bf16.gmra.mxu0 %v6168
      %v6696 = vpop.f32.mrf.mxu0
      %v6697 = vadd.f32 %v6461, %v6696
      %v6698 = vpop.f32.mrf.mxu0
      %v6699 = vpop.f32.mrf.mxu0
      %v6700 = vadd.f32 %v6464, %v6699
      %v6701 = vpop.f32.mrf.mxu0
      %6702 = vmatprep.mubr.bf16.mxu0 %v6359
      %6703 = vmatmul.mubr.bf16.gmra.mxu0 %v6171
      %v6704 = vpop.f32.mrf.mxu0
      %v6705 = vadd.f32 %v6469, %v6704
      %v6706 = vpop.f32.mrf.mxu0
      %v6707 = vpop.f32.mrf.mxu0
      %v6708 = vadd.f32 %v6472, %v6707
      %v6709 = vpop.f32.mrf.mxu0
      %6710 = vmatprep.mubr.bf16.mxu0 %v6362
      %6711 = vmatmul.mubr.bf16.gmra.mxu0 %v6174
      %v6712 = vpop.f32.mrf.mxu0
      %v6713 = vadd.f32 %v6477, %v6712
      %v6714 = vpop.f32.mrf.mxu0
      %v6715 = vpop.f32.mrf.mxu0
      %v6716 = vadd.f32 %v6480, %v6715
      %v6717 = vpop.f32.mrf.mxu0
      %6718 = vmatprep.mubr.bf16.mxu0 %v6365
      %6719 = vmatmul.mubr.bf16.gmra.mxu0 %v6177
      %v6720 = vpop.f32.mrf.mxu0
      %v6721 = vadd.f32 %v6485, %v6720
      %v6722 = vpop.f32.mrf.mxu0
      %v6723 = vpop.f32.mrf.mxu0
      %v6724 = vadd.f32 %v6488, %v6723
      %v6725 = vpop.f32.mrf.mxu0
      %6726 = vmatprep.mubr.bf16.mxu0 %v6368
      %6727 = vmatmul.mubr.bf16.gmra.mxu0 %v6180
      %v6728 = vpop.f32.mrf.mxu0
      %v6729 = vadd.f32 %v6493, %v6728
      %v6730 = vpop.f32.mrf.mxu0
      %v6731 = vpop.f32.mrf.mxu0
      %v6732 = vadd.f32 %v6496, %v6731
      %v6733 = vpop.f32.mrf.mxu0
      %6734 = vmatprep.mubr.bf16.mxu0 %v6371
      %6735 = vmatmul.mubr.bf16.gmra.mxu0 %v6183
      %v6736 = vpop.f32.mrf.mxu0
      %v6737 = vadd.f32 %v6501, %v6736
      %v6738 = vpop.f32.mrf.mxu0
      %v6739 = vpop.f32.mrf.mxu0
      %v6740 = vadd.f32 %v6504, %v6739
      %v6741 = vpop.f32.mrf.mxu0
      %6742 = vmatprep.mubr.bf16.mxu0 %v6374
      %6743 = vmatmul.mubr.bf16.gmra.mxu0 %v6186
      %v6744 = vpop.f32.mrf.mxu0
      %v6745 = vadd.f32 %v6509, %v6744
      %v6746 = vpop.f32.mrf.mxu0
      %v6747 = vpop.f32.mrf.mxu0
      %v6748 = vadd.f32 %v6512, %v6747
      %v6749 = vpop.f32.mrf.mxu0
      %6750 = vmatprep.mubr.bf16.mxu0 %v6377
      %6751 = vmatmul.mubr.bf16.gmra.mxu0 %v6189
      %v6752 = vpop.f32.mrf.mxu0
      %v6753 = vadd.f32 %v6517, %v6752
      %v6754 = vpop.f32.mrf.mxu0
      %v6755 = vpop.f32.mrf.mxu0
      %v6756 = vadd.f32 %v6520, %v6755
      %v6757 = vpop.f32.mrf.mxu0
      %6758 = vmatprep.mubr.bf16.mxu0 %v6380
      %6759 = vmatmul.mubr.bf16.gmra.mxu0 %v6192
      %v6760 = vpop.f32.mrf.mxu0
      %v6761 = vadd.f32 %v6525, %v6760
      %v6762 = vpop.f32.mrf.mxu0
      %v6763 = vpop.f32.mrf.mxu0
      %v6764 = vadd.f32 %v6528, %v6763
      %v6765 = vpop.f32.mrf.mxu0
      %6766 = vmatprep.mubr.bf16.mxu0 %v6383
      %6767 = vmatmul.mubr.bf16.gmra.mxu0 %v6195
      %v6768 = vpop.f32.mrf.mxu0
      %v6769 = vadd.f32 %v6533, %v6768
      %v6770 = vpop.f32.mrf.mxu0
      %v6771 = vpop.f32.mrf.mxu0
      %v6772 = vadd.f32 %v6536, %v6771
      %v6773 = vpop.f32.mrf.mxu0
      %6774 = vmatprep.mubr.bf16.mxu0 %v6386
      %6775 = vmatmul.mubr.bf16.gmra.mxu0 %v6198
      %v6776 = vpop.f32.mrf.mxu0
      %v6777 = vadd.f32 %v6541, %v6776
      %v6778 = vpop.f32.mrf.mxu0
      %v6779 = vpop.f32.mrf.mxu0
      %v6780 = vadd.f32 %v6544, %v6779
      %v6781 = vpop.f32.mrf.mxu0
      %6782 = vmatprep.mubr.bf16.mxu0 %v6389
      %6783 = vmatmul.mubr.bf16.gmra.mxu0 %v6201
      %v6784 = vpop.f32.mrf.mxu0
      %v6785 = vadd.f32 %v6549, %v6784
      %v6786 = vpop.f32.mrf.mxu0
      %v6787 = vpop.f32.mrf.mxu0
      %v6788 = vadd.f32 %v6552, %v6787
      %v6789 = vpop.f32.mrf.mxu0
      %6790 = vdwg.mxu0
      %v6792 = vshrl.u32 %v5831, 16
      %v6794 = vshll.u32 %v5831, 16
      %v6796 = vrot.slane %v6794, 1
      %v6797 = vor.u32 %v6792, %v6796
      %v6799 = vshll.u32 %v5849, 16
      %v6801 = vrot.slane %v6799, 1
      %v6802 = vsel %vm5522, %v6797, %v6801
      %v6805 = vrot.slane %v5831, 1
      %v6806 = vrot.slane %v5849, 1
      %v6807 = vsel %vm6074, %v6805, %v6806
      %6808 = vrot.lane.b32.xlu0 %v6802, 64
      %v6809 = vpop.permute.xlu0 %6808
      %v6811 = vsel %vm1801, %v5831, %v6809
      %s6813 = scalar_lea.vmem %s3, 192
      %v6814 = vld [vmem:[%s6813] sm:$0xf]
      %v6815 = vld [vmem:[%s6813 + $0x4] sm:$0xf]
      %v6816 = vld [vmem:[%s6813 + $0x8] sm:$0xf]
      %v6817 = vld [vmem:[%s6813 + $0xc] sm:$0xf]
      %v6818 = vld [vmem:[%s6813 + $0x10] sm:$0xf]
      %v6819 = vld [vmem:[%s6813 + $0x14] sm:$0xf]
      %v6820 = vld [vmem:[%s6813 + $0x18] sm:$0xf]
      %v6821 = vld [vmem:[%s6813 + $0x1c] sm:$0xf]
      %v6822 = vld [vmem:[%s6813 + $0x20] sm:$0xf]
      %v6823 = vld [vmem:[%s6813 + $0x24] sm:$0xf]
      %v6824 = vld [vmem:[%s6813 + $0x28] sm:$0xf]
      %v6825 = vld [vmem:[%s6813 + $0x2c] sm:$0xf]
      %v6826 = vld [vmem:[%s6813 + $0x30] sm:$0xf]
      %v6827 = vld [vmem:[%s6813 + $0x34] sm:$0xf]
      %v6828 = vld [vmem:[%s6813 + $0x38] sm:$0xf]
      %v6829 = vld [vmem:[%s6813 + $0x3c] sm:$0xf]
      %v6830 = vld [vmem:[%s6813 + $0x40] sm:$0xf]
      %v6831 = vld [vmem:[%s6813 + $0x44] sm:$0xf]
      %v6832 = vld [vmem:[%s6813 + $0x48] sm:$0xf]
      %v6833 = vld [vmem:[%s6813 + $0x4c] sm:$0xf]
      %v6834 = vld [vmem:[%s6813 + $0x50] sm:$0xf]
      %v6835 = vld [vmem:[%s6813 + $0x54] sm:$0xf]
      %v6836 = vld [vmem:[%s6813 + $0x58] sm:$0xf]
      %v6837 = vld [vmem:[%s6813 + $0x5c] sm:$0xf]
      %v6862 = vunpack.c.l.b16 %v6814
      %v6863 = vunpack.c.l.b16 %v6815
      %v6864 = vunpack.c.l.b16 %v6816
      %v6865 = vunpack.c.l.b16 %v6817
      %v6866 = vunpack.c.l.b16 %v6818
      %v6867 = vunpack.c.l.b16 %v6819
      %v6868 = vunpack.c.l.b16 %v6820
      %v6869 = vunpack.c.l.b16 %v6821
      %v6870 = vunpack.c.l.b16 %v6822
      %v6871 = vunpack.c.l.b16 %v6823
      %v6872 = vunpack.c.l.b16 %v6824
      %v6873 = vunpack.c.l.b16 %v6825
      %v6874 = vunpack.c.l.b16 %v6826
      %v6875 = vunpack.c.l.b16 %v6827
      %v6876 = vunpack.c.l.b16 %v6828
      %v6877 = vunpack.c.l.b16 %v6829
      %v6878 = vunpack.c.l.b16 %v6830
      %v6879 = vunpack.c.l.b16 %v6831
      %v6880 = vunpack.c.l.b16 %v6832
      %v6881 = vunpack.c.l.b16 %v6833
      %v6882 = vunpack.c.l.b16 %v6834
      %v6883 = vunpack.c.l.b16 %v6835
      %v6884 = vunpack.c.l.b16 %v6836
      %v6885 = vunpack.c.l.b16 %v6837
      %v6886 = vpack.c.b16 %v6863, %v6862
      %v6887 = vpack.c.b16 %v6865, %v6864
      %v6888 = vpack.c.b16 %v6867, %v6866
      %v6889 = vpack.c.b16 %v6869, %v6868
      %v6890 = vpack.c.b16 %v6871, %v6870
      %v6891 = vpack.c.b16 %v6873, %v6872
      %v6892 = vpack.c.b16 %v6875, %v6874
      %v6893 = vpack.c.b16 %v6877, %v6876
      %v6894 = vpack.c.b16 %v6879, %v6878
      %v6895 = vpack.c.b16 %v6881, %v6880
      %v6896 = vpack.c.b16 %v6883, %v6882
      %v6897 = vpack.c.b16 %v6885, %v6884
      %v6911 = vsel %vm1801, %v6807, 0
      %6913 = vmatprep.subr.bf16.mxu0 0
      %6914 = vmatpush1.bf16.msra.mxu0 %v6893
      %6915 = vmatprep.subr.bf16.mxu0 0
      %6916 = vmatpush1.bf16.msra.mxu0 %v6892
      %6917 = vmatprep.subr.bf16.mxu0 0
      %6918 = vmatpush1.bf16.msra.mxu0 %v6891
      %6919 = vmatprep.subr.bf16.mxu0 0
      %6920 = vmatpush1.bf16.msra.mxu0 %v6890
      %6921 = vmatprep.subr.bf16.mxu0 0
      %6922 = vmatpush1.bf16.msra.mxu0 %v6889
      %6923 = vmatprep.subr.bf16.mxu0 0
      %6924 = vmatpush1.bf16.msra.mxu0 %v6888
      %6925 = vmatprep.subr.bf16.mxu0 0
      %6926 = vmatpush1.bf16.msra.mxu0 %v6887
      %6927 = vmatprep.subr.bf16.mxu0 0
      %6928 = vmatpush1.bf16.msra.mxu0 %v6886
      %6929 = vmatprep.subr.bf16.mxu0 0
      %6930 = vmatpush2.bf16.msra.mxu0 0
      %6931 = vmatprep.subr.bf16.mxu0 0
      %6932 = vmatpush2.bf16.msra.mxu0 0
      %6933 = vmatprep.subr.bf16.mxu0 0
      %6934 = vmatpush2.bf16.msra.mxu0 0
      %6935 = vmatprep.subr.bf16.mxu0 0
      %6936 = vmatpush2.bf16.msra.mxu0 0
      %6937 = vmatprep.subr.bf16.mxu0 0
      %6938 = vmatpush2.bf16.msra.mxu0 %v6897
      %6939 = vmatprep.subr.bf16.mxu0 0
      %6940 = vmatpush2.bf16.msra.mxu0 %v6896
      %6941 = vmatprep.subr.bf16.mxu0 0
      %6942 = vmatpush2.bf16.msra.mxu0 %v6895
      %6943 = vmatprep.subr.bf16.mxu0 0
      %6944 = vmatpush2.bf16.msra.mxu0 %v6894
      %6945 = vmatprep.mubr.bf16.mxu0 %v6350
      %6946 = vmatmul.mubr.bf16.gmra.mxu0 %v6162
      %v6947 = vpop.f32.mrf.mxu0
      %v6948 = vadd.f32 0.0, %v6947
      %v6949 = vpop.f32.mrf.mxu0
      %v6950 = vpop.f32.mrf.mxu0
      %v6951 = vadd.f32 0.0, %v6950
      %v6952 = vpop.f32.mrf.mxu0
      %6953 = vmatprep.mubr.bf16.mxu0 %v6353
      %6954 = vmatmul.mubr.bf16.gmra.mxu0 %v6165
      %v6955 = vpop.f32.mrf.mxu0
      %v6956 = vadd.f32 0.0, %v6955
      %v6957 = vpop.f32.mrf.mxu0
      %v6958 = vpop.f32.mrf.mxu0
      %v6959 = vadd.f32 0.0, %v6958
      %v6960 = vpop.f32.mrf.mxu0
      %6961 = vmatprep.mubr.bf16.mxu0 %v6356
      %6962 = vmatmul.mubr.bf16.gmra.mxu0 %v6168
      %v6963 = vpop.f32.mrf.mxu0
      %v6964 = vadd.f32 0.0, %v6963
      %v6965 = vpop.f32.mrf.mxu0
      %v6966 = vpop.f32.mrf.mxu0
      %v6967 = vadd.f32 0.0, %v6966
      %v6968 = vpop.f32.mrf.mxu0
      %6969 = vmatprep.mubr.bf16.mxu0 %v6359
      %6970 = vmatmul.mubr.bf16.gmra.mxu0 %v6171
      %v6971 = vpop.f32.mrf.mxu0
      %v6972 = vadd.f32 0.0, %v6971
      %v6973 = vpop.f32.mrf.mxu0
      %v6974 = vpop.f32.mrf.mxu0
      %v6975 = vadd.f32 0.0, %v6974
      %v6976 = vpop.f32.mrf.mxu0
      %6977 = vmatprep.mubr.bf16.mxu0 %v6362
      %6978 = vmatmul.mubr.bf16.gmra.mxu0 %v6174
      %v6979 = vpop.f32.mrf.mxu0
      %v6980 = vadd.f32 0.0, %v6979
      %v6981 = vpop.f32.mrf.mxu0
      %v6982 = vpop.f32.mrf.mxu0
      %v6983 = vadd.f32 0.0, %v6982
      %v6984 = vpop.f32.mrf.mxu0
      %6985 = vmatprep.mubr.bf16.mxu0 %v6365
      %6986 = vmatmul.mubr.bf16.gmra.mxu0 %v6177
      %v6987 = vpop.f32.mrf.mxu0
      %v6988 = vadd.f32 0.0, %v6987
      %v6989 = vpop.f32.mrf.mxu0
      %v6990 = vpop.f32.mrf.mxu0
      %v6991 = vadd.f32 0.0, %v6990
      %v6992 = vpop.f32.mrf.mxu0
      %6993 = vmatprep.mubr.bf16.mxu0 %v6368
      %6994 = vmatmul.mubr.bf16.gmra.mxu0 %v6180
      %v6995 = vpop.f32.mrf.mxu0
      %v6996 = vadd.f32 0.0, %v6995
      %v6997 = vpop.f32.mrf.mxu0
      %v6998 = vpop.f32.mrf.mxu0
      %v6999 = vadd.f32 0.0, %v6998
      %v7000 = vpop.f32.mrf.mxu0
      %7001 = vmatprep.mubr.bf16.mxu0 %v6371
      %7002 = vmatmul.mubr.bf16.gmra.mxu0 %v6183
      %v7003 = vpop.f32.mrf.mxu0
      %v7004 = vadd.f32 0.0, %v7003
      %v7005 = vpop.f32.mrf.mxu0
      %v7006 = vpop.f32.mrf.mxu0
      %v7007 = vadd.f32 0.0, %v7006
      %v7008 = vpop.f32.mrf.mxu0
      %7009 = vmatprep.mubr.bf16.mxu0 %v6374
      %7010 = vmatmul.mubr.bf16.gmra.mxu0 %v6186
      %v7011 = vpop.f32.mrf.mxu0
      %v7012 = vadd.f32 0.0, %v7011
      %v7013 = vpop.f32.mrf.mxu0
      %v7014 = vpop.f32.mrf.mxu0
      %v7015 = vadd.f32 0.0, %v7014
      %v7016 = vpop.f32.mrf.mxu0
      %7017 = vmatprep.mubr.bf16.mxu0 %v6377
      %7018 = vmatmul.mubr.bf16.gmra.mxu0 %v6189
      %v7019 = vpop.f32.mrf.mxu0
      %v7020 = vadd.f32 0.0, %v7019
      %v7021 = vpop.f32.mrf.mxu0
      %v7022 = vpop.f32.mrf.mxu0
      %v7023 = vadd.f32 0.0, %v7022
      %v7024 = vpop.f32.mrf.mxu0
      %7025 = vmatprep.mubr.bf16.mxu0 %v6380
      %7026 = vmatmul.mubr.bf16.gmra.mxu0 %v6192
      %v7027 = vpop.f32.mrf.mxu0
      %v7028 = vadd.f32 0.0, %v7027
      %v7029 = vpop.f32.mrf.mxu0
      %v7030 = vpop.f32.mrf.mxu0
      %v7031 = vadd.f32 0.0, %v7030
      %v7032 = vpop.f32.mrf.mxu0
      %7033 = vmatprep.mubr.bf16.mxu0 %v6383
      %7034 = vmatmul.mubr.bf16.gmra.mxu0 %v6195
      %v7035 = vpop.f32.mrf.mxu0
      %v7036 = vadd.f32 0.0, %v7035
      %v7037 = vpop.f32.mrf.mxu0
      %v7038 = vpop.f32.mrf.mxu0
      %v7039 = vadd.f32 0.0, %v7038
      %v7040 = vpop.f32.mrf.mxu0
      %7041 = vmatprep.mubr.bf16.mxu0 %v6386
      %7042 = vmatmul.mubr.bf16.gmra.mxu0 %v6198
      %v7043 = vpop.f32.mrf.mxu0
      %v7044 = vadd.f32 0.0, %v7043
      %v7045 = vpop.f32.mrf.mxu0
      %v7046 = vpop.f32.mrf.mxu0
      %v7047 = vadd.f32 0.0, %v7046
      %v7048 = vpop.f32.mrf.mxu0
      %7049 = vmatprep.mubr.bf16.mxu0 %v6389
      %7050 = vmatmul.mubr.bf16.gmra.mxu0 %v6201
      %v7051 = vpop.f32.mrf.mxu0
      %v7052 = vadd.f32 0.0, %v7051
      %v7053 = vpop.f32.mrf.mxu0
      %v7054 = vpop.f32.mrf.mxu0
      %v7055 = vadd.f32 0.0, %v7054
      %v7056 = vpop.f32.mrf.mxu0
      %7057 = vmatprep.mubr.bf16.mxu0 %v6392
      %7058 = vmatmul.mubr.bf16.gmra.mxu0 %v6247
      %v7059 = vpop.f32.mrf.mxu0
      %v7060 = vadd.f32 0.0, %v7059
      %v7061 = vpop.f32.mrf.mxu0
      %v7062 = vpop.f32.mrf.mxu0
      %v7063 = vadd.f32 0.0, %v7062
      %v7064 = vpop.f32.mrf.mxu0
      %7065 = vmatprep.mubr.bf16.mxu0 %v6911
      %7066 = vmatmul.mubr.bf16.gmra.mxu0 %v6811
      %v7067 = vpop.f32.mrf.mxu0
      %v7068 = vadd.f32 0.0, %v7067
      %v7069 = vpop.f32.mrf.mxu0
      %v7070 = vpop.f32.mrf.mxu0
      %v7071 = vadd.f32 0.0, %v7070
      %v7072 = vpop.f32.mrf.mxu0
      %7073 = vdwg.mxu0
      %v7074 = vadd.f32 %v6665, %v6948
      %v7075 = vadd.f32 %v6668, %v6951
      %v7076 = vadd.f32 %v6673, %v6956
      %v7077 = vadd.f32 %v6676, %v6959
      %v7078 = vadd.f32 %v6681, %v6964
      %v7079 = vadd.f32 %v6684, %v6967
      %v7080 = vadd.f32 %v6689, %v6972
      %v7081 = vadd.f32 %v6692, %v6975
      %v7082 = vadd.f32 %v6697, %v6980
      %v7083 = vadd.f32 %v6700, %v6983
      %v7084 = vadd.f32 %v6705, %v6988
      %v7085 = vadd.f32 %v6708, %v6991
      %v7086 = vadd.f32 %v6713, %v6996
      %v7087 = vadd.f32 %v6716, %v6999
      %v7088 = vadd.f32 %v6721, %v7004
      %v7089 = vadd.f32 %v6724, %v7007
      %v7090 = vadd.f32 %v6729, %v7012
      %v7091 = vadd.f32 %v6732, %v7015
      %v7092 = vadd.f32 %v6737, %v7020
      %v7093 = vadd.f32 %v6740, %v7023
      %v7094 = vadd.f32 %v6745, %v7028
      %v7095 = vadd.f32 %v6748, %v7031
      %v7096 = vadd.f32 %v6753, %v7036
      %v7097 = vadd.f32 %v6756, %v7039
      %v7098 = vadd.f32 %v6761, %v7044
      %v7099 = vadd.f32 %v6764, %v7047
      %v7100 = vadd.f32 %v6769, %v7052
      %v7101 = vadd.f32 %v6772, %v7055
      %v7102 = vadd.f32 %v6777, %v7060
      %v7103 = vadd.f32 %v6780, %v7063
      %v7104 = vadd.f32 %v6785, %v7068
      %v7105 = vadd.f32 %v6788, %v7071
      %v7106 = vld [vmem:[%s4] sm:$0x1]
      %v7108 = vlaneseq
      %v7109 = vshrl.u32 %v7108, 7
      %v7110 = vsub.s32 0, %v7109
      %v7111 = vrot.slane %v7106, %v7110
      %v7113 = vadd.f32 %v7074, %v7111
      %v7114 = vadd.f32 %v7075, %v7111
      %v7115 = vadd.f32 %v7076, %v7111
      %v7116 = vadd.f32 %v7077, %v7111
      %v7117 = vadd.f32 %v7078, %v7111
      %v7118 = vadd.f32 %v7079, %v7111
      %v7119 = vadd.f32 %v7080, %v7111
      %v7120 = vadd.f32 %v7081, %v7111
      %v7121 = vadd.f32 %v7082, %v7111
      %v7122 = vadd.f32 %v7083, %v7111
      %v7123 = vadd.f32 %v7084, %v7111
      %v7124 = vadd.f32 %v7085, %v7111
      %v7125 = vadd.f32 %v7086, %v7111
      %v7126 = vadd.f32 %v7087, %v7111
      %v7127 = vadd.f32 %v7088, %v7111
      %v7128 = vadd.f32 %v7089, %v7111
      %v7129 = vadd.f32 %v7090, %v7111
      %v7130 = vadd.f32 %v7091, %v7111
      %v7131 = vadd.f32 %v7092, %v7111
      %v7132 = vadd.f32 %v7093, %v7111
      %v7133 = vadd.f32 %v7094, %v7111
      %v7134 = vadd.f32 %v7095, %v7111
      %v7135 = vadd.f32 %v7096, %v7111
      %v7136 = vadd.f32 %v7097, %v7111
      %v7137 = vadd.f32 %v7098, %v7111
      %v7138 = vadd.f32 %v7099, %v7111
      %v7139 = vadd.f32 %v7100, %v7111
      %v7140 = vadd.f32 %v7101, %v7111
      %v7141 = vadd.f32 %v7102, %v7111
      %v7142 = vadd.f32 %v7103, %v7111
      %v7143 = vadd.f32 %v7104, %v7111
      %v7144 = vadd.f32 %v7105, %v7111
      %v7145 = vpack.c.bf16 %v5036, %v5035
      %v7146 = vpack.c.bf16 %v5038, %v5037
      %v7147 = vpack.c.bf16 %v5040, %v5039
      %v7148 = vpack.c.bf16 %v5042, %v5041
      %v7149 = vpack.c.bf16 %v5044, %v5043
      %v7150 = vpack.c.bf16 %v5046, %v5045
      %v7151 = vpack.c.bf16 %v5048, %v5047
      %v7152 = vpack.c.bf16 %v5050, %v5049
      %v7153 = vpack.c.bf16 %v5052, %v5051
      %v7154 = vpack.c.bf16 %v5054, %v5053
      %v7155 = vpack.c.bf16 %v5056, %v5055
      %v7156 = vpack.c.bf16 %v5058, %v5057
      %v7157 = vpack.c.bf16 %v5060, %v5059
      %v7158 = vpack.c.bf16 %v5062, %v5061
      %v7159 = vpack.c.bf16 %v5064, %v5063
      %v7160 = vpack.c.bf16 %v5066, %v5065
      %v7161 = vld [vmem:[%s5] sm:$0xf]
      %v7162 = vld [vmem:[%s5 + $0x4] sm:$0xf]
      %v7163 = vld [vmem:[%s5 + $0x8] sm:$0xf]
      %v7164 = vld [vmem:[%s5 + $0xc] sm:$0xf]
      %v7165 = vld [vmem:[%s5 + $0x10] sm:$0xf]
      %v7166 = vld [vmem:[%s5 + $0x14] sm:$0xf]
      %v7167 = vld [vmem:[%s5 + $0x18] sm:$0xf]
      %v7168 = vld [vmem:[%s5 + $0x1c] sm:$0xf]
      %v7169 = vpack.c.bf16 %v7114, %v7113
      %v7170 = vpack.c.bf16 %v7116, %v7115
      %v7171 = vpack.c.bf16 %v7118, %v7117
      %v7172 = vpack.c.bf16 %v7120, %v7119
      %v7173 = vpack.c.bf16 %v7122, %v7121
      %v7174 = vpack.c.bf16 %v7124, %v7123
      %v7175 = vpack.c.bf16 %v7126, %v7125
      %v7176 = vpack.c.bf16 %v7128, %v7127
      %v7177 = vpack.c.bf16 %v7130, %v7129
      %v7178 = vpack.c.bf16 %v7132, %v7131
      %v7179 = vpack.c.bf16 %v7134, %v7133
      %v7180 = vpack.c.bf16 %v7136, %v7135
      %v7181 = vpack.c.bf16 %v7138, %v7137
      %v7182 = vpack.c.bf16 %v7140, %v7139
      %v7183 = vpack.c.bf16 %v7142, %v7141
      %v7184 = vpack.c.bf16 %v7144, %v7143
      %v7185 = vld [vmem:[%s6] sm:$0xf]
      %v7186 = vld [vmem:[%s6 + $0x4] sm:$0xf]
      %v7187 = vld [vmem:[%s6 + $0x8] sm:$0xf]
      %v7188 = vld [vmem:[%s6 + $0xc] sm:$0xf]
      %v7189 = vld [vmem:[%s6 + $0x10] sm:$0xf]
      %v7190 = vld [vmem:[%s6 + $0x14] sm:$0xf]
      %v7191 = vld [vmem:[%s6 + $0x18] sm:$0xf]
      %v7192 = vld [vmem:[%s6 + $0x1c] sm:$0xf]
      %v7201 = vunpack.c.l.b16 %v7185
      %v7202 = vunpack.c.l.b16 %v7186
      %v7203 = vunpack.c.l.b16 %v7187
      %v7204 = vunpack.c.l.b16 %v7188
      %v7205 = vunpack.c.l.b16 %v7189
      %v7206 = vunpack.c.l.b16 %v7190
      %v7207 = vunpack.c.l.b16 %v7191
      %v7208 = vunpack.c.l.b16 %v7192
      %v7209 = vpack.c.b16 %v7202, %v7201
      %v7210 = vpack.c.b16 %v7204, %v7203
      %v7211 = vpack.c.b16 %v7206, %v7205
      %v7212 = vpack.c.b16 %v7208, %v7207
      %v7218 = vsel %vm1801, %v7169, 0
      %v7221 = vsel %vm1801, %v7170, 0
      %v7224 = vsel %vm1801, %v7171, 0
      %v7227 = vsel %vm1801, %v7172, 0
      %v7230 = vsel %vm1801, %v7173, 0
      %v7233 = vsel %vm1801, %v7174, 0
      %v7236 = vsel %vm1801, %v7175, 0
      %v7239 = vsel %vm1801, %v7176, 0
      %v7242 = vsel %vm1801, %v7177, 0
      %v7245 = vsel %vm1801, %v7178, 0
      %v7248 = vsel %vm1801, %v7179, 0
      %v7251 = vsel %vm1801, %v7180, 0
      %v7254 = vsel %vm1801, %v7181, 0
      %v7257 = vsel %vm1801, %v7182, 0
      %v7260 = vsel %vm1801, %v7183, 0
      %v7263 = vsel %vm1801, %v7184, 0
      %7265 = vmatprep.subr.bf16.mxu0 0
      %7266 = vmatpush1.bf16.msra.mxu0 0
      %7267 = vmatprep.subr.bf16.mxu0 0
      %7268 = vmatpush1.bf16.msra.mxu0 0
      %7269 = vmatprep.subr.bf16.mxu0 0
      %7270 = vmatpush1.bf16.msra.mxu0 0
      %7271 = vmatprep.subr.bf16.mxu0 0
      %7272 = vmatpush1.bf16.msra.mxu0 0
      %7273 = vmatprep.subr.bf16.mxu0 0
      %7274 = vmatpush1.bf16.msra.mxu0 %v7212
      %7275 = vmatprep.subr.bf16.mxu0 0
      %7276 = vmatpush1.bf16.msra.mxu0 %v7211
      %7277 = vmatprep.subr.bf16.mxu0 0
      %7278 = vmatpush1.bf16.msra.mxu0 %v7210
      %7279 = vmatprep.subr.bf16.mxu0 0
      %7280 = vmatpush1.bf16.msra.mxu0 %v7209
      %7281 = vmatprep.subr.bf16.mxu0 0
      %7282 = vmatpush2.bf16.msra.mxu0 0
      %7283 = vmatprep.subr.bf16.mxu0 0
      %7284 = vmatpush2.bf16.msra.mxu0 0
      %7285 = vmatprep.subr.bf16.mxu0 0
      %7286 = vmatpush2.bf16.msra.mxu0 0
      %7287 = vmatprep.subr.bf16.mxu0 0
      %7288 = vmatpush2.bf16.msra.mxu0 0
      %7289 = vmatprep.subr.bf16.mxu0 0
      %7290 = vmatpush2.bf16.msra.mxu0 0
      %7291 = vmatprep.subr.bf16.mxu0 0
      %7292 = vmatpush2.bf16.msra.mxu0 0
      %7293 = vmatprep.subr.bf16.mxu0 0
      %7294 = vmatpush2.bf16.msra.mxu0 0
      %7295 = vmatprep.subr.bf16.mxu0 0
      %7296 = vmatpush2.bf16.msra.mxu0 0
      %7297 = vmatprep.mubr.bf16.mxu0 0
      %7298 = vmatmul.mubr.bf16.gmra.mxu0 %v7218
      %v7299 = vpop.f32.mrf.mxu0
      %v7300 = vadd.f32 0.0, %v7299
      %v7301 = vpop.f32.mrf.mxu0
      %v7302 = vpop.f32.mrf.mxu0
      %v7303 = vadd.f32 0.0, %v7302
      %v7304 = vpop.f32.mrf.mxu0
      %7305 = vmatprep.mubr.bf16.mxu0 0
      %7306 = vmatmul.mubr.bf16.gmra.mxu0 %v7221
      %v7307 = vpop.f32.mrf.mxu0
      %v7308 = vadd.f32 0.0, %v7307
      %v7309 = vpop.f32.mrf.mxu0
      %v7310 = vpop.f32.mrf.mxu0
      %v7311 = vadd.f32 0.0, %v7310
      %v7312 = vpop.f32.mrf.mxu0
      %7313 = vmatprep.mubr.bf16.mxu0 0
      %7314 = vmatmul.mubr.bf16.gmra.mxu0 %v7224
      %v7315 = vpop.f32.mrf.mxu0
      %v7316 = vadd.f32 0.0, %v7315
      %v7317 = vpop.f32.mrf.mxu0
      %v7318 = vpop.f32.mrf.mxu0
      %v7319 = vadd.f32 0.0, %v7318
      %v7320 = vpop.f32.mrf.mxu0
      %7321 = vmatprep.mubr.bf16.mxu0 0
      %7322 = vmatmul.mubr.bf16.gmra.mxu0 %v7227
      %v7323 = vpop.f32.mrf.mxu0
      %v7324 = vadd.f32 0.0, %v7323
      %v7325 = vpop.f32.mrf.mxu0
      %v7326 = vpop.f32.mrf.mxu0
      %v7327 = vadd.f32 0.0, %v7326
      %v7328 = vpop.f32.mrf.mxu0
      %7329 = vmatprep.mubr.bf16.mxu0 0
      %7330 = vmatmul.mubr.bf16.gmra.mxu0 %v7230
      %v7331 = vpop.f32.mrf.mxu0
      %v7332 = vadd.f32 0.0, %v7331
      %v7333 = vpop.f32.mrf.mxu0
      %v7334 = vpop.f32.mrf.mxu0
      %v7335 = vadd.f32 0.0, %v7334
      %v7336 = vpop.f32.mrf.mxu0
      %7337 = vmatprep.mubr.bf16.mxu0 0
      %7338 = vmatmul.mubr.bf16.gmra.mxu0 %v7233
      %v7339 = vpop.f32.mrf.mxu0
      %v7340 = vadd.f32 0.0, %v7339
      %v7341 = vpop.f32.mrf.mxu0
      %v7342 = vpop.f32.mrf.mxu0
      %v7343 = vadd.f32 0.0, %v7342
      %v7344 = vpop.f32.mrf.mxu0
      %7345 = vmatprep.mubr.bf16.mxu0 0
      %7346 = vmatmul.mubr.bf16.gmra.mxu0 %v7236
      %v7347 = vpop.f32.mrf.mxu0
      %v7348 = vadd.f32 0.0, %v7347
      %v7349 = vpop.f32.mrf.mxu0
      %v7350 = vpop.f32.mrf.mxu0
      %v7351 = vadd.f32 0.0, %v7350
      %v7352 = vpop.f32.mrf.mxu0
      %7353 = vmatprep.mubr.bf16.mxu0 0
      %7354 = vmatmul.mubr.bf16.gmra.mxu0 %v7239
      %v7355 = vpop.f32.mrf.mxu0
      %v7356 = vadd.f32 0.0, %v7355
      %v7357 = vpop.f32.mrf.mxu0
      %v7358 = vpop.f32.mrf.mxu0
      %v7359 = vadd.f32 0.0, %v7358
      %v7360 = vpop.f32.mrf.mxu0
      %7361 = vmatprep.mubr.bf16.mxu0 0
      %7362 = vmatmul.mubr.bf16.gmra.mxu0 %v7242
      %v7363 = vpop.f32.mrf.mxu0
      %v7364 = vadd.f32 0.0, %v7363
      %v7365 = vpop.f32.mrf.mxu0
      %v7366 = vpop.f32.mrf.mxu0
      %v7367 = vadd.f32 0.0, %v7366
      %v7368 = vpop.f32.mrf.mxu0
      %7369 = vmatprep.mubr.bf16.mxu0 0
      %7370 = vmatmul.mubr.bf16.gmra.mxu0 %v7245
      %v7371 = vpop.f32.mrf.mxu0
      %v7372 = vadd.f32 0.0, %v7371
      %v7373 = vpop.f32.mrf.mxu0
      %v7374 = vpop.f32.mrf.mxu0
      %v7375 = vadd.f32 0.0, %v7374
      %v7376 = vpop.f32.mrf.mxu0
      %7377 = vmatprep.mubr.bf16.mxu0 0
      %7378 = vmatmul.mubr.bf16.gmra.mxu0 %v7248
      %v7379 = vpop.f32.mrf.mxu0
      %v7380 = vadd.f32 0.0, %v7379
      %v7381 = vpop.f32.mrf.mxu0
      %v7382 = vpop.f32.mrf.mxu0
      %v7383 = vadd.f32 0.0, %v7382
      %v7384 = vpop.f32.mrf.mxu0
      %7385 = vmatprep.mubr.bf16.mxu0 0
      %7386 = vmatmul.mubr.bf16.gmra.mxu0 %v7251
      %v7387 = vpop.f32.mrf.mxu0
      %v7388 = vadd.f32 0.0, %v7387
      %v7389 = vpop.f32.mrf.mxu0
      %v7390 = vpop.f32.mrf.mxu0
      %v7391 = vadd.f32 0.0, %v7390
      %v7392 = vpop.f32.mrf.mxu0
      %7393 = vmatprep.mubr.bf16.mxu0 0
      %7394 = vmatmul.mubr.bf16.gmra.mxu0 %v7254
      %v7395 = vpop.f32.mrf.mxu0
      %v7396 = vadd.f32 0.0, %v7395
      %v7397 = vpop.f32.mrf.mxu0
      %v7398 = vpop.f32.mrf.mxu0
      %v7399 = vadd.f32 0.0, %v7398
      %v7400 = vpop.f32.mrf.mxu0
      %7401 = vmatprep.mubr.bf16.mxu0 0
      %7402 = vmatmul.mubr.bf16.gmra.mxu0 %v7257
      %v7403 = vpop.f32.mrf.mxu0
      %v7404 = vadd.f32 0.0, %v7403
      %v7405 = vpop.f32.mrf.mxu0
      %v7406 = vpop.f32.mrf.mxu0
      %v7407 = vadd.f32 0.0, %v7406
      %v7408 = vpop.f32.mrf.mxu0
      %7409 = vmatprep.mubr.bf16.mxu0 0
      %7410 = vmatmul.mubr.bf16.gmra.mxu0 %v7260
      %v7411 = vpop.f32.mrf.mxu0
      %v7412 = vadd.f32 0.0, %v7411
      %v7413 = vpop.f32.mrf.mxu0
      %v7414 = vpop.f32.mrf.mxu0
      %v7415 = vadd.f32 0.0, %v7414
      %v7416 = vpop.f32.mrf.mxu0
      %7417 = vmatprep.mubr.bf16.mxu0 0
      %7418 = vmatmul.mubr.bf16.gmra.mxu0 %v7263
      %v7419 = vpop.f32.mrf.mxu0
      %v7420 = vadd.f32 0.0, %v7419
      %v7421 = vpop.f32.mrf.mxu0
      %v7422 = vpop.f32.mrf.mxu0
      %v7423 = vadd.f32 0.0, %v7422
      %v7424 = vpop.f32.mrf.mxu0
      %7425 = vdwg.mxu0
      %v7434 = vunpack.c.l.b16 %v7161
      %v7435 = vunpack.c.l.b16 %v7162
      %v7436 = vunpack.c.l.b16 %v7163
      %v7437 = vunpack.c.l.b16 %v7164
      %v7438 = vunpack.c.l.b16 %v7165
      %v7439 = vunpack.c.l.b16 %v7166
      %v7440 = vunpack.c.l.b16 %v7167
      %v7441 = vunpack.c.l.b16 %v7168
      %v7442 = vpack.c.b16 %v7435, %v7434
      %v7443 = vpack.c.b16 %v7437, %v7436
      %v7444 = vpack.c.b16 %v7439, %v7438
      %v7445 = vpack.c.b16 %v7441, %v7440
      %v7451 = vsel %vm1801, %v7145, 0
      %v7454 = vsel %vm1801, %v7146, 0
      %v7457 = vsel %vm1801, %v7147, 0
      %v7460 = vsel %vm1801, %v7148, 0
      %v7463 = vsel %vm1801, %v7149, 0
      %v7466 = vsel %vm1801, %v7150, 0
      %v7469 = vsel %vm1801, %v7151, 0
      %v7472 = vsel %vm1801, %v7152, 0
      %v7475 = vsel %vm1801, %v7153, 0
      %v7478 = vsel %vm1801, %v7154, 0
      %v7481 = vsel %vm1801, %v7155, 0
      %v7484 = vsel %vm1801, %v7156, 0
      %v7487 = vsel %vm1801, %v7157, 0
      %v7490 = vsel %vm1801, %v7158, 0
      %v7493 = vsel %vm1801, %v7159, 0
      %v7496 = vsel %vm1801, %v7160, 0
      %7498 = vmatprep.subr.bf16.mxu0 0
      %7499 = vmatpush1.bf16.msra.mxu0 0
      %7500 = vmatprep.subr.bf16.mxu0 0
      %7501 = vmatpush1.bf16.msra.mxu0 0
      %7502 = vmatprep.subr.bf16.mxu0 0
      %7503 = vmatpush1.bf16.msra.mxu0 0
      %7504 = vmatprep.subr.bf16.mxu0 0
      %7505 = vmatpush1.bf16.msra.mxu0 0
      %7506 = vmatprep.subr.bf16.mxu0 0
      %7507 = vmatpush1.bf16.msra.mxu0 %v7445
      %7508 = vmatprep.subr.bf16.mxu0 0
      %7509 = vmatpush1.bf16.msra.mxu0 %v7444
      %7510 = vmatprep.subr.bf16.mxu0 0
      %7511 = vmatpush1.bf16.msra.mxu0 %v7443
      %7512 = vmatprep.subr.bf16.mxu0 0
      %7513 = vmatpush1.bf16.msra.mxu0 %v7442
      %7514 = vmatprep.subr.bf16.mxu0 0
      %7515 = vmatpush2.bf16.msra.mxu0 0
      %7516 = vmatprep.subr.bf16.mxu0 0
      %7517 = vmatpush2.bf16.msra.mxu0 0
      %7518 = vmatprep.subr.bf16.mxu0 0
      %7519 = vmatpush2.bf16.msra.mxu0 0
      %7520 = vmatprep.subr.bf16.mxu0 0
      %7521 = vmatpush2.bf16.msra.mxu0 0
      %7522 = vmatprep.subr.bf16.mxu0 0
      %7523 = vmatpush2.bf16.msra.mxu0 0
      %7524 = vmatprep.subr.bf16.mxu0 0
      %7525 = vmatpush2.bf16.msra.mxu0 0
      %7526 = vmatprep.subr.bf16.mxu0 0
      %7527 = vmatpush2.bf16.msra.mxu0 0
      %7528 = vmatprep.subr.bf16.mxu0 0
      %7529 = vmatpush2.bf16.msra.mxu0 0
      %7530 = vmatprep.mubr.bf16.mxu0 0
      %7531 = vmatmul.mubr.bf16.gmra.mxu0 %v7451
      %v7532 = vpop.f32.mrf.mxu0
      %v7533 = vadd.f32 %v7300, %v7532
      %v7534 = vpop.f32.mrf.mxu0
      %v7535 = vpop.f32.mrf.mxu0
      %v7536 = vadd.f32 %v7303, %v7535
      %v7537 = vpop.f32.mrf.mxu0
      %7538 = vmatprep.mubr.bf16.mxu0 0
      %7539 = vmatmul.mubr.bf16.gmra.mxu0 %v7454
      %v7540 = vpop.f32.mrf.mxu0
      %v7541 = vadd.f32 %v7308, %v7540
      %v7542 = vpop.f32.mrf.mxu0
      %v7543 = vpop.f32.mrf.mxu0
      %v7544 = vadd.f32 %v7311, %v7543
      %v7545 = vpop.f32.mrf.mxu0
      %7546 = vmatprep.mubr.bf16.mxu0 0
      %7547 = vmatmul.mubr.bf16.gmra.mxu0 %v7457
      %v7548 = vpop.f32.mrf.mxu0
      %v7549 = vadd.f32 %v7316, %v7548
      %v7550 = vpop.f32.mrf.mxu0
      %v7551 = vpop.f32.mrf.mxu0
      %v7552 = vadd.f32 %v7319, %v7551
      %v7553 = vpop.f32.mrf.mxu0
      %7554 = vmatprep.mubr.bf16.mxu0 0
      %7555 = vmatmul.mubr.bf16.gmra.mxu0 %v7460
      %v7556 = vpop.f32.mrf.mxu0
      %v7557 = vadd.f32 %v7324, %v7556
      %v7558 = vpop.f32.mrf.mxu0
      %v7559 = vpop.f32.mrf.mxu0
      %v7560 = vadd.f32 %v7327, %v7559
      %v7561 = vpop.f32.mrf.mxu0
      %7562 = vmatprep.mubr.bf16.mxu0 0
      %7563 = vmatmul.mubr.bf16.gmra.mxu0 %v7463
      %v7564 = vpop.f32.mrf.mxu0
      %v7565 = vadd.f32 %v7332, %v7564
      %v7566 = vpop.f32.mrf.mxu0
      %v7567 = vpop.f32.mrf.mxu0
      %v7568 = vadd.f32 %v7335, %v7567
      %v7569 = vpop.f32.mrf.mxu0
      %7570 = vmatprep.mubr.bf16.mxu0 0
      %7571 = vmatmul.mubr.bf16.gmra.mxu0 %v7466
      %v7572 = vpop.f32.mrf.mxu0
      %v7573 = vadd.f32 %v7340, %v7572
      %v7574 = vpop.f32.mrf.mxu0
      %v7575 = vpop.f32.mrf.mxu0
      %v7576 = vadd.f32 %v7343, %v7575
      %v7577 = vpop.f32.mrf.mxu0
      %7578 = vmatprep.mubr.bf16.mxu0 0
      %7579 = vmatmul.mubr.bf16.gmra.mxu0 %v7469
      %v7580 = vpop.f32.mrf.mxu0
      %v7581 = vadd.f32 %v7348, %v7580
      %v7582 = vpop.f32.mrf.mxu0
      %v7583 = vpop.f32.mrf.mxu0
      %v7584 = vadd.f32 %v7351, %v7583
      %v7585 = vpop.f32.mrf.mxu0
      %7586 = vmatprep.mubr.bf16.mxu0 0
      %7587 = vmatmul.mubr.bf16.gmra.mxu0 %v7472
      %v7588 = vpop.f32.mrf.mxu0
      %v7589 = vadd.f32 %v7356, %v7588
      %v7590 = vpop.f32.mrf.mxu0
      %v7591 = vpop.f32.mrf.mxu0
      %v7592 = vadd.f32 %v7359, %v7591
      %v7593 = vpop.f32.mrf.mxu0
      %7594 = vmatprep.mubr.bf16.mxu0 0
      %7595 = vmatmul.mubr.bf16.gmra.mxu0 %v7475
      %v7596 = vpop.f32.mrf.mxu0
      %v7597 = vadd.f32 %v7364, %v7596
      %v7598 = vpop.f32.mrf.mxu0
      %v7599 = vpop.f32.mrf.mxu0
      %v7600 = vadd.f32 %v7367, %v7599
      %v7601 = vpop.f32.mrf.mxu0
      %7602 = vmatprep.mubr.bf16.mxu0 0
      %7603 = vmatmul.mubr.bf16.gmra.mxu0 %v7478
      %v7604 = vpop.f32.mrf.mxu0
      %v7605 = vadd.f32 %v7372, %v7604
      %v7606 = vpop.f32.mrf.mxu0
      %v7607 = vpop.f32.mrf.mxu0
      %v7608 = vadd.f32 %v7375, %v7607
      %v7609 = vpop.f32.mrf.mxu0
      %7610 = vmatprep.mubr.bf16.mxu0 0
      %7611 = vmatmul.mubr.bf16.gmra.mxu0 %v7481
      %v7612 = vpop.f32.mrf.mxu0
      %v7613 = vadd.f32 %v7380, %v7612
      %v7614 = vpop.f32.mrf.mxu0
      %v7615 = vpop.f32.mrf.mxu0
      %v7616 = vadd.f32 %v7383, %v7615
      %v7617 = vpop.f32.mrf.mxu0
      %7618 = vmatprep.mubr.bf16.mxu0 0
      %7619 = vmatmul.mubr.bf16.gmra.mxu0 %v7484
      %v7620 = vpop.f32.mrf.mxu0
      %v7621 = vadd.f32 %v7388, %v7620
      %v7622 = vpop.f32.mrf.mxu0
      %v7623 = vpop.f32.mrf.mxu0
      %v7624 = vadd.f32 %v7391, %v7623
      %v7625 = vpop.f32.mrf.mxu0
      %7626 = vmatprep.mubr.bf16.mxu0 0
      %7627 = vmatmul.mubr.bf16.gmra.mxu0 %v7487
      %v7628 = vpop.f32.mrf.mxu0
      %v7629 = vadd.f32 %v7396, %v7628
      %v7630 = vpop.f32.mrf.mxu0
      %v7631 = vpop.f32.mrf.mxu0
      %v7632 = vadd.f32 %v7399, %v7631
      %v7633 = vpop.f32.mrf.mxu0
      %7634 = vmatprep.mubr.bf16.mxu0 0
      %7635 = vmatmul.mubr.bf16.gmra.mxu0 %v7490
      %v7636 = vpop.f32.mrf.mxu0
      %v7637 = vadd.f32 %v7404, %v7636
      %v7638 = vpop.f32.mrf.mxu0
      %v7639 = vpop.f32.mrf.mxu0
      %v7640 = vadd.f32 %v7407, %v7639
      %v7641 = vpop.f32.mrf.mxu0
      %7642 = vmatprep.mubr.bf16.mxu0 0
      %7643 = vmatmul.mubr.bf16.gmra.mxu0 %v7493
      %v7644 = vpop.f32.mrf.mxu0
      %v7645 = vadd.f32 %v7412, %v7644
      %v7646 = vpop.f32.mrf.mxu0
      %v7647 = vpop.f32.mrf.mxu0
      %v7648 = vadd.f32 %v7415, %v7647
      %v7649 = vpop.f32.mrf.mxu0
      %7650 = vmatprep.mubr.bf16.mxu0 0
      %7651 = vmatmul.mubr.bf16.gmra.mxu0 %v7496
      %v7652 = vpop.f32.mrf.mxu0
      %v7653 = vadd.f32 %v7420, %v7652
      %v7654 = vpop.f32.mrf.mxu0
      %v7655 = vpop.f32.mrf.mxu0
      %v7656 = vadd.f32 %v7423, %v7655
      %v7657 = vpop.f32.mrf.mxu0
      %7658 = vdwg.mxu0
      %v7659 = vld [vmem:[%s7] sm:$0xf]
      %v7660 = vld [vmem:[%s7 + $0x4] sm:$0xf]
      %v7661 = vld [vmem:[%s7 + $0x8] sm:$0xf]
      %v7662 = vld [vmem:[%s7 + $0xc] sm:$0xf]
      %v7663 = vld [vmem:[%s7 + $0x10] sm:$0xf]
      %v7664 = vld [vmem:[%s7 + $0x14] sm:$0xf]
      %v7665 = vld [vmem:[%s7 + $0x18] sm:$0xf]
      %v7666 = vld [vmem:[%s7 + $0x1c] sm:$0xf]
      %v7675 = vunpack.c.l.b16 %v7659
      %v7676 = vunpack.c.l.b16 %v7660
      %v7677 = vunpack.c.l.b16 %v7661
      %v7678 = vunpack.c.l.b16 %v7662
      %v7679 = vunpack.c.l.b16 %v7663
      %v7680 = vunpack.c.l.b16 %v7664
      %v7681 = vunpack.c.l.b16 %v7665
      %v7682 = vunpack.c.l.b16 %v7666
      %v7683 = vpack.c.b16 %v7676, %v7675
      %v7684 = vpack.c.b16 %v7678, %v7677
      %v7685 = vpack.c.b16 %v7680, %v7679
      %v7686 = vpack.c.b16 %v7682, %v7681
      %v7691 = vsel %vm1801, %v1642, 0
      %v7693 = vsel %vm1801, %v1643, 0
      %v7695 = vsel %vm1801, %v1644, 0
      %v7697 = vsel %vm1801, %v1645, 0
      %v7699 = vsel %vm1801, %v1646, 0
      %v7701 = vsel %vm1801, %v1647, 0
      %v7703 = vsel %vm1801, %v1648, 0
      %v7705 = vsel %vm1801, %v1649, 0
      %v7707 = vsel %vm1801, %v1650, 0
      %v7709 = vsel %vm1801, %v1651, 0
      %v7711 = vsel %vm1801, %v1652, 0
      %v7713 = vsel %vm1801, %v1653, 0
      %v7715 = vsel %vm1801, %v1654, 0
      %v7717 = vsel %vm1801, %v1655, 0
      %v7719 = vsel %vm1801, %v1656, 0
      %v7721 = vsel %vm1801, %v2052, 0
      %7723 = vmatprep.subr.bf16.mxu0 0
      %7724 = vmatpush1.bf16.msra.mxu0 0
      %7725 = vmatprep.subr.bf16.mxu0 0
      %7726 = vmatpush1.bf16.msra.mxu0 0
      %7727 = vmatprep.subr.bf16.mxu0 0
      %7728 = vmatpush1.bf16.msra.mxu0 0
      %7729 = vmatprep.subr.bf16.mxu0 0
      %7730 = vmatpush1.bf16.msra.mxu0 0
      %7731 = vmatprep.subr.bf16.mxu0 0
      %7732 = vmatpush1.bf16.msra.mxu0 %v7686
      %7733 = vmatprep.subr.bf16.mxu0 0
      %7734 = vmatpush1.bf16.msra.mxu0 %v7685
      %7735 = vmatprep.subr.bf16.mxu0 0
      %7736 = vmatpush1.bf16.msra.mxu0 %v7684
      %7737 = vmatprep.subr.bf16.mxu0 0
      %7738 = vmatpush1.bf16.msra.mxu0 %v7683
      %7739 = vmatprep.subr.bf16.mxu0 0
      %7740 = vmatpush2.bf16.msra.mxu0 0
      %7741 = vmatprep.subr.bf16.mxu0 0
      %7742 = vmatpush2.bf16.msra.mxu0 0
      %7743 = vmatprep.subr.bf16.mxu0 0
      %7744 = vmatpush2.bf16.msra.mxu0 0
      %7745 = vmatprep.subr.bf16.mxu0 0
      %7746 = vmatpush2.bf16.msra.mxu0 0
      %7747 = vmatprep.subr.bf16.mxu0 0
      %7748 = vmatpush2.bf16.msra.mxu0 0
      %7749 = vmatprep.subr.bf16.mxu0 0
      %7750 = vmatpush2.bf16.msra.mxu0 0
      %7751 = vmatprep.subr.bf16.mxu0 0
      %7752 = vmatpush2.bf16.msra.mxu0 0
      %7753 = vmatprep.subr.bf16.mxu0 0
      %7754 = vmatpush2.bf16.msra.mxu0 0
      %7755 = vmatprep.mubr.bf16.mxu0 0
      %7756 = vmatmul.mubr.bf16.gmra.mxu0 %v7691
      %v7757 = vpop.f32.mrf.mxu0
      %v7758 = vadd.f32 0.0, %v7757
      %v7759 = vpop.f32.mrf.mxu0
      %v7760 = vpop.f32.mrf.mxu0
      %v7761 = vadd.f32 0.0, %v7760
      %v7762 = vpop.f32.mrf.mxu0
      %7763 = vmatprep.mubr.bf16.mxu0 0
      %7764 = vmatmul.mubr.bf16.gmra.mxu0 %v7693
      %v7765 = vpop.f32.mrf.mxu0
      %v7766 = vadd.f32 0.0, %v7765
      %v7767 = vpop.f32.mrf.mxu0
      %v7768 = vpop.f32.mrf.mxu0
      %v7769 = vadd.f32 0.0, %v7768
      %v7770 = vpop.f32.mrf.mxu0
      %7771 = vmatprep.mubr.bf16.mxu0 0
      %7772 = vmatmul.mubr.bf16.gmra.mxu0 %v7695
      %v7773 = vpop.f32.mrf.mxu0
      %v7774 = vadd.f32 0.0, %v7773
      %v7775 = vpop.f32.mrf.mxu0
      %v7776 = vpop.f32.mrf.mxu0
      %v7777 = vadd.f32 0.0, %v7776
      %v7778 = vpop.f32.mrf.mxu0
      %7779 = vmatprep.mubr.bf16.mxu0 0
      %7780 = vmatmul.mubr.bf16.gmra.mxu0 %v7697
      %v7781 = vpop.f32.mrf.mxu0
      %v7782 = vadd.f32 0.0, %v7781
      %v7783 = vpop.f32.mrf.mxu0
      %v7784 = vpop.f32.mrf.mxu0
      %v7785 = vadd.f32 0.0, %v7784
      %v7786 = vpop.f32.mrf.mxu0
      %7787 = vmatprep.mubr.bf16.mxu0 0
      %7788 = vmatmul.mubr.bf16.gmra.mxu0 %v7699
      %v7789 = vpop.f32.mrf.mxu0
      %v7790 = vadd.f32 0.0, %v7789
      %v7791 = vpop.f32.mrf.mxu0
      %v7792 = vpop.f32.mrf.mxu0
      %v7793 = vadd.f32 0.0, %v7792
      %v7794 = vpop.f32.mrf.mxu0
      %7795 = vmatprep.mubr.bf16.mxu0 0
      %7796 = vmatmul.mubr.bf16.gmra.mxu0 %v7701
      %v7797 = vpop.f32.mrf.mxu0
      %v7798 = vadd.f32 0.0, %v7797
      %v7799 = vpop.f32.mrf.mxu0
      %v7800 = vpop.f32.mrf.mxu0
      %v7801 = vadd.f32 0.0, %v7800
      %v7802 = vpop.f32.mrf.mxu0
      %7803 = vmatprep.mubr.bf16.mxu0 0
      %7804 = vmatmul.mubr.bf16.gmra.mxu0 %v7703
      %v7805 = vpop.f32.mrf.mxu0
      %v7806 = vadd.f32 0.0, %v7805
      %v7807 = vpop.f32.mrf.mxu0
      %v7808 = vpop.f32.mrf.mxu0
      %v7809 = vadd.f32 0.0, %v7808
      %v7810 = vpop.f32.mrf.mxu0
      %7811 = vmatprep.mubr.bf16.mxu0 0
      %7812 = vmatmul.mubr.bf16.gmra.mxu0 %v7705
      %v7813 = vpop.f32.mrf.mxu0
      %v7814 = vadd.f32 0.0, %v7813
      %v7815 = vpop.f32.mrf.mxu0
      %v7816 = vpop.f32.mrf.mxu0
      %v7817 = vadd.f32 0.0, %v7816
      %v7818 = vpop.f32.mrf.mxu0
      %7819 = vmatprep.mubr.bf16.mxu0 0
      %7820 = vmatmul.mubr.bf16.gmra.mxu0 %v7707
      %v7821 = vpop.f32.mrf.mxu0
      %v7822 = vadd.f32 0.0, %v7821
      %v7823 = vpop.f32.mrf.mxu0
      %v7824 = vpop.f32.mrf.mxu0
      %v7825 = vadd.f32 0.0, %v7824
      %v7826 = vpop.f32.mrf.mxu0
      %7827 = vmatprep.mubr.bf16.mxu0 0
      %7828 = vmatmul.mubr.bf16.gmra.mxu0 %v7709
      %v7829 = vpop.f32.mrf.mxu0
      %v7830 = vadd.f32 0.0, %v7829
      %v7831 = vpop.f32.mrf.mxu0
      %v7832 = vpop.f32.mrf.mxu0
      %v7833 = vadd.f32 0.0, %v7832
      %v7834 = vpop.f32.mrf.mxu0
      %7835 = vmatprep.mubr.bf16.mxu0 0
      %7836 = vmatmul.mubr.bf16.gmra.mxu0 %v7711
      %v7837 = vpop.f32.mrf.mxu0
      %v7838 = vadd.f32 0.0, %v7837
      %v7839 = vpop.f32.mrf.mxu0
      %v7840 = vpop.f32.mrf.mxu0
      %v7841 = vadd.f32 0.0, %v7840
      %v7842 = vpop.f32.mrf.mxu0
      %7843 = vmatprep.mubr.bf16.mxu0 0
      %7844 = vmatmul.mubr.bf16.gmra.mxu0 %v7713
      %v7845 = vpop.f32.mrf.mxu0
      %v7846 = vadd.f32 0.0, %v7845
      %v7847 = vpop.f32.mrf.mxu0
      %v7848 = vpop.f32.mrf.mxu0
      %v7849 = vadd.f32 0.0, %v7848
      %v7850 = vpop.f32.mrf.mxu0
      %7851 = vmatprep.mubr.bf16.mxu0 0
      %7852 = vmatmul.mubr.bf16.gmra.mxu0 %v7715
      %v7853 = vpop.f32.mrf.mxu0
      %v7854 = vadd.f32 0.0, %v7853
      %v7855 = vpop.f32.mrf.mxu0
      %v7856 = vpop.f32.mrf.mxu0
      %v7857 = vadd.f32 0.0, %v7856
      %v7858 = vpop.f32.mrf.mxu0
      %7859 = vmatprep.mubr.bf16.mxu0 0
      %7860 = vmatmul.mubr.bf16.gmra.mxu0 %v7717
      %v7861 = vpop.f32.mrf.mxu0
      %v7862 = vadd.f32 0.0, %v7861
      %v7863 = vpop.f32.mrf.mxu0
      %v7864 = vpop.f32.mrf.mxu0
      %v7865 = vadd.f32 0.0, %v7864
      %v7866 = vpop.f32.mrf.mxu0
      %7867 = vmatprep.mubr.bf16.mxu0 0
      %7868 = vmatmul.mubr.bf16.gmra.mxu0 %v7719
      %v7869 = vpop.f32.mrf.mxu0
      %v7870 = vadd.f32 0.0, %v7869
      %v7871 = vpop.f32.mrf.mxu0
      %v7872 = vpop.f32.mrf.mxu0
      %v7873 = vadd.f32 0.0, %v7872
      %v7874 = vpop.f32.mrf.mxu0
      %7875 = vmatprep.mubr.bf16.mxu0 0
      %7876 = vmatmul.mubr.bf16.gmra.mxu0 %v7721
      %v7877 = vpop.f32.mrf.mxu0
      %v7878 = vadd.f32 0.0, %v7877
      %v7879 = vpop.f32.mrf.mxu0
      %v7880 = vpop.f32.mrf.mxu0
      %v7881 = vadd.f32 0.0, %v7880
      %v7882 = vpop.f32.mrf.mxu0
      %7883 = vdwg.mxu0
      %v7884 = vadd.f32 %v7533, %v7758
      %v7885 = vadd.f32 %v7536, %v7761
      %v7886 = vadd.f32 %v7541, %v7766
      %v7887 = vadd.f32 %v7544, %v7769
      %v7888 = vadd.f32 %v7549, %v7774
      %v7889 = vadd.f32 %v7552, %v7777
      %v7890 = vadd.f32 %v7557, %v7782
      %v7891 = vadd.f32 %v7560, %v7785
      %v7892 = vadd.f32 %v7565, %v7790
      %v7893 = vadd.f32 %v7568, %v7793
      %v7894 = vadd.f32 %v7573, %v7798
      %v7895 = vadd.f32 %v7576, %v7801
      %v7896 = vadd.f32 %v7581, %v7806
      %v7897 = vadd.f32 %v7584, %v7809
      %v7898 = vadd.f32 %v7589, %v7814
      %v7899 = vadd.f32 %v7592, %v7817
      %v7900 = vadd.f32 %v7597, %v7822
      %v7901 = vadd.f32 %v7600, %v7825
      %v7902 = vadd.f32 %v7605, %v7830
      %v7903 = vadd.f32 %v7608, %v7833
      %v7904 = vadd.f32 %v7613, %v7838
      %v7905 = vadd.f32 %v7616, %v7841
      %v7906 = vadd.f32 %v7621, %v7846
      %v7907 = vadd.f32 %v7624, %v7849
      %v7908 = vadd.f32 %v7629, %v7854
      %v7909 = vadd.f32 %v7632, %v7857
      %v7910 = vadd.f32 %v7637, %v7862
      %v7911 = vadd.f32 %v7640, %v7865
      %v7912 = vadd.f32 %v7645, %v7870
      %v7913 = vadd.f32 %v7648, %v7873
      %v7914 = vadd.f32 %v7653, %v7878
      %v7915 = vadd.f32 %v7656, %v7881
      %v7916 = vld [vmem:[%s8] sm:$0x1]
      %v7918 = vlaneseq
      %v7919 = vshrl.u32 %v7918, 7
      %v7920 = vsub.s32 0, %v7919
      %v7921 = vrot.slane %v7916, %v7920
      %v7923 = vadd.f32 %v7884, %v7921
      %v7924 = vadd.f32 %v7885, %v7921
      %v7925 = vadd.f32 %v7886, %v7921
      %v7926 = vadd.f32 %v7887, %v7921
      %v7927 = vadd.f32 %v7888, %v7921
      %v7928 = vadd.f32 %v7889, %v7921
      %v7929 = vadd.f32 %v7890, %v7921
      %v7930 = vadd.f32 %v7891, %v7921
      %v7931 = vadd.f32 %v7892, %v7921
      %v7932 = vadd.f32 %v7893, %v7921
      %v7933 = vadd.f32 %v7894, %v7921
      %v7934 = vadd.f32 %v7895, %v7921
      %v7935 = vadd.f32 %v7896, %v7921
      %v7936 = vadd.f32 %v7897, %v7921
      %v7937 = vadd.f32 %v7898, %v7921
      %v7938 = vadd.f32 %v7899, %v7921
      %v7939 = vadd.f32 %v7900, %v7921
      %v7940 = vadd.f32 %v7901, %v7921
      %v7941 = vadd.f32 %v7902, %v7921
      %v7942 = vadd.f32 %v7903, %v7921
      %v7943 = vadd.f32 %v7904, %v7921
      %v7944 = vadd.f32 %v7905, %v7921
      %v7945 = vadd.f32 %v7906, %v7921
      %v7946 = vadd.f32 %v7907, %v7921
      %v7947 = vadd.f32 %v7908, %v7921
      %v7948 = vadd.f32 %v7909, %v7921
      %v7949 = vadd.f32 %v7910, %v7921
      %v7950 = vadd.f32 %v7911, %v7921
      %v7951 = vadd.f32 %v7912, %v7921
      %v7952 = vadd.f32 %v7913, %v7921
      %v7953 = vadd.f32 %v7914, %v7921
      %v7954 = vadd.f32 %v7915, %v7921
      %vm7955 = vcmp.ge.f32.partialorder %v7923, 0.0
      %vm7956 = vcmp.ge.f32.partialorder %v7924, 0.0
      %vm7957 = vcmp.ge.f32.partialorder %v7925, 0.0
      %vm7958 = vcmp.ge.f32.partialorder %v7926, 0.0
      %vm7959 = vcmp.ge.f32.partialorder %v7927, 0.0
      %vm7960 = vcmp.ge.f32.partialorder %v7928, 0.0
      %vm7961 = vcmp.ge.f32.partialorder %v7929, 0.0
      %vm7962 = vcmp.ge.f32.partialorder %v7930, 0.0
      %vm7963 = vcmp.ge.f32.partialorder %v7931, 0.0
      %vm7964 = vcmp.ge.f32.partialorder %v7932, 0.0
      %vm7965 = vcmp.ge.f32.partialorder %v7933, 0.0
      %vm7966 = vcmp.ge.f32.partialorder %v7934, 0.0
      %vm7967 = vcmp.ge.f32.partialorder %v7935, 0.0
      %vm7968 = vcmp.ge.f32.partialorder %v7936, 0.0
      %vm7969 = vcmp.ge.f32.partialorder %v7937, 0.0
      %vm7970 = vcmp.ge.f32.partialorder %v7938, 0.0
      %vm7971 = vcmp.ge.f32.partialorder %v7939, 0.0
      %vm7972 = vcmp.ge.f32.partialorder %v7940, 0.0
      %vm7973 = vcmp.ge.f32.partialorder %v7941, 0.0
      %vm7974 = vcmp.ge.f32.partialorder %v7942, 0.0
      %vm7975 = vcmp.ge.f32.partialorder %v7943, 0.0
      %vm7976 = vcmp.ge.f32.partialorder %v7944, 0.0
      %vm7977 = vcmp.ge.f32.partialorder %v7945, 0.0
      %vm7978 = vcmp.ge.f32.partialorder %v7946, 0.0
      %vm7979 = vcmp.ge.f32.partialorder %v7947, 0.0
      %vm7980 = vcmp.ge.f32.partialorder %v7948, 0.0
      %vm7981 = vcmp.ge.f32.partialorder %v7949, 0.0
      %vm7982 = vcmp.ge.f32.partialorder %v7950, 0.0
      %vm7983 = vcmp.ge.f32.partialorder %v7951, 0.0
      %vm7984 = vcmp.ge.f32.partialorder %v7952, 0.0
      %vm7985 = vcmp.ge.f32.partialorder %v7953, 0.0
      %vm7986 = vcmp.ge.f32.partialorder %v7954, 0.0
      %v7987 = vmul.f32 %v7923, 0.05
      %v7988 = vmul.f32 %v7924, 0.05
      %v7989 = vmul.f32 %v7925, 0.05
      %v7990 = vmul.f32 %v7926, 0.05
      %v7991 = vmul.f32 %v7927, 0.05
      %v7992 = vmul.f32 %v7928, 0.05
      %v7993 = vmul.f32 %v7929, 0.05
      %v7994 = vmul.f32 %v7930, 0.05
      %v7995 = vmul.f32 %v7931, 0.05
      %v7996 = vmul.f32 %v7932, 0.05
      %v7997 = vmul.f32 %v7933, 0.05
      %v7998 = vmul.f32 %v7934, 0.05
      %v7999 = vmul.f32 %v7935, 0.05
      %v8000 = vmul.f32 %v7936, 0.05
      %v8001 = vmul.f32 %v7937, 0.05
      %v8002 = vmul.f32 %v7938, 0.05
      %v8003 = vmul.f32 %v7939, 0.05
      %v8004 = vmul.f32 %v7940, 0.05
      %v8005 = vmul.f32 %v7941, 0.05
      %v8006 = vmul.f32 %v7942, 0.05
      %v8007 = vmul.f32 %v7943, 0.05
      %v8008 = vmul.f32 %v7944, 0.05
      %v8009 = vmul.f32 %v7945, 0.05
      %v8010 = vmul.f32 %v7946, 0.05
      %v8011 = vmul.f32 %v7947, 0.05
      %v8012 = vmul.f32 %v7948, 0.05
      %v8013 = vmul.f32 %v7949, 0.05
      %v8014 = vmul.f32 %v7950, 0.05
      %v8015 = vmul.f32 %v7951, 0.05
      %v8016 = vmul.f32 %v7952, 0.05
      %v8017 = vmul.f32 %v7953, 0.05
      %v8018 = vmul.f32 %v7954, 0.05
      %v8019 = vsel %vm7955, %v7923, %v7987
      %v8020 = vsel %vm7956, %v7924, %v7988
      %v8021 = vsel %vm7957, %v7925, %v7989
      %v8022 = vsel %vm7958, %v7926, %v7990
      %v8023 = vsel %vm7959, %v7927, %v7991
      %v8024 = vsel %vm7960, %v7928, %v7992
      %v8025 = vsel %vm7961, %v7929, %v7993
      %v8026 = vsel %vm7962, %v7930, %v7994
      %v8027 = vsel %vm7963, %v7931, %v7995
      %v8028 = vsel %vm7964, %v7932, %v7996
      %v8029 = vsel %vm7965, %v7933, %v7997
      %v8030 = vsel %vm7966, %v7934, %v7998
      %v8031 = vsel %vm7967, %v7935, %v7999
      %v8032 = vsel %vm7968, %v7936, %v8000
      %v8033 = vsel %vm7969, %v7937, %v8001
      %v8034 = vsel %vm7970, %v7938, %v8002
      %v8035 = vsel %vm7971, %v7939, %v8003
      %v8036 = vsel %vm7972, %v7940, %v8004
      %v8037 = vsel %vm7973, %v7941, %v8005
      %v8038 = vsel %vm7974, %v7942, %v8006
      %v8039 = vsel %vm7975, %v7943, %v8007
      %v8040 = vsel %vm7976, %v7944, %v8008
      %v8041 = vsel %vm7977, %v7945, %v8009
      %v8042 = vsel %vm7978, %v7946, %v8010
      %v8043 = vsel %vm7979, %v7947, %v8011
      %v8044 = vsel %vm7980, %v7948, %v8012
      %v8045 = vsel %vm7981, %v7949, %v8013
      %v8046 = vsel %vm7982, %v7950, %v8014
      %v8047 = vsel %vm7983, %v7951, %v8015
      %v8048 = vsel %vm7984, %v7952, %v8016
      %v8049 = vsel %vm7985, %v7953, %v8017
      %v8050 = vsel %vm7986, %v7954, %v8018
      %8051 = vst.msk [vmem:[%s370] sm:$0xff] %vm1801, %v8019
      %8052 = vst.msk [vmem:[%s370 + $0x8] sm:$0xff] %vm1801, %v8020
      %8053 = vst.msk [vmem:[%s370 + $0x10] sm:$0xff] %vm1801, %v8021
      %8054 = vst.msk [vmem:[%s370 + $0x18] sm:$0xff] %vm1801, %v8022
      %8055 = vst.msk [vmem:[%s370 + $0x20] sm:$0xff] %vm1801, %v8023
      %8056 = vst.msk [vmem:[%s370 + $0x28] sm:$0xff] %vm1801, %v8024
      %8057 = vst.msk [vmem:[%s370 + $0x30] sm:$0xff] %vm1801, %v8025
      %8058 = vst.msk [vmem:[%s370 + $0x38] sm:$0xff] %vm1801, %v8026
      %8059 = vst.msk [vmem:[%s370 + $0x40] sm:$0xff] %vm1801, %v8027
      %8060 = vst.msk [vmem:[%s370 + $0x48] sm:$0xff] %vm1801, %v8028
      %8061 = vst.msk [vmem:[%s370 + $0x50] sm:$0xff] %vm1801, %v8029
      %8062 = vst.msk [vmem:[%s370 + $0x58] sm:$0xff] %vm1801, %v8030
      %8063 = vst.msk [vmem:[%s370 + $0x60] sm:$0xff] %vm1801, %v8031
      %8064 = vst.msk [vmem:[%s370 + $0x68] sm:$0xff] %vm1801, %v8032
      %8065 = vst.msk [vmem:[%s370 + $0x70] sm:$0xff] %vm1801, %v8033
      %8066 = vst.msk [vmem:[%s370 + $0x78] sm:$0xff] %vm1801, %v8034
      %8067 = vst.msk [vmem:[%s370 + $0x80] sm:$0xff] %vm1801, %v8035
      %8068 = vst.msk [vmem:[%s370 + $0x88] sm:$0xff] %vm1801, %v8036
      %8069 = vst.msk [vmem:[%s370 + $0x90] sm:$0xff] %vm1801, %v8037
      %8070 = vst.msk [vmem:[%s370 + $0x98] sm:$0xff] %vm1801, %v8038
      %8071 = vst.msk [vmem:[%s370 + $0xa0] sm:$0xff] %vm1801, %v8039
      %8072 = vst.msk [vmem:[%s370 + $0xa8] sm:$0xff] %vm1801, %v8040
      %8073 = vst.msk [vmem:[%s370 + $0xb0] sm:$0xff] %vm1801, %v8041
      %8074 = vst.msk [vmem:[%s370 + $0xb8] sm:$0xff] %vm1801, %v8042
      %8075 = vst.msk [vmem:[%s370 + $0xc0] sm:$0xff] %vm1801, %v8043
      %8076 = vst.msk [vmem:[%s370 + $0xc8] sm:$0xff] %vm1801, %v8044
      %8077 = vst.msk [vmem:[%s370 + $0xd0] sm:$0xff] %vm1801, %v8045
      %8078 = vst.msk [vmem:[%s370 + $0xd8] sm:$0xff] %vm1801, %v8046
      %8079 = vst.msk [vmem:[%s370 + $0xe0] sm:$0xff] %vm1801, %v8047
      %8080 = vst.msk [vmem:[%s370 + $0xe8] sm:$0xff] %vm1801, %v8048
      %8081 = vst.msk [vmem:[%s370 + $0xf0] sm:$0xff] %vm1801, %v8049
      %8082 = vst.msk [vmem:[%s370 + $0xf8] sm:$0xff] %vm1801, %v8050
      %s8083 = smul.u32 16, %s25
      %p8084 = scmp.lt.s32.totalorder %s24, 1
      %s8085 = scalar_select %p8084, %s24, 1
      %p8086 = scmp.lt.s32.totalorder %s8083, 15
      %s8087 = scalar_select %p8086, %s8083, 15
      %s8088 = smul.addr %s8087, 2
      %s8089 = smul.addr %s8085, 32
      %s8090 = sadd.s32 %s8088, %s8089
      %s8091 = smul.addr %s8090, 8
      %s8092 = scalar_lea.vmem %s9, %s8091
      // Predicated region
      $region57: #{cascade_forward.1} parent=55 // pred_check
        %p8093 = pneg %p248
      $region58: #{cascade_forward.1} parent=55 // pred_check_branch
        %8095 = sbr.rel (%p8093) target = $region60
      $region59: #{cascade_forward.1} parent=55 // pred_region
        %s8096 = smul.u32 16, %s25
      $region60: #{cascade_forward.1} parent=55 // pred_fallthru
        _
    $region56: #{cascade_forward.1} parent=5 // pred_fallthru
      _
    %p8097 = scmp.le.s32.totalorder 2, %s15
    // Predicated region
    $region61: #{cascade_forward.1} parent=5 // pred_check
      %p8098 = pneg %p8097
    $region62: #{cascade_forward.1} parent=5 // pred_check_branch
      %8100 = sbr.rel (%p8098) target = $region64
    $region63: #{cascade_forward.1} parent=5 // pred_region
      %s8101 = ssub.s32 %s15, 2
      // Predicated region
      $region65: #{cascade_forward.1} parent=63 // pred_check
        %p8102 = pneg %p254
      $region66: #{cascade_forward.1} parent=63 // pred_check_branch
        %8104 = sbr.rel (%p8102) target = $region68
      $region67: #{cascade_forward.1} parent=63 // pred_region
        %s8105 = smul.u32 16, %s27
        %p8106 = scmp.lt.s32.totalorder %s26, 1
        %s8107 = scalar_select %p8106, %s26, 1
        %p8108 = scmp.lt.s32.totalorder %s8105, 15
        %s8109 = scalar_select %p8108, %s8105, 15
        %s8110 = smul.addr %s8109, 2
        %s8111 = smul.addr %s8107, 32
        %s8112 = sadd.s32 %s8110, %s8111
        %s8113 = smul.addr %s8112, 8
        %s8114 = scalar_lea.vmem %s9, %s8113
      $region68: #{cascade_forward.1} parent=63 // pred_fallthru
        _
    $region64: #{cascade_forward.1} parent=5 // pred_fallthru
      _
  $region6: #{cascade_forward.1} parent=0 // loop_footer
    %s19 = sadd.s32 1, %s15
  $region7: #{cascade_forward.1} parent=0 // loop_footer_branch
    %14 = sbr.rel target = $region3
  $region8: #{cascade_forward.1} parent=0 // loop_exit
    _

</llo_original>
